<compile_context>
chip_gen: v7x
topology: tpu7x:2x2x1
jax: 0.10.0
libtpu: 0.0.40
codegen_flags: <defaults>
</compile_context>

<pallas_src>
import numpy as np
import jax
import jax.numpy as jnp
from jax.experimental import pallas as pl
from jax.experimental.pallas import tpu as pltpu

LANE = 128


def _round_up(v, m):
    return (v + m - 1) // m * m


def _make_expansion_kernel(H, W, Cxp, Cp):
    """Fused kernel for static pre-upsample spatial size (H, W)."""
    H2, W2 = 2 * H, 2 * W
    Ho1, Wo1 = H2 - 2, W2 - 2
    Ho2, Wo2 = H2 - 4, W2 - 4
    L1 = (Ho1 - 1) * W2 + Wo1          # valid wide-flat rows of conv1 output
    L2 = (Ho2 - 1) * W2 + Wo2          # valid wide-flat rows of conv2 output
    # Wide-flat invariants: deepest reads stay inside what is written/allocated.
    assert 2 * W2 + 2 + L2 <= L1, "conv2 would read uninitialised h1 rows"
    assert 2 * W2 + 2 + L1 <= H2 * W2, "conv1 would read outside the cat slab"
    CHUNK = min(512, _round_up(max(L1, L2), 8))   # M-tile for conv1/conv2
    CT = max(1, CHUNK // W2)                      # x rows per transposed-conv step
    f32, bf16 = jnp.float32, jnp.bfloat16

    def kernel(xw_ref, y_ref, wt_ref, bt_ref, w1_ref, b1_ref, w2_ref, b2_ref,
               out_ref, cat_scr, h1_scr, acc_scr):
        # ---------- fused concat: y lives in lanes [Cp, 2*Cp) of cat ----------
        for r0 in range(0, H2 * W2, CHUNK):
            cl = min(CHUNK, H2 * W2 - r0)
            cat_scr[pl.ds(r0, cl), pl.ds(Cp, Cp)] = y_ref[pl.ds(r0, cl), :]

        # ---- ConvTranspose2d(C, C/2, k=2, s=2) into lanes [0, Cp) of cat ----
        # xw rows i*W2+J hold x[i, J//2]; the W interleave is a row-parity
        # select of two MXU results, the H interleave is aligned block stores.
        bt = bt_ref[...]                                         # (1, Cp) f32
        col_par = jax.lax.broadcasted_iota(jnp.int32, (CT * W2, 1), 0) % 2
        for i0 in range(0, H, CT):
            ct = min(CT, H - i0)
            xw = xw_ref[pl.ds(i0 * W2, ct * W2), :]              # (ct*W2, Cxp)
            par = col_par[:ct * W2]
            for di in range(2):
                u0 = jnp.dot(xw, wt_ref[di, 0, :, :], preferred_element_type=f32)
                u1 = jnp.dot(xw, wt_ref[di, 1, :, :], preferred_element_type=f32)
                row = (jnp.where(par == 1, u1, u0) + bt).astype(bf16)
                for ii in range(ct):
                    dst = (2 * (i0 + ii) + di) * W2              # multiple of W2
                    cat_scr[pl.ds(dst, W2), pl.ds(0, Cp)] = (
                        row[ii * W2:(ii + 1) * W2, :])

        # -------- conv1 (3x3 valid) over cat, K = 2*Cp, bias + ReLU ----------
        b1 = b1_ref[...]
        for r0 in range(0, L1, CHUNK):
            cl = min(CHUNK, L1 - r0)
            acc_scr[pl.ds(0, cl), :] = jnp.dot(
                cat_scr[pl.ds(r0, cl), :], w1_ref[0, 0, :, :],
                preferred_element_type=f32)
            for a in range(3):
                for b in range(3):
                    if a == 0 and b == 0:
                        continue
                    off = a * W2 + b
                    acc_scr[pl.ds(0, cl), :] += jnp.dot(
                        cat_scr[pl.ds(r0 + off, cl), :], w1_ref[a, b, :, :],
                        preferred_element_type=f32)
            h1_scr[pl.ds(r0, cl), :] = jnp.maximum(
                acc_scr[pl.ds(0, cl), :] + b1, 0.0).astype(bf16)

        # --------------------- conv2 (3x3 valid) + ReLU ----------------------
        b2 = b2_ref[...]
        for r0 in range(0, L2, CHUNK):
            cl = min(CHUNK, L2 - r0)
            acc_scr[pl.ds(0, cl), :] = jnp.dot(
                h1_scr[pl.ds(r0, cl), :], w2_ref[0, 0, :, :],
                preferred_element_type=f32)
            for a in range(3):
                for b in range(3):
                    if a == 0 and b == 0:
                        continue
                    off = a * W2 + b
                    acc_scr[pl.ds(0, cl), :] += jnp.dot(
                        h1_scr[pl.ds(r0 + off, cl), :], w2_ref[a, b, :, :],
                        preferred_element_type=f32)
            out_ref[pl.ds(r0, cl), :] = jnp.maximum(
                acc_scr[pl.ds(0, cl), :] + b2, 0.0)
        # fully define the trailing wrap rows of the output block
        out_ref[pl.ds(L2, Ho2 * W2 - L2), :] = jnp.zeros(
            (Ho2 * W2 - L2, Cp), f32)

    return kernel, CHUNK, L1, L2


def expansion_forward(params, x_nchw, y_nchw):
    """Forward pass of Expansion.  Inputs/outputs are NCHW (PyTorch layout)."""
    N, C, H, W = x_nchw.shape
    Cout = C // 2
    H2, W2 = 2 * H, 2 * W
    Ho2, Wo2 = H2 - 4, W2 - 4
    Cxp = _round_up(C, LANE)
    Cp = _round_up(Cout, LANE)
    f32, bf16 = jnp.float32, jnp.bfloat16

    # x: NCHW -> NHWC, 2x upsample along W, pad channels to full lane tiles,
    # bf16, flatten to a lane-dense 2-D slab of shape (H*W2, Cxp).
    xw = jnp.transpose(x_nchw, (0, 2, 3, 1)).astype(f32)
    xw = jnp.repeat(xw, 2, axis=2)                              # (N, H, W2, C)
    xw = jnp.pad(xw, ((0, 0), (0, 0), (0, 0), (0, Cxp - C)))
    xw = xw.astype(bf16).reshape(N, H * W2, Cxp)

    y = jnp.transpose(y_nchw, (0, 2, 3, 1)).astype(f32)
    y = jnp.pad(y, ((0, 0), (0, 0), (0, 0), (0, Cp - Cout)))
    y = y.astype(bf16).reshape(N, H2 * W2, Cp)

    # ConvTranspose2d weight (C, Cout, 2, 2) -> wt[di, dj, cin, cout]
    wt = jnp.transpose(params["up_w"], (2, 3, 0, 1)).astype(f32)
    wt = jnp.pad(wt, ((0, 0), (0, 0), (0, Cxp - C), (0, Cp - Cout))).astype(bf16)
    bt = jnp.pad(params["up_b"].astype(f32), (0, Cp - Cout)).reshape(1, Cp)

    # conv1 weight (Cout, 2*Cout, 3, 3) -> (3, 3, cin, cout); `up` channel half
    # in rows [0, Cp), `y` half in rows [Cp, 2Cp) -> concat fused into K.
    w1 = jnp.transpose(params["c1_w"], (2, 3, 1, 0)).astype(f32)
    w1u = jnp.pad(w1[:, :, :Cout, :],
                  ((0, 0), (0, 0), (0, Cp - Cout), (0, Cp - Cout)))
    w1y = jnp.pad(w1[:, :, Cout:, :],
                  ((0, 0), (0, 0), (0, Cp - Cout), (0, Cp - Cout)))
    w1cat = jnp.concatenate([w1u, w1y], axis=2).astype(bf16)    # (3,3,2Cp,Cp)
    b1 = jnp.pad(params["c1_b"].astype(f32), (0, Cp - Cout)).reshape(1, Cp)

    w2 = jnp.transpose(params["c2_w"], (2, 3, 1, 0)).astype(f32)
    w2 = jnp.pad(w2, ((0, 0), (0, 0), (0, Cp - Cout), (0, Cp - Cout))).astype(bf16)
    b2 = jnp.pad(params["c2_b"].astype(f32), (0, Cp - Cout)).reshape(1, Cp)

    kernel, CHUNK, L1, L2 = _make_expansion_kernel(H, W, Cxp, Cp)

    # VMEM budget from actual buffer sizes (double-buffered blocks + scratch).
    blk_bytes = (2 * (H * W2 * Cxp * 2 + H2 * W2 * Cp * 2 + Ho2 * W2 * Cp * 4)
                 + 4 * Cxp * Cp * 2 + 18 * Cp * Cp * 2 + 9 * Cp * Cp * 2
                 + 3 * Cp * 4)
    scr_bytes = (H2 * W2 * 2 * Cp * 2 + _round_up(L1, 8) * Cp * 2
                 + CHUNK * Cp * 4)
    vmem_limit = int(min(max((blk_bytes + scr_bytes) * 5 // 4 + (4 << 20),
                             32 << 20), 112 << 20))

    flops = N * 2 * (4 * H * W2 * Cxp * Cp           # transposed conv
                     + 9 * L1 * (2 * Cp) * Cp        # conv1 (K = 2*Cp)
                     + 9 * L2 * Cp * Cp)             # conv2
    bytes_accessed = ((xw.size + y.size + wt.size + w1cat.size + w2.size) * 2
                      + N * Ho2 * W2 * Cp * 4)

    out = pl.pallas_call(
        kernel,
        out_shape=jax.ShapeDtypeStruct((N, Ho2 * W2, Cp), f32),
        grid=(N,),
        in_specs=[
            pl.BlockSpec((None, H * W2, Cxp), lambda n: (n, 0, 0)),    # xw
            pl.BlockSpec((None, H2 * W2, Cp), lambda n: (n, 0, 0)),    # y
            pl.BlockSpec((2, 2, Cxp, Cp), lambda n: (0, 0, 0, 0)),     # wt
            pl.BlockSpec((1, Cp), lambda n: (0, 0)),                   # bt
            pl.BlockSpec((3, 3, 2 * Cp, Cp), lambda n: (0, 0, 0, 0)),  # w1cat
            pl.BlockSpec((1, Cp), lambda n: (0, 0)),                   # b1
            pl.BlockSpec((3, 3, Cp, Cp), lambda n: (0, 0, 0, 0)),      # w2
            pl.BlockSpec((1, Cp), lambda n: (0, 0)),                   # b2
        ],
        out_specs=pl.BlockSpec((None, Ho2 * W2, Cp), lambda n: (n, 0, 0)),
        scratch_shapes=[
            pltpu.VMEM((H2 * W2, 2 * Cp), bf16),              # cat = [up | y]
            pltpu.VMEM((_round_up(L1, 8), Cp), bf16),         # h1 (wide-flat)
            pltpu.VMEM((CHUNK, Cp), jnp.float32),             # chunk accumulator
        ],
        compiler_params=pltpu.CompilerParams(
            dimension_semantics=("parallel",),
            vmem_limit_bytes=vmem_limit),
        cost_estimate=pl.CostEstimate(flops=flops, transcendentals=0,
                                      bytes_accessed=bytes_accessed),
    )(xw, y, wt, bt, w1cat, b1, w2, b2)

    # wide-flat (N, Ho2*W2, Cp) -> NCHW (N, Cout, Ho2, Wo2)
    out = out.reshape(N, Ho2, W2, Cp)[:, :, :Wo2, :Cout]
    return jnp.transpose(out, (0, 3, 1, 2)).astype(x_nchw.dtype)


# ----------------------------- numpy reference -------------------------------

def reference_numpy(params, x, y):
    x = np.asarray(x, np.float32)
    y = np.asarray(y, np.float32)
    up_w = np.asarray(params["up_w"], np.float32)
    up_b = np.asarray(params["up_b"], np.float32)
    N, C, H, W = x.shape
    Co = C // 2
    up = np.zeros((N, Co, 2 * H, 2 * W), np.float32)
    for di in range(2):
        for dj in range(2):
            up[:, :, di::2, dj::2] = np.einsum('ncij,co->noij',
                                               x, up_w[:, :, di, dj])
    up += up_b[None, :, None, None]
    cat = np.concatenate([up, y], axis=1)

    def conv3x3_relu(inp, w, b):
        Hh, Ww = inp.shape[2], inp.shape[3]
        Ho, Wo = Hh - 2, Ww - 2
        out = np.zeros((inp.shape[0], w.shape[0], Ho, Wo), np.float32)
        for a in range(3):
            for bb in range(3):
                out += np.einsum('ncij,oc->noij',
                                 inp[:, :, a:a + Ho, bb:bb + Wo], w[:, :, a, bb])
        out += b[None, :, None, None]
        return np.maximum(out, 0.0)

    h1 = conv3x3_relu(cat, np.asarray(params["c1_w"], np.float32),
                      np.asarray(params["c1_b"], np.float32))
    h2 = conv3x3_relu(h1, np.asarray(params["c2_w"], np.float32),
                      np.asarray(params["c2_b"], np.float32))
    return h2


# ---------------------------------- main --------------------------------------

if __name__ == "__main__":
    in_channels = 4
    in_channel_size = 8
    out_channels = in_channels // 2
    N = 2

    key = jax.random.PRNGKey(0)
    k_x, k_y, k_uw, k_ub, k_1w, k_1b, k_2w, k_2b = jax.random.split(key, 8)

    # module inputs (NCHW, PyTorch convention)
    x = jax.random.normal(k_x, (N, in_channels, in_channel_size, in_channel_size),
                          dtype=jnp.float32)
    y = jax.random.normal(k_y, (N, out_channels, 2 * in_channel_size,
                                2 * in_channel_size), dtype=jnp.float32)

    # deterministic synthetic parameters (PyTorch weight layouts)
    params = {
        "up_w": 0.2 * jax.random.normal(k_uw, (in_channels, out_channels, 2, 2),
                                        dtype=jnp.float32),
        "up_b": 0.1 * jax.random.normal(k_ub, (out_channels,), dtype=jnp.float32),
        "c1_w": 0.2 * jax.random.normal(k_1w, (out_channels, in_channels, 3, 3),
                                        dtype=jnp.float32),
        "c1_b": 0.1 * jax.random.normal(k_1b, (out_channels,), dtype=jnp.float32),
        "c2_w": 0.2 * jax.random.normal(k_2w, (out_channels, out_channels, 3, 3),
                                        dtype=jnp.float32),
        "c2_b": 0.1 * jax.random.normal(k_2b, (out_channels,), dtype=jnp.float32),
    }

    out = jax.jit(expansion_forward)(params, x, y)
    out = jax.block_until_ready(out)

    expected_hw = 2 * in_channel_size - 4   # ConvTrain: two 3x3 valid convs
    assert out.shape == (N, out_channels, expected_hw, expected_hw), out.shape

    ref = reference_numpy(params, x, y)
    # bf16 matmul operands with f32 accumulation -> relaxed tolerance.
    np.testing.assert_allclose(np.asarray(out), ref, atol=5e-2, rtol=5e-2)

    print("KERNEL_OK")
</pallas_src>

<mosaic_0001>
module attributes {stable_mosaic.version = 11 : i64} {
  func.func @kernel(%arg0: i32, %arg1: memref<1x128x128xbf16, #tpu.memory_space<vmem>>, %arg2: memref<1x256x128xbf16, #tpu.memory_space<vmem>>, %arg3: memref<2x2x128x128xbf16, #tpu.memory_space<vmem>>, %arg4: memref<1x128xf32, #tpu.memory_space<vmem>>, %arg5: memref<3x3x256x128xbf16, #tpu.memory_space<vmem>>, %arg6: memref<1x128xf32, #tpu.memory_space<vmem>>, %arg7: memref<3x3x128x128xbf16, #tpu.memory_space<vmem>>, %arg8: memref<1x128xf32, #tpu.memory_space<vmem>>, %arg9: memref<1x192x128xf32, #tpu.memory_space<vmem>>, %arg10: memref<256x256xbf16, #tpu.memory_space<vmem>>, %arg11: memref<224x128xbf16, #tpu.memory_space<vmem>>, %arg12: memref<224x128xf32, #tpu.memory_space<vmem>>) attributes {dimension_semantics = [#tpu.dimension_semantics<parallel>], iteration_bounds = array<i64: 2>, scalar_prefetch = 0 : i64, scratch_operands = 3 : i64, tpu.core_type = #tpu.core_type<tc>, window_params = [{transform_indices = @transform_0, window_bounds = array<i64: 1, 128, 128>}, {transform_indices = @transform_1, window_bounds = array<i64: 1, 256, 128>}, {pipeline_mode = #tpu.pipeline_mode<synchronous>, transform_indices = @transform_2, window_bounds = array<i64: 2, 2, 128, 128>}, {pipeline_mode = #tpu.pipeline_mode<synchronous>, transform_indices = @transform_3, window_bounds = array<i64: 1, 128>}, {pipeline_mode = #tpu.pipeline_mode<synchronous>, transform_indices = @transform_4, window_bounds = array<i64: 3, 3, 256, 128>}, {pipeline_mode = #tpu.pipeline_mode<synchronous>, transform_indices = @transform_5, window_bounds = array<i64: 1, 128>}, {pipeline_mode = #tpu.pipeline_mode<synchronous>, transform_indices = @transform_6, window_bounds = array<i64: 3, 3, 128, 128>}, {pipeline_mode = #tpu.pipeline_mode<synchronous>, transform_indices = @transform_7, window_bounds = array<i64: 1, 128>}, {transform_indices = @transform_8, window_bounds = array<i64: 1, 192, 128>}]} {
    %c0 = arith.constant 0 : index
    %c0_0 = arith.constant 0 : index
    %c0_1 = arith.constant 0 : index
    %0 = vector.load %arg2[%c0, %c0_0, %c0_1] : memref<1x256x128xbf16, #tpu.memory_space<vmem>>, vector<1x224x128xbf16>
    %1 = vector.shape_cast %0 : vector<1x224x128xbf16> to vector<224x128xbf16>
    %c0_2 = arith.constant 0 : index
    %c128 = arith.constant 128 : index
    %2 = vector.load %arg10[%c0_2, %c128] : memref<256x256xbf16, #tpu.memory_space<vmem>>, vector<224x128xbf16>
    tpu.vector_store %arg10[%c0_2, %c128], %1 {strides = array<i32>} : memref<256x256xbf16, #tpu.memory_space<vmem>>, vector<224x128xbf16>,
    %c0_3 = arith.constant 0 : index
    %c224 = arith.constant 224 : index
    %c0_4 = arith.constant 0 : index
    %3 = vector.load %arg2[%c0_3, %c224, %c0_4] : memref<1x256x128xbf16, #tpu.memory_space<vmem>>, vector<1x32x128xbf16>
    %4 = vector.shape_cast %3 : vector<1x32x128xbf16> to vector<32x128xbf16>
    %c224_5 = arith.constant 224 : index
    %c128_6 = arith.constant 128 : index
    %5 = vector.load %arg10[%c224_5, %c128_6] : memref<256x256xbf16, #tpu.memory_space<vmem>>, vector<32x128xbf16>
    tpu.vector_store %arg10[%c224_5, %c128_6], %4 {strides = array<i32>} : memref<256x256xbf16, #tpu.memory_space<vmem>>, vector<32x128xbf16>,
    %c0_7 = arith.constant 0 : index
    %c0_8 = arith.constant 0 : index
    %6 = vector.load %arg4[%c0_7, %c0_8] : memref<1x128xf32, #tpu.memory_space<vmem>>, vector<1x128xf32>
    %7 = tpu.iota {dimensions = array<i32: 0>} : vector<224x1xi32>
    %c2_i32 = arith.constant 2 : i32
    %c0_i32 = arith.constant 0 : i32
    %8 = arith.cmpi eq, %c2_i32, %c0_i32 : i32
    %c1_i32 = arith.constant 1 : i32
    %9 = arith.select %8, %c1_i32, %c2_i32 : i32
    %10 = vector.broadcast %9 : i32 to vector<224x1xi32>
    %11 = arith.remsi %7, %10 : vector<224x1xi32>
    %c0_i32_9 = arith.constant 0 : i32
    %12 = vector.broadcast %c0_i32_9 : i32 to vector<224x1xi32>
    %13 = arith.cmpi ne, %11, %12 : vector<224x1xi32>
    %c0_i32_10 = arith.constant 0 : i32
    %14 = vector.broadcast %c0_i32_10 : i32 to vector<224x1xi32>
    %15 = arith.cmpi slt, %11, %14 : vector<224x1xi32>
    %c0_i32_11 = arith.constant 0 : i32
    %16 = arith.cmpi slt, %9, %c0_i32_11 : i32
    %17 = vector.broadcast %16 : i1 to vector<224x1xi1>
    %18 = vector.broadcast %17 : vector<224x1xi1> to vector<224x1xi1>
    %19 = arith.xori %15, %18 : vector<224x1xi1>
    %20 = arith.andi %19, %13 : vector<224x1xi1>
    %21 = vector.broadcast %9 : i32 to vector<224x1xi32>
    %22 = arith.addi %11, %21 : vector<224x1xi32>
    %23 = arith.select %20, %22, %11 : vector<224x1xi1>, vector<224x1xi32>
    %c0_12 = arith.constant 0 : index
    %c0_13 = arith.constant 0 : index
    %c0_14 = arith.constant 0 : index
    %24 = vector.load %arg1[%c0_12, %c0_13, %c0_14] : memref<1x128x128xbf16, #tpu.memory_space<vmem>>, vector<1x128x128xbf16>
    %25 = vector.shape_cast %24 : vector<1x128x128xbf16> to vector<128x128xbf16>
    %26 = vector.extract_strided_slice %23 {offsets = [0, 0], sizes = [128, 1], strides = [1, 1]} : vector<224x1xi32> to vector<128x1xi32>
    %c0_15 = arith.constant 0 : index
    %c0_16 = arith.constant 0 : index
    %c0_17 = arith.constant 0 : index
    %c0_18 = arith.constant 0 : index
    %27 = vector.load %arg3[%c0_15, %c0_16, %c0_17, %c0_18] : memref<2x2x128x128xbf16, #tpu.memory_space<vmem>>, vector<1x1x128x128xbf16>
    %28 = vector.shape_cast %27 : vector<1x1x128x128xbf16> to vector<128x128xbf16>
    %cst = arith.constant dense<0.000000e+00> : vector<128x128xf32>
    %29 = tpu.matmul %25, %28, %cst {dimension_numbers = #tpu.dot_dimension_numbers<[1], [0], [0], [1], [0, 0, 1, 1], [], []>} : vector<128x128xbf16>, vector<128x128xbf16>, vector<128x128xf32> -> vector<128x128xf32>
    %c0_19 = arith.constant 0 : index
    %c1 = arith.constant 1 : index
    %c0_20 = arith.constant 0 : index
    %c0_21 = arith.constant 0 : index
    %30 = vector.load %arg3[%c0_19, %c1, %c0_20, %c0_21] : memref<2x2x128x128xbf16, #tpu.memory_space<vmem>>, vector<1x1x128x128xbf16>
    %31 = vector.shape_cast %30 : vector<1x1x128x128xbf16> to vector<128x128xbf16>
    %cst_22 = arith.constant dense<0.000000e+00> : vector<128x128xf32>
    %32 = tpu.matmul %25, %31, %cst_22 {dimension_numbers = #tpu.dot_dimension_numbers<[1], [0], [0], [1], [0, 0, 1, 1], [], []>} : vector<128x128xbf16>, vector<128x128xbf16>, vector<128x128xf32> -> vector<128x128xf32>
    %c1_i32_23 = arith.constant 1 : i32
    %33 = vector.broadcast %c1_i32_23 : i32 to vector<128x1xi32>
    %34 = arith.cmpi eq, %26, %33 : vector<128x1xi32>
    %35 = vector.shape_cast %34 : vector<128x1xi1> to vector<128x1xi1>
    %36 = vector.broadcast %35 : vector<128x1xi1> to vector<128x128xi1>
    %37 = arith.select %36, %32, %29 : vector<128x128xi1>, vector<128x128xf32>
    %38 = vector.broadcast %6 : vector<1x128xf32> to vector<128x128xf32>
    %39 = arith.addf %37, %38 : vector<128x128xf32>
    %40 = arith.truncf %39 : vector<128x128xf32> to vector<128x128xbf16>
    %41 = vector.extract_strided_slice %40 {offsets = [0, 0], sizes = [16, 128], strides = [1, 1]} : vector<128x128xbf16> to vector<16x128xbf16>
    %c0_24 = arith.constant 0 : index
    %c0_25 = arith.constant 0 : index
    %42 = vector.load %arg10[%c0_24, %c0_25] : memref<256x256xbf16, #tpu.memory_space<vmem>>, vector<16x128xbf16>
    tpu.vector_store %arg10[%c0_24, %c0_25], %41 {strides = array<i32>} : memref<256x256xbf16, #tpu.memory_space<vmem>>, vector<16x128xbf16>,
    %43 = vector.extract_strided_slice %40 {offsets = [16, 0], sizes = [16, 128], strides = [1, 1]} : vector<128x128xbf16> to vector<16x128xbf16>
    %c32 = arith.constant 32 : index
    %c0_26 = arith.constant 0 : index
    %44 = vector.load %arg10[%c32, %c0_26] : memref<256x256xbf16, #tpu.memory_space<vmem>>, vector<16x128xbf16>
    tpu.vector_store %arg10[%c32, %c0_26], %43 {strides = array<i32>} : memref<256x256xbf16, #tpu.memory_space<vmem>>, vector<16x128xbf16>,
    %45 = vector.extract_strided_slice %40 {offsets = [32, 0], sizes = [16, 128], strides = [1, 1]} : vector<128x128xbf16> to vector<16x128xbf16>
    %c64 = arith.constant 64 : index
    %c0_27 = arith.constant 0 : index
    %46 = vector.load %arg10[%c64, %c0_27] : memref<256x256xbf16, #tpu.memory_space<vmem>>, vector<16x128xbf16>
    tpu.vector_store %arg10[%c64, %c0_27], %45 {strides = array<i32>} : memref<256x256xbf16, #tpu.memory_space<vmem>>, vector<16x128xbf16>,
    %47 = vector.extract_strided_slice %40 {offsets = [48, 0], sizes = [16, 128], strides = [1, 1]} : vector<128x128xbf16> to vector<16x128xbf16>
    %c96 = arith.constant 96 : index
    %c0_28 = arith.constant 0 : index
    %48 = vector.load %arg10[%c96, %c0_28] : memref<256x256xbf16, #tpu.memory_space<vmem>>, vector<16x128xbf16>
    tpu.vector_store %arg10[%c96, %c0_28], %47 {strides = array<i32>} : memref<256x256xbf16, #tpu.memory_space<vmem>>, vector<16x128xbf16>,
    %49 = vector.extract_strided_slice %40 {offsets = [64, 0], sizes = [16, 128], strides = [1, 1]} : vector<128x128xbf16> to vector<16x128xbf16>
    %c128_29 = arith.constant 128 : index
    %c0_30 = arith.constant 0 : index
    %50 = vector.load %arg10[%c128_29, %c0_30] : memref<256x256xbf16, #tpu.memory_space<vmem>>, vector<16x128xbf16>
    tpu.vector_store %arg10[%c128_29, %c0_30], %49 {strides = array<i32>} : memref<256x256xbf16, #tpu.memory_space<vmem>>, vector<16x128xbf16>,
    %51 = vector.extract_strided_slice %40 {offsets = [80, 0], sizes = [16, 128], strides = [1, 1]} : vector<128x128xbf16> to vector<16x128xbf16>
    %c160 = arith.constant 160 : index
    %c0_31 = arith.constant 0 : index
    %52 = vector.load %arg10[%c160, %c0_31] : memref<256x256xbf16, #tpu.memory_space<vmem>>, vector<16x128xbf16>
    tpu.vector_store %arg10[%c160, %c0_31], %51 {strides = array<i32>} : memref<256x256xbf16, #tpu.memory_space<vmem>>, vector<16x128xbf16>,
    %53 = vector.extract_strided_slice %40 {offsets = [96, 0], sizes = [16, 128], strides = [1, 1]} : vector<128x128xbf16> to vector<16x128xbf16>
    %c192 = arith.constant 192 : index
    %c0_32 = arith.constant 0 : index
    %54 = vector.load %arg10[%c192, %c0_32] : memref<256x256xbf16, #tpu.memory_space<vmem>>, vector<16x128xbf16>
    tpu.vector_store %arg10[%c192, %c0_32], %53 {strides = array<i32>} : memref<256x256xbf16, #tpu.memory_space<vmem>>, vector<16x128xbf16>,
    %55 = vector.extract_strided_slice %40 {offsets = [112, 0], sizes = [16, 128], strides = [1, 1]} : vector<128x128xbf16> to vector<16x128xbf16>
    %c224_33 = arith.constant 224 : index
    %c0_34 = arith.constant 0 : index
    %56 = vector.load %arg10[%c224_33, %c0_34] : memref<256x256xbf16, #tpu.memory_space<vmem>>, vector<16x128xbf16>
    tpu.vector_store %arg10[%c224_33, %c0_34], %55 {strides = array<i32>} : memref<256x256xbf16, #tpu.memory_space<vmem>>, vector<16x128xbf16>,
    %c1_35 = arith.constant 1 : index
    %c0_36 = arith.constant 0 : index
    %c0_37 = arith.constant 0 : index
    %c0_38 = arith.constant 0 : index
    %57 = vector.load %arg3[%c1_35, %c0_36, %c0_37, %c0_38] : memref<2x2x128x128xbf16, #tpu.memory_space<vmem>>, vector<1x1x128x128xbf16>
    %58 = vector.shape_cast %57 : vector<1x1x128x128xbf16> to vector<128x128xbf16>
    %cst_39 = arith.constant dense<0.000000e+00> : vector<128x128xf32>
    %59 = tpu.matmul %25, %58, %cst_39 {dimension_numbers = #tpu.dot_dimension_numbers<[1], [0], [0], [1], [0, 0, 1, 1], [], []>} : vector<128x128xbf16>, vector<128x128xbf16>, vector<128x128xf32> -> vector<128x128xf32>
    %c1_40 = arith.constant 1 : index
    %c1_41 = arith.constant 1 : index
    %c0_42 = arith.constant 0 : index
    %c0_43 = arith.constant 0 : index
    %60 = vector.load %arg3[%c1_40, %c1_41, %c0_42, %c0_43] : memref<2x2x128x128xbf16, #tpu.memory_space<vmem>>, vector<1x1x128x128xbf16>
    %61 = vector.shape_cast %60 : vector<1x1x128x128xbf16> to vector<128x128xbf16>
    %cst_44 = arith.constant dense<0.000000e+00> : vector<128x128xf32>
    %62 = tpu.matmul %25, %61, %cst_44 {dimension_numbers = #tpu.dot_dimension_numbers<[1], [0], [0], [1], [0, 0, 1, 1], [], []>} : vector<128x128xbf16>, vector<128x128xbf16>, vector<128x128xf32> -> vector<128x128xf32>
    %c1_i32_45 = arith.constant 1 : i32
    %63 = vector.broadcast %c1_i32_45 : i32 to vector<128x1xi32>
    %64 = arith.cmpi eq, %26, %63 : vector<128x1xi32>
    %65 = vector.shape_cast %64 : vector<128x1xi1> to vector<128x1xi1>
    %66 = vector.broadcast %65 : vector<128x1xi1> to vector<128x128xi1>
    %67 = arith.select %66, %62, %59 : vector<128x128xi1>, vector<128x128xf32>
    %68 = vector.broadcast %6 : vector<1x128xf32> to vector<128x128xf32>
    %69 = arith.addf %67, %68 : vector<128x128xf32>
    %70 = arith.truncf %69 : vector<128x128xf32> to vector<128x128xbf16>
    %71 = vector.extract_strided_slice %70 {offsets = [0, 0], sizes = [16, 128], strides = [1, 1]} : vector<128x128xbf16> to vector<16x128xbf16>
    %c16 = arith.constant 16 : index
    %c0_46 = arith.constant 0 : index
    %72 = vector.load %arg10[%c16, %c0_46] : memref<256x256xbf16, #tpu.memory_space<vmem>>, vector<16x128xbf16>
    tpu.vector_store %arg10[%c16, %c0_46], %71 {strides = array<i32>} : memref<256x256xbf16, #tpu.memory_space<vmem>>, vector<16x128xbf16>,
    %73 = vector.extract_strided_slice %70 {offsets = [16, 0], sizes = [16, 128], strides = [1, 1]} : vector<128x128xbf16> to vector<16x128xbf16>
    %c48 = arith.constant 48 : index
    %c0_47 = arith.constant 0 : index
    %74 = vector.load %arg10[%c48, %c0_47] : memref<256x256xbf16, #tpu.memory_space<vmem>>, vector<16x128xbf16>
    tpu.vector_store %arg10[%c48, %c0_47], %73 {strides = array<i32>} : memref<256x256xbf16, #tpu.memory_space<vmem>>, vector<16x128xbf16>,
    %75 = vector.extract_strided_slice %70 {offsets = [32, 0], sizes = [16, 128], strides = [1, 1]} : vector<128x128xbf16> to vector<16x128xbf16>
    %c80 = arith.constant 80 : index
    %c0_48 = arith.constant 0 : index
    %76 = vector.load %arg10[%c80, %c0_48] : memref<256x256xbf16, #tpu.memory_space<vmem>>, vector<16x128xbf16>
    tpu.vector_store %arg10[%c80, %c0_48], %75 {strides = array<i32>} : memref<256x256xbf16, #tpu.memory_space<vmem>>, vector<16x128xbf16>,
    %77 = vector.extract_strided_slice %70 {offsets = [48, 0], sizes = [16, 128], strides = [1, 1]} : vector<128x128xbf16> to vector<16x128xbf16>
    %c112 = arith.constant 112 : index
    %c0_49 = arith.constant 0 : index
    %78 = vector.load %arg10[%c112, %c0_49] : memref<256x256xbf16, #tpu.memory_space<vmem>>, vector<16x128xbf16>
    tpu.vector_store %arg10[%c112, %c0_49], %77 {strides = array<i32>} : memref<256x256xbf16, #tpu.memory_space<vmem>>, vector<16x128xbf16>,
    %79 = vector.extract_strided_slice %70 {offsets = [64, 0], sizes = [16, 128], strides = [1, 1]} : vector<128x128xbf16> to vector<16x128xbf16>
    %c144 = arith.constant 144 : index
    %c0_50 = arith.constant 0 : index
    %80 = vector.load %arg10[%c144, %c0_50] : memref<256x256xbf16, #tpu.memory_space<vmem>>, vector<16x128xbf16>
    tpu.vector_store %arg10[%c144, %c0_50], %79 {strides = array<i32>} : memref<256x256xbf16, #tpu.memory_space<vmem>>, vector<16x128xbf16>,
    %81 = vector.extract_strided_slice %70 {offsets = [80, 0], sizes = [16, 128], strides = [1, 1]} : vector<128x128xbf16> to vector<16x128xbf16>
    %c176 = arith.constant 176 : index
    %c0_51 = arith.constant 0 : index
    %82 = vector.load %arg10[%c176, %c0_51] : memref<256x256xbf16, #tpu.memory_space<vmem>>, vector<16x128xbf16>
    tpu.vector_store %arg10[%c176, %c0_51], %81 {strides = array<i32>} : memref<256x256xbf16, #tpu.memory_space<vmem>>, vector<16x128xbf16>,
    %83 = vector.extract_strided_slice %70 {offsets = [96, 0], sizes = [16, 128], strides = [1, 1]} : vector<128x128xbf16> to vector<16x128xbf16>
    %c208 = arith.constant 208 : index
    %c0_52 = arith.constant 0 : index
    %84 = vector.load %arg10[%c208, %c0_52] : memref<256x256xbf16, #tpu.memory_space<vmem>>, vector<16x128xbf16>
    tpu.vector_store %arg10[%c208, %c0_52], %83 {strides = array<i32>} : memref<256x256xbf16, #tpu.memory_space<vmem>>, vector<16x128xbf16>,
    %85 = vector.extract_strided_slice %70 {offsets = [112, 0], sizes = [16, 128], strides = [1, 1]} : vector<128x128xbf16> to vector<16x128xbf16>
    %c240 = arith.constant 240 : index
    %c0_53 = arith.constant 0 : index
    %86 = vector.load %arg10[%c240, %c0_53] : memref<256x256xbf16, #tpu.memory_space<vmem>>, vector<16x128xbf16>
    tpu.vector_store %arg10[%c240, %c0_53], %85 {strides = array<i32>} : memref<256x256xbf16, #tpu.memory_space<vmem>>, vector<16x128xbf16>,
    %c0_54 = arith.constant 0 : index
    %c0_55 = arith.constant 0 : index
    %87 = vector.load %arg6[%c0_54, %c0_55] : memref<1x128xf32, #tpu.memory_space<vmem>>, vector<1x128xf32>
    %c0_56 = arith.constant 0 : index
    %c0_57 = arith.constant 0 : index
    %88 = vector.load %arg10[%c0_56, %c0_57] : memref<256x256xbf16, #tpu.memory_space<vmem>>, vector<222x256xbf16>
    %c0_58 = arith.constant 0 : index
    %c0_59 = arith.constant 0 : index
    %c0_60 = arith.constant 0 : index
    %c0_61 = arith.constant 0 : index
    %89 = vector.load %arg5[%c0_58, %c0_59, %c0_60, %c0_61] : memref<3x3x256x128xbf16, #tpu.memory_space<vmem>>, vector<1x1x256x128xbf16>
    %90 = vector.shape_cast %89 : vector<1x1x256x128xbf16> to vector<256x128xbf16>
    %cst_62 = arith.constant dense<0.000000e+00> : vector<222x128xf32>
    %91 = tpu.matmul %88, %90, %cst_62 {dimension_numbers = #tpu.dot_dimension_numbers<[1], [0], [0], [1], [0, 0, 1, 1], [], []>} : vector<222x256xbf16>, vector<256x128xbf16>, vector<222x128xf32> -> vector<222x128xf32>
    %c0_63 = arith.constant 0 : index
    %c0_64 = arith.constant 0 : index
    %92 = vector.load %arg12[%c0_63, %c0_64] : memref<224x128xf32, #tpu.memory_space<vmem>>, vector<222x128xf32>
    tpu.vector_store %arg12[%c0_63, %c0_64], %91 {strides = array<i32>} : memref<224x128xf32, #tpu.memory_space<vmem>>, vector<222x128xf32>,
    %c0_65 = arith.constant 0 : index
    %c0_66 = arith.constant 0 : index
    %93 = vector.load %arg12[%c0_65, %c0_66] : memref<224x128xf32, #tpu.memory_space<vmem>>, vector<222x128xf32>
    %c1_67 = arith.constant 1 : index
    %c0_68 = arith.constant 0 : index
    %94 = vector.load %arg10[%c1_67, %c0_68] : memref<256x256xbf16, #tpu.memory_space<vmem>>, vector<222x256xbf16>
    %c0_69 = arith.constant 0 : index
    %c1_70 = arith.constant 1 : index
    %c0_71 = arith.constant 0 : index
    %c0_72 = arith.constant 0 : index
    %95 = vector.load %arg5[%c0_69, %c1_70, %c0_71, %c0_72] : memref<3x3x256x128xbf16, #tpu.memory_space<vmem>>, vector<1x1x256x128xbf16>
    %96 = vector.shape_cast %95 : vector<1x1x256x128xbf16> to vector<256x128xbf16>
    %cst_73 = arith.constant dense<0.000000e+00> : vector<222x128xf32>
    %97 = tpu.matmul %94, %96, %cst_73 {dimension_numbers = #tpu.dot_dimension_numbers<[1], [0], [0], [1], [0, 0, 1, 1], [], []>} : vector<222x256xbf16>, vector<256x128xbf16>, vector<222x128xf32> -> vector<222x128xf32>
    %98 = arith.addf %93, %97 : vector<222x128xf32>
    %c0_74 = arith.constant 0 : index
    %c0_75 = arith.constant 0 : index
    %99 = vector.load %arg12[%c0_74, %c0_75] : memref<224x128xf32, #tpu.memory_space<vmem>>, vector<222x128xf32>
    tpu.vector_store %arg12[%c0_74, %c0_75], %98 {strides = array<i32>} : memref<224x128xf32, #tpu.memory_space<vmem>>, vector<222x128xf32>,
    %c0_76 = arith.constant 0 : index
    %c0_77 = arith.constant 0 : index
    %100 = vector.load %arg12[%c0_76, %c0_77] : memref<224x128xf32, #tpu.memory_space<vmem>>, vector<222x128xf32>
    %c2 = arith.constant 2 : index
    %c0_78 = arith.constant 0 : index
    %101 = vector.load %arg10[%c2, %c0_78] : memref<256x256xbf16, #tpu.memory_space<vmem>>, vector<222x256xbf16>
    %c0_79 = arith.constant 0 : index
    %c2_80 = arith.constant 2 : index
    %c0_81 = arith.constant 0 : index
    %c0_82 = arith.constant 0 : index
    %102 = vector.load %arg5[%c0_79, %c2_80, %c0_81, %c0_82] : memref<3x3x256x128xbf16, #tpu.memory_space<vmem>>, vector<1x1x256x128xbf16>
    %103 = vector.shape_cast %102 : vector<1x1x256x128xbf16> to vector<256x128xbf16>
    %cst_83 = arith.constant dense<0.000000e+00> : vector<222x128xf32>
    %104 = tpu.matmul %101, %103, %cst_83 {dimension_numbers = #tpu.dot_dimension_numbers<[1], [0], [0], [1], [0, 0, 1, 1], [], []>} : vector<222x256xbf16>, vector<256x128xbf16>, vector<222x128xf32> -> vector<222x128xf32>
    %105 = arith.addf %100, %104 : vector<222x128xf32>
    %c0_84 = arith.constant 0 : index
    %c0_85 = arith.constant 0 : index
    %106 = vector.load %arg12[%c0_84, %c0_85] : memref<224x128xf32, #tpu.memory_space<vmem>>, vector<222x128xf32>
    tpu.vector_store %arg12[%c0_84, %c0_85], %105 {strides = array<i32>} : memref<224x128xf32, #tpu.memory_space<vmem>>, vector<222x128xf32>,
    %c0_86 = arith.constant 0 : index
    %c0_87 = arith.constant 0 : index
    %107 = vector.load %arg12[%c0_86, %c0_87] : memref<224x128xf32, #tpu.memory_space<vmem>>, vector<222x128xf32>
    %c16_88 = arith.constant 16 : index
    %c0_89 = arith.constant 0 : index
    %108 = vector.load %arg10[%c16_88, %c0_89] : memref<256x256xbf16, #tpu.memory_space<vmem>>, vector<222x256xbf16>
    %c1_90 = arith.constant 1 : index
    %c0_91 = arith.constant 0 : index
    %c0_92 = arith.constant 0 : index
    %c0_93 = arith.constant 0 : index
    %109 = vector.load %arg5[%c1_90, %c0_91, %c0_92, %c0_93] : memref<3x3x256x128xbf16, #tpu.memory_space<vmem>>, vector<1x1x256x128xbf16>
    %110 = vector.shape_cast %109 : vector<1x1x256x128xbf16> to vector<256x128xbf16>
    %cst_94 = arith.constant dense<0.000000e+00> : vector<222x128xf32>
    %111 = tpu.matmul %108, %110, %cst_94 {dimension_numbers = #tpu.dot_dimension_numbers<[1], [0], [0], [1], [0, 0, 1, 1], [], []>} : vector<222x256xbf16>, vector<256x128xbf16>, vector<222x128xf32> -> vector<222x128xf32>
    %112 = arith.addf %107, %111 : vector<222x128xf32>
    %c0_95 = arith.constant 0 : index
    %c0_96 = arith.constant 0 : index
    %113 = vector.load %arg12[%c0_95, %c0_96] : memref<224x128xf32, #tpu.memory_space<vmem>>, vector<222x128xf32>
    tpu.vector_store %arg12[%c0_95, %c0_96], %112 {strides = array<i32>} : memref<224x128xf32, #tpu.memory_space<vmem>>, vector<222x128xf32>,
    %c0_97 = arith.constant 0 : index
    %c0_98 = arith.constant 0 : index
    %114 = vector.load %arg12[%c0_97, %c0_98] : memref<224x128xf32, #tpu.memory_space<vmem>>, vector<222x128xf32>
    %c17 = arith.constant 17 : index
    %c0_99 = arith.constant 0 : index
    %115 = vector.load %arg10[%c17, %c0_99] : memref<256x256xbf16, #tpu.memory_space<vmem>>, vector<222x256xbf16>
    %c1_100 = arith.constant 1 : index
    %c1_101 = arith.constant 1 : index
    %c0_102 = arith.constant 0 : index
    %c0_103 = arith.constant 0 : index
    %116 = vector.load %arg5[%c1_100, %c1_101, %c0_102, %c0_103] : memref<3x3x256x128xbf16, #tpu.memory_space<vmem>>, vector<1x1x256x128xbf16>
    %117 = vector.shape_cast %116 : vector<1x1x256x128xbf16> to vector<256x128xbf16>
    %cst_104 = arith.constant dense<0.000000e+00> : vector<222x128xf32>
    %118 = tpu.matmul %115, %117, %cst_104 {dimension_numbers = #tpu.dot_dimension_numbers<[1], [0], [0], [1], [0, 0, 1, 1], [], []>} : vector<222x256xbf16>, vector<256x128xbf16>, vector<222x128xf32> -> vector<222x128xf32>
    %119 = arith.addf %114, %118 : vector<222x128xf32>
    %c0_105 = arith.constant 0 : index
    %c0_106 = arith.constant 0 : index
    %120 = vector.load %arg12[%c0_105, %c0_106] : memref<224x128xf32, #tpu.memory_space<vmem>>, vector<222x128xf32>
    tpu.vector_store %arg12[%c0_105, %c0_106], %119 {strides = array<i32>} : memref<224x128xf32, #tpu.memory_space<vmem>>, vector<222x128xf32>,
    %c0_107 = arith.constant 0 : index
    %c0_108 = arith.constant 0 : index
    %121 = vector.load %arg12[%c0_107, %c0_108] : memref<224x128xf32, #tpu.memory_space<vmem>>, vector<222x128xf32>
    %c18 = arith.constant 18 : index
    %c0_109 = arith.constant 0 : index
    %122 = vector.load %arg10[%c18, %c0_109] : memref<256x256xbf16, #tpu.memory_space<vmem>>, vector<222x256xbf16>
    %c1_110 = arith.constant 1 : index
    %c2_111 = arith.constant 2 : index
    %c0_112 = arith.constant 0 : index
    %c0_113 = arith.constant 0 : index
    %123 = vector.load %arg5[%c1_110, %c2_111, %c0_112, %c0_113] : memref<3x3x256x128xbf16, #tpu.memory_space<vmem>>, vector<1x1x256x128xbf16>
    %124 = vector.shape_cast %123 : vector<1x1x256x128xbf16> to vector<256x128xbf16>
    %cst_114 = arith.constant dense<0.000000e+00> : vector<222x128xf32>
    %125 = tpu.matmul %122, %124, %cst_114 {dimension_numbers = #tpu.dot_dimension_numbers<[1], [0], [0], [1], [0, 0, 1, 1], [], []>} : vector<222x256xbf16>, vector<256x128xbf16>, vector<222x128xf32> -> vector<222x128xf32>
    %126 = arith.addf %121, %125 : vector<222x128xf32>
    %c0_115 = arith.constant 0 : index
    %c0_116 = arith.constant 0 : index
    %127 = vector.load %arg12[%c0_115, %c0_116] : memref<224x128xf32, #tpu.memory_space<vmem>>, vector<222x128xf32>
    tpu.vector_store %arg12[%c0_115, %c0_116], %126 {strides = array<i32>} : memref<224x128xf32, #tpu.memory_space<vmem>>, vector<222x128xf32>,
    %c0_117 = arith.constant 0 : index
    %c0_118 = arith.constant 0 : index
    %128 = vector.load %arg12[%c0_117, %c0_118] : memref<224x128xf32, #tpu.memory_space<vmem>>, vector<222x128xf32>
    %c32_119 = arith.constant 32 : index
    %c0_120 = arith.constant 0 : index
    %129 = vector.load %arg10[%c32_119, %c0_120] : memref<256x256xbf16, #tpu.memory_space<vmem>>, vector<222x256xbf16>
    %c2_121 = arith.constant 2 : index
    %c0_122 = arith.constant 0 : index
    %c0_123 = arith.constant 0 : index
    %c0_124 = arith.constant 0 : index
    %130 = vector.load %arg5[%c2_121, %c0_122, %c0_123, %c0_124] : memref<3x3x256x128xbf16, #tpu.memory_space<vmem>>, vector<1x1x256x128xbf16>
    %131 = vector.shape_cast %130 : vector<1x1x256x128xbf16> to vector<256x128xbf16>
    %cst_125 = arith.constant dense<0.000000e+00> : vector<222x128xf32>
    %132 = tpu.matmul %129, %131, %cst_125 {dimension_numbers = #tpu.dot_dimension_numbers<[1], [0], [0], [1], [0, 0, 1, 1], [], []>} : vector<222x256xbf16>, vector<256x128xbf16>, vector<222x128xf32> -> vector<222x128xf32>
    %133 = arith.addf %128, %132 : vector<222x128xf32>
    %c0_126 = arith.constant 0 : index
    %c0_127 = arith.constant 0 : index
    %134 = vector.load %arg12[%c0_126, %c0_127] : memref<224x128xf32, #tpu.memory_space<vmem>>, vector<222x128xf32>
    tpu.vector_store %arg12[%c0_126, %c0_127], %133 {strides = array<i32>} : memref<224x128xf32, #tpu.memory_space<vmem>>, vector<222x128xf32>,
    %c0_128 = arith.constant 0 : index
    %c0_129 = arith.constant 0 : index
    %135 = vector.load %arg12[%c0_128, %c0_129] : memref<224x128xf32, #tpu.memory_space<vmem>>, vector<222x128xf32>
    %c33 = arith.constant 33 : index
    %c0_130 = arith.constant 0 : index
    %136 = vector.load %arg10[%c33, %c0_130] : memref<256x256xbf16, #tpu.memory_space<vmem>>, vector<222x256xbf16>
    %c2_131 = arith.constant 2 : index
    %c1_132 = arith.constant 1 : index
    %c0_133 = arith.constant 0 : index
    %c0_134 = arith.constant 0 : index
    %137 = vector.load %arg5[%c2_131, %c1_132, %c0_133, %c0_134] : memref<3x3x256x128xbf16, #tpu.memory_space<vmem>>, vector<1x1x256x128xbf16>
    %138 = vector.shape_cast %137 : vector<1x1x256x128xbf16> to vector<256x128xbf16>
    %cst_135 = arith.constant dense<0.000000e+00> : vector<222x128xf32>
    %139 = tpu.matmul %136, %138, %cst_135 {dimension_numbers = #tpu.dot_dimension_numbers<[1], [0], [0], [1], [0, 0, 1, 1], [], []>} : vector<222x256xbf16>, vector<256x128xbf16>, vector<222x128xf32> -> vector<222x128xf32>
    %140 = arith.addf %135, %139 : vector<222x128xf32>
    %c0_136 = arith.constant 0 : index
    %c0_137 = arith.constant 0 : index
    %141 = vector.load %arg12[%c0_136, %c0_137] : memref<224x128xf32, #tpu.memory_space<vmem>>, vector<222x128xf32>
    tpu.vector_store %arg12[%c0_136, %c0_137], %140 {strides = array<i32>} : memref<224x128xf32, #tpu.memory_space<vmem>>, vector<222x128xf32>,
    %c0_138 = arith.constant 0 : index
    %c0_139 = arith.constant 0 : index
    %142 = vector.load %arg12[%c0_138, %c0_139] : memref<224x128xf32, #tpu.memory_space<vmem>>, vector<222x128xf32>
    %c34 = arith.constant 34 : index
    %c0_140 = arith.constant 0 : index
    %143 = vector.load %arg10[%c34, %c0_140] : memref<256x256xbf16, #tpu.memory_space<vmem>>, vector<222x256xbf16>
    %c2_141 = arith.constant 2 : index
    %c2_142 = arith.constant 2 : index
    %c0_143 = arith.constant 0 : index
    %c0_144 = arith.constant 0 : index
    %144 = vector.load %arg5[%c2_141, %c2_142, %c0_143, %c0_144] : memref<3x3x256x128xbf16, #tpu.memory_space<vmem>>, vector<1x1x256x128xbf16>
    %145 = vector.shape_cast %144 : vector<1x1x256x128xbf16> to vector<256x128xbf16>
    %cst_145 = arith.constant dense<0.000000e+00> : vector<222x128xf32>
    %146 = tpu.matmul %143, %145, %cst_145 {dimension_numbers = #tpu.dot_dimension_numbers<[1], [0], [0], [1], [0, 0, 1, 1], [], []>} : vector<222x256xbf16>, vector<256x128xbf16>, vector<222x128xf32> -> vector<222x128xf32>
    %147 = arith.addf %142, %146 : vector<222x128xf32>
    %c0_146 = arith.constant 0 : index
    %c0_147 = arith.constant 0 : index
    %148 = vector.load %arg12[%c0_146, %c0_147] : memref<224x128xf32, #tpu.memory_space<vmem>>, vector<222x128xf32>
    tpu.vector_store %arg12[%c0_146, %c0_147], %147 {strides = array<i32>} : memref<224x128xf32, #tpu.memory_space<vmem>>, vector<222x128xf32>,
    %c0_148 = arith.constant 0 : index
    %c0_149 = arith.constant 0 : index
    %149 = vector.load %arg12[%c0_148, %c0_149] : memref<224x128xf32, #tpu.memory_space<vmem>>, vector<222x128xf32>
    %150 = vector.broadcast %87 : vector<1x128xf32> to vector<222x128xf32>
    %151 = arith.addf %149, %150 : vector<222x128xf32>
    %cst_150 = arith.constant 0.000000e+00 : f32
    %152 = vector.broadcast %cst_150 : f32 to vector<222x128xf32>
    %153 = arith.maximumf %151, %152 : vector<222x128xf32>
    %154 = arith.truncf %153 : vector<222x128xf32> to vector<222x128xbf16>
    %c0_151 = arith.constant 0 : index
    %c0_152 = arith.constant 0 : index
    %155 = vector.load %arg11[%c0_151, %c0_152] : memref<224x128xbf16, #tpu.memory_space<vmem>>, vector<222x128xbf16>
    tpu.vector_store %arg11[%c0_151, %c0_152], %154 {strides = array<i32>} : memref<224x128xbf16, #tpu.memory_space<vmem>>, vector<222x128xbf16>,
    %c0_153 = arith.constant 0 : index
    %c0_154 = arith.constant 0 : index
    %156 = vector.load %arg8[%c0_153, %c0_154] : memref<1x128xf32, #tpu.memory_space<vmem>>, vector<1x128xf32>
    %c0_155 = arith.constant 0 : index
    %c0_156 = arith.constant 0 : index
    %157 = vector.load %arg11[%c0_155, %c0_156] : memref<224x128xbf16, #tpu.memory_space<vmem>>, vector<188x128xbf16>
    %c0_157 = arith.constant 0 : index
    %c0_158 = arith.constant 0 : index
    %c0_159 = arith.constant 0 : index
    %c0_160 = arith.constant 0 : index
    %158 = vector.load %arg7[%c0_157, %c0_158, %c0_159, %c0_160] : memref<3x3x128x128xbf16, #tpu.memory_space<vmem>>, vector<1x1x128x128xbf16>
    %159 = vector.shape_cast %158 : vector<1x1x128x128xbf16> to vector<128x128xbf16>
    %cst_161 = arith.constant dense<0.000000e+00> : vector<188x128xf32>
    %160 = tpu.matmul %157, %159, %cst_161 {dimension_numbers = #tpu.dot_dimension_numbers<[1], [0], [0], [1], [0, 0, 1, 1], [], []>} : vector<188x128xbf16>, vector<128x128xbf16>, vector<188x128xf32> -> vector<188x128xf32>
    %c0_162 = arith.constant 0 : index
    %c0_163 = arith.constant 0 : index
    %161 = vector.load %arg12[%c0_162, %c0_163] : memref<224x128xf32, #tpu.memory_space<vmem>>, vector<188x128xf32>
    tpu.vector_store %arg12[%c0_162, %c0_163], %160 {strides = array<i32>} : memref<224x128xf32, #tpu.memory_space<vmem>>, vector<188x128xf32>,
    %c0_164 = arith.constant 0 : index
    %c0_165 = arith.constant 0 : index
    %162 = vector.load %arg12[%c0_164, %c0_165] : memref<224x128xf32, #tpu.memory_space<vmem>>, vector<188x128xf32>
    %c1_166 = arith.constant 1 : index
    %c0_167 = arith.constant 0 : index
    %163 = vector.load %arg11[%c1_166, %c0_167] : memref<224x128xbf16, #tpu.memory_space<vmem>>, vector<188x128xbf16>
    %c0_168 = arith.constant 0 : index
    %c1_169 = arith.constant 1 : index
    %c0_170 = arith.constant 0 : index
    %c0_171 = arith.constant 0 : index
    %164 = vector.load %arg7[%c0_168, %c1_169, %c0_170, %c0_171] : memref<3x3x128x128xbf16, #tpu.memory_space<vmem>>, vector<1x1x128x128xbf16>
    %165 = vector.shape_cast %164 : vector<1x1x128x128xbf16> to vector<128x128xbf16>
    %cst_172 = arith.constant dense<0.000000e+00> : vector<188x128xf32>
    %166 = tpu.matmul %163, %165, %cst_172 {dimension_numbers = #tpu.dot_dimension_numbers<[1], [0], [0], [1], [0, 0, 1, 1], [], []>} : vector<188x128xbf16>, vector<128x128xbf16>, vector<188x128xf32> -> vector<188x128xf32>
    %167 = arith.addf %162, %166 : vector<188x128xf32>
    %c0_173 = arith.constant 0 : index
    %c0_174 = arith.constant 0 : index
    %168 = vector.load %arg12[%c0_173, %c0_174] : memref<224x128xf32, #tpu.memory_space<vmem>>, vector<188x128xf32>
    tpu.vector_store %arg12[%c0_173, %c0_174], %167 {strides = array<i32>} : memref<224x128xf32, #tpu.memory_space<vmem>>, vector<188x128xf32>,
    %c0_175 = arith.constant 0 : index
    %c0_176 = arith.constant 0 : index
    %169 = vector.load %arg12[%c0_175, %c0_176] : memref<224x128xf32, #tpu.memory_space<vmem>>, vector<188x128xf32>
    %c2_177 = arith.constant 2 : index
    %c0_178 = arith.constant 0 : index
    %170 = vector.load %arg11[%c2_177, %c0_178] : memref<224x128xbf16, #tpu.memory_space<vmem>>, vector<188x128xbf16>
    %c0_179 = arith.constant 0 : index
    %c2_180 = arith.constant 2 : index
    %c0_181 = arith.constant 0 : index
    %c0_182 = arith.constant 0 : index
    %171 = vector.load %arg7[%c0_179, %c2_180, %c0_181, %c0_182] : memref<3x3x128x128xbf16, #tpu.memory_space<vmem>>, vector<1x1x128x128xbf16>
    %172 = vector.shape_cast %171 : vector<1x1x128x128xbf16> to vector<128x128xbf16>
    %cst_183 = arith.constant dense<0.000000e+00> : vector<188x128xf32>
    %173 = tpu.matmul %170, %172, %cst_183 {dimension_numbers = #tpu.dot_dimension_numbers<[1], [0], [0], [1], [0, 0, 1, 1], [], []>} : vector<188x128xbf16>, vector<128x128xbf16>, vector<188x128xf32> -> vector<188x128xf32>
    %174 = arith.addf %169, %173 : vector<188x128xf32>
    %c0_184 = arith.constant 0 : index
    %c0_185 = arith.constant 0 : index
    %175 = vector.load %arg12[%c0_184, %c0_185] : memref<224x128xf32, #tpu.memory_space<vmem>>, vector<188x128xf32>
    tpu.vector_store %arg12[%c0_184, %c0_185], %174 {strides = array<i32>} : memref<224x128xf32, #tpu.memory_space<vmem>>, vector<188x128xf32>,
    %c0_186 = arith.constant 0 : index
    %c0_187 = arith.constant 0 : index
    %176 = vector.load %arg12[%c0_186, %c0_187] : memref<224x128xf32, #tpu.memory_space<vmem>>, vector<188x128xf32>
    %c16_188 = arith.constant 16 : index
    %c0_189 = arith.constant 0 : index
    %177 = vector.load %arg11[%c16_188, %c0_189] : memref<224x128xbf16, #tpu.memory_space<vmem>>, vector<188x128xbf16>
    %c1_190 = arith.constant 1 : index
    %c0_191 = arith.constant 0 : index
    %c0_192 = arith.constant 0 : index
    %c0_193 = arith.constant 0 : index
    %178 = vector.load %arg7[%c1_190, %c0_191, %c0_192, %c0_193] : memref<3x3x128x128xbf16, #tpu.memory_space<vmem>>, vector<1x1x128x128xbf16>
    %179 = vector.shape_cast %178 : vector<1x1x128x128xbf16> to vector<128x128xbf16>
    %cst_194 = arith.constant dense<0.000000e+00> : vector<188x128xf32>
    %180 = tpu.matmul %177, %179, %cst_194 {dimension_numbers = #tpu.dot_dimension_numbers<[1], [0], [0], [1], [0, 0, 1, 1], [], []>} : vector<188x128xbf16>, vector<128x128xbf16>, vector<188x128xf32> -> vector<188x128xf32>
    %181 = arith.addf %176, %180 : vector<188x128xf32>
    %c0_195 = arith.constant 0 : index
    %c0_196 = arith.constant 0 : index
    %182 = vector.load %arg12[%c0_195, %c0_196] : memref<224x128xf32, #tpu.memory_space<vmem>>, vector<188x128xf32>
    tpu.vector_store %arg12[%c0_195, %c0_196], %181 {strides = array<i32>} : memref<224x128xf32, #tpu.memory_space<vmem>>, vector<188x128xf32>,
    %c0_197 = arith.constant 0 : index
    %c0_198 = arith.constant 0 : index
    %183 = vector.load %arg12[%c0_197, %c0_198] : memref<224x128xf32, #tpu.memory_space<vmem>>, vector<188x128xf32>
    %c17_199 = arith.constant 17 : index
    %c0_200 = arith.constant 0 : index
    %184 = vector.load %arg11[%c17_199, %c0_200] : memref<224x128xbf16, #tpu.memory_space<vmem>>, vector<188x128xbf16>
    %c1_201 = arith.constant 1 : index
    %c1_202 = arith.constant 1 : index
    %c0_203 = arith.constant 0 : index
    %c0_204 = arith.constant 0 : index
    %185 = vector.load %arg7[%c1_201, %c1_202, %c0_203, %c0_204] : memref<3x3x128x128xbf16, #tpu.memory_space<vmem>>, vector<1x1x128x128xbf16>
    %186 = vector.shape_cast %185 : vector<1x1x128x128xbf16> to vector<128x128xbf16>
    %cst_205 = arith.constant dense<0.000000e+00> : vector<188x128xf32>
    %187 = tpu.matmul %184, %186, %cst_205 {dimension_numbers = #tpu.dot_dimension_numbers<[1], [0], [0], [1], [0, 0, 1, 1], [], []>} : vector<188x128xbf16>, vector<128x128xbf16>, vector<188x128xf32> -> vector<188x128xf32>
    %188 = arith.addf %183, %187 : vector<188x128xf32>
    %c0_206 = arith.constant 0 : index
    %c0_207 = arith.constant 0 : index
    %189 = vector.load %arg12[%c0_206, %c0_207] : memref<224x128xf32, #tpu.memory_space<vmem>>, vector<188x128xf32>
    tpu.vector_store %arg12[%c0_206, %c0_207], %188 {strides = array<i32>} : memref<224x128xf32, #tpu.memory_space<vmem>>, vector<188x128xf32>,
    %c0_208 = arith.constant 0 : index
    %c0_209 = arith.constant 0 : index
    %190 = vector.load %arg12[%c0_208, %c0_209] : memref<224x128xf32, #tpu.memory_space<vmem>>, vector<188x128xf32>
    %c18_210 = arith.constant 18 : index
    %c0_211 = arith.constant 0 : index
    %191 = vector.load %arg11[%c18_210, %c0_211] : memref<224x128xbf16, #tpu.memory_space<vmem>>, vector<188x128xbf16>
    %c1_212 = arith.constant 1 : index
    %c2_213 = arith.constant 2 : index
    %c0_214 = arith.constant 0 : index
    %c0_215 = arith.constant 0 : index
    %192 = vector.load %arg7[%c1_212, %c2_213, %c0_214, %c0_215] : memref<3x3x128x128xbf16, #tpu.memory_space<vmem>>, vector<1x1x128x128xbf16>
    %193 = vector.shape_cast %192 : vector<1x1x128x128xbf16> to vector<128x128xbf16>
    %cst_216 = arith.constant dense<0.000000e+00> : vector<188x128xf32>
    %194 = tpu.matmul %191, %193, %cst_216 {dimension_numbers = #tpu.dot_dimension_numbers<[1], [0], [0], [1], [0, 0, 1, 1], [], []>} : vector<188x128xbf16>, vector<128x128xbf16>, vector<188x128xf32> -> vector<188x128xf32>
    %195 = arith.addf %190, %194 : vector<188x128xf32>
    %c0_217 = arith.constant 0 : index
    %c0_218 = arith.constant 0 : index
    %196 = vector.load %arg12[%c0_217, %c0_218] : memref<224x128xf32, #tpu.memory_space<vmem>>, vector<188x128xf32>
    tpu.vector_store %arg12[%c0_217, %c0_218], %195 {strides = array<i32>} : memref<224x128xf32, #tpu.memory_space<vmem>>, vector<188x128xf32>,
    %c0_219 = arith.constant 0 : index
    %c0_220 = arith.constant 0 : index
    %197 = vector.load %arg12[%c0_219, %c0_220] : memref<224x128xf32, #tpu.memory_space<vmem>>, vector<188x128xf32>
    %c32_221 = arith.constant 32 : index
    %c0_222 = arith.constant 0 : index
    %198 = vector.load %arg11[%c32_221, %c0_222] : memref<224x128xbf16, #tpu.memory_space<vmem>>, vector<188x128xbf16>
    %c2_223 = arith.constant 2 : index
    %c0_224 = arith.constant 0 : index
    %c0_225 = arith.constant 0 : index
    %c0_226 = arith.constant 0 : index
    %199 = vector.load %arg7[%c2_223, %c0_224, %c0_225, %c0_226] : memref<3x3x128x128xbf16, #tpu.memory_space<vmem>>, vector<1x1x128x128xbf16>
    %200 = vector.shape_cast %199 : vector<1x1x128x128xbf16> to vector<128x128xbf16>
    %cst_227 = arith.constant dense<0.000000e+00> : vector<188x128xf32>
    %201 = tpu.matmul %198, %200, %cst_227 {dimension_numbers = #tpu.dot_dimension_numbers<[1], [0], [0], [1], [0, 0, 1, 1], [], []>} : vector<188x128xbf16>, vector<128x128xbf16>, vector<188x128xf32> -> vector<188x128xf32>
    %202 = arith.addf %197, %201 : vector<188x128xf32>
    %c0_228 = arith.constant 0 : index
    %c0_229 = arith.constant 0 : index
    %203 = vector.load %arg12[%c0_228, %c0_229] : memref<224x128xf32, #tpu.memory_space<vmem>>, vector<188x128xf32>
    tpu.vector_store %arg12[%c0_228, %c0_229], %202 {strides = array<i32>} : memref<224x128xf32, #tpu.memory_space<vmem>>, vector<188x128xf32>,
    %c0_230 = arith.constant 0 : index
    %c0_231 = arith.constant 0 : index
    %204 = vector.load %arg12[%c0_230, %c0_231] : memref<224x128xf32, #tpu.memory_space<vmem>>, vector<188x128xf32>
    %c33_232 = arith.constant 33 : index
    %c0_233 = arith.constant 0 : index
    %205 = vector.load %arg11[%c33_232, %c0_233] : memref<224x128xbf16, #tpu.memory_space<vmem>>, vector<188x128xbf16>
    %c2_234 = arith.constant 2 : index
    %c1_235 = arith.constant 1 : index
    %c0_236 = arith.constant 0 : index
    %c0_237 = arith.constant 0 : index
    %206 = vector.load %arg7[%c2_234, %c1_235, %c0_236, %c0_237] : memref<3x3x128x128xbf16, #tpu.memory_space<vmem>>, vector<1x1x128x128xbf16>
    %207 = vector.shape_cast %206 : vector<1x1x128x128xbf16> to vector<128x128xbf16>
    %cst_238 = arith.constant dense<0.000000e+00> : vector<188x128xf32>
    %208 = tpu.matmul %205, %207, %cst_238 {dimension_numbers = #tpu.dot_dimension_numbers<[1], [0], [0], [1], [0, 0, 1, 1], [], []>} : vector<188x128xbf16>, vector<128x128xbf16>, vector<188x128xf32> -> vector<188x128xf32>
    %209 = arith.addf %204, %208 : vector<188x128xf32>
    %c0_239 = arith.constant 0 : index
    %c0_240 = arith.constant 0 : index
    %210 = vector.load %arg12[%c0_239, %c0_240] : memref<224x128xf32, #tpu.memory_space<vmem>>, vector<188x128xf32>
    tpu.vector_store %arg12[%c0_239, %c0_240], %209 {strides = array<i32>} : memref<224x128xf32, #tpu.memory_space<vmem>>, vector<188x128xf32>,
    %c0_241 = arith.constant 0 : index
    %c0_242 = arith.constant 0 : index
    %211 = vector.load %arg12[%c0_241, %c0_242] : memref<224x128xf32, #tpu.memory_space<vmem>>, vector<188x128xf32>
    %c34_243 = arith.constant 34 : index
    %c0_244 = arith.constant 0 : index
    %212 = vector.load %arg11[%c34_243, %c0_244] : memref<224x128xbf16, #tpu.memory_space<vmem>>, vector<188x128xbf16>
    %c2_245 = arith.constant 2 : index
    %c2_246 = arith.constant 2 : index
    %c0_247 = arith.constant 0 : index
    %c0_248 = arith.constant 0 : index
    %213 = vector.load %arg7[%c2_245, %c2_246, %c0_247, %c0_248] : memref<3x3x128x128xbf16, #tpu.memory_space<vmem>>, vector<1x1x128x128xbf16>
    %214 = vector.shape_cast %213 : vector<1x1x128x128xbf16> to vector<128x128xbf16>
    %cst_249 = arith.constant dense<0.000000e+00> : vector<188x128xf32>
    %215 = tpu.matmul %212, %214, %cst_249 {dimension_numbers = #tpu.dot_dimension_numbers<[1], [0], [0], [1], [0, 0, 1, 1], [], []>} : vector<188x128xbf16>, vector<128x128xbf16>, vector<188x128xf32> -> vector<188x128xf32>
    %216 = arith.addf %211, %215 : vector<188x128xf32>
    %c0_250 = arith.constant 0 : index
    %c0_251 = arith.constant 0 : index
    %217 = vector.load %arg12[%c0_250, %c0_251] : memref<224x128xf32, #tpu.memory_space<vmem>>, vector<188x128xf32>
    tpu.vector_store %arg12[%c0_250, %c0_251], %216 {strides = array<i32>} : memref<224x128xf32, #tpu.memory_space<vmem>>, vector<188x128xf32>,
    %c0_252 = arith.constant 0 : index
    %c0_253 = arith.constant 0 : index
    %218 = vector.load %arg12[%c0_252, %c0_253] : memref<224x128xf32, #tpu.memory_space<vmem>>, vector<188x128xf32>
    %219 = vector.broadcast %156 : vector<1x128xf32> to vector<188x128xf32>
    %220 = arith.addf %218, %219 : vector<188x128xf32>
    %cst_254 = arith.constant 0.000000e+00 : f32
    %221 = vector.broadcast %cst_254 : f32 to vector<188x128xf32>
    %222 = arith.maximumf %220, %221 : vector<188x128xf32>
    %c0_255 = arith.constant 0 : index
    %c0_256 = arith.constant 0 : index
    %c0_257 = arith.constant 0 : index
    %223 = vector.load %arg9[%c0_255, %c0_256, %c0_257] : memref<1x192x128xf32, #tpu.memory_space<vmem>>, vector<1x188x128xf32>
    %224 = vector.shape_cast %223 : vector<1x188x128xf32> to vector<188x128xf32>
    %225 = vector.shape_cast %222 : vector<188x128xf32> to vector<1x188x128xf32>
    tpu.vector_store %arg9[%c0_255, %c0_256, %c0_257], %225 {strides = array<i32>} : memref<1x192x128xf32, #tpu.memory_space<vmem>>, vector<1x188x128xf32>,
    %cst_258 = arith.constant 0.000000e+00 : f32
    %226 = vector.broadcast %cst_258 : f32 to vector<4x128xf32>
    %c0_259 = arith.constant 0 : index
    %c188 = arith.constant 188 : index
    %c0_260 = arith.constant 0 : index
    %227 = vector.load %arg9[%c0_259, %c188, %c0_260] : memref<1x192x128xf32, #tpu.memory_space<vmem>>, vector<1x4x128xf32>
    %228 = vector.shape_cast %227 : vector<1x4x128xf32> to vector<4x128xf32>
    %229 = vector.shape_cast %226 : vector<4x128xf32> to vector<1x4x128xf32>
    tpu.vector_store %arg9[%c0_259, %c188, %c0_260], %229 {strides = array<i32>} : memref<1x192x128xf32, #tpu.memory_space<vmem>>, vector<1x4x128xf32>,
    return
  }
  func.func @transform_0(%arg0: i32) -> (i32, i32, i32) {
    %c0_i32 = arith.constant 0 : i32
    %c0_i32_0 = arith.constant 0 : i32
    %c0_i32_1 = arith.constant 0 : i32
    return %arg0, %c0_i32, %c0_i32_0 : i32, i32, i32
  }
  func.func @transform_1(%arg0: i32) -> (i32, i32, i32) {
    %c0_i32 = arith.constant 0 : i32
    %c0_i32_0 = arith.constant 0 : i32
    %c0_i32_1 = arith.constant 0 : i32
    return %arg0, %c0_i32, %c0_i32_0 : i32, i32, i32
  }
  func.func @transform_2(%arg0: i32) -> (i32, i32, i32, i32) {
    %c0_i32 = arith.constant 0 : i32
    %c0_i32_0 = arith.constant 0 : i32
    %c0_i32_1 = arith.constant 0 : i32
    %c0_i32_2 = arith.constant 0 : i32
    %c0_i32_3 = arith.constant 0 : i32
    return %c0_i32, %c0_i32_0, %c0_i32_1, %c0_i32_2 : i32, i32, i32, i32
  }
  func.func @transform_3(%arg0: i32) -> (i32, i32) {
    %c0_i32 = arith.constant 0 : i32
    %c0_i32_0 = arith.constant 0 : i32
    %c0_i32_1 = arith.constant 0 : i32
    return %c0_i32, %c0_i32_0 : i32, i32
  }
  func.func @transform_4(%arg0: i32) -> (i32, i32, i32, i32) {
    %c0_i32 = arith.constant 0 : i32
    %c0_i32_0 = arith.constant 0 : i32
    %c0_i32_1 = arith.constant 0 : i32
    %c0_i32_2 = arith.constant 0 : i32
    %c0_i32_3 = arith.constant 0 : i32
    return %c0_i32, %c0_i32_0, %c0_i32_1, %c0_i32_2 : i32, i32, i32, i32
  }
  func.func @transform_5(%arg0: i32) -> (i32, i32) {
    %c0_i32 = arith.constant 0 : i32
    %c0_i32_0 = arith.constant 0 : i32
    %c0_i32_1 = arith.constant 0 : i32
    return %c0_i32, %c0_i32_0 : i32, i32
  }
  func.func @transform_6(%arg0: i32) -> (i32, i32, i32, i32) {
    %c0_i32 = arith.constant 0 : i32
    %c0_i32_0 = arith.constant 0 : i32
    %c0_i32_1 = arith.constant 0 : i32
    %c0_i32_2 = arith.constant 0 : i32
    %c0_i32_3 = arith.constant 0 : i32
    return %c0_i32, %c0_i32_0, %c0_i32_1, %c0_i32_2 : i32, i32, i32, i32
  }
  func.func @transform_7(%arg0: i32) -> (i32, i32) {
    %c0_i32 = arith.constant 0 : i32
    %c0_i32_0 = arith.constant 0 : i32
    %c0_i32_1 = arith.constant 0 : i32
    return %c0_i32, %c0_i32_0 : i32, i32
  }
  func.func @transform_8(%arg0: i32) -> (i32, i32, i32) {
    %c0_i32 = arith.constant 0 : i32
    %c0_i32_0 = arith.constant 0 : i32
    %c0_i32_1 = arith.constant 0 : i32
    return %arg0, %c0_i32, %c0_i32_0 : i32, i32, i32
  }
}

</mosaic_0001>

<llo_original>
// kernel: expansion_forward.1
$region0: #{expansion_forward.1}
  #allocation0 [shape = 'u32[]', space=smem, size = 0x4, offset = 0x4, fixed_abs, tag = 'smem constant byte address 0x4 - core index']
  #allocation1 [shape = 'u32[144,128]{1,0:T(1,128)}', space=vmem, size = 0x12000, scoped, tag = 'internal scratch']
  #allocation2 [shape = 'bf16[256,256]{1,0:T(16,128)(2,1)}', space=vmem, size = 0x20000, scoped, tag = 'scratch operand']
  #allocation3 [shape = 'bf16[224,128]{1,0:T(16,128)(2,1)}', space=vmem, size = 0xe000, scoped, tag = 'scratch operand']
  #allocation4 [shape = 'f32[224,128]{1,0:T(8,128)}', space=vmem, size = 0x1c000, scoped, tag = 'scratch operand']
  %s0 = inlined_call_operand.vmem [shape: bf16[2,128,128], index: 0, kind: input, shape index: {}]
  %s1 = inlined_call_operand.vmem [shape: bf16[2,256,128], index: 1, kind: input, shape index: {}]
  %s2 = inlined_call_operand.vmem [shape: bf16[2,2,128,128], index: 2, kind: input, shape index: {}]
  %s3 = inlined_call_operand.vmem [shape: f32[1,128], index: 3, kind: input, shape index: {}]
  %s4 = inlined_call_operand.vmem [shape: bf16[3,3,256,128], index: 4, kind: input, shape index: {}]
  %s5 = inlined_call_operand.vmem [shape: f32[1,128], index: 5, kind: input, shape index: {}]
  %s6 = inlined_call_operand.vmem [shape: bf16[3,3,128,128], index: 6, kind: input, shape index: {}]
  %s7 = inlined_call_operand.vmem [shape: f32[1,128], index: 7, kind: input, shape index: {}]
  %s8 = inlined_call_operand.vmem [shape: f32[2,192,128], index: 8, kind: output, shape index: {}]
  %s9 = sld [smem:[#allocation0]]
  $region65: #{expansion_forward.1} parent=0
    _
  %s11 = ssub.s32 1, %s9
  %s12 = scalar_select 0, %s11, %s9
  loop: start=0, step=1, limit=4
  $region2: #{expansion_forward.1} parent=0 // loop_pre_header
    _
  $region3: #{expansion_forward.1} parent=0 // loop_header
    %s14 = sphi 0, %s18
    %p15 = scmp.ge.s32.totalorder %s14, 4
    %s24 = sphi 0, %s26
    %s27 = sphi 0, %s24
    %s28 = sphi 0, %s27
    %s44 = sphi 0, %s28
    %s50 = sphi 0, %s52
    %s53 = sphi 0, %s50
    %s54 = sphi 0, %s53
    %s70 = sphi 0, %s54
    %s74 = sphi 0, %s74
    %s76 = sphi 0, %s74
    %s77 = sphi 0, %s76
    %s91 = sphi 0, %s77
    %s95 = sphi 0, %s95
    %s97 = sphi 0, %s95
    %s98 = sphi 0, %s97
    %s112 = sphi 0, %s98
    %s116 = sphi 0, %s116
    %s118 = sphi 0, %s116
    %s119 = sphi 0, %s118
    %s133 = sphi 0, %s119
    %s137 = sphi 0, %s137
    %s139 = sphi 0, %s137
    %s140 = sphi 0, %s139
    %s154 = sphi 0, %s140
    %s158 = sphi 0, %s158
    %s160 = sphi 0, %s158
    %s161 = sphi 0, %s160
    %s175 = sphi 0, %s161
    %s179 = sphi 0, %s179
    %s181 = sphi 0, %s179
    %s182 = sphi 0, %s181
    %s196 = sphi 0, %s182
    %s202 = sphi 0, %s204
    %s205 = sphi 0, %s202
    %s206 = sphi 0, %s205
    %s222 = sphi 0, %s206
  $region4: #{expansion_forward.1} parent=0 // loop_header_branch
    %17 = sbr.rel (%p15) target = $region8
  $region5: #{expansion_forward.1} parent=0 // loop_body
    %s19 = ssub.s32 %s14, 1
    %s20 = ssub.s32 %s14, 2
    %s21 = sadd.s32 %s14, 1
    %s22 = ssub.s32 %s14, %s21
    %p23 = scmp.eq.s32.totalorder %s22, 0
    %s25 = sadd.s32 %s24, 1
    %s26 = scalar_select %p23, %s24, %s25
    %p29 = pneg %p23
    %p30 = scmp.eq.s32.totalorder %s14, 1
    %p31 = por %p29, %p30
    %p32 = scmp.ne.s32.totalorder %s24, %s27
    %p33 = scmp.eq.s32.totalorder %s14, 0
    %p34 = por %p32, %p33
    %p35 = scmp.ne.s32.totalorder %s24, %s27
    %p36 = scmp.eq.s32.totalorder %s19, 1
    %p37 = por %p35, %p36
    %p38 = scmp.ne.s32.totalorder %s27, %s28
    %p39 = scmp.eq.s32.totalorder %s19, 0
    %p40 = por %p38, %p39
    %p41 = scmp.ne.s32.totalorder %s27, %s28
    %p42 = scmp.eq.s32.totalorder %s20, 1
    %p43 = por %p41, %p42
    %p45 = scmp.ne.s32.totalorder %s28, %s44
    %p46 = scmp.eq.s32.totalorder %s20, 0
    %p47 = por %p45, %p46
    %s48 = ssub.s32 %s14, %s21
    %p49 = scmp.eq.s32.totalorder %s48, 0
    %s51 = sadd.s32 %s50, 1
    %s52 = scalar_select %p49, %s50, %s51
    %p55 = pneg %p49
    %p56 = scmp.eq.s32.totalorder %s14, 1
    %p57 = por %p55, %p56
    %p58 = scmp.ne.s32.totalorder %s50, %s53
    %p59 = scmp.eq.s32.totalorder %s14, 0
    %p60 = por %p58, %p59
    %p61 = scmp.ne.s32.totalorder %s50, %s53
    %p62 = scmp.eq.s32.totalorder %s19, 1
    %p63 = por %p61, %p62
    %p64 = scmp.ne.s32.totalorder %s53, %s54
    %p65 = scmp.eq.s32.totalorder %s19, 0
    %p66 = por %p64, %p65
    %p67 = scmp.ne.s32.totalorder %s53, %s54
    %p68 = scmp.eq.s32.totalorder %s20, 1
    %p69 = por %p67, %p68
    %p71 = scmp.ne.s32.totalorder %s54, %s70
    %p72 = scmp.eq.s32.totalorder %s20, 0
    %p73 = por %p71, %p72
    %s75 = sadd.s32 %s74, 1
    %p78 = scmp.eq.s32.totalorder %s14, 1
    %p79 = scmp.ne.s32.totalorder %s74, %s76
    %p80 = scmp.eq.s32.totalorder %s14, 0
    %p81 = por %p79, %p80
    %p82 = scmp.ne.s32.totalorder %s74, %s76
    %p83 = scmp.eq.s32.totalorder %s19, 1
    %p84 = por %p82, %p83
    %p85 = scmp.ne.s32.totalorder %s76, %s77
    %p86 = scmp.eq.s32.totalorder %s19, 0
    %p87 = por %p85, %p86
    %p88 = scmp.ne.s32.totalorder %s76, %s77
    %p89 = scmp.eq.s32.totalorder %s20, 1
    %p90 = por %p88, %p89
    %p92 = scmp.ne.s32.totalorder %s77, %s91
    %p93 = scmp.eq.s32.totalorder %s20, 0
    %p94 = por %p92, %p93
    %s96 = sadd.s32 %s95, 1
    %p99 = scmp.eq.s32.totalorder %s14, 1
    %p100 = scmp.ne.s32.totalorder %s95, %s97
    %p101 = scmp.eq.s32.totalorder %s14, 0
    %p102 = por %p100, %p101
    %p103 = scmp.ne.s32.totalorder %s95, %s97
    %p104 = scmp.eq.s32.totalorder %s19, 1
    %p105 = por %p103, %p104
    %p106 = scmp.ne.s32.totalorder %s97, %s98
    %p107 = scmp.eq.s32.totalorder %s19, 0
    %p108 = por %p106, %p107
    %p109 = scmp.ne.s32.totalorder %s97, %s98
    %p110 = scmp.eq.s32.totalorder %s20, 1
    %p111 = por %p109, %p110
    %p113 = scmp.ne.s32.totalorder %s98, %s112
    %p114 = scmp.eq.s32.totalorder %s20, 0
    %p115 = por %p113, %p114
    %s117 = sadd.s32 %s116, 1
    %p120 = scmp.eq.s32.totalorder %s14, 1
    %p121 = scmp.ne.s32.totalorder %s116, %s118
    %p122 = scmp.eq.s32.totalorder %s14, 0
    %p123 = por %p121, %p122
    %p124 = scmp.ne.s32.totalorder %s116, %s118
    %p125 = scmp.eq.s32.totalorder %s19, 1
    %p126 = por %p124, %p125
    %p127 = scmp.ne.s32.totalorder %s118, %s119
    %p128 = scmp.eq.s32.totalorder %s19, 0
    %p129 = por %p127, %p128
    %p130 = scmp.ne.s32.totalorder %s118, %s119
    %p131 = scmp.eq.s32.totalorder %s20, 1
    %p132 = por %p130, %p131
    %p134 = scmp.ne.s32.totalorder %s119, %s133
    %p135 = scmp.eq.s32.totalorder %s20, 0
    %p136 = por %p134, %p135
    %s138 = sadd.s32 %s137, 1
    %p141 = scmp.eq.s32.totalorder %s14, 1
    %p142 = scmp.ne.s32.totalorder %s137, %s139
    %p143 = scmp.eq.s32.totalorder %s14, 0
    %p144 = por %p142, %p143
    %p145 = scmp.ne.s32.totalorder %s137, %s139
    %p146 = scmp.eq.s32.totalorder %s19, 1
    %p147 = por %p145, %p146
    %p148 = scmp.ne.s32.totalorder %s139, %s140
    %p149 = scmp.eq.s32.totalorder %s19, 0
    %p150 = por %p148, %p149
    %p151 = scmp.ne.s32.totalorder %s139, %s140
    %p152 = scmp.eq.s32.totalorder %s20, 1
    %p153 = por %p151, %p152
    %p155 = scmp.ne.s32.totalorder %s140, %s154
    %p156 = scmp.eq.s32.totalorder %s20, 0
    %p157 = por %p155, %p156
    %s159 = sadd.s32 %s158, 1
    %p162 = scmp.eq.s32.totalorder %s14, 1
    %p163 = scmp.ne.s32.totalorder %s158, %s160
    %p164 = scmp.eq.s32.totalorder %s14, 0
    %p165 = por %p163, %p164
    %p166 = scmp.ne.s32.totalorder %s158, %s160
    %p167 = scmp.eq.s32.totalorder %s19, 1
    %p168 = por %p166, %p167
    %p169 = scmp.ne.s32.totalorder %s160, %s161
    %p170 = scmp.eq.s32.totalorder %s19, 0
    %p171 = por %p169, %p170
    %p172 = scmp.ne.s32.totalorder %s160, %s161
    %p173 = scmp.eq.s32.totalorder %s20, 1
    %p174 = por %p172, %p173
    %p176 = scmp.ne.s32.totalorder %s161, %s175
    %p177 = scmp.eq.s32.totalorder %s20, 0
    %p178 = por %p176, %p177
    %s180 = sadd.s32 %s179, 1
    %p183 = scmp.eq.s32.totalorder %s14, 1
    %p184 = scmp.ne.s32.totalorder %s179, %s181
    %p185 = scmp.eq.s32.totalorder %s14, 0
    %p186 = por %p184, %p185
    %p187 = scmp.ne.s32.totalorder %s179, %s181
    %p188 = scmp.eq.s32.totalorder %s19, 1
    %p189 = por %p187, %p188
    %p190 = scmp.ne.s32.totalorder %s181, %s182
    %p191 = scmp.eq.s32.totalorder %s19, 0
    %p192 = por %p190, %p191
    %p193 = scmp.ne.s32.totalorder %s181, %s182
    %p194 = scmp.eq.s32.totalorder %s20, 1
    %p195 = por %p193, %p194
    %p197 = scmp.ne.s32.totalorder %s182, %s196
    %p198 = scmp.eq.s32.totalorder %s20, 0
    %p199 = por %p197, %p198
    %s200 = ssub.s32 %s14, %s21
    %p201 = scmp.eq.s32.totalorder %s200, 0
    %s203 = sadd.s32 %s202, 1
    %s204 = scalar_select %p201, %s202, %s203
    %p207 = pneg %p201
    %p208 = scmp.eq.s32.totalorder %s14, 1
    %p209 = por %p207, %p208
    %p210 = scmp.ne.s32.totalorder %s202, %s205
    %p211 = scmp.eq.s32.totalorder %s14, 0
    %p212 = por %p210, %p211
    %p213 = scmp.ne.s32.totalorder %s202, %s205
    %p214 = scmp.eq.s32.totalorder %s19, 1
    %p215 = por %p213, %p214
    %p216 = scmp.ne.s32.totalorder %s205, %s206
    %p217 = scmp.eq.s32.totalorder %s19, 0
    %p218 = por %p216, %p217
    %p219 = scmp.ne.s32.totalorder %s205, %s206
    %p220 = scmp.eq.s32.totalorder %s20, 1
    %p221 = por %p219, %p220
    %p223 = scmp.ne.s32.totalorder %s206, %s222
    %p224 = scmp.eq.s32.totalorder %s20, 0
    %p225 = por %p223, %p224
    %p226 = scmp.le.s32.totalorder 1, %s14
    %p227 = scmp.lt.s32.totalorder %s14, 3
    %p228 = pnand %p226, %p227
    %p229 = pneg %p228
    // Predicated region
    $region9: #{expansion_forward.1} parent=5 // pred_check
      _
    $region10: #{expansion_forward.1} parent=5 // pred_check_branch
      %231 = sbr.rel (%p228) target = $region12
    $region11: #{expansion_forward.1} parent=5 // pred_region
      %s232 = ssub.s32 %s14, 1
      // Predicated region
      $region13: #{expansion_forward.1} parent=11 // pred_check
        %p233 = pneg %p87
      $region14: #{expansion_forward.1} parent=11 // pred_check_branch
        %235 = sbr.rel (%p233) target = $region16
      $region15: #{expansion_forward.1} parent=11 // pred_region
        _
      $region16: #{expansion_forward.1} parent=11 // pred_fallthru
        _
      // Predicated region
      $region17: #{expansion_forward.1} parent=11 // pred_check
        %p236 = pneg %p108
      $region18: #{expansion_forward.1} parent=11 // pred_check_branch
        %238 = sbr.rel (%p236) target = $region20
      $region19: #{expansion_forward.1} parent=11 // pred_region
        _
      $region20: #{expansion_forward.1} parent=11 // pred_fallthru
        _
      // Predicated region
      $region21: #{expansion_forward.1} parent=11 // pred_check
        %p239 = pneg %p129
      $region22: #{expansion_forward.1} parent=11 // pred_check_branch
        %241 = sbr.rel (%p239) target = $region24
      $region23: #{expansion_forward.1} parent=11 // pred_region
        _
      $region24: #{expansion_forward.1} parent=11 // pred_fallthru
        _
      // Predicated region
      $region25: #{expansion_forward.1} parent=11 // pred_check
        %p242 = pneg %p150
      $region26: #{expansion_forward.1} parent=11 // pred_check_branch
        %244 = sbr.rel (%p242) target = $region28
      $region27: #{expansion_forward.1} parent=11 // pred_region
        _
      $region28: #{expansion_forward.1} parent=11 // pred_fallthru
        _
      // Predicated region
      $region29: #{expansion_forward.1} parent=11 // pred_check
        %p245 = pneg %p171
      $region30: #{expansion_forward.1} parent=11 // pred_check_branch
        %247 = sbr.rel (%p245) target = $region32
      $region31: #{expansion_forward.1} parent=11 // pred_region
        _
      $region32: #{expansion_forward.1} parent=11 // pred_fallthru
        _
      // Predicated region
      $region33: #{expansion_forward.1} parent=11 // pred_check
        %p248 = pneg %p192
      $region34: #{expansion_forward.1} parent=11 // pred_check_branch
        %250 = sbr.rel (%p248) target = $region36
      $region35: #{expansion_forward.1} parent=11 // pred_region
        _
      $region36: #{expansion_forward.1} parent=11 // pred_fallthru
        _
    $region12: #{expansion_forward.1} parent=5 // pred_fallthru
      _
    %p251 = scmp.lt.s32.totalorder %s14, 2
    // Predicated region
    $region37: #{expansion_forward.1} parent=5 // pred_check
      %p252 = pneg %p251
    $region38: #{expansion_forward.1} parent=5 // pred_check_branch
      %254 = sbr.rel (%p252) target = $region40
    $region39: #{expansion_forward.1} parent=5 // pred_region
      // Predicated region
      $region41: #{expansion_forward.1} parent=39 // pred_check
        %p255 = pneg %p34
      $region42: #{expansion_forward.1} parent=39 // pred_check_branch
        %257 = sbr.rel (%p255) target = $region44
      $region43: #{expansion_forward.1} parent=39 // pred_region
        %p258 = scmp.lt.s32.totalorder %s14, 1
        %s259 = scalar_select %p258, %s14, 1
        %s260 = smul.addr %s259, 16
        %s261 = smul.addr %s260, 4
        %s262 = scalar_lea.vmem %s0, %s261
      $region44: #{expansion_forward.1} parent=39 // pred_fallthru
        _
      // Predicated region
      $region45: #{expansion_forward.1} parent=39 // pred_check
        %p263 = pneg %p60
      $region46: #{expansion_forward.1} parent=39 // pred_check_branch
        %265 = sbr.rel (%p263) target = $region48
      $region47: #{expansion_forward.1} parent=39 // pred_region
        %p266 = scmp.lt.s32.totalorder %s14, 1
        %s267 = scalar_select %p266, %s14, 1
        %s268 = smul.addr %s267, 32
        %s269 = smul.addr %s268, 4
        %s270 = scalar_lea.vmem %s1, %s269
      $region48: #{expansion_forward.1} parent=39 // pred_fallthru
        _
    $region40: #{expansion_forward.1} parent=5 // pred_fallthru
      _
    %p271 = scmp.le.s32.totalorder 1, %s14
    %p272 = scmp.lt.s32.totalorder %s14, 3
    %p273 = pnand %p271, %p272
    %p274 = pneg %p273
    // Predicated region
    $region49: #{expansion_forward.1} parent=5 // pred_check
      _
    $region50: #{expansion_forward.1} parent=5 // pred_check_branch
      %276 = sbr.rel (%p273) target = $region52
    $region51: #{expansion_forward.1} parent=5 // pred_region
      %s277 = ssub.s32 %s14, 1
      %p278 = scmp.lt.s32.totalorder %s19, 1
      %s279 = scalar_select %p278, %s19, 1
      %s280 = smul.addr %s279, 16
      %s281 = smul.addr %s280, 4
      %s282 = scalar_lea.vmem %s0, %s281
      %p283 = pneg %p40
      %p284 = pneg %p37
      %p285 = scmp.lt.s32.totalorder %s19, 1
      %s286 = scalar_select %p285, %s19, 1
      %s287 = smul.addr %s286, 32
      %s288 = smul.addr %s287, 4
      %s289 = scalar_lea.vmem %s1, %s288
      %p290 = pneg %p66
      %p291 = pneg %p63
      %p292 = pneg %p87
      %p293 = pneg %p84
      %p294 = pneg %p108
      %p295 = pneg %p105
      %p296 = pneg %p129
      %p297 = pneg %p126
      %p298 = pneg %p150
      %p299 = pneg %p147
      %p300 = pneg %p171
      %p301 = pneg %p168
      %p302 = pneg %p192
      %p303 = pneg %p189
      %p304 = pneg %p218
      %p305 = pneg %p215
      %p306 = scmp.lt.s32.totalorder %s19, 1
      %s307 = scalar_select %p306, %s19, 1
      %s308 = smul.addr %s307, 24
      %s309 = smul.addr %s308, 8
      %s310 = scalar_lea.vmem %s8, %s309
      %p311 = scmp.lt.s32.totalorder %s19, 1
      %s312 = scalar_select %p311, %s19, 1
      %s313 = smul.addr %s312, 16
      %s314 = smul.addr %s313, 4
      %s315 = scalar_lea.vmem %s0, %s314
      %p316 = scmp.lt.s32.totalorder %s19, 1
      %s317 = scalar_select %p316, %s19, 1
      %s318 = smul.addr %s317, 32
      %s319 = smul.addr %s318, 4
      %s320 = scalar_lea.vmem %s1, %s319
      %p321 = scmp.lt.s32.totalorder %s19, 1
      %s322 = scalar_select %p321, %s19, 1
      %s323 = smul.addr %s322, 24
      %s324 = smul.addr %s323, 8
      %s325 = scalar_lea.vmem %s8, %s324
      %v327 = vld [vmem:[%s320] sm:$0xf]
      %v328 = vld [vmem:[%s320 + $0x4] sm:$0xf]
      %v329 = vld [vmem:[%s320 + $0x8] sm:$0xf]
      %v330 = vld [vmem:[%s320 + $0xc] sm:$0xf]
      %v331 = vld [vmem:[%s320 + $0x10] sm:$0xf]
      %v332 = vld [vmem:[%s320 + $0x14] sm:$0xf]
      %v333 = vld [vmem:[%s320 + $0x18] sm:$0xf]
      %v334 = vld [vmem:[%s320 + $0x1c] sm:$0xf]
      %v335 = vld [vmem:[%s320 + $0x20] sm:$0xf]
      %v336 = vld [vmem:[%s320 + $0x24] sm:$0xf]
      %v337 = vld [vmem:[%s320 + $0x28] sm:$0xf]
      %v338 = vld [vmem:[%s320 + $0x2c] sm:$0xf]
      %v339 = vld [vmem:[%s320 + $0x30] sm:$0xf]
      %v340 = vld [vmem:[%s320 + $0x34] sm:$0xf]
      %v341 = vld [vmem:[%s320 + $0x38] sm:$0xf]
      %v342 = vld [vmem:[%s320 + $0x3c] sm:$0xf]
      %v343 = vld [vmem:[%s320 + $0x40] sm:$0xf]
      %v344 = vld [vmem:[%s320 + $0x44] sm:$0xf]
      %v345 = vld [vmem:[%s320 + $0x48] sm:$0xf]
      %v346 = vld [vmem:[%s320 + $0x4c] sm:$0xf]
      %v347 = vld [vmem:[%s320 + $0x50] sm:$0xf]
      %v348 = vld [vmem:[%s320 + $0x54] sm:$0xf]
      %v349 = vld [vmem:[%s320 + $0x58] sm:$0xf]
      %v350 = vld [vmem:[%s320 + $0x5c] sm:$0xf]
      %v351 = vld [vmem:[%s320 + $0x60] sm:$0xf]
      %v352 = vld [vmem:[%s320 + $0x64] sm:$0xf]
      %v353 = vld [vmem:[%s320 + $0x68] sm:$0xf]
      %v354 = vld [vmem:[%s320 + $0x6c] sm:$0xf]
      %v383 = vunpack.c.l.b16 %v327
      %v384 = vunpack.c.l.b16 %v328
      %v385 = vunpack.c.l.b16 %v329
      %v386 = vunpack.c.l.b16 %v330
      %v387 = vunpack.c.l.b16 %v331
      %v388 = vunpack.c.l.b16 %v332
      %v389 = vunpack.c.l.b16 %v333
      %v390 = vunpack.c.l.b16 %v334
      %v391 = vunpack.c.l.b16 %v335
      %v392 = vunpack.c.l.b16 %v336
      %v393 = vunpack.c.l.b16 %v337
      %v394 = vunpack.c.l.b16 %v338
      %v395 = vunpack.c.l.b16 %v339
      %v396 = vunpack.c.l.b16 %v340
      %v397 = vunpack.c.l.b16 %v341
      %v398 = vunpack.c.l.b16 %v342
      %v399 = vunpack.c.l.b16 %v343
      %v400 = vunpack.c.l.b16 %v344
      %v401 = vunpack.c.l.b16 %v345
      %v402 = vunpack.c.l.b16 %v346
      %v403 = vunpack.c.l.b16 %v347
      %v404 = vunpack.c.l.b16 %v348
      %v405 = vunpack.c.l.b16 %v349
      %v406 = vunpack.c.l.b16 %v350
      %v407 = vunpack.c.l.b16 %v351
      %v408 = vunpack.c.l.b16 %v352
      %v409 = vunpack.c.l.b16 %v353
      %v410 = vunpack.c.l.b16 %v354
      %v411 = vpack.c.b16 %v384, %v383
      %v412 = vpack.c.b16 %v386, %v385
      %v413 = vpack.c.b16 %v388, %v387
      %v414 = vpack.c.b16 %v390, %v389
      %v415 = vpack.c.b16 %v392, %v391
      %v416 = vpack.c.b16 %v394, %v393
      %v417 = vpack.c.b16 %v396, %v395
      %v418 = vpack.c.b16 %v398, %v397
      %v419 = vpack.c.b16 %v400, %v399
      %v420 = vpack.c.b16 %v402, %v401
      %v421 = vpack.c.b16 %v404, %v403
      %v422 = vpack.c.b16 %v406, %v405
      %v423 = vpack.c.b16 %v408, %v407
      %v424 = vpack.c.b16 %v410, %v409
      %439 = vst [vmem:[#allocation2 + $0x8] sm:$0xff] %v411
      %440 = vst [vmem:[#allocation2 + $0x18] sm:$0xff] %v412
      %441 = vst [vmem:[#allocation2 + $0x28] sm:$0xff] %v413
      %442 = vst [vmem:[#allocation2 + $0x38] sm:$0xff] %v414
      %443 = vst [vmem:[#allocation2 + $0x48] sm:$0xff] %v415
      %444 = vst [vmem:[#allocation2 + $0x58] sm:$0xff] %v416
      %445 = vst [vmem:[#allocation2 + $0x68] sm:$0xff] %v417
      %446 = vst [vmem:[#allocation2 + $0x78] sm:$0xff] %v418
      %447 = vst [vmem:[#allocation2 + $0x88] sm:$0xff] %v419
      %448 = vst [vmem:[#allocation2 + $0x98] sm:$0xff] %v420
      %449 = vst [vmem:[#allocation2 + $0xa8] sm:$0xff] %v421
      %450 = vst [vmem:[#allocation2 + $0xb8] sm:$0xff] %v422
      %451 = vst [vmem:[#allocation2 + $0xc8] sm:$0xff] %v423
      %452 = vst [vmem:[#allocation2 + $0xd8] sm:$0xff] %v424
      %v453 = vld [vmem:[%s320 + $0x70] sm:$0xf]
      %v454 = vld [vmem:[%s320 + $0x74] sm:$0xf]
      %v455 = vld [vmem:[%s320 + $0x78] sm:$0xf]
      %v456 = vld [vmem:[%s320 + $0x7c] sm:$0xf]
      %v461 = vunpack.c.l.b16 %v453
      %v462 = vunpack.c.l.b16 %v454
      %v463 = vunpack.c.l.b16 %v455
      %v464 = vunpack.c.l.b16 %v456
      %v465 = vpack.c.b16 %v462, %v461
      %v466 = vpack.c.b16 %v464, %v463
      %469 = vst [vmem:[#allocation2 + $0xe8] sm:$0xff] %v465
      %470 = vst [vmem:[#allocation2 + $0xf8] sm:$0xff] %v466
      %v471 = vld [vmem:[%s3] sm:$0x1]
      %v472 = vlaneseq
      %v473 = vshrl.u32 %v472, 7
      %v474 = vadd.s32 %v473, 8
      %v475 = vadd.s32 %v473, 16
      %v476 = vadd.s32 %v473, 24
      %v477 = vadd.s32 %v473, 32
      %v478 = vadd.s32 %v473, 40
      %v479 = vadd.s32 %v473, 48
      %v480 = vadd.s32 %v473, 56
      %v481 = vadd.s32 %v473, 64
      %v482 = vadd.s32 %v473, 72
      %v483 = vadd.s32 %v473, 80
      %v484 = vadd.s32 %v473, 88
      %v485 = vadd.s32 %v473, 96
      %v486 = vadd.s32 %v473, 104
      %v487 = vadd.s32 %v473, 112
      %v488 = vadd.s32 %v473, 120
      %vm489 = vcmp.lt.s32.totalorder %v473, 0
      %v490 = vsub.s32 0, %v473
      %v491 = vsel %vm489, %v490, %v473
      %v492 = vshrl.u32 %v491, 1
      %v493 = vand.u32 %v491, 1
      %v494 = vsub.s32 0, %v493
      %v495 = vsel %vm489, %v494, %v493
      %vm496 = vcmp.lt.s32.totalorder %v474, 0
      %v497 = vsub.s32 0, %v474
      %v498 = vsel %vm496, %v497, %v474
      %v499 = vshrl.u32 %v498, 1
      %v500 = vand.u32 %v498, 1
      %v501 = vsub.s32 0, %v500
      %v502 = vsel %vm496, %v501, %v500
      %vm503 = vcmp.lt.s32.totalorder %v475, 0
      %v504 = vsub.s32 0, %v475
      %v505 = vsel %vm503, %v504, %v475
      %v506 = vshrl.u32 %v505, 1
      %v507 = vand.u32 %v505, 1
      %v508 = vsub.s32 0, %v507
      %v509 = vsel %vm503, %v508, %v507
      %vm510 = vcmp.lt.s32.totalorder %v476, 0
      %v511 = vsub.s32 0, %v476
      %v512 = vsel %vm510, %v511, %v476
      %v513 = vshrl.u32 %v512, 1
      %v514 = vand.u32 %v512, 1
      %v515 = vsub.s32 0, %v514
      %v516 = vsel %vm510, %v515, %v514
      %vm517 = vcmp.lt.s32.totalorder %v477, 0
      %v518 = vsub.s32 0, %v477
      %v519 = vsel %vm517, %v518, %v477
      %v520 = vshrl.u32 %v519, 1
      %v521 = vand.u32 %v519, 1
      %v522 = vsub.s32 0, %v521
      %v523 = vsel %vm517, %v522, %v521
      %vm524 = vcmp.lt.s32.totalorder %v478, 0
      %v525 = vsub.s32 0, %v478
      %v526 = vsel %vm524, %v525, %v478
      %v527 = vshrl.u32 %v526, 1
      %v528 = vand.u32 %v526, 1
      %v529 = vsub.s32 0, %v528
      %v530 = vsel %vm524, %v529, %v528
      %vm531 = vcmp.lt.s32.totalorder %v479, 0
      %v532 = vsub.s32 0, %v479
      %v533 = vsel %vm531, %v532, %v479
      %v534 = vshrl.u32 %v533, 1
      %v535 = vand.u32 %v533, 1
      %v536 = vsub.s32 0, %v535
      %v537 = vsel %vm531, %v536, %v535
      %vm538 = vcmp.lt.s32.totalorder %v480, 0
      %v539 = vsub.s32 0, %v480
      %v540 = vsel %vm538, %v539, %v480
      %v541 = vshrl.u32 %v540, 1
      %v542 = vand.u32 %v540, 1
      %v543 = vsub.s32 0, %v542
      %v544 = vsel %vm538, %v543, %v542
      %vm545 = vcmp.lt.s32.totalorder %v481, 0
      %v546 = vsub.s32 0, %v481
      %v547 = vsel %vm545, %v546, %v481
      %v548 = vshrl.u32 %v547, 1
      %v549 = vand.u32 %v547, 1
      %v550 = vsub.s32 0, %v549
      %v551 = vsel %vm545, %v550, %v549
      %vm552 = vcmp.lt.s32.totalorder %v482, 0
      %v553 = vsub.s32 0, %v482
      %v554 = vsel %vm552, %v553, %v482
      %v555 = vshrl.u32 %v554, 1
      %v556 = vand.u32 %v554, 1
      %v557 = vsub.s32 0, %v556
      %v558 = vsel %vm552, %v557, %v556
      %vm559 = vcmp.lt.s32.totalorder %v483, 0
      %v560 = vsub.s32 0, %v483
      %v561 = vsel %vm559, %v560, %v483
      %v562 = vshrl.u32 %v561, 1
      %v563 = vand.u32 %v561, 1
      %v564 = vsub.s32 0, %v563
      %v565 = vsel %vm559, %v564, %v563
      %vm566 = vcmp.lt.s32.totalorder %v484, 0
      %v567 = vsub.s32 0, %v484
      %v568 = vsel %vm566, %v567, %v484
      %v569 = vshrl.u32 %v568, 1
      %v570 = vand.u32 %v568, 1
      %v571 = vsub.s32 0, %v570
      %v572 = vsel %vm566, %v571, %v570
      %vm573 = vcmp.lt.s32.totalorder %v485, 0
      %v574 = vsub.s32 0, %v485
      %v575 = vsel %vm573, %v574, %v485
      %v576 = vshrl.u32 %v575, 1
      %v577 = vand.u32 %v575, 1
      %v578 = vsub.s32 0, %v577
      %v579 = vsel %vm573, %v578, %v577
      %vm580 = vcmp.lt.s32.totalorder %v486, 0
      %v581 = vsub.s32 0, %v486
      %v582 = vsel %vm580, %v581, %v486
      %v583 = vshrl.u32 %v582, 1
      %v584 = vand.u32 %v582, 1
      %v585 = vsub.s32 0, %v584
      %v586 = vsel %vm580, %v585, %v584
      %vm587 = vcmp.lt.s32.totalorder %v487, 0
      %v588 = vsub.s32 0, %v487
      %v589 = vsel %vm587, %v588, %v487
      %v590 = vshrl.u32 %v589, 1
      %v591 = vand.u32 %v589, 1
      %v592 = vsub.s32 0, %v591
      %v593 = vsel %vm587, %v592, %v591
      %vm594 = vcmp.lt.s32.totalorder %v488, 0
      %v595 = vsub.s32 0, %v488
      %v596 = vsel %vm594, %v595, %v488
      %v597 = vshrl.u32 %v596, 1
      %v598 = vand.u32 %v596, 1
      %v599 = vsub.s32 0, %v598
      %v600 = vsel %vm594, %v599, %v598
      %vm601 = vcmp.ne.s32.totalorder %v495, 0
      %vm602 = vcmp.ne.s32.totalorder %v502, 0
      %vm603 = vcmp.ne.s32.totalorder %v509, 0
      %vm604 = vcmp.ne.s32.totalorder %v516, 0
      %vm605 = vcmp.ne.s32.totalorder %v523, 0
      %vm606 = vcmp.ne.s32.totalorder %v530, 0
      %vm607 = vcmp.ne.s32.totalorder %v537, 0
      %vm608 = vcmp.ne.s32.totalorder %v544, 0
      %vm609 = vcmp.ne.s32.totalorder %v551, 0
      %vm610 = vcmp.ne.s32.totalorder %v558, 0
      %vm611 = vcmp.ne.s32.totalorder %v565, 0
      %vm612 = vcmp.ne.s32.totalorder %v572, 0
      %vm613 = vcmp.ne.s32.totalorder %v579, 0
      %vm614 = vcmp.ne.s32.totalorder %v586, 0
      %vm615 = vcmp.ne.s32.totalorder %v593, 0
      %vm616 = vcmp.ne.s32.totalorder %v600, 0
      %vm617 = vcmp.lt.s32.totalorder %v495, 0
      %vm618 = vcmp.lt.s32.totalorder %v502, 0
      %vm619 = vcmp.lt.s32.totalorder %v509, 0
      %vm620 = vcmp.lt.s32.totalorder %v516, 0
      %vm621 = vcmp.lt.s32.totalorder %v523, 0
      %vm622 = vcmp.lt.s32.totalorder %v530, 0
      %vm623 = vcmp.lt.s32.totalorder %v537, 0
      %vm624 = vcmp.lt.s32.totalorder %v544, 0
      %vm625 = vcmp.lt.s32.totalorder %v551, 0
      %vm626 = vcmp.lt.s32.totalorder %v558, 0
      %vm627 = vcmp.lt.s32.totalorder %v565, 0
      %vm628 = vcmp.lt.s32.totalorder %v572, 0
      %vm629 = vcmp.lt.s32.totalorder %v579, 0
      %vm630 = vcmp.lt.s32.totalorder %v586, 0
      %vm631 = vcmp.lt.s32.totalorder %v593, 0
      %vm632 = vcmp.lt.s32.totalorder %v600, 0
      %vm633 = vmand %vm617, %vm601
      %vm634 = vmand %vm618, %vm602
      %vm635 = vmand %vm619, %vm603
      %vm636 = vmand %vm620, %vm604
      %vm637 = vmand %vm621, %vm605
      %vm638 = vmand %vm622, %vm606
      %vm639 = vmand %vm623, %vm607
      %vm640 = vmand %vm624, %vm608
      %vm641 = vmand %vm625, %vm609
      %vm642 = vmand %vm626, %vm610
      %vm643 = vmand %vm627, %vm611
      %vm644 = vmand %vm628, %vm612
      %vm645 = vmand %vm629, %vm613
      %vm646 = vmand %vm630, %vm614
      %vm647 = vmand %vm631, %vm615
      %vm648 = vmand %vm632, %vm616
      %v649 = vadd.s32 %v495, 2
      %v650 = vadd.s32 %v502, 2
      %v651 = vadd.s32 %v509, 2
      %v652 = vadd.s32 %v516, 2
      %v653 = vadd.s32 %v523, 2
      %v654 = vadd.s32 %v530, 2
      %v655 = vadd.s32 %v537, 2
      %v656 = vadd.s32 %v544, 2
      %v657 = vadd.s32 %v551, 2
      %v658 = vadd.s32 %v558, 2
      %v659 = vadd.s32 %v565, 2
      %v660 = vadd.s32 %v572, 2
      %v661 = vadd.s32 %v579, 2
      %v662 = vadd.s32 %v586, 2
      %v663 = vadd.s32 %v593, 2
      %v664 = vadd.s32 %v600, 2
      %v665 = vsel %vm633, %v649, %v495
      %v666 = vsel %vm634, %v650, %v502
      %v667 = vsel %vm635, %v651, %v509
      %v668 = vsel %vm636, %v652, %v516
      %v669 = vsel %vm637, %v653, %v523
      %v670 = vsel %vm638, %v654, %v530
      %v671 = vsel %vm639, %v655, %v537
      %v672 = vsel %vm640, %v656, %v544
      %v673 = vsel %vm641, %v657, %v551
      %v674 = vsel %vm642, %v658, %v558
      %v675 = vsel %vm643, %v659, %v565
      %v676 = vsel %vm644, %v660, %v572
      %v677 = vsel %vm645, %v661, %v579
      %v678 = vsel %vm646, %v662, %v586
      %v679 = vsel %vm647, %v663, %v593
      %v680 = vsel %vm648, %v664, %v600
      %v681 = vld [vmem:[%s315] sm:$0xf]
      %v682 = vld [vmem:[%s315 + $0x4] sm:$0xf]
      %v683 = vld [vmem:[%s315 + $0x8] sm:$0xf]
      %v684 = vld [vmem:[%s315 + $0xc] sm:$0xf]
      %v685 = vld [vmem:[%s315 + $0x10] sm:$0xf]
      %v686 = vld [vmem:[%s315 + $0x14] sm:$0xf]
      %v687 = vld [vmem:[%s315 + $0x18] sm:$0xf]
      %v688 = vld [vmem:[%s315 + $0x1c] sm:$0xf]
      %v689 = vld [vmem:[%s315 + $0x20] sm:$0xf]
      %v690 = vld [vmem:[%s315 + $0x24] sm:$0xf]
      %v691 = vld [vmem:[%s315 + $0x28] sm:$0xf]
      %v692 = vld [vmem:[%s315 + $0x2c] sm:$0xf]
      %v693 = vld [vmem:[%s315 + $0x30] sm:$0xf]
      %v694 = vld [vmem:[%s315 + $0x34] sm:$0xf]
      %v695 = vld [vmem:[%s315 + $0x38] sm:$0xf]
      %v696 = vld [vmem:[%s315 + $0x3c] sm:$0xf]
      %v697 = vld [vmem:[%s2] sm:$0xf]
      %v698 = vld [vmem:[%s2 + $0x4] sm:$0xf]
      %v699 = vld [vmem:[%s2 + $0x8] sm:$0xf]
      %v700 = vld [vmem:[%s2 + $0xc] sm:$0xf]
      %v701 = vld [vmem:[%s2 + $0x10] sm:$0xf]
      %v702 = vld [vmem:[%s2 + $0x14] sm:$0xf]
      %v703 = vld [vmem:[%s2 + $0x18] sm:$0xf]
      %v704 = vld [vmem:[%s2 + $0x1c] sm:$0xf]
      %v705 = vld [vmem:[%s2 + $0x20] sm:$0xf]
      %v706 = vld [vmem:[%s2 + $0x24] sm:$0xf]
      %v707 = vld [vmem:[%s2 + $0x28] sm:$0xf]
      %v708 = vld [vmem:[%s2 + $0x2c] sm:$0xf]
      %v709 = vld [vmem:[%s2 + $0x30] sm:$0xf]
      %v710 = vld [vmem:[%s2 + $0x34] sm:$0xf]
      %v711 = vld [vmem:[%s2 + $0x38] sm:$0xf]
      %v712 = vld [vmem:[%s2 + $0x3c] sm:$0xf]
      %v729 = vunpack.c.l.b16 %v681
      %v730 = vunpack.c.l.b16 %v682
      %v731 = vunpack.c.l.b16 %v683
      %v732 = vunpack.c.l.b16 %v684
      %v733 = vunpack.c.l.b16 %v685
      %v734 = vunpack.c.l.b16 %v686
      %v735 = vunpack.c.l.b16 %v687
      %v736 = vunpack.c.l.b16 %v688
      %v737 = vunpack.c.l.b16 %v689
      %v738 = vunpack.c.l.b16 %v690
      %v739 = vunpack.c.l.b16 %v691
      %v740 = vunpack.c.l.b16 %v692
      %v741 = vunpack.c.l.b16 %v693
      %v742 = vunpack.c.l.b16 %v694
      %v743 = vunpack.c.l.b16 %v695
      %v744 = vunpack.c.l.b16 %v696
      %v745 = vpack.c.b16 %v730, %v729
      %v746 = vpack.c.b16 %v732, %v731
      %v747 = vpack.c.b16 %v734, %v733
      %v748 = vpack.c.b16 %v736, %v735
      %v749 = vpack.c.b16 %v738, %v737
      %v750 = vpack.c.b16 %v740, %v739
      %v751 = vpack.c.b16 %v742, %v741
      %v752 = vpack.c.b16 %v744, %v743
      %v777 = vunpack.c.l.b16 %v697
      %v778 = vunpack.c.l.b16 %v698
      %v779 = vunpack.c.l.b16 %v699
      %v780 = vunpack.c.l.b16 %v700
      %v781 = vunpack.c.l.b16 %v701
      %v782 = vunpack.c.l.b16 %v702
      %v783 = vunpack.c.l.b16 %v703
      %v784 = vunpack.c.l.b16 %v704
      %v785 = vunpack.c.l.b16 %v705
      %v786 = vunpack.c.l.b16 %v706
      %v787 = vunpack.c.l.b16 %v707
      %v788 = vunpack.c.l.b16 %v708
      %v789 = vunpack.c.l.b16 %v709
      %v790 = vunpack.c.l.b16 %v710
      %v791 = vunpack.c.l.b16 %v711
      %v792 = vunpack.c.l.b16 %v712
      %v793 = vpack.c.b16 %v778, %v777
      %v794 = vpack.c.b16 %v780, %v779
      %v795 = vpack.c.b16 %v782, %v781
      %v796 = vpack.c.b16 %v784, %v783
      %v797 = vpack.c.b16 %v786, %v785
      %v798 = vpack.c.b16 %v788, %v787
      %v799 = vpack.c.b16 %v790, %v789
      %v800 = vpack.c.b16 %v792, %v791
      %809 = vmatprep.subr.bf16.mxu0 0
      %810 = vmatpush1.bf16.msra.mxu0 %v793
      %811 = vmatprep.subr.bf16.mxu0 0
      %812 = vmatpush1.bf16.msra.mxu0 %v794
      %813 = vmatprep.subr.bf16.mxu0 0
      %814 = vmatpush1.bf16.msra.mxu0 %v795
      %815 = vmatprep.subr.bf16.mxu0 0
      %816 = vmatpush1.bf16.msra.mxu0 %v796
      %817 = vmatprep.subr.bf16.mxu0 0
      %818 = vmatpush1.bf16.msra.mxu0 %v797
      %819 = vmatprep.subr.bf16.mxu0 0
      %820 = vmatpush1.bf16.msra.mxu0 %v798
      %821 = vmatprep.subr.bf16.mxu0 0
      %822 = vmatpush1.bf16.msra.mxu0 %v799
      %823 = vmatprep.subr.bf16.mxu0 0
      %824 = vmatpush1.bf16.msra.mxu0 %v800
      %825 = vmatprep.subr.bf16.mxu0 0
      %826 = vmatpush1.bf16.msra.mxu0 0
      %827 = vmatprep.subr.bf16.mxu0 0
      %828 = vmatpush1.bf16.msra.mxu0 0
      %829 = vmatprep.subr.bf16.mxu0 0
      %830 = vmatpush1.bf16.msra.mxu0 0
      %831 = vmatprep.subr.bf16.mxu0 0
      %832 = vmatpush1.bf16.msra.mxu0 0
      %833 = vmatprep.subr.bf16.mxu0 0
      %834 = vmatpush1.bf16.msra.mxu0 0
      %835 = vmatprep.subr.bf16.mxu0 0
      %836 = vmatpush1.bf16.msra.mxu0 0
      %837 = vmatprep.subr.bf16.mxu0 0
      %838 = vmatpush1.bf16.msra.mxu0 0
      %839 = vmatprep.subr.bf16.mxu0 0
      %840 = vmatpush1.bf16.msra.mxu0 0
      %841 = vmatprep.mubr.bf16.mxu0 0
      %842 = vmatmul.mubr.bf16.gmra.mrb[0].mxu0 %v745
      %v843 = vpop.f32.mrb[0].mxu0
      %v844 = vadd.f32 0.0, %v843
      %v845 = vpop.f32.mrb[0].mxu0
      %v846 = vpop.f32.mrb[0].mxu0
      %v847 = vadd.f32 0.0, %v846
      %v848 = vpop.f32.mrb[0].mxu0
      %849 = vmatprep.mubr.bf16.mxu0 0
      %850 = vmatmul.mubr.bf16.gmra.mrb[0].mxu0 %v746
      %v851 = vpop.f32.mrb[0].mxu0
      %v852 = vadd.f32 0.0, %v851
      %v853 = vpop.f32.mrb[0].mxu0
      %v854 = vpop.f32.mrb[0].mxu0
      %v855 = vadd.f32 0.0, %v854
      %v856 = vpop.f32.mrb[0].mxu0
      %857 = vmatprep.mubr.bf16.mxu0 0
      %858 = vmatmul.mubr.bf16.gmra.mrb[0].mxu0 %v747
      %v859 = vpop.f32.mrb[0].mxu0
      %v860 = vadd.f32 0.0, %v859
      %v861 = vpop.f32.mrb[0].mxu0
      %v862 = vpop.f32.mrb[0].mxu0
      %v863 = vadd.f32 0.0, %v862
      %v864 = vpop.f32.mrb[0].mxu0
      %865 = vmatprep.mubr.bf16.mxu0 0
      %866 = vmatmul.mubr.bf16.gmra.mrb[0].mxu0 %v748
      %v867 = vpop.f32.mrb[0].mxu0
      %v868 = vadd.f32 0.0, %v867
      %v869 = vpop.f32.mrb[0].mxu0
      %v870 = vpop.f32.mrb[0].mxu0
      %v871 = vadd.f32 0.0, %v870
      %v872 = vpop.f32.mrb[0].mxu0
      %873 = vmatprep.mubr.bf16.mxu0 0
      %874 = vmatmul.mubr.bf16.gmra.mrb[0].mxu0 %v749
      %v875 = vpop.f32.mrb[0].mxu0
      %v876 = vadd.f32 0.0, %v875
      %v877 = vpop.f32.mrb[0].mxu0
      %v878 = vpop.f32.mrb[0].mxu0
      %v879 = vadd.f32 0.0, %v878
      %v880 = vpop.f32.mrb[0].mxu0
      %881 = vmatprep.mubr.bf16.mxu0 0
      %882 = vmatmul.mubr.bf16.gmra.mrb[0].mxu0 %v750
      %v883 = vpop.f32.mrb[0].mxu0
      %v884 = vadd.f32 0.0, %v883
      %v885 = vpop.f32.mrb[0].mxu0
      %v886 = vpop.f32.mrb[0].mxu0
      %v887 = vadd.f32 0.0, %v886
      %v888 = vpop.f32.mrb[0].mxu0
      %889 = vmatprep.mubr.bf16.mxu0 0
      %890 = vmatmul.mubr.bf16.gmra.mrb[0].mxu0 %v751
      %v891 = vpop.f32.mrb[0].mxu0
      %v892 = vadd.f32 0.0, %v891
      %v893 = vpop.f32.mrb[0].mxu0
      %v894 = vpop.f32.mrb[0].mxu0
      %v895 = vadd.f32 0.0, %v894
      %v896 = vpop.f32.mrb[0].mxu0
      %897 = vmatprep.mubr.bf16.mxu0 0
      %898 = vmatmul.mubr.bf16.gmra.mrb[0].mxu0 %v752
      %v899 = vpop.f32.mrb[0].mxu0
      %v900 = vadd.f32 0.0, %v899
      %v901 = vpop.f32.mrb[0].mxu0
      %v902 = vpop.f32.mrb[0].mxu0
      %v903 = vadd.f32 0.0, %v902
      %v904 = vpop.f32.mrb[0].mxu0
      %905 = vdwg.mxu0
      %s906 = scalar_lea.vmem %s2, 64
      %v907 = vld [vmem:[%s906] sm:$0xf]
      %v908 = vld [vmem:[%s906 + $0x4] sm:$0xf]
      %v909 = vld [vmem:[%s906 + $0x8] sm:$0xf]
      %v910 = vld [vmem:[%s906 + $0xc] sm:$0xf]
      %v911 = vld [vmem:[%s906 + $0x10] sm:$0xf]
      %v912 = vld [vmem:[%s906 + $0x14] sm:$0xf]
      %v913 = vld [vmem:[%s906 + $0x18] sm:$0xf]
      %v914 = vld [vmem:[%s906 + $0x1c] sm:$0xf]
      %v915 = vld [vmem:[%s906 + $0x20] sm:$0xf]
      %v916 = vld [vmem:[%s906 + $0x24] sm:$0xf]
      %v917 = vld [vmem:[%s906 + $0x28] sm:$0xf]
      %v918 = vld [vmem:[%s906 + $0x2c] sm:$0xf]
      %v919 = vld [vmem:[%s906 + $0x30] sm:$0xf]
      %v920 = vld [vmem:[%s906 + $0x34] sm:$0xf]
      %v921 = vld [vmem:[%s906 + $0x38] sm:$0xf]
      %v922 = vld [vmem:[%s906 + $0x3c] sm:$0xf]
      %v939 = vunpack.c.l.b16 %v907
      %v940 = vunpack.c.l.b16 %v908
      %v941 = vunpack.c.l.b16 %v909
      %v942 = vunpack.c.l.b16 %v910
      %v943 = vunpack.c.l.b16 %v911
      %v944 = vunpack.c.l.b16 %v912
      %v945 = vunpack.c.l.b16 %v913
      %v946 = vunpack.c.l.b16 %v914
      %v947 = vunpack.c.l.b16 %v915
      %v948 = vunpack.c.l.b16 %v916
      %v949 = vunpack.c.l.b16 %v917
      %v950 = vunpack.c.l.b16 %v918
      %v951 = vunpack.c.l.b16 %v919
      %v952 = vunpack.c.l.b16 %v920
      %v953 = vunpack.c.l.b16 %v921
      %v954 = vunpack.c.l.b16 %v922
      %v955 = vpack.c.b16 %v940, %v939
      %v956 = vpack.c.b16 %v942, %v941
      %v957 = vpack.c.b16 %v944, %v943
      %v958 = vpack.c.b16 %v946, %v945
      %v959 = vpack.c.b16 %v948, %v947
      %v960 = vpack.c.b16 %v950, %v949
      %v961 = vpack.c.b16 %v952, %v951
      %v962 = vpack.c.b16 %v954, %v953
      %971 = vmatprep.subr.bf16.mxu0 0
      %972 = vmatpush1.bf16.msra.mxu0 %v955
      %973 = vmatprep.subr.bf16.mxu0 0
      %974 = vmatpush1.bf16.msra.mxu0 %v956
      %975 = vmatprep.subr.bf16.mxu0 0
      %976 = vmatpush1.bf16.msra.mxu0 %v957
      %977 = vmatprep.subr.bf16.mxu0 0
      %978 = vmatpush1.bf16.msra.mxu0 %v958
      %979 = vmatprep.subr.bf16.mxu0 0
      %980 = vmatpush1.bf16.msra.mxu0 %v959
      %981 = vmatprep.subr.bf16.mxu0 0
      %982 = vmatpush1.bf16.msra.mxu0 %v960
      %983 = vmatprep.subr.bf16.mxu0 0
      %984 = vmatpush1.bf16.msra.mxu0 %v961
      %985 = vmatprep.subr.bf16.mxu0 0
      %986 = vmatpush1.bf16.msra.mxu0 %v962
      %987 = vmatprep.subr.bf16.mxu0 0
      %988 = vmatpush1.bf16.msra.mxu0 0
      %989 = vmatprep.subr.bf16.mxu0 0
      %990 = vmatpush1.bf16.msra.mxu0 0
      %991 = vmatprep.subr.bf16.mxu0 0
      %992 = vmatpush1.bf16.msra.mxu0 0
      %993 = vmatprep.subr.bf16.mxu0 0
      %994 = vmatpush1.bf16.msra.mxu0 0
      %995 = vmatprep.subr.bf16.mxu0 0
      %996 = vmatpush1.bf16.msra.mxu0 0
      %997 = vmatprep.subr.bf16.mxu0 0
      %998 = vmatpush1.bf16.msra.mxu0 0
      %999 = vmatprep.subr.bf16.mxu0 0
      %1000 = vmatpush1.bf16.msra.mxu0 0
      %1001 = vmatprep.subr.bf16.mxu0 0
      %1002 = vmatpush1.bf16.msra.mxu0 0
      %1003 = vmatprep.mubr.bf16.mxu0 0
      %1004 = vmatmul.mubr.bf16.gmra.mrb[0].mxu0 %v745
      %v1005 = vpop.f32.mrb[0].mxu0
      %v1006 = vadd.f32 0.0, %v1005
      %v1007 = vpop.f32.mrb[0].mxu0
      %v1008 = vpop.f32.mrb[0].mxu0
      %v1009 = vadd.f32 0.0, %v1008
      %v1010 = vpop.f32.mrb[0].mxu0
      %1011 = vmatprep.mubr.bf16.mxu0 0
      %1012 = vmatmul.mubr.bf16.gmra.mrb[0].mxu0 %v746
      %v1013 = vpop.f32.mrb[0].mxu0
      %v1014 = vadd.f32 0.0, %v1013
      %v1015 = vpop.f32.mrb[0].mxu0
      %v1016 = vpop.f32.mrb[0].mxu0
      %v1017 = vadd.f32 0.0, %v1016
      %v1018 = vpop.f32.mrb[0].mxu0
      %1019 = vmatprep.mubr.bf16.mxu0 0
      %1020 = vmatmul.mubr.bf16.gmra.mrb[0].mxu0 %v747
      %v1021 = vpop.f32.mrb[0].mxu0
      %v1022 = vadd.f32 0.0, %v1021
      %v1023 = vpop.f32.mrb[0].mxu0
      %v1024 = vpop.f32.mrb[0].mxu0
      %v1025 = vadd.f32 0.0, %v1024
      %v1026 = vpop.f32.mrb[0].mxu0
      %1027 = vmatprep.mubr.bf16.mxu0 0
      %1028 = vmatmul.mubr.bf16.gmra.mrb[0].mxu0 %v748
      %v1029 = vpop.f32.mrb[0].mxu0
      %v1030 = vadd.f32 0.0, %v1029
      %v1031 = vpop.f32.mrb[0].mxu0
      %v1032 = vpop.f32.mrb[0].mxu0
      %v1033 = vadd.f32 0.0, %v1032
      %v1034 = vpop.f32.mrb[0].mxu0
      %1035 = vmatprep.mubr.bf16.mxu0 0
      %1036 = vmatmul.mubr.bf16.gmra.mrb[0].mxu0 %v749
      %v1037 = vpop.f32.mrb[0].mxu0
      %v1038 = vadd.f32 0.0, %v1037
      %v1039 = vpop.f32.mrb[0].mxu0
      %v1040 = vpop.f32.mrb[0].mxu0
      %v1041 = vadd.f32 0.0, %v1040
      %v1042 = vpop.f32.mrb[0].mxu0
      %1043 = vmatprep.mubr.bf16.mxu0 0
      %1044 = vmatmul.mubr.bf16.gmra.mrb[0].mxu0 %v750
      %v1045 = vpop.f32.mrb[0].mxu0
      %v1046 = vadd.f32 0.0, %v1045
      %v1047 = vpop.f32.mrb[0].mxu0
      %v1048 = vpop.f32.mrb[0].mxu0
      %v1049 = vadd.f32 0.0, %v1048
      %v1050 = vpop.f32.mrb[0].mxu0
      %1051 = vmatprep.mubr.bf16.mxu0 0
      %1052 = vmatmul.mubr.bf16.gmra.mrb[0].mxu0 %v751
      %v1053 = vpop.f32.mrb[0].mxu0
      %v1054 = vadd.f32 0.0, %v1053
      %v1055 = vpop.f32.mrb[0].mxu0
      %v1056 = vpop.f32.mrb[0].mxu0
      %v1057 = vadd.f32 0.0, %v1056
      %v1058 = vpop.f32.mrb[0].mxu0
      %1059 = vmatprep.mubr.bf16.mxu0 0
      %1060 = vmatmul.mubr.bf16.gmra.mrb[0].mxu0 %v752
      %v1061 = vpop.f32.mrb[0].mxu0
      %v1062 = vadd.f32 0.0, %v1061
      %v1063 = vpop.f32.mrb[0].mxu0
      %v1064 = vpop.f32.mrb[0].mxu0
      %v1065 = vadd.f32 0.0, %v1064
      %v1066 = vpop.f32.mrb[0].mxu0
      %1067 = vdwg.mxu0
      %vm1068 = vcmp.eq.s32.totalorder %v665, 1
      %vm1069 = vcmp.eq.s32.totalorder %v666, 1
      %vm1070 = vcmp.eq.s32.totalorder %v667, 1
      %vm1071 = vcmp.eq.s32.totalorder %v668, 1
      %vm1072 = vcmp.eq.s32.totalorder %v669, 1
      %vm1073 = vcmp.eq.s32.totalorder %v670, 1
      %vm1074 = vcmp.eq.s32.totalorder %v671, 1
      %vm1075 = vcmp.eq.s32.totalorder %v672, 1
      %vm1076 = vcmp.eq.s32.totalorder %v673, 1
      %vm1077 = vcmp.eq.s32.totalorder %v674, 1
      %vm1078 = vcmp.eq.s32.totalorder %v675, 1
      %vm1079 = vcmp.eq.s32.totalorder %v676, 1
      %vm1080 = vcmp.eq.s32.totalorder %v677, 1
      %vm1081 = vcmp.eq.s32.totalorder %v678, 1
      %vm1082 = vcmp.eq.s32.totalorder %v679, 1
      %vm1083 = vcmp.eq.s32.totalorder %v680, 1
      %v1084 = vsel %vm1068, 1, 0
      %v1085 = vsel %vm1069, 1, 0
      %v1086 = vsel %vm1070, 1, 0
      %v1087 = vsel %vm1071, 1, 0
      %v1088 = vsel %vm1072, 1, 0
      %v1089 = vsel %vm1073, 1, 0
      %v1090 = vsel %vm1074, 1, 0
      %v1091 = vsel %vm1075, 1, 0
      %v1092 = vsel %vm1076, 1, 0
      %v1093 = vsel %vm1077, 1, 0
      %v1094 = vsel %vm1078, 1, 0
      %v1095 = vsel %vm1079, 1, 0
      %v1096 = vsel %vm1080, 1, 0
      %v1097 = vsel %vm1081, 1, 0
      %v1098 = vsel %vm1082, 1, 0
      %v1099 = vsel %vm1083, 1, 0
      %vm1100 = vcmp.eq.s32.totalorder %v1084, 1
      %vm1101 = vcmp.eq.s32.totalorder %v1085, 1
      %vm1102 = vcmp.eq.s32.totalorder %v1086, 1
      %vm1103 = vcmp.eq.s32.totalorder %v1087, 1
      %vm1104 = vcmp.eq.s32.totalorder %v1088, 1
      %vm1105 = vcmp.eq.s32.totalorder %v1089, 1
      %vm1106 = vcmp.eq.s32.totalorder %v1090, 1
      %vm1107 = vcmp.eq.s32.totalorder %v1091, 1
      %vm1108 = vcmp.eq.s32.totalorder %v1092, 1
      %vm1109 = vcmp.eq.s32.totalorder %v1093, 1
      %vm1110 = vcmp.eq.s32.totalorder %v1094, 1
      %vm1111 = vcmp.eq.s32.totalorder %v1095, 1
      %vm1112 = vcmp.eq.s32.totalorder %v1096, 1
      %vm1113 = vcmp.eq.s32.totalorder %v1097, 1
      %vm1114 = vcmp.eq.s32.totalorder %v1098, 1
      %vm1115 = vcmp.eq.s32.totalorder %v1099, 1
      %v1116 = vsel %vm1100, %v1006, %v844
      %v1117 = vsel %vm1101, %v1009, %v847
      %v1118 = vsel %vm1102, %v1014, %v852
      %v1119 = vsel %vm1103, %v1017, %v855
      %v1120 = vsel %vm1104, %v1022, %v860
      %v1121 = vsel %vm1105, %v1025, %v863
      %v1122 = vsel %vm1106, %v1030, %v868
      %v1123 = vsel %vm1107, %v1033, %v871
      %v1124 = vsel %vm1108, %v1038, %v876
      %v1125 = vsel %vm1109, %v1041, %v879
      %v1126 = vsel %vm1110, %v1046, %v884
      %v1127 = vsel %vm1111, %v1049, %v887
      %v1128 = vsel %vm1112, %v1054, %v892
      %v1129 = vsel %vm1113, %v1057, %v895
      %v1130 = vsel %vm1114, %v1062, %v900
      %v1131 = vsel %vm1115, %v1065, %v903
      %v1133 = vlaneseq
      %v1134 = vshrl.u32 %v1133, 7
      %v1135 = vsub.s32 0, %v1134
      %v1136 = vrot.slane %v471, %v1135
      %v1138 = vadd.f32 %v1116, %v1136
      %v1139 = vadd.f32 %v1117, %v1136
      %v1140 = vadd.f32 %v1118, %v1136
      %v1141 = vadd.f32 %v1119, %v1136
      %v1142 = vadd.f32 %v1120, %v1136
      %v1143 = vadd.f32 %v1121, %v1136
      %v1144 = vadd.f32 %v1122, %v1136
      %v1145 = vadd.f32 %v1123, %v1136
      %v1146 = vadd.f32 %v1124, %v1136
      %v1147 = vadd.f32 %v1125, %v1136
      %v1148 = vadd.f32 %v1126, %v1136
      %v1149 = vadd.f32 %v1127, %v1136
      %v1150 = vadd.f32 %v1128, %v1136
      %v1151 = vadd.f32 %v1129, %v1136
      %v1152 = vadd.f32 %v1130, %v1136
      %v1153 = vadd.f32 %v1131, %v1136
      %v1154 = vpack.c.bf16 %v1139, %v1138
      %v1155 = vpack.c.bf16 %v1141, %v1140
      %v1156 = vpack.c.bf16 %v1143, %v1142
      %v1157 = vpack.c.bf16 %v1145, %v1144
      %v1158 = vpack.c.bf16 %v1147, %v1146
      %v1159 = vpack.c.bf16 %v1149, %v1148
      %v1160 = vpack.c.bf16 %v1151, %v1150
      %v1161 = vpack.c.bf16 %v1153, %v1152
      %1162 = vst [vmem:[#allocation2] sm:$0xff] %v1154
      %1163 = vst [vmem:[#allocation2 + $0x20] sm:$0xff] %v1155
      %1164 = vst [vmem:[#allocation2 + $0x40] sm:$0xff] %v1156
      %1165 = vst [vmem:[#allocation2 + $0x60] sm:$0xff] %v1157
      %1166 = vst [vmem:[#allocation2 + $0x80] sm:$0xff] %v1158
      %1167 = vst [vmem:[#allocation2 + $0xa0] sm:$0xff] %v1159
      %1168 = vst [vmem:[#allocation2 + $0xc0] sm:$0xff] %v1160
      %1169 = vst [vmem:[#allocation2 + $0xe0] sm:$0xff] %v1161
      %s1170 = scalar_lea.vmem %s2, 128
      %v1171 = vld [vmem:[%s1170] sm:$0xf]
      %v1172 = vld [vmem:[%s1170 + $0x4] sm:$0xf]
      %v1173 = vld [vmem:[%s1170 + $0x8] sm:$0xf]
      %v1174 = vld [vmem:[%s1170 + $0xc] sm:$0xf]
      %v1175 = vld [vmem:[%s1170 + $0x10] sm:$0xf]
      %v1176 = vld [vmem:[%s1170 + $0x14] sm:$0xf]
      %v1177 = vld [vmem:[%s1170 + $0x18] sm:$0xf]
      %v1178 = vld [vmem:[%s1170 + $0x1c] sm:$0xf]
      %v1179 = vld [vmem:[%s1170 + $0x20] sm:$0xf]
      %v1180 = vld [vmem:[%s1170 + $0x24] sm:$0xf]
      %v1181 = vld [vmem:[%s1170 + $0x28] sm:$0xf]
      %v1182 = vld [vmem:[%s1170 + $0x2c] sm:$0xf]
      %v1183 = vld [vmem:[%s1170 + $0x30] sm:$0xf]
      %v1184 = vld [vmem:[%s1170 + $0x34] sm:$0xf]
      %v1185 = vld [vmem:[%s1170 + $0x38] sm:$0xf]
      %v1186 = vld [vmem:[%s1170 + $0x3c] sm:$0xf]
      %v1203 = vunpack.c.l.b16 %v1171
      %v1204 = vunpack.c.l.b16 %v1172
      %v1205 = vunpack.c.l.b16 %v1173
      %v1206 = vunpack.c.l.b16 %v1174
      %v1207 = vunpack.c.l.b16 %v1175
      %v1208 = vunpack.c.l.b16 %v1176
      %v1209 = vunpack.c.l.b16 %v1177
      %v1210 = vunpack.c.l.b16 %v1178
      %v1211 = vunpack.c.l.b16 %v1179
      %v1212 = vunpack.c.l.b16 %v1180
      %v1213 = vunpack.c.l.b16 %v1181
      %v1214 = vunpack.c.l.b16 %v1182
      %v1215 = vunpack.c.l.b16 %v1183
      %v1216 = vunpack.c.l.b16 %v1184
      %v1217 = vunpack.c.l.b16 %v1185
      %v1218 = vunpack.c.l.b16 %v1186
      %v1219 = vpack.c.b16 %v1204, %v1203
      %v1220 = vpack.c.b16 %v1206, %v1205
      %v1221 = vpack.c.b16 %v1208, %v1207
      %v1222 = vpack.c.b16 %v1210, %v1209
      %v1223 = vpack.c.b16 %v1212, %v1211
      %v1224 = vpack.c.b16 %v1214, %v1213
      %v1225 = vpack.c.b16 %v1216, %v1215
      %v1226 = vpack.c.b16 %v1218, %v1217
      %1235 = vmatprep.subr.bf16.mxu0 0
      %1236 = vmatpush1.bf16.msra.mxu0 %v1219
      %1237 = vmatprep.subr.bf16.mxu0 0
      %1238 = vmatpush1.bf16.msra.mxu0 %v1220
      %1239 = vmatprep.subr.bf16.mxu0 0
      %1240 = vmatpush1.bf16.msra.mxu0 %v1221
      %1241 = vmatprep.subr.bf16.mxu0 0
      %1242 = vmatpush1.bf16.msra.mxu0 %v1222
      %1243 = vmatprep.subr.bf16.mxu0 0
      %1244 = vmatpush1.bf16.msra.mxu0 %v1223
      %1245 = vmatprep.subr.bf16.mxu0 0
      %1246 = vmatpush1.bf16.msra.mxu0 %v1224
      %1247 = vmatprep.subr.bf16.mxu0 0
      %1248 = vmatpush1.bf16.msra.mxu0 %v1225
      %1249 = vmatprep.subr.bf16.mxu0 0
      %1250 = vmatpush1.bf16.msra.mxu0 %v1226
      %1251 = vmatprep.subr.bf16.mxu0 0
      %1252 = vmatpush1.bf16.msra.mxu0 0
      %1253 = vmatprep.subr.bf16.mxu0 0
      %1254 = vmatpush1.bf16.msra.mxu0 0
      %1255 = vmatprep.subr.bf16.mxu0 0
      %1256 = vmatpush1.bf16.msra.mxu0 0
      %1257 = vmatprep.subr.bf16.mxu0 0
      %1258 = vmatpush1.bf16.msra.mxu0 0
      %1259 = vmatprep.subr.bf16.mxu0 0
      %1260 = vmatpush1.bf16.msra.mxu0 0
      %1261 = vmatprep.subr.bf16.mxu0 0
      %1262 = vmatpush1.bf16.msra.mxu0 0
      %1263 = vmatprep.subr.bf16.mxu0 0
      %1264 = vmatpush1.bf16.msra.mxu0 0
      %1265 = vmatprep.subr.bf16.mxu0 0
      %1266 = vmatpush1.bf16.msra.mxu0 0
      %1267 = vmatprep.mubr.bf16.mxu0 0
      %1268 = vmatmul.mubr.bf16.gmra.mrb[0].mxu0 %v745
      %v1269 = vpop.f32.mrb[0].mxu0
      %v1270 = vadd.f32 0.0, %v1269
      %v1271 = vpop.f32.mrb[0].mxu0
      %v1272 = vpop.f32.mrb[0].mxu0
      %v1273 = vadd.f32 0.0, %v1272
      %v1274 = vpop.f32.mrb[0].mxu0
      %1275 = vmatprep.mubr.bf16.mxu0 0
      %1276 = vmatmul.mubr.bf16.gmra.mrb[0].mxu0 %v746
      %v1277 = vpop.f32.mrb[0].mxu0
      %v1278 = vadd.f32 0.0, %v1277
      %v1279 = vpop.f32.mrb[0].mxu0
      %v1280 = vpop.f32.mrb[0].mxu0
      %v1281 = vadd.f32 0.0, %v1280
      %v1282 = vpop.f32.mrb[0].mxu0
      %1283 = vmatprep.mubr.bf16.mxu0 0
      %1284 = vmatmul.mubr.bf16.gmra.mrb[0].mxu0 %v747
      %v1285 = vpop.f32.mrb[0].mxu0
      %v1286 = vadd.f32 0.0, %v1285
      %v1287 = vpop.f32.mrb[0].mxu0
      %v1288 = vpop.f32.mrb[0].mxu0
      %v1289 = vadd.f32 0.0, %v1288
      %v1290 = vpop.f32.mrb[0].mxu0
      %1291 = vmatprep.mubr.bf16.mxu0 0
      %1292 = vmatmul.mubr.bf16.gmra.mrb[0].mxu0 %v748
      %v1293 = vpop.f32.mrb[0].mxu0
      %v1294 = vadd.f32 0.0, %v1293
      %v1295 = vpop.f32.mrb[0].mxu0
      %v1296 = vpop.f32.mrb[0].mxu0
      %v1297 = vadd.f32 0.0, %v1296
      %v1298 = vpop.f32.mrb[0].mxu0
      %1299 = vmatprep.mubr.bf16.mxu0 0
      %1300 = vmatmul.mubr.bf16.gmra.mrb[0].mxu0 %v749
      %v1301 = vpop.f32.mrb[0].mxu0
      %v1302 = vadd.f32 0.0, %v1301
      %v1303 = vpop.f32.mrb[0].mxu0
      %v1304 = vpop.f32.mrb[0].mxu0
      %v1305 = vadd.f32 0.0, %v1304
      %v1306 = vpop.f32.mrb[0].mxu0
      %1307 = vmatprep.mubr.bf16.mxu0 0
      %1308 = vmatmul.mubr.bf16.gmra.mrb[0].mxu0 %v750
      %v1309 = vpop.f32.mrb[0].mxu0
      %v1310 = vadd.f32 0.0, %v1309
      %v1311 = vpop.f32.mrb[0].mxu0
      %v1312 = vpop.f32.mrb[0].mxu0
      %v1313 = vadd.f32 0.0, %v1312
      %v1314 = vpop.f32.mrb[0].mxu0
      %1315 = vmatprep.mubr.bf16.mxu0 0
      %1316 = vmatmul.mubr.bf16.gmra.mrb[0].mxu0 %v751
      %v1317 = vpop.f32.mrb[0].mxu0
      %v1318 = vadd.f32 0.0, %v1317
      %v1319 = vpop.f32.mrb[0].mxu0
      %v1320 = vpop.f32.mrb[0].mxu0
      %v1321 = vadd.f32 0.0, %v1320
      %v1322 = vpop.f32.mrb[0].mxu0
      %1323 = vmatprep.mubr.bf16.mxu0 0
      %1324 = vmatmul.mubr.bf16.gmra.mrb[0].mxu0 %v752
      %v1325 = vpop.f32.mrb[0].mxu0
      %v1326 = vadd.f32 0.0, %v1325
      %v1327 = vpop.f32.mrb[0].mxu0
      %v1328 = vpop.f32.mrb[0].mxu0
      %v1329 = vadd.f32 0.0, %v1328
      %v1330 = vpop.f32.mrb[0].mxu0
      %1331 = vdwg.mxu0
      %s1332 = scalar_lea.vmem %s2, 192
      %v1333 = vld [vmem:[%s1332] sm:$0xf]
      %v1334 = vld [vmem:[%s1332 + $0x4] sm:$0xf]
      %v1335 = vld [vmem:[%s1332 + $0x8] sm:$0xf]
      %v1336 = vld [vmem:[%s1332 + $0xc] sm:$0xf]
      %v1337 = vld [vmem:[%s1332 + $0x10] sm:$0xf]
      %v1338 = vld [vmem:[%s1332 + $0x14] sm:$0xf]
      %v1339 = vld [vmem:[%s1332 + $0x18] sm:$0xf]
      %v1340 = vld [vmem:[%s1332 + $0x1c] sm:$0xf]
      %v1341 = vld [vmem:[%s1332 + $0x20] sm:$0xf]
      %v1342 = vld [vmem:[%s1332 + $0x24] sm:$0xf]
      %v1343 = vld [vmem:[%s1332 + $0x28] sm:$0xf]
      %v1344 = vld [vmem:[%s1332 + $0x2c] sm:$0xf]
      %v1345 = vld [vmem:[%s1332 + $0x30] sm:$0xf]
      %v1346 = vld [vmem:[%s1332 + $0x34] sm:$0xf]
      %v1347 = vld [vmem:[%s1332 + $0x38] sm:$0xf]
      %v1348 = vld [vmem:[%s1332 + $0x3c] sm:$0xf]
      %v1365 = vunpack.c.l.b16 %v1333
      %v1366 = vunpack.c.l.b16 %v1334
      %v1367 = vunpack.c.l.b16 %v1335
      %v1368 = vunpack.c.l.b16 %v1336
      %v1369 = vunpack.c.l.b16 %v1337
      %v1370 = vunpack.c.l.b16 %v1338
      %v1371 = vunpack.c.l.b16 %v1339
      %v1372 = vunpack.c.l.b16 %v1340
      %v1373 = vunpack.c.l.b16 %v1341
      %v1374 = vunpack.c.l.b16 %v1342
      %v1375 = vunpack.c.l.b16 %v1343
      %v1376 = vunpack.c.l.b16 %v1344
      %v1377 = vunpack.c.l.b16 %v1345
      %v1378 = vunpack.c.l.b16 %v1346
      %v1379 = vunpack.c.l.b16 %v1347
      %v1380 = vunpack.c.l.b16 %v1348
      %v1381 = vpack.c.b16 %v1366, %v1365
      %v1382 = vpack.c.b16 %v1368, %v1367
      %v1383 = vpack.c.b16 %v1370, %v1369
      %v1384 = vpack.c.b16 %v1372, %v1371
      %v1385 = vpack.c.b16 %v1374, %v1373
      %v1386 = vpack.c.b16 %v1376, %v1375
      %v1387 = vpack.c.b16 %v1378, %v1377
      %v1388 = vpack.c.b16 %v1380, %v1379
      %1397 = vmatprep.subr.bf16.mxu0 0
      %1398 = vmatpush1.bf16.msra.mxu0 %v1381
      %1399 = vmatprep.subr.bf16.mxu0 0
      %1400 = vmatpush1.bf16.msra.mxu0 %v1382
      %1401 = vmatprep.subr.bf16.mxu0 0
      %1402 = vmatpush1.bf16.msra.mxu0 %v1383
      %1403 = vmatprep.subr.bf16.mxu0 0
      %1404 = vmatpush1.bf16.msra.mxu0 %v1384
      %1405 = vmatprep.subr.bf16.mxu0 0
      %1406 = vmatpush1.bf16.msra.mxu0 %v1385
      %1407 = vmatprep.subr.bf16.mxu0 0
      %1408 = vmatpush1.bf16.msra.mxu0 %v1386
      %1409 = vmatprep.subr.bf16.mxu0 0
      %1410 = vmatpush1.bf16.msra.mxu0 %v1387
      %1411 = vmatprep.subr.bf16.mxu0 0
      %1412 = vmatpush1.bf16.msra.mxu0 %v1388
      %1413 = vmatprep.subr.bf16.mxu0 0
      %1414 = vmatpush1.bf16.msra.mxu0 0
      %1415 = vmatprep.subr.bf16.mxu0 0
      %1416 = vmatpush1.bf16.msra.mxu0 0
      %1417 = vmatprep.subr.bf16.mxu0 0
      %1418 = vmatpush1.bf16.msra.mxu0 0
      %1419 = vmatprep.subr.bf16.mxu0 0
      %1420 = vmatpush1.bf16.msra.mxu0 0
      %1421 = vmatprep.subr.bf16.mxu0 0
      %1422 = vmatpush1.bf16.msra.mxu0 0
      %1423 = vmatprep.subr.bf16.mxu0 0
      %1424 = vmatpush1.bf16.msra.mxu0 0
      %1425 = vmatprep.subr.bf16.mxu0 0
      %1426 = vmatpush1.bf16.msra.mxu0 0
      %1427 = vmatprep.subr.bf16.mxu0 0
      %1428 = vmatpush1.bf16.msra.mxu0 0
      %1429 = vmatprep.mubr.bf16.mxu0 0
      %1430 = vmatmul.mubr.bf16.gmra.mrb[0].mxu0 %v745
      %v1431 = vpop.f32.mrb[0].mxu0
      %v1432 = vadd.f32 0.0, %v1431
      %v1433 = vpop.f32.mrb[0].mxu0
      %v1434 = vpop.f32.mrb[0].mxu0
      %v1435 = vadd.f32 0.0, %v1434
      %v1436 = vpop.f32.mrb[0].mxu0
      %1437 = vmatprep.mubr.bf16.mxu0 0
      %1438 = vmatmul.mubr.bf16.gmra.mrb[0].mxu0 %v746
      %v1439 = vpop.f32.mrb[0].mxu0
      %v1440 = vadd.f32 0.0, %v1439
      %v1441 = vpop.f32.mrb[0].mxu0
      %v1442 = vpop.f32.mrb[0].mxu0
      %v1443 = vadd.f32 0.0, %v1442
      %v1444 = vpop.f32.mrb[0].mxu0
      %1445 = vmatprep.mubr.bf16.mxu0 0
      %1446 = vmatmul.mubr.bf16.gmra.mrb[0].mxu0 %v747
      %v1447 = vpop.f32.mrb[0].mxu0
      %v1448 = vadd.f32 0.0, %v1447
      %v1449 = vpop.f32.mrb[0].mxu0
      %v1450 = vpop.f32.mrb[0].mxu0
      %v1451 = vadd.f32 0.0, %v1450
      %v1452 = vpop.f32.mrb[0].mxu0
      %1453 = vmatprep.mubr.bf16.mxu0 0
      %1454 = vmatmul.mubr.bf16.gmra.mrb[0].mxu0 %v748
      %v1455 = vpop.f32.mrb[0].mxu0
      %v1456 = vadd.f32 0.0, %v1455
      %v1457 = vpop.f32.mrb[0].mxu0
      %v1458 = vpop.f32.mrb[0].mxu0
      %v1459 = vadd.f32 0.0, %v1458
      %v1460 = vpop.f32.mrb[0].mxu0
      %1461 = vmatprep.mubr.bf16.mxu0 0
      %1462 = vmatmul.mubr.bf16.gmra.mrb[0].mxu0 %v749
      %v1463 = vpop.f32.mrb[0].mxu0
      %v1464 = vadd.f32 0.0, %v1463
      %v1465 = vpop.f32.mrb[0].mxu0
      %v1466 = vpop.f32.mrb[0].mxu0
      %v1467 = vadd.f32 0.0, %v1466
      %v1468 = vpop.f32.mrb[0].mxu0
      %1469 = vmatprep.mubr.bf16.mxu0 0
      %1470 = vmatmul.mubr.bf16.gmra.mrb[0].mxu0 %v750
      %v1471 = vpop.f32.mrb[0].mxu0
      %v1472 = vadd.f32 0.0, %v1471
      %v1473 = vpop.f32.mrb[0].mxu0
      %v1474 = vpop.f32.mrb[0].mxu0
      %v1475 = vadd.f32 0.0, %v1474
      %v1476 = vpop.f32.mrb[0].mxu0
      %1477 = vmatprep.mubr.bf16.mxu0 0
      %1478 = vmatmul.mubr.bf16.gmra.mrb[0].mxu0 %v751
      %v1479 = vpop.f32.mrb[0].mxu0
      %v1480 = vadd.f32 0.0, %v1479
      %v1481 = vpop.f32.mrb[0].mxu0
      %v1482 = vpop.f32.mrb[0].mxu0
      %v1483 = vadd.f32 0.0, %v1482
      %v1484 = vpop.f32.mrb[0].mxu0
      %1485 = vmatprep.mubr.bf16.mxu0 0
      %1486 = vmatmul.mubr.bf16.gmra.mrb[0].mxu0 %v752
      %v1487 = vpop.f32.mrb[0].mxu0
      %v1488 = vadd.f32 0.0, %v1487
      %v1489 = vpop.f32.mrb[0].mxu0
      %v1490 = vpop.f32.mrb[0].mxu0
      %v1491 = vadd.f32 0.0, %v1490
      %v1492 = vpop.f32.mrb[0].mxu0
      %1493 = vdwg.mxu0
      %v1494 = vsel %vm1100, %v1432, %v1270
      %v1495 = vsel %vm1101, %v1435, %v1273
      %v1496 = vsel %vm1102, %v1440, %v1278
      %v1497 = vsel %vm1103, %v1443, %v1281
      %v1498 = vsel %vm1104, %v1448, %v1286
      %v1499 = vsel %vm1105, %v1451, %v1289
      %v1500 = vsel %vm1106, %v1456, %v1294
      %v1501 = vsel %vm1107, %v1459, %v1297
      %v1502 = vsel %vm1108, %v1464, %v1302
      %v1503 = vsel %vm1109, %v1467, %v1305
      %v1504 = vsel %vm1110, %v1472, %v1310
      %v1505 = vsel %vm1111, %v1475, %v1313
      %v1506 = vsel %vm1112, %v1480, %v1318
      %v1507 = vsel %vm1113, %v1483, %v1321
      %v1508 = vsel %vm1114, %v1488, %v1326
      %v1509 = vsel %vm1115, %v1491, %v1329
      %v1510 = vadd.f32 %v1494, %v1136
      %v1511 = vadd.f32 %v1495, %v1136
      %v1512 = vadd.f32 %v1496, %v1136
      %v1513 = vadd.f32 %v1497, %v1136
      %v1514 = vadd.f32 %v1498, %v1136
      %v1515 = vadd.f32 %v1499, %v1136
      %v1516 = vadd.f32 %v1500, %v1136
      %v1517 = vadd.f32 %v1501, %v1136
      %v1518 = vadd.f32 %v1502, %v1136
      %v1519 = vadd.f32 %v1503, %v1136
      %v1520 = vadd.f32 %v1504, %v1136
      %v1521 = vadd.f32 %v1505, %v1136
      %v1522 = vadd.f32 %v1506, %v1136
      %v1523 = vadd.f32 %v1507, %v1136
      %v1524 = vadd.f32 %v1508, %v1136
      %v1525 = vadd.f32 %v1509, %v1136
      %v1526 = vpack.c.bf16 %v1511, %v1510
      %v1527 = vpack.c.bf16 %v1513, %v1512
      %v1528 = vpack.c.bf16 %v1515, %v1514
      %v1529 = vpack.c.bf16 %v1517, %v1516
      %v1530 = vpack.c.bf16 %v1519, %v1518
      %v1531 = vpack.c.bf16 %v1521, %v1520
      %v1532 = vpack.c.bf16 %v1523, %v1522
      %v1533 = vpack.c.bf16 %v1525, %v1524
      %1534 = vst [vmem:[#allocation2 + $0x10] sm:$0xff] %v1526
      %1535 = vst [vmem:[#allocation2 + $0x30] sm:$0xff] %v1527
      %1536 = vst [vmem:[#allocation2 + $0x50] sm:$0xff] %v1528
      %1537 = vst [vmem:[#allocation2 + $0x70] sm:$0xff] %v1529
      %1538 = vst [vmem:[#allocation2 + $0x90] sm:$0xff] %v1530
      %1539 = vst [vmem:[#allocation2 + $0xb0] sm:$0xff] %v1531
      %1540 = vst [vmem:[#allocation2 + $0xd0] sm:$0xff] %v1532
      %1541 = vst [vmem:[#allocation2 + $0xf0] sm:$0xff] %v1533
      %v1542 = vld [vmem:[%s5] sm:$0x1]
      %v1543 = vld [vmem:[#allocation2] sm:$0xff]
      %v1544 = vld [vmem:[#allocation2 + $0x8] sm:$0xff]
      %v1545 = vld [vmem:[#allocation2 + $0x10] sm:$0xff]
      %v1546 = vld [vmem:[#allocation2 + $0x18] sm:$0xff]
      %v1547 = vld [vmem:[#allocation2 + $0x20] sm:$0xff]
      %v1548 = vld [vmem:[#allocation2 + $0x28] sm:$0xff]
      %v1549 = vld [vmem:[#allocation2 + $0x30] sm:$0xff]
      %v1550 = vld [vmem:[#allocation2 + $0x38] sm:$0xff]
      %v1551 = vld [vmem:[#allocation2 + $0x40] sm:$0xff]
      %v1552 = vld [vmem:[#allocation2 + $0x48] sm:$0xff]
      %v1553 = vld [vmem:[#allocation2 + $0x50] sm:$0xff]
      %v1554 = vld [vmem:[#allocation2 + $0x58] sm:$0xff]
      %v1555 = vld [vmem:[#allocation2 + $0x60] sm:$0xff]
      %v1556 = vld [vmem:[#allocation2 + $0x68] sm:$0xff]
      %v1557 = vld [vmem:[#allocation2 + $0x70] sm:$0xff]
      %v1558 = vld [vmem:[#allocation2 + $0x78] sm:$0xff]
      %v1559 = vld [vmem:[#allocation2 + $0x80] sm:$0xff]
      %v1560 = vld [vmem:[#allocation2 + $0x88] sm:$0xff]
      %v1561 = vld [vmem:[#allocation2 + $0x90] sm:$0xff]
      %v1562 = vld [vmem:[#allocation2 + $0x98] sm:$0xff]
      %v1563 = vld [vmem:[#allocation2 + $0xa0] sm:$0xff]
      %v1564 = vld [vmem:[#allocation2 + $0xa8] sm:$0xff]
      %v1565 = vld [vmem:[#allocation2 + $0xb0] sm:$0xff]
      %v1566 = vld [vmem:[#allocation2 + $0xb8] sm:$0xff]
      %v1567 = vld [vmem:[#allocation2 + $0xc0] sm:$0xff]
      %v1568 = vld [vmem:[#allocation2 + $0xc8] sm:$0xff]
      %v1569 = vld [vmem:[#allocation2 + $0xd0] sm:$0x7f]
      %v1570 = vld [vmem:[#allocation2 + $0xd8] sm:$0x7f]
      %v1571 = vld [vmem:[%s4] sm:$0xf]
      %v1572 = vld [vmem:[%s4 + $0x4] sm:$0xf]
      %v1573 = vld [vmem:[%s4 + $0x8] sm:$0xf]
      %v1574 = vld [vmem:[%s4 + $0xc] sm:$0xf]
      %v1575 = vld [vmem:[%s4 + $0x10] sm:$0xf]
      %v1576 = vld [vmem:[%s4 + $0x14] sm:$0xf]
      %v1577 = vld [vmem:[%s4 + $0x18] sm:$0xf]
      %v1578 = vld [vmem:[%s4 + $0x1c] sm:$0xf]
      %v1579 = vld [vmem:[%s4 + $0x20] sm:$0xf]
      %v1580 = vld [vmem:[%s4 + $0x24] sm:$0xf]
      %v1581 = vld [vmem:[%s4 + $0x28] sm:$0xf]
      %v1582 = vld [vmem:[%s4 + $0x2c] sm:$0xf]
      %v1583 = vld [vmem:[%s4 + $0x30] sm:$0xf]
      %v1584 = vld [vmem:[%s4 + $0x34] sm:$0xf]
      %v1585 = vld [vmem:[%s4 + $0x38] sm:$0xf]
      %v1586 = vld [vmem:[%s4 + $0x3c] sm:$0xf]
      %v1587 = vld [vmem:[%s4 + $0x40] sm:$0xf]
      %v1588 = vld [vmem:[%s4 + $0x44] sm:$0xf]
      %v1589 = vld [vmem:[%s4 + $0x48] sm:$0xf]
      %v1590 = vld [vmem:[%s4 + $0x4c] sm:$0xf]
      %v1591 = vld [vmem:[%s4 + $0x50] sm:$0xf]
      %v1592 = vld [vmem:[%s4 + $0x54] sm:$0xf]
      %v1593 = vld [vmem:[%s4 + $0x58] sm:$0xf]
      %v1594 = vld [vmem:[%s4 + $0x5c] sm:$0xf]
      %v1595 = vld [vmem:[%s4 + $0x60] sm:$0xf]
      %v1596 = vld [vmem:[%s4 + $0x64] sm:$0xf]
      %v1597 = vld [vmem:[%s4 + $0x68] sm:$0xf]
      %v1598 = vld [vmem:[%s4 + $0x6c] sm:$0xf]
      %v1599 = vld [vmem:[%s4 + $0x70] sm:$0xf]
      %v1600 = vld [vmem:[%s4 + $0x74] sm:$0xf]
      %v1601 = vld [vmem:[%s4 + $0x78] sm:$0xf]
      %v1602 = vld [vmem:[%s4 + $0x7c] sm:$0xf]
      %v1635 = vunpack.c.l.b16 %v1571
      %v1636 = vunpack.c.l.b16 %v1572
      %v1637 = vunpack.c.l.b16 %v1573
      %v1638 = vunpack.c.l.b16 %v1574
      %v1639 = vunpack.c.l.b16 %v1575
      %v1640 = vunpack.c.l.b16 %v1576
      %v1641 = vunpack.c.l.b16 %v1577
      %v1642 = vunpack.c.l.b16 %v1578
      %v1643 = vunpack.c.l.b16 %v1579
      %v1644 = vunpack.c.l.b16 %v1580
      %v1645 = vunpack.c.l.b16 %v1581
      %v1646 = vunpack.c.l.b16 %v1582
      %v1647 = vunpack.c.l.b16 %v1583
      %v1648 = vunpack.c.l.b16 %v1584
      %v1649 = vunpack.c.l.b16 %v1585
      %v1650 = vunpack.c.l.b16 %v1586
      %v1651 = vunpack.c.l.b16 %v1587
      %v1652 = vunpack.c.l.b16 %v1588
      %v1653 = vunpack.c.l.b16 %v1589
      %v1654 = vunpack.c.l.b16 %v1590
      %v1655 = vunpack.c.l.b16 %v1591
      %v1656 = vunpack.c.l.b16 %v1592
      %v1657 = vunpack.c.l.b16 %v1593
      %v1658 = vunpack.c.l.b16 %v1594
      %v1659 = vunpack.c.l.b16 %v1595
      %v1660 = vunpack.c.l.b16 %v1596
      %v1661 = vunpack.c.l.b16 %v1597
      %v1662 = vunpack.c.l.b16 %v1598
      %v1663 = vunpack.c.l.b16 %v1599
      %v1664 = vunpack.c.l.b16 %v1600
      %v1665 = vunpack.c.l.b16 %v1601
      %v1666 = vunpack.c.l.b16 %v1602
      %v1667 = vpack.c.b16 %v1636, %v1635
      %v1668 = vpack.c.b16 %v1638, %v1637
      %v1669 = vpack.c.b16 %v1640, %v1639
      %v1670 = vpack.c.b16 %v1642, %v1641
      %v1671 = vpack.c.b16 %v1644, %v1643
      %v1672 = vpack.c.b16 %v1646, %v1645
      %v1673 = vpack.c.b16 %v1648, %v1647
      %v1674 = vpack.c.b16 %v1650, %v1649
      %v1675 = vpack.c.b16 %v1652, %v1651
      %v1676 = vpack.c.b16 %v1654, %v1653
      %v1677 = vpack.c.b16 %v1656, %v1655
      %v1678 = vpack.c.b16 %v1658, %v1657
      %v1679 = vpack.c.b16 %v1660, %v1659
      %v1680 = vpack.c.b16 %v1662, %v1661
      %v1681 = vpack.c.b16 %v1664, %v1663
      %v1682 = vpack.c.b16 %v1666, %v1665
      %1699 = vmatprep.subr.bf16.mxu0 0
      %1700 = vmatpush1.bf16.msra.mxu0 %v1667
      %1701 = vmatprep.subr.bf16.mxu0 0
      %1702 = vmatpush1.bf16.msra.mxu0 %v1668
      %1703 = vmatprep.subr.bf16.mxu0 0
      %1704 = vmatpush1.bf16.msra.mxu0 %v1669
      %1705 = vmatprep.subr.bf16.mxu0 0
      %1706 = vmatpush1.bf16.msra.mxu0 %v1670
      %1707 = vmatprep.subr.bf16.mxu0 0
      %1708 = vmatpush1.bf16.msra.mxu0 %v1671
      %1709 = vmatprep.subr.bf16.mxu0 0
      %1710 = vmatpush1.bf16.msra.mxu0 %v1672
      %1711 = vmatprep.subr.bf16.mxu0 0
      %1712 = vmatpush1.bf16.msra.mxu0 %v1673
      %1713 = vmatprep.subr.bf16.mxu0 0
      %1714 = vmatpush1.bf16.msra.mxu0 %v1674
      %1715 = vmatprep.subr.bf16.mxu0 0
      %1716 = vmatpush1.bf16.msra.mxu0 %v1675
      %1717 = vmatprep.subr.bf16.mxu0 0
      %1718 = vmatpush1.bf16.msra.mxu0 %v1676
      %1719 = vmatprep.subr.bf16.mxu0 0
      %1720 = vmatpush1.bf16.msra.mxu0 %v1677
      %1721 = vmatprep.subr.bf16.mxu0 0
      %1722 = vmatpush1.bf16.msra.mxu0 %v1678
      %1723 = vmatprep.subr.bf16.mxu0 0
      %1724 = vmatpush1.bf16.msra.mxu0 %v1679
      %1725 = vmatprep.subr.bf16.mxu0 0
      %1726 = vmatpush1.bf16.msra.mxu0 %v1680
      %1727 = vmatprep.subr.bf16.mxu0 0
      %1728 = vmatpush1.bf16.msra.mxu0 %v1681
      %1729 = vmatprep.subr.bf16.mxu0 0
      %1730 = vmatpush1.bf16.msra.mxu0 %v1682
      %1731 = vmatprep.mubr.bf16.mxu0 %v1544
      %1732 = vmatmul.mubr.bf16.gmra.mrb[0].mxu0 %v1543
      %v1733 = vpop.f32.mrb[0].mxu0
      %v1734 = vadd.f32 0.0, %v1733
      %v1735 = vpop.f32.mrb[0].mxu0
      %v1736 = vpop.f32.mrb[0].mxu0
      %v1737 = vadd.f32 0.0, %v1736
      %v1738 = vpop.f32.mrb[0].mxu0
      %1739 = vmatprep.mubr.bf16.mxu0 %v1546
      %1740 = vmatmul.mubr.bf16.gmra.mrb[0].mxu0 %v1545
      %v1741 = vpop.f32.mrb[0].mxu0
      %v1742 = vadd.f32 0.0, %v1741
      %v1743 = vpop.f32.mrb[0].mxu0
      %v1744 = vpop.f32.mrb[0].mxu0
      %v1745 = vadd.f32 0.0, %v1744
      %v1746 = vpop.f32.mrb[0].mxu0
      %1747 = vmatprep.mubr.bf16.mxu0 %v1548
      %1748 = vmatmul.mubr.bf16.gmra.mrb[0].mxu0 %v1547
      %v1749 = vpop.f32.mrb[0].mxu0
      %v1750 = vadd.f32 0.0, %v1749
      %v1751 = vpop.f32.mrb[0].mxu0
      %v1752 = vpop.f32.mrb[0].mxu0
      %v1753 = vadd.f32 0.0, %v1752
      %v1754 = vpop.f32.mrb[0].mxu0
      %1755 = vmatprep.mubr.bf16.mxu0 %v1550
      %1756 = vmatmul.mubr.bf16.gmra.mrb[0].mxu0 %v1549
      %v1757 = vpop.f32.mrb[0].mxu0
      %v1758 = vadd.f32 0.0, %v1757
      %v1759 = vpop.f32.mrb[0].mxu0
      %v1760 = vpop.f32.mrb[0].mxu0
      %v1761 = vadd.f32 0.0, %v1760
      %v1762 = vpop.f32.mrb[0].mxu0
      %1763 = vmatprep.mubr.bf16.mxu0 %v1552
      %1764 = vmatmul.mubr.bf16.gmra.mrb[0].mxu0 %v1551
      %v1765 = vpop.f32.mrb[0].mxu0
      %v1766 = vadd.f32 0.0, %v1765
      %v1767 = vpop.f32.mrb[0].mxu0
      %v1768 = vpop.f32.mrb[0].mxu0
      %v1769 = vadd.f32 0.0, %v1768
      %v1770 = vpop.f32.mrb[0].mxu0
      %1771 = vmatprep.mubr.bf16.mxu0 %v1554
      %1772 = vmatmul.mubr.bf16.gmra.mrb[0].mxu0 %v1553
      %v1773 = vpop.f32.mrb[0].mxu0
      %v1774 = vadd.f32 0.0, %v1773
      %v1775 = vpop.f32.mrb[0].mxu0
      %v1776 = vpop.f32.mrb[0].mxu0
      %v1777 = vadd.f32 0.0, %v1776
      %v1778 = vpop.f32.mrb[0].mxu0
      %1779 = vmatprep.mubr.bf16.mxu0 %v1556
      %1780 = vmatmul.mubr.bf16.gmra.mrb[0].mxu0 %v1555
      %v1781 = vpop.f32.mrb[0].mxu0
      %v1782 = vadd.f32 0.0, %v1781
      %v1783 = vpop.f32.mrb[0].mxu0
      %v1784 = vpop.f32.mrb[0].mxu0
      %v1785 = vadd.f32 0.0, %v1784
      %v1786 = vpop.f32.mrb[0].mxu0
      %1787 = vmatprep.mubr.bf16.mxu0 %v1558
      %1788 = vmatmul.mubr.bf16.gmra.mrb[0].mxu0 %v1557
      %v1789 = vpop.f32.mrb[0].mxu0
      %v1790 = vadd.f32 0.0, %v1789
      %v1791 = vpop.f32.mrb[0].mxu0
      %v1792 = vpop.f32.mrb[0].mxu0
      %v1793 = vadd.f32 0.0, %v1792
      %v1794 = vpop.f32.mrb[0].mxu0
      %1795 = vmatprep.mubr.bf16.mxu0 %v1560
      %1796 = vmatmul.mubr.bf16.gmra.mrb[0].mxu0 %v1559
      %v1797 = vpop.f32.mrb[0].mxu0
      %v1798 = vadd.f32 0.0, %v1797
      %v1799 = vpop.f32.mrb[0].mxu0
      %v1800 = vpop.f32.mrb[0].mxu0
      %v1801 = vadd.f32 0.0, %v1800
      %v1802 = vpop.f32.mrb[0].mxu0
      %1803 = vmatprep.mubr.bf16.mxu0 %v1562
      %1804 = vmatmul.mubr.bf16.gmra.mrb[0].mxu0 %v1561
      %v1805 = vpop.f32.mrb[0].mxu0
      %v1806 = vadd.f32 0.0, %v1805
      %v1807 = vpop.f32.mrb[0].mxu0
      %v1808 = vpop.f32.mrb[0].mxu0
      %v1809 = vadd.f32 0.0, %v1808
      %v1810 = vpop.f32.mrb[0].mxu0
      %1811 = vmatprep.mubr.bf16.mxu0 %v1564
      %1812 = vmatmul.mubr.bf16.gmra.mrb[0].mxu0 %v1563
      %v1813 = vpop.f32.mrb[0].mxu0
      %v1814 = vadd.f32 0.0, %v1813
      %v1815 = vpop.f32.mrb[0].mxu0
      %v1816 = vpop.f32.mrb[0].mxu0
      %v1817 = vadd.f32 0.0, %v1816
      %v1818 = vpop.f32.mrb[0].mxu0
      %1819 = vmatprep.mubr.bf16.mxu0 %v1566
      %1820 = vmatmul.mubr.bf16.gmra.mrb[0].mxu0 %v1565
      %v1821 = vpop.f32.mrb[0].mxu0
      %v1822 = vadd.f32 0.0, %v1821
      %v1823 = vpop.f32.mrb[0].mxu0
      %v1824 = vpop.f32.mrb[0].mxu0
      %v1825 = vadd.f32 0.0, %v1824
      %v1826 = vpop.f32.mrb[0].mxu0
      %1827 = vmatprep.mubr.bf16.mxu0 %v1568
      %1828 = vmatmul.mubr.bf16.gmra.mrb[0].mxu0 %v1567
      %v1829 = vpop.f32.mrb[0].mxu0
      %v1830 = vadd.f32 0.0, %v1829
      %v1831 = vpop.f32.mrb[0].mxu0
      %v1832 = vpop.f32.mrb[0].mxu0
      %v1833 = vadd.f32 0.0, %v1832
      %v1834 = vpop.f32.mrb[0].mxu0
      %1835 = vmatprep.mubr.bf16.mxu0 %v1570
      %1836 = vmatmul.mubr.bf16.gmra.mrb[0].mxu0 %v1569
      %v1837 = vpop.f32.mrb[0].mxu0
      %v1838 = vadd.f32 0.0, %v1837
      %v1839 = vpop.f32.mrb[0].mxu0
      %v1840 = vpop.f32.mrb[0].mxu0
      %v1841 = vadd.f32 0.0, %v1840
      %v1842 = vpop.f32.mrb[0].mxu0
      %1843 = vdwg.mxu0
      %1844 = vst [vmem:[#allocation4] sm:$0xff] %v1734
      %1845 = vst [vmem:[#allocation4 + $0x8] sm:$0xff] %v1737
      %1846 = vst [vmem:[#allocation4 + $0x10] sm:$0xff] %v1742
      %1847 = vst [vmem:[#allocation4 + $0x18] sm:$0xff] %v1745
      %1848 = vst [vmem:[#allocation4 + $0x20] sm:$0xff] %v1750
      %1849 = vst [vmem:[#allocation4 + $0x28] sm:$0xff] %v1753
      %1850 = vst [vmem:[#allocation4 + $0x30] sm:$0xff] %v1758
      %1851 = vst [vmem:[#allocation4 + $0x38] sm:$0xff] %v1761
      %1852 = vst [vmem:[#allocation4 + $0x40] sm:$0xff] %v1766
      %1853 = vst [vmem:[#allocation4 + $0x48] sm:$0xff] %v1769
      %1854 = vst [vmem:[#allocation4 + $0x50] sm:$0xff] %v1774
      %1855 = vst [vmem:[#allocation4 + $0x58] sm:$0xff] %v1777
      %1856 = vst [vmem:[#allocation4 + $0x60] sm:$0xff] %v1782
      %1857 = vst [vmem:[#allocation4 + $0x68] sm:$0xff] %v1785
      %1858 = vst [vmem:[#allocation4 + $0x70] sm:$0xff] %v1790
      %1859 = vst [vmem:[#allocation4 + $0x78] sm:$0xff] %v1793
      %1860 = vst [vmem:[#allocation4 + $0x80] sm:$0xff] %v1798
      %1861 = vst [vmem:[#allocation4 + $0x88] sm:$0xff] %v1801
      %1862 = vst [vmem:[#allocation4 + $0x90] sm:$0xff] %v1806
      %1863 = vst [vmem:[#allocation4 + $0x98] sm:$0xff] %v1809
      %1864 = vst [vmem:[#allocation4 + $0xa0] sm:$0xff] %v1814
      %1865 = vst [vmem:[#allocation4 + $0xa8] sm:$0xff] %v1817
      %1866 = vst [vmem:[#allocation4 + $0xb0] sm:$0xff] %v1822
      %1867 = vst [vmem:[#allocation4 + $0xb8] sm:$0xff] %v1825
      %1868 = vst [vmem:[#allocation4 + $0xc0] sm:$0xff] %v1830
      %1869 = vst [vmem:[#allocation4 + $0xc8] sm:$0xff] %v1833
      %1870 = vst [vmem:[#allocation4 + $0xd0] sm:$0xff] %v1838
      %1871 = vst [vmem:[#allocation4 + $0xd8] sm:$0x3f] %v1841
      %v1872 = vld [vmem:[#allocation4] sm:$0xff]
      %v1873 = vld [vmem:[#allocation4 + $0x8] sm:$0xff]
      %v1874 = vld [vmem:[#allocation4 + $0x10] sm:$0xff]
      %v1875 = vld [vmem:[#allocation4 + $0x18] sm:$0xff]
      %v1876 = vld [vmem:[#allocation4 + $0x20] sm:$0xff]
      %v1877 = vld [vmem:[#allocation4 + $0x28] sm:$0xff]
      %v1878 = vld [vmem:[#allocation4 + $0x30] sm:$0xff]
      %v1879 = vld [vmem:[#allocation4 + $0x38] sm:$0xff]
      %v1880 = vld [vmem:[#allocation4 + $0x40] sm:$0xff]
      %v1881 = vld [vmem:[#allocation4 + $0x48] sm:$0xff]
      %v1882 = vld [vmem:[#allocation4 + $0x50] sm:$0xff]
      %v1883 = vld [vmem:[#allocation4 + $0x58] sm:$0xff]
      %v1884 = vld [vmem:[#allocation4 + $0x60] sm:$0xff]
      %v1885 = vld [vmem:[#allocation4 + $0x68] sm:$0xff]
      %v1886 = vld [vmem:[#allocation4 + $0x70] sm:$0xff]
      %v1887 = vld [vmem:[#allocation4 + $0x78] sm:$0xff]
      %v1888 = vld [vmem:[#allocation4 + $0x80] sm:$0xff]
      %v1889 = vld [vmem:[#allocation4 + $0x88] sm:$0xff]
      %v1890 = vld [vmem:[#allocation4 + $0x90] sm:$0xff]
      %v1891 = vld [vmem:[#allocation4 + $0x98] sm:$0xff]
      %v1892 = vld [vmem:[#allocation4 + $0xa0] sm:$0xff]
      %v1893 = vld [vmem:[#allocation4 + $0xa8] sm:$0xff]
      %v1894 = vld [vmem:[#allocation4 + $0xb0] sm:$0xff]
      %v1895 = vld [vmem:[#allocation4 + $0xb8] sm:$0xff]
      %v1896 = vld [vmem:[#allocation4 + $0xc0] sm:$0xff]
      %v1897 = vld [vmem:[#allocation4 + $0xc8] sm:$0xff]
      %v1898 = vld [vmem:[#allocation4 + $0xd0] sm:$0xff]
      %v1899 = vld [vmem:[#allocation4 + $0xd8] sm:$0x3f]
      %v1900 = vld [vmem:[#allocation2] sm:$0xff]
      %v1901 = vld [vmem:[#allocation2 + $0x8] sm:$0xff]
      %v1902 = vld [vmem:[#allocation2 + $0x10] sm:$0xff]
      %v1903 = vld [vmem:[#allocation2 + $0x18] sm:$0xff]
      %v1904 = vld [vmem:[#allocation2 + $0x20] sm:$0xff]
      %v1905 = vld [vmem:[#allocation2 + $0x28] sm:$0xff]
      %v1906 = vld [vmem:[#allocation2 + $0x30] sm:$0xff]
      %v1907 = vld [vmem:[#allocation2 + $0x38] sm:$0xff]
      %v1908 = vld [vmem:[#allocation2 + $0x40] sm:$0xff]
      %v1909 = vld [vmem:[#allocation2 + $0x48] sm:$0xff]
      %v1910 = vld [vmem:[#allocation2 + $0x50] sm:$0xff]
      %v1911 = vld [vmem:[#allocation2 + $0x58] sm:$0xff]
      %v1912 = vld [vmem:[#allocation2 + $0x60] sm:$0xff]
      %v1913 = vld [vmem:[#allocation2 + $0x68] sm:$0xff]
      %v1914 = vld [vmem:[#allocation2 + $0x70] sm:$0xff]
      %v1915 = vld [vmem:[#allocation2 + $0x78] sm:$0xff]
      %v1916 = vld [vmem:[#allocation2 + $0x80] sm:$0xff]
      %v1917 = vld [vmem:[#allocation2 + $0x88] sm:$0xff]
      %v1918 = vld [vmem:[#allocation2 + $0x90] sm:$0xff]
      %v1919 = vld [vmem:[#allocation2 + $0x98] sm:$0xff]
      %v1920 = vld [vmem:[#allocation2 + $0xa0] sm:$0xff]
      %v1921 = vld [vmem:[#allocation2 + $0xa8] sm:$0xff]
      %v1922 = vld [vmem:[#allocation2 + $0xb0] sm:$0xff]
      %v1923 = vld [vmem:[#allocation2 + $0xb8] sm:$0xff]
      %v1924 = vld [vmem:[#allocation2 + $0xc0] sm:$0xff]
      %v1925 = vld [vmem:[#allocation2 + $0xc8] sm:$0xff]
      %v1926 = vld [vmem:[#allocation2 + $0xd0] sm:$0xff]
      %v1927 = vld [vmem:[#allocation2 + $0xd8] sm:$0xff]
      %s1928 = scalar_lea.vmem %s4, 128
      %v1929 = vld [vmem:[%s1928] sm:$0xf]
      %v1930 = vld [vmem:[%s1928 + $0x4] sm:$0xf]
      %v1931 = vld [vmem:[%s1928 + $0x8] sm:$0xf]
      %v1932 = vld [vmem:[%s1928 + $0xc] sm:$0xf]
      %v1933 = vld [vmem:[%s1928 + $0x10] sm:$0xf]
      %v1934 = vld [vmem:[%s1928 + $0x14] sm:$0xf]
      %v1935 = vld [vmem:[%s1928 + $0x18] sm:$0xf]
      %v1936 = vld [vmem:[%s1928 + $0x1c] sm:$0xf]
      %v1937 = vld [vmem:[%s1928 + $0x20] sm:$0xf]
      %v1938 = vld [vmem:[%s1928 + $0x24] sm:$0xf]
      %v1939 = vld [vmem:[%s1928 + $0x28] sm:$0xf]
      %v1940 = vld [vmem:[%s1928 + $0x2c] sm:$0xf]
      %v1941 = vld [vmem:[%s1928 + $0x30] sm:$0xf]
      %v1942 = vld [vmem:[%s1928 + $0x34] sm:$0xf]
      %v1943 = vld [vmem:[%s1928 + $0x38] sm:$0xf]
      %v1944 = vld [vmem:[%s1928 + $0x3c] sm:$0xf]
      %v1945 = vld [vmem:[%s1928 + $0x40] sm:$0xf]
      %v1946 = vld [vmem:[%s1928 + $0x44] sm:$0xf]
      %v1947 = vld [vmem:[%s1928 + $0x48] sm:$0xf]
      %v1948 = vld [vmem:[%s1928 + $0x4c] sm:$0xf]
      %v1949 = vld [vmem:[%s1928 + $0x50] sm:$0xf]
      %v1950 = vld [vmem:[%s1928 + $0x54] sm:$0xf]
      %v1951 = vld [vmem:[%s1928 + $0x58] sm:$0xf]
      %v1952 = vld [vmem:[%s1928 + $0x5c] sm:$0xf]
      %v1953 = vld [vmem:[%s1928 + $0x60] sm:$0xf]
      %v1954 = vld [vmem:[%s1928 + $0x64] sm:$0xf]
      %v1955 = vld [vmem:[%s1928 + $0x68] sm:$0xf]
      %v1956 = vld [vmem:[%s1928 + $0x6c] sm:$0xf]
      %v1957 = vld [vmem:[%s1928 + $0x70] sm:$0xf]
      %v1958 = vld [vmem:[%s1928 + $0x74] sm:$0xf]
      %v1959 = vld [vmem:[%s1928 + $0x78] sm:$0xf]
      %v1960 = vld [vmem:[%s1928 + $0x7c] sm:$0xf]
      %vm1961 = vsmask.f32 7424
      %v1963 = vshrl.u32 %v1900, 16
      %v1965 = vshll.u32 %v1900, 16
      %v1967 = vrot.slane %v1965, 1
      %v1968 = vor.u32 %v1963, %v1967
      %v1970 = vshll.u32 %v1902, 16
      %v1972 = vrot.slane %v1970, 1
      %v1973 = vsel %vm1961, %v1968, %v1972
      %v1975 = vshrl.u32 %v1901, 16
      %v1977 = vshll.u32 %v1901, 16
      %v1979 = vrot.slane %v1977, 1
      %v1980 = vor.u32 %v1975, %v1979
      %v1982 = vshll.u32 %v1903, 16
      %v1984 = vrot.slane %v1982, 1
      %v1985 = vsel %vm1961, %v1980, %v1984
      %v1986 = vshrl.u32 %v1902, 16
      %v1988 = vor.u32 %v1986, %v1972
      %v1990 = vshll.u32 %v1904, 16
      %v1992 = vrot.slane %v1990, 1
      %v1993 = vsel %vm1961, %v1988, %v1992
      %v1994 = vshrl.u32 %v1903, 16
      %v1996 = vor.u32 %v1994, %v1984
      %v1998 = vshll.u32 %v1905, 16
      %v2000 = vrot.slane %v1998, 1
      %v2001 = vsel %vm1961, %v1996, %v2000
      %v2002 = vshrl.u32 %v1904, 16
      %v2004 = vor.u32 %v2002, %v1992
      %v2006 = vshll.u32 %v1906, 16
      %v2008 = vrot.slane %v2006, 1
      %v2009 = vsel %vm1961, %v2004, %v2008
      %v2010 = vshrl.u32 %v1905, 16
      %v2012 = vor.u32 %v2010, %v2000
      %v2014 = vshll.u32 %v1907, 16
      %v2016 = vrot.slane %v2014, 1
      %v2017 = vsel %vm1961, %v2012, %v2016
      %v2018 = vshrl.u32 %v1906, 16
      %v2020 = vor.u32 %v2018, %v2008
      %v2022 = vshll.u32 %v1908, 16
      %v2024 = vrot.slane %v2022, 1
      %v2025 = vsel %vm1961, %v2020, %v2024
      %v2026 = vshrl.u32 %v1907, 16
      %v2028 = vor.u32 %v2026, %v2016
      %v2030 = vshll.u32 %v1909, 16
      %v2032 = vrot.slane %v2030, 1
      %v2033 = vsel %vm1961, %v2028, %v2032
      %v2034 = vshrl.u32 %v1908, 16
      %v2036 = vor.u32 %v2034, %v2024
      %v2038 = vshll.u32 %v1910, 16
      %v2040 = vrot.slane %v2038, 1
      %v2041 = vsel %vm1961, %v2036, %v2040
      %v2042 = vshrl.u32 %v1909, 16
      %v2044 = vor.u32 %v2042, %v2032
      %v2046 = vshll.u32 %v1911, 16
      %v2048 = vrot.slane %v2046, 1
      %v2049 = vsel %vm1961, %v2044, %v2048
      %v2050 = vshrl.u32 %v1910, 16
      %v2052 = vor.u32 %v2050, %v2040
      %v2054 = vshll.u32 %v1912, 16
      %v2056 = vrot.slane %v2054, 1
      %v2057 = vsel %vm1961, %v2052, %v2056
      %v2058 = vshrl.u32 %v1911, 16
      %v2060 = vor.u32 %v2058, %v2048
      %v2062 = vshll.u32 %v1913, 16
      %v2064 = vrot.slane %v2062, 1
      %v2065 = vsel %vm1961, %v2060, %v2064
      %v2066 = vshrl.u32 %v1912, 16
      %v2068 = vor.u32 %v2066, %v2056
      %v2070 = vshll.u32 %v1914, 16
      %v2072 = vrot.slane %v2070, 1
      %v2073 = vsel %vm1961, %v2068, %v2072
      %v2074 = vshrl.u32 %v1913, 16
      %v2076 = vor.u32 %v2074, %v2064
      %v2078 = vshll.u32 %v1915, 16
      %v2080 = vrot.slane %v2078, 1
      %v2081 = vsel %vm1961, %v2076, %v2080
      %v2082 = vshrl.u32 %v1914, 16
      %v2084 = vor.u32 %v2082, %v2072
      %v2086 = vshll.u32 %v1916, 16
      %v2088 = vrot.slane %v2086, 1
      %v2089 = vsel %vm1961, %v2084, %v2088
      %v2090 = vshrl.u32 %v1915, 16
      %v2092 = vor.u32 %v2090, %v2080
      %v2094 = vshll.u32 %v1917, 16
      %v2096 = vrot.slane %v2094, 1
      %v2097 = vsel %vm1961, %v2092, %v2096
      %v2098 = vshrl.u32 %v1916, 16
      %v2100 = vor.u32 %v2098, %v2088
      %v2102 = vshll.u32 %v1918, 16
      %v2104 = vrot.slane %v2102, 1
      %v2105 = vsel %vm1961, %v2100, %v2104
      %v2106 = vshrl.u32 %v1917, 16
      %v2108 = vor.u32 %v2106, %v2096
      %v2110 = vshll.u32 %v1919, 16
      %v2112 = vrot.slane %v2110, 1
      %v2113 = vsel %vm1961, %v2108, %v2112
      %v2114 = vshrl.u32 %v1918, 16
      %v2116 = vor.u32 %v2114, %v2104
      %v2118 = vshll.u32 %v1920, 16
      %v2120 = vrot.slane %v2118, 1
      %v2121 = vsel %vm1961, %v2116, %v2120
      %v2122 = vshrl.u32 %v1919, 16
      %v2124 = vor.u32 %v2122, %v2112
      %v2126 = vshll.u32 %v1921, 16
      %v2128 = vrot.slane %v2126, 1
      %v2129 = vsel %vm1961, %v2124, %v2128
      %v2130 = vshrl.u32 %v1920, 16
      %v2132 = vor.u32 %v2130, %v2120
      %v2134 = vshll.u32 %v1922, 16
      %v2136 = vrot.slane %v2134, 1
      %v2137 = vsel %vm1961, %v2132, %v2136
      %v2138 = vshrl.u32 %v1921, 16
      %v2140 = vor.u32 %v2138, %v2128
      %v2142 = vshll.u32 %v1923, 16
      %v2144 = vrot.slane %v2142, 1
      %v2145 = vsel %vm1961, %v2140, %v2144
      %v2146 = vshrl.u32 %v1922, 16
      %v2148 = vor.u32 %v2146, %v2136
      %v2150 = vshll.u32 %v1924, 16
      %v2152 = vrot.slane %v2150, 1
      %v2153 = vsel %vm1961, %v2148, %v2152
      %v2154 = vshrl.u32 %v1923, 16
      %v2156 = vor.u32 %v2154, %v2144
      %v2158 = vshll.u32 %v1925, 16
      %v2160 = vrot.slane %v2158, 1
      %v2161 = vsel %vm1961, %v2156, %v2160
      %v2162 = vshrl.u32 %v1924, 16
      %v2164 = vor.u32 %v2162, %v2152
      %v2166 = vshll.u32 %v1926, 16
      %v2168 = vrot.slane %v2166, 1
      %v2169 = vsel %vm1961, %v2164, %v2168
      %v2170 = vshrl.u32 %v1925, 16
      %v2172 = vor.u32 %v2170, %v2160
      %v2174 = vshll.u32 %v1927, 16
      %v2176 = vrot.slane %v2174, 1
      %v2177 = vsel %vm1961, %v2172, %v2176
      %v2178 = vshrl.u32 %v1926, 16
      %v2180 = vor.u32 %v2178, %v2168
      %v2181 = vshrl.u32 %v1927, 16
      %v2183 = vor.u32 %v2181, %v2176
      %v2244 = vunpack.c.l.b16 %v1929
      %v2245 = vunpack.c.l.b16 %v1930
      %v2246 = vunpack.c.l.b16 %v1931
      %v2247 = vunpack.c.l.b16 %v1932
      %v2248 = vunpack.c.l.b16 %v1933
      %v2249 = vunpack.c.l.b16 %v1934
      %v2250 = vunpack.c.l.b16 %v1935
      %v2251 = vunpack.c.l.b16 %v1936
      %v2252 = vunpack.c.l.b16 %v1937
      %v2253 = vunpack.c.l.b16 %v1938
      %v2254 = vunpack.c.l.b16 %v1939
      %v2255 = vunpack.c.l.b16 %v1940
      %v2256 = vunpack.c.l.b16 %v1941
      %v2257 = vunpack.c.l.b16 %v1942
      %v2258 = vunpack.c.l.b16 %v1943
      %v2259 = vunpack.c.l.b16 %v1944
      %v2260 = vunpack.c.l.b16 %v1945
      %v2261 = vunpack.c.l.b16 %v1946
      %v2262 = vunpack.c.l.b16 %v1947
      %v2263 = vunpack.c.l.b16 %v1948
      %v2264 = vunpack.c.l.b16 %v1949
      %v2265 = vunpack.c.l.b16 %v1950
      %v2266 = vunpack.c.l.b16 %v1951
      %v2267 = vunpack.c.l.b16 %v1952
      %v2268 = vunpack.c.l.b16 %v1953
      %v2269 = vunpack.c.l.b16 %v1954
      %v2270 = vunpack.c.l.b16 %v1955
      %v2271 = vunpack.c.l.b16 %v1956
      %v2272 = vunpack.c.l.b16 %v1957
      %v2273 = vunpack.c.l.b16 %v1958
      %v2274 = vunpack.c.l.b16 %v1959
      %v2275 = vunpack.c.l.b16 %v1960
      %v2276 = vpack.c.b16 %v2245, %v2244
      %v2277 = vpack.c.b16 %v2247, %v2246
      %v2278 = vpack.c.b16 %v2249, %v2248
      %v2279 = vpack.c.b16 %v2251, %v2250
      %v2280 = vpack.c.b16 %v2253, %v2252
      %v2281 = vpack.c.b16 %v2255, %v2254
      %v2282 = vpack.c.b16 %v2257, %v2256
      %v2283 = vpack.c.b16 %v2259, %v2258
      %v2284 = vpack.c.b16 %v2261, %v2260
      %v2285 = vpack.c.b16 %v2263, %v2262
      %v2286 = vpack.c.b16 %v2265, %v2264
      %v2287 = vpack.c.b16 %v2267, %v2266
      %v2288 = vpack.c.b16 %v2269, %v2268
      %v2289 = vpack.c.b16 %v2271, %v2270
      %v2290 = vpack.c.b16 %v2273, %v2272
      %v2291 = vpack.c.b16 %v2275, %v2274
      %2308 = vmatprep.subr.bf16.mxu0 0
      %2309 = vmatpush1.bf16.msra.mxu0 %v2276
      %2310 = vmatprep.subr.bf16.mxu0 0
      %2311 = vmatpush1.bf16.msra.mxu0 %v2277
      %2312 = vmatprep.subr.bf16.mxu0 0
      %2313 = vmatpush1.bf16.msra.mxu0 %v2278
      %2314 = vmatprep.subr.bf16.mxu0 0
      %2315 = vmatpush1.bf16.msra.mxu0 %v2279
      %2316 = vmatprep.subr.bf16.mxu0 0
      %2317 = vmatpush1.bf16.msra.mxu0 %v2280
      %2318 = vmatprep.subr.bf16.mxu0 0
      %2319 = vmatpush1.bf16.msra.mxu0 %v2281
      %2320 = vmatprep.subr.bf16.mxu0 0
      %2321 = vmatpush1.bf16.msra.mxu0 %v2282
      %2322 = vmatprep.subr.bf16.mxu0 0
      %2323 = vmatpush1.bf16.msra.mxu0 %v2283
      %2324 = vmatprep.subr.bf16.mxu0 0
      %2325 = vmatpush1.bf16.msra.mxu0 %v2284
      %2326 = vmatprep.subr.bf16.mxu0 0
      %2327 = vmatpush1.bf16.msra.mxu0 %v2285
      %2328 = vmatprep.subr.bf16.mxu0 0
      %2329 = vmatpush1.bf16.msra.mxu0 %v2286
      %2330 = vmatprep.subr.bf16.mxu0 0
      %2331 = vmatpush1.bf16.msra.mxu0 %v2287
      %2332 = vmatprep.subr.bf16.mxu0 0
      %2333 = vmatpush1.bf16.msra.mxu0 %v2288
      %2334 = vmatprep.subr.bf16.mxu0 0
      %2335 = vmatpush1.bf16.msra.mxu0 %v2289
      %2336 = vmatprep.subr.bf16.mxu0 0
      %2337 = vmatpush1.bf16.msra.mxu0 %v2290
      %2338 = vmatprep.subr.bf16.mxu0 0
      %2339 = vmatpush1.bf16.msra.mxu0 %v2291
      %2340 = vmatprep.mubr.bf16.mxu0 %v1985
      %2341 = vmatmul.mubr.bf16.gmra.mrb[0].mxu0 %v1973
      %v2342 = vpop.f32.mrb[0].mxu0
      %v2343 = vadd.f32 0.0, %v2342
      %v2344 = vpop.f32.mrb[0].mxu0
      %v2345 = vpop.f32.mrb[0].mxu0
      %v2346 = vadd.f32 0.0, %v2345
      %v2347 = vpop.f32.mrb[0].mxu0
      %2348 = vmatprep.mubr.bf16.mxu0 %v2001
      %2349 = vmatmul.mubr.bf16.gmra.mrb[0].mxu0 %v1993
      %v2350 = vpop.f32.mrb[0].mxu0
      %v2351 = vadd.f32 0.0, %v2350
      %v2352 = vpop.f32.mrb[0].mxu0
      %v2353 = vpop.f32.mrb[0].mxu0
      %v2354 = vadd.f32 0.0, %v2353
      %v2355 = vpop.f32.mrb[0].mxu0
      %2356 = vmatprep.mubr.bf16.mxu0 %v2017
      %2357 = vmatmul.mubr.bf16.gmra.mrb[0].mxu0 %v2009
      %v2358 = vpop.f32.mrb[0].mxu0
      %v2359 = vadd.f32 0.0, %v2358
      %v2360 = vpop.f32.mrb[0].mxu0
      %v2361 = vpop.f32.mrb[0].mxu0
      %v2362 = vadd.f32 0.0, %v2361
      %v2363 = vpop.f32.mrb[0].mxu0
      %2364 = vmatprep.mubr.bf16.mxu0 %v2033
      %2365 = vmatmul.mubr.bf16.gmra.mrb[0].mxu0 %v2025
      %v2366 = vpop.f32.mrb[0].mxu0
      %v2367 = vadd.f32 0.0, %v2366
      %v2368 = vpop.f32.mrb[0].mxu0
      %v2369 = vpop.f32.mrb[0].mxu0
      %v2370 = vadd.f32 0.0, %v2369
      %v2371 = vpop.f32.mrb[0].mxu0
      %2372 = vmatprep.mubr.bf16.mxu0 %v2049
      %2373 = vmatmul.mubr.bf16.gmra.mrb[0].mxu0 %v2041
      %v2374 = vpop.f32.mrb[0].mxu0
      %v2375 = vadd.f32 0.0, %v2374
      %v2376 = vpop.f32.mrb[0].mxu0
      %v2377 = vpop.f32.mrb[0].mxu0
      %v2378 = vadd.f32 0.0, %v2377
      %v2379 = vpop.f32.mrb[0].mxu0
      %2380 = vmatprep.mubr.bf16.mxu0 %v2065
      %2381 = vmatmul.mubr.bf16.gmra.mrb[0].mxu0 %v2057
      %v2382 = vpop.f32.mrb[0].mxu0
      %v2383 = vadd.f32 0.0, %v2382
      %v2384 = vpop.f32.mrb[0].mxu0
      %v2385 = vpop.f32.mrb[0].mxu0
      %v2386 = vadd.f32 0.0, %v2385
      %v2387 = vpop.f32.mrb[0].mxu0
      %2388 = vmatprep.mubr.bf16.mxu0 %v2081
      %2389 = vmatmul.mubr.bf16.gmra.mrb[0].mxu0 %v2073
      %v2390 = vpop.f32.mrb[0].mxu0
      %v2391 = vadd.f32 0.0, %v2390
      %v2392 = vpop.f32.mrb[0].mxu0
      %v2393 = vpop.f32.mrb[0].mxu0
      %v2394 = vadd.f32 0.0, %v2393
      %v2395 = vpop.f32.mrb[0].mxu0
      %2396 = vmatprep.mubr.bf16.mxu0 %v2097
      %2397 = vmatmul.mubr.bf16.gmra.mrb[0].mxu0 %v2089
      %v2398 = vpop.f32.mrb[0].mxu0
      %v2399 = vadd.f32 0.0, %v2398
      %v2400 = vpop.f32.mrb[0].mxu0
      %v2401 = vpop.f32.mrb[0].mxu0
      %v2402 = vadd.f32 0.0, %v2401
      %v2403 = vpop.f32.mrb[0].mxu0
      %2404 = vmatprep.mubr.bf16.mxu0 %v2113
      %2405 = vmatmul.mubr.bf16.gmra.mrb[0].mxu0 %v2105
      %v2406 = vpop.f32.mrb[0].mxu0
      %v2407 = vadd.f32 0.0, %v2406
      %v2408 = vpop.f32.mrb[0].mxu0
      %v2409 = vpop.f32.mrb[0].mxu0
      %v2410 = vadd.f32 0.0, %v2409
      %v2411 = vpop.f32.mrb[0].mxu0
      %2412 = vmatprep.mubr.bf16.mxu0 %v2129
      %2413 = vmatmul.mubr.bf16.gmra.mrb[0].mxu0 %v2121
      %v2414 = vpop.f32.mrb[0].mxu0
      %v2415 = vadd.f32 0.0, %v2414
      %v2416 = vpop.f32.mrb[0].mxu0
      %v2417 = vpop.f32.mrb[0].mxu0
      %v2418 = vadd.f32 0.0, %v2417
      %v2419 = vpop.f32.mrb[0].mxu0
      %2420 = vmatprep.mubr.bf16.mxu0 %v2145
      %2421 = vmatmul.mubr.bf16.gmra.mrb[0].mxu0 %v2137
      %v2422 = vpop.f32.mrb[0].mxu0
      %v2423 = vadd.f32 0.0, %v2422
      %v2424 = vpop.f32.mrb[0].mxu0
      %v2425 = vpop.f32.mrb[0].mxu0
      %v2426 = vadd.f32 0.0, %v2425
      %v2427 = vpop.f32.mrb[0].mxu0
      %2428 = vmatprep.mubr.bf16.mxu0 %v2161
      %2429 = vmatmul.mubr.bf16.gmra.mrb[0].mxu0 %v2153
      %v2430 = vpop.f32.mrb[0].mxu0
      %v2431 = vadd.f32 0.0, %v2430
      %v2432 = vpop.f32.mrb[0].mxu0
      %v2433 = vpop.f32.mrb[0].mxu0
      %v2434 = vadd.f32 0.0, %v2433
      %v2435 = vpop.f32.mrb[0].mxu0
      %2436 = vmatprep.mubr.bf16.mxu0 %v2177
      %2437 = vmatmul.mubr.bf16.gmra.mrb[0].mxu0 %v2169
      %v2438 = vpop.f32.mrb[0].mxu0
      %v2439 = vadd.f32 0.0, %v2438
      %v2440 = vpop.f32.mrb[0].mxu0
      %v2441 = vpop.f32.mrb[0].mxu0
      %v2442 = vadd.f32 0.0, %v2441
      %v2443 = vpop.f32.mrb[0].mxu0
      %2444 = vmatprep.mubr.bf16.mxu0 %v2183
      %2445 = vmatmul.mubr.bf16.gmra.mrb[0].mxu0 %v2180
      %v2446 = vpop.f32.mrb[0].mxu0
      %v2447 = vadd.f32 0.0, %v2446
      %v2448 = vpop.f32.mrb[0].mxu0
      %v2449 = vpop.f32.mrb[0].mxu0
      %v2450 = vadd.f32 0.0, %v2449
      %v2451 = vpop.f32.mrb[0].mxu0
      %2452 = vdwg.mxu0
      %v2453 = vadd.f32 %v1872, %v2343
      %v2454 = vadd.f32 %v1873, %v2346
      %v2455 = vadd.f32 %v1874, %v2351
      %v2456 = vadd.f32 %v1875, %v2354
      %v2457 = vadd.f32 %v1876, %v2359
      %v2458 = vadd.f32 %v1877, %v2362
      %v2459 = vadd.f32 %v1878, %v2367
      %v2460 = vadd.f32 %v1879, %v2370
      %v2461 = vadd.f32 %v1880, %v2375
      %v2462 = vadd.f32 %v1881, %v2378
      %v2463 = vadd.f32 %v1882, %v2383
      %v2464 = vadd.f32 %v1883, %v2386
      %v2465 = vadd.f32 %v1884, %v2391
      %v2466 = vadd.f32 %v1885, %v2394
      %v2467 = vadd.f32 %v1886, %v2399
      %v2468 = vadd.f32 %v1887, %v2402
      %v2469 = vadd.f32 %v1888, %v2407
      %v2470 = vadd.f32 %v1889, %v2410
      %v2471 = vadd.f32 %v1890, %v2415
      %v2472 = vadd.f32 %v1891, %v2418
      %v2473 = vadd.f32 %v1892, %v2423
      %v2474 = vadd.f32 %v1893, %v2426
      %v2475 = vadd.f32 %v1894, %v2431
      %v2476 = vadd.f32 %v1895, %v2434
      %v2477 = vadd.f32 %v1896, %v2439
      %v2478 = vadd.f32 %v1897, %v2442
      %v2479 = vadd.f32 %v1898, %v2447
      %v2480 = vadd.f32 %v1899, %v2450
      %2481 = vst [vmem:[#allocation4] sm:$0xff] %v2453
      %2482 = vst [vmem:[#allocation4 + $0x8] sm:$0xff] %v2454
      %2483 = vst [vmem:[#allocation4 + $0x10] sm:$0xff] %v2455
      %2484 = vst [vmem:[#allocation4 + $0x18] sm:$0xff] %v2456
      %2485 = vst [vmem:[#allocation4 + $0x20] sm:$0xff] %v2457
      %2486 = vst [vmem:[#allocation4 + $0x28] sm:$0xff] %v2458
      %2487 = vst [vmem:[#allocation4 + $0x30] sm:$0xff] %v2459
      %2488 = vst [vmem:[#allocation4 + $0x38] sm:$0xff] %v2460
      %2489 = vst [vmem:[#allocation4 + $0x40] sm:$0xff] %v2461
      %2490 = vst [vmem:[#allocation4 + $0x48] sm:$0xff] %v2462
      %2491 = vst [vmem:[#allocation4 + $0x50] sm:$0xff] %v2463
      %2492 = vst [vmem:[#allocation4 + $0x58] sm:$0xff] %v2464
      %2493 = vst [vmem:[#allocation4 + $0x60] sm:$0xff] %v2465
      %2494 = vst [vmem:[#allocation4 + $0x68] sm:$0xff] %v2466
      %2495 = vst [vmem:[#allocation4 + $0x70] sm:$0xff] %v2467
      %2496 = vst [vmem:[#allocation4 + $0x78] sm:$0xff] %v2468
      %2497 = vst [vmem:[#allocation4 + $0x80] sm:$0xff] %v2469
      %2498 = vst [vmem:[#allocation4 + $0x88] sm:$0xff] %v2470
      %2499 = vst [vmem:[#allocation4 + $0x90] sm:$0xff] %v2471
      %2500 = vst [vmem:[#allocation4 + $0x98] sm:$0xff] %v2472
      %2501 = vst [vmem:[#allocation4 + $0xa0] sm:$0xff] %v2473
      %2502 = vst [vmem:[#allocation4 + $0xa8] sm:$0xff] %v2474
      %2503 = vst [vmem:[#allocation4 + $0xb0] sm:$0xff] %v2475
      %2504 = vst [vmem:[#allocation4 + $0xb8] sm:$0xff] %v2476
      %2505 = vst [vmem:[#allocation4 + $0xc0] sm:$0xff] %v2477
      %2506 = vst [vmem:[#allocation4 + $0xc8] sm:$0xff] %v2478
      %2507 = vst [vmem:[#allocation4 + $0xd0] sm:$0xff] %v2479
      %2508 = vst [vmem:[#allocation4 + $0xd8] sm:$0x3f] %v2480
      %v2509 = vld [vmem:[#allocation4] sm:$0xff]
      %v2510 = vld [vmem:[#allocation4 + $0x8] sm:$0xff]
      %v2511 = vld [vmem:[#allocation4 + $0x10] sm:$0xff]
      %v2512 = vld [vmem:[#allocation4 + $0x18] sm:$0xff]
      %v2513 = vld [vmem:[#allocation4 + $0x20] sm:$0xff]
      %v2514 = vld [vmem:[#allocation4 + $0x28] sm:$0xff]
      %v2515 = vld [vmem:[#allocation4 + $0x30] sm:$0xff]
      %v2516 = vld [vmem:[#allocation4 + $0x38] sm:$0xff]
      %v2517 = vld [vmem:[#allocation4 + $0x40] sm:$0xff]
      %v2518 = vld [vmem:[#allocation4 + $0x48] sm:$0xff]
      %v2519 = vld [vmem:[#allocation4 + $0x50] sm:$0xff]
      %v2520 = vld [vmem:[#allocation4 + $0x58] sm:$0xff]
      %v2521 = vld [vmem:[#allocation4 + $0x60] sm:$0xff]
      %v2522 = vld [vmem:[#allocation4 + $0x68] sm:$0xff]
      %v2523 = vld [vmem:[#allocation4 + $0x70] sm:$0xff]
      %v2524 = vld [vmem:[#allocation4 + $0x78] sm:$0xff]
      %v2525 = vld [vmem:[#allocation4 + $0x80] sm:$0xff]
      %v2526 = vld [vmem:[#allocation4 + $0x88] sm:$0xff]
      %v2527 = vld [vmem:[#allocation4 + $0x90] sm:$0xff]
      %v2528 = vld [vmem:[#allocation4 + $0x98] sm:$0xff]
      %v2529 = vld [vmem:[#allocation4 + $0xa0] sm:$0xff]
      %v2530 = vld [vmem:[#allocation4 + $0xa8] sm:$0xff]
      %v2531 = vld [vmem:[#allocation4 + $0xb0] sm:$0xff]
      %v2532 = vld [vmem:[#allocation4 + $0xb8] sm:$0xff]
      %v2533 = vld [vmem:[#allocation4 + $0xc0] sm:$0xff]
      %v2534 = vld [vmem:[#allocation4 + $0xc8] sm:$0xff]
      %v2535 = vld [vmem:[#allocation4 + $0xd0] sm:$0xff]
      %v2536 = vld [vmem:[#allocation4 + $0xd8] sm:$0x3f]
      %v2537 = vld [vmem:[#allocation2] sm:$0xfe]
      %v2538 = vld [vmem:[#allocation2 + $0x8] sm:$0xfe]
      %v2539 = vld [vmem:[#allocation2 + $0x10] sm:$0xff]
      %v2540 = vld [vmem:[#allocation2 + $0x18] sm:$0xff]
      %v2541 = vld [vmem:[#allocation2 + $0x20] sm:$0xff]
      %v2542 = vld [vmem:[#allocation2 + $0x28] sm:$0xff]
      %v2543 = vld [vmem:[#allocation2 + $0x30] sm:$0xff]
      %v2544 = vld [vmem:[#allocation2 + $0x38] sm:$0xff]
      %v2545 = vld [vmem:[#allocation2 + $0x40] sm:$0xff]
      %v2546 = vld [vmem:[#allocation2 + $0x48] sm:$0xff]
      %v2547 = vld [vmem:[#allocation2 + $0x50] sm:$0xff]
      %v2548 = vld [vmem:[#allocation2 + $0x58] sm:$0xff]
      %v2549 = vld [vmem:[#allocation2 + $0x60] sm:$0xff]
      %v2550 = vld [vmem:[#allocation2 + $0x68] sm:$0xff]
      %v2551 = vld [vmem:[#allocation2 + $0x70] sm:$0xff]
      %v2552 = vld [vmem:[#allocation2 + $0x78] sm:$0xff]
      %v2553 = vld [vmem:[#allocation2 + $0x80] sm:$0xff]
      %v2554 = vld [vmem:[#allocation2 + $0x88] sm:$0xff]
      %v2555 = vld [vmem:[#allocation2 + $0x90] sm:$0xff]
      %v2556 = vld [vmem:[#allocation2 + $0x98] sm:$0xff]
      %v2557 = vld [vmem:[#allocation2 + $0xa0] sm:$0xff]
      %v2558 = vld [vmem:[#allocation2 + $0xa8] sm:$0xff]
      %v2559 = vld [vmem:[#allocation2 + $0xb0] sm:$0xff]
      %v2560 = vld [vmem:[#allocation2 + $0xb8] sm:$0xff]
      %v2561 = vld [vmem:[#allocation2 + $0xc0] sm:$0xff]
      %v2562 = vld [vmem:[#allocation2 + $0xc8] sm:$0xff]
      %v2563 = vld [vmem:[#allocation2 + $0xd0] sm:$0xff]
      %v2564 = vld [vmem:[#allocation2 + $0xd8] sm:$0xff]
      %s2565 = scalar_lea.vmem %s4, 256
      %v2566 = vld [vmem:[%s2565] sm:$0xf]
      %v2567 = vld [vmem:[%s2565 + $0x4] sm:$0xf]
      %v2568 = vld [vmem:[%s2565 + $0x8] sm:$0xf]
      %v2569 = vld [vmem:[%s2565 + $0xc] sm:$0xf]
      %v2570 = vld [vmem:[%s2565 + $0x10] sm:$0xf]
      %v2571 = vld [vmem:[%s2565 + $0x14] sm:$0xf]
      %v2572 = vld [vmem:[%s2565 + $0x18] sm:$0xf]
      %v2573 = vld [vmem:[%s2565 + $0x1c] sm:$0xf]
      %v2574 = vld [vmem:[%s2565 + $0x20] sm:$0xf]
      %v2575 = vld [vmem:[%s2565 + $0x24] sm:$0xf]
      %v2576 = vld [vmem:[%s2565 + $0x28] sm:$0xf]
      %v2577 = vld [vmem:[%s2565 + $0x2c] sm:$0xf]
      %v2578 = vld [vmem:[%s2565 + $0x30] sm:$0xf]
      %v2579 = vld [vmem:[%s2565 + $0x34] sm:$0xf]
      %v2580 = vld [vmem:[%s2565 + $0x38] sm:$0xf]
      %v2581 = vld [vmem:[%s2565 + $0x3c] sm:$0xf]
      %v2582 = vld [vmem:[%s2565 + $0x40] sm:$0xf]
      %v2583 = vld [vmem:[%s2565 + $0x44] sm:$0xf]
      %v2584 = vld [vmem:[%s2565 + $0x48] sm:$0xf]
      %v2585 = vld [vmem:[%s2565 + $0x4c] sm:$0xf]
      %v2586 = vld [vmem:[%s2565 + $0x50] sm:$0xf]
      %v2587 = vld [vmem:[%s2565 + $0x54] sm:$0xf]
      %v2588 = vld [vmem:[%s2565 + $0x58] sm:$0xf]
      %v2589 = vld [vmem:[%s2565 + $0x5c] sm:$0xf]
      %v2590 = vld [vmem:[%s2565 + $0x60] sm:$0xf]
      %v2591 = vld [vmem:[%s2565 + $0x64] sm:$0xf]
      %v2592 = vld [vmem:[%s2565 + $0x68] sm:$0xf]
      %v2593 = vld [vmem:[%s2565 + $0x6c] sm:$0xf]
      %v2594 = vld [vmem:[%s2565 + $0x70] sm:$0xf]
      %v2595 = vld [vmem:[%s2565 + $0x74] sm:$0xf]
      %v2596 = vld [vmem:[%s2565 + $0x78] sm:$0xf]
      %v2597 = vld [vmem:[%s2565 + $0x7c] sm:$0xf]
      %vm2626 = vcmask 1046528
      %v2627 = vrot.slane %v2537, 1
      %v2628 = vrot.slane %v2539, 1
      %v2629 = vsel %vm2626, %v2627, %v2628
      %v2630 = vrot.slane %v2538, 1
      %v2631 = vrot.slane %v2540, 1
      %v2632 = vsel %vm2626, %v2630, %v2631
      %v2633 = vrot.slane %v2541, 1
      %v2634 = vsel %vm2626, %v2628, %v2633
      %v2635 = vrot.slane %v2542, 1
      %v2636 = vsel %vm2626, %v2631, %v2635
      %v2637 = vrot.slane %v2543, 1
      %v2638 = vsel %vm2626, %v2633, %v2637
      %v2639 = vrot.slane %v2544, 1
      %v2640 = vsel %vm2626, %v2635, %v2639
      %v2641 = vrot.slane %v2545, 1
      %v2642 = vsel %vm2626, %v2637, %v2641
      %v2643 = vrot.slane %v2546, 1
      %v2644 = vsel %vm2626, %v2639, %v2643
      %v2645 = vrot.slane %v2547, 1
      %v2646 = vsel %vm2626, %v2641, %v2645
      %v2647 = vrot.slane %v2548, 1
      %v2648 = vsel %vm2626, %v2643, %v2647
      %v2649 = vrot.slane %v2549, 1
      %v2650 = vsel %vm2626, %v2645, %v2649
      %v2651 = vrot.slane %v2550, 1
      %v2652 = vsel %vm2626, %v2647, %v2651
      %v2653 = vrot.slane %v2551, 1
      %v2654 = vsel %vm2626, %v2649, %v2653
      %v2655 = vrot.slane %v2552, 1
      %v2656 = vsel %vm2626, %v2651, %v2655
      %v2657 = vrot.slane %v2553, 1
      %v2658 = vsel %vm2626, %v2653, %v2657
      %v2659 = vrot.slane %v2554, 1
      %v2660 = vsel %vm2626, %v2655, %v2659
      %v2661 = vrot.slane %v2555, 1
      %v2662 = vsel %vm2626, %v2657, %v2661
      %v2663 = vrot.slane %v2556, 1
      %v2664 = vsel %vm2626, %v2659, %v2663
      %v2665 = vrot.slane %v2557, 1
      %v2666 = vsel %vm2626, %v2661, %v2665
      %v2667 = vrot.slane %v2558, 1
      %v2668 = vsel %vm2626, %v2663, %v2667
      %v2669 = vrot.slane %v2559, 1
      %v2670 = vsel %vm2626, %v2665, %v2669
      %v2671 = vrot.slane %v2560, 1
      %v2672 = vsel %vm2626, %v2667, %v2671
      %v2673 = vrot.slane %v2561, 1
      %v2674 = vsel %vm2626, %v2669, %v2673
      %v2675 = vrot.slane %v2562, 1
      %v2676 = vsel %vm2626, %v2671, %v2675
      %v2677 = vrot.slane %v2563, 1
      %v2678 = vsel %vm2626, %v2673, %v2677
      %v2679 = vrot.slane %v2564, 1
      %v2680 = vsel %vm2626, %v2675, %v2679
      %v2741 = vunpack.c.l.b16 %v2566
      %v2742 = vunpack.c.l.b16 %v2567
      %v2743 = vunpack.c.l.b16 %v2568
      %v2744 = vunpack.c.l.b16 %v2569
      %v2745 = vunpack.c.l.b16 %v2570
      %v2746 = vunpack.c.l.b16 %v2571
      %v2747 = vunpack.c.l.b16 %v2572
      %v2748 = vunpack.c.l.b16 %v2573
      %v2749 = vunpack.c.l.b16 %v2574
      %v2750 = vunpack.c.l.b16 %v2575
      %v2751 = vunpack.c.l.b16 %v2576
      %v2752 = vunpack.c.l.b16 %v2577
      %v2753 = vunpack.c.l.b16 %v2578
      %v2754 = vunpack.c.l.b16 %v2579
      %v2755 = vunpack.c.l.b16 %v2580
      %v2756 = vunpack.c.l.b16 %v2581
      %v2757 = vunpack.c.l.b16 %v2582
      %v2758 = vunpack.c.l.b16 %v2583
      %v2759 = vunpack.c.l.b16 %v2584
      %v2760 = vunpack.c.l.b16 %v2585
      %v2761 = vunpack.c.l.b16 %v2586
      %v2762 = vunpack.c.l.b16 %v2587
      %v2763 = vunpack.c.l.b16 %v2588
      %v2764 = vunpack.c.l.b16 %v2589
      %v2765 = vunpack.c.l.b16 %v2590
      %v2766 = vunpack.c.l.b16 %v2591
      %v2767 = vunpack.c.l.b16 %v2592
      %v2768 = vunpack.c.l.b16 %v2593
      %v2769 = vunpack.c.l.b16 %v2594
      %v2770 = vunpack.c.l.b16 %v2595
      %v2771 = vunpack.c.l.b16 %v2596
      %v2772 = vunpack.c.l.b16 %v2597
      %v2773 = vpack.c.b16 %v2742, %v2741
      %v2774 = vpack.c.b16 %v2744, %v2743
      %v2775 = vpack.c.b16 %v2746, %v2745
      %v2776 = vpack.c.b16 %v2748, %v2747
      %v2777 = vpack.c.b16 %v2750, %v2749
      %v2778 = vpack.c.b16 %v2752, %v2751
      %v2779 = vpack.c.b16 %v2754, %v2753
      %v2780 = vpack.c.b16 %v2756, %v2755
      %v2781 = vpack.c.b16 %v2758, %v2757
      %v2782 = vpack.c.b16 %v2760, %v2759
      %v2783 = vpack.c.b16 %v2762, %v2761
      %v2784 = vpack.c.b16 %v2764, %v2763
      %v2785 = vpack.c.b16 %v2766, %v2765
      %v2786 = vpack.c.b16 %v2768, %v2767
      %v2787 = vpack.c.b16 %v2770, %v2769
      %v2788 = vpack.c.b16 %v2772, %v2771
      %2805 = vmatprep.subr.bf16.mxu0 0
      %2806 = vmatpush1.bf16.msra.mxu0 %v2773
      %2807 = vmatprep.subr.bf16.mxu0 0
      %2808 = vmatpush1.bf16.msra.mxu0 %v2774
      %2809 = vmatprep.subr.bf16.mxu0 0
      %2810 = vmatpush1.bf16.msra.mxu0 %v2775
      %2811 = vmatprep.subr.bf16.mxu0 0
      %2812 = vmatpush1.bf16.msra.mxu0 %v2776
      %2813 = vmatprep.subr.bf16.mxu0 0
      %2814 = vmatpush1.bf16.msra.mxu0 %v2777
      %2815 = vmatprep.subr.bf16.mxu0 0
      %2816 = vmatpush1.bf16.msra.mxu0 %v2778
      %2817 = vmatprep.subr.bf16.mxu0 0
      %2818 = vmatpush1.bf16.msra.mxu0 %v2779
      %2819 = vmatprep.subr.bf16.mxu0 0
      %2820 = vmatpush1.bf16.msra.mxu0 %v2780
      %2821 = vmatprep.subr.bf16.mxu0 0
      %2822 = vmatpush1.bf16.msra.mxu0 %v2781
      %2823 = vmatprep.subr.bf16.mxu0 0
      %2824 = vmatpush1.bf16.msra.mxu0 %v2782
      %2825 = vmatprep.subr.bf16.mxu0 0
      %2826 = vmatpush1.bf16.msra.mxu0 %v2783
      %2827 = vmatprep.subr.bf16.mxu0 0
      %2828 = vmatpush1.bf16.msra.mxu0 %v2784
      %2829 = vmatprep.subr.bf16.mxu0 0
      %2830 = vmatpush1.bf16.msra.mxu0 %v2785
      %2831 = vmatprep.subr.bf16.mxu0 0
      %2832 = vmatpush1.bf16.msra.mxu0 %v2786
      %2833 = vmatprep.subr.bf16.mxu0 0
      %2834 = vmatpush1.bf16.msra.mxu0 %v2787
      %2835 = vmatprep.subr.bf16.mxu0 0
      %2836 = vmatpush1.bf16.msra.mxu0 %v2788
      %2837 = vmatprep.mubr.bf16.mxu0 %v2632
      %2838 = vmatmul.mubr.bf16.gmra.mrb[0].mxu0 %v2629
      %v2839 = vpop.f32.mrb[0].mxu0
      %v2840 = vadd.f32 0.0, %v2839
      %v2841 = vpop.f32.mrb[0].mxu0
      %v2842 = vpop.f32.mrb[0].mxu0
      %v2843 = vadd.f32 0.0, %v2842
      %v2844 = vpop.f32.mrb[0].mxu0
      %2845 = vmatprep.mubr.bf16.mxu0 %v2636
      %2846 = vmatmul.mubr.bf16.gmra.mrb[0].mxu0 %v2634
      %v2847 = vpop.f32.mrb[0].mxu0
      %v2848 = vadd.f32 0.0, %v2847
      %v2849 = vpop.f32.mrb[0].mxu0
      %v2850 = vpop.f32.mrb[0].mxu0
      %v2851 = vadd.f32 0.0, %v2850
      %v2852 = vpop.f32.mrb[0].mxu0
      %2853 = vmatprep.mubr.bf16.mxu0 %v2640
      %2854 = vmatmul.mubr.bf16.gmra.mrb[0].mxu0 %v2638
      %v2855 = vpop.f32.mrb[0].mxu0
      %v2856 = vadd.f32 0.0, %v2855
      %v2857 = vpop.f32.mrb[0].mxu0
      %v2858 = vpop.f32.mrb[0].mxu0
      %v2859 = vadd.f32 0.0, %v2858
      %v2860 = vpop.f32.mrb[0].mxu0
      %2861 = vmatprep.mubr.bf16.mxu0 %v2644
      %2862 = vmatmul.mubr.bf16.gmra.mrb[0].mxu0 %v2642
      %v2863 = vpop.f32.mrb[0].mxu0
      %v2864 = vadd.f32 0.0, %v2863
      %v2865 = vpop.f32.mrb[0].mxu0
      %v2866 = vpop.f32.mrb[0].mxu0
      %v2867 = vadd.f32 0.0, %v2866
      %v2868 = vpop.f32.mrb[0].mxu0
      %2869 = vmatprep.mubr.bf16.mxu0 %v2648
      %2870 = vmatmul.mubr.bf16.gmra.mrb[0].mxu0 %v2646
      %v2871 = vpop.f32.mrb[0].mxu0
      %v2872 = vadd.f32 0.0, %v2871
      %v2873 = vpop.f32.mrb[0].mxu0
      %v2874 = vpop.f32.mrb[0].mxu0
      %v2875 = vadd.f32 0.0, %v2874
      %v2876 = vpop.f32.mrb[0].mxu0
      %2877 = vmatprep.mubr.bf16.mxu0 %v2652
      %2878 = vmatmul.mubr.bf16.gmra.mrb[0].mxu0 %v2650
      %v2879 = vpop.f32.mrb[0].mxu0
      %v2880 = vadd.f32 0.0, %v2879
      %v2881 = vpop.f32.mrb[0].mxu0
      %v2882 = vpop.f32.mrb[0].mxu0
      %v2883 = vadd.f32 0.0, %v2882
      %v2884 = vpop.f32.mrb[0].mxu0
      %2885 = vmatprep.mubr.bf16.mxu0 %v2656
      %2886 = vmatmul.mubr.bf16.gmra.mrb[0].mxu0 %v2654
      %v2887 = vpop.f32.mrb[0].mxu0
      %v2888 = vadd.f32 0.0, %v2887
      %v2889 = vpop.f32.mrb[0].mxu0
      %v2890 = vpop.f32.mrb[0].mxu0
      %v2891 = vadd.f32 0.0, %v2890
      %v2892 = vpop.f32.mrb[0].mxu0
      %2893 = vmatprep.mubr.bf16.mxu0 %v2660
      %2894 = vmatmul.mubr.bf16.gmra.mrb[0].mxu0 %v2658
      %v2895 = vpop.f32.mrb[0].mxu0
      %v2896 = vadd.f32 0.0, %v2895
      %v2897 = vpop.f32.mrb[0].mxu0
      %v2898 = vpop.f32.mrb[0].mxu0
      %v2899 = vadd.f32 0.0, %v2898
      %v2900 = vpop.f32.mrb[0].mxu0
      %2901 = vmatprep.mubr.bf16.mxu0 %v2664
      %2902 = vmatmul.mubr.bf16.gmra.mrb[0].mxu0 %v2662
      %v2903 = vpop.f32.mrb[0].mxu0
      %v2904 = vadd.f32 0.0, %v2903
      %v2905 = vpop.f32.mrb[0].mxu0
      %v2906 = vpop.f32.mrb[0].mxu0
      %v2907 = vadd.f32 0.0, %v2906
      %v2908 = vpop.f32.mrb[0].mxu0
      %2909 = vmatprep.mubr.bf16.mxu0 %v2668
      %2910 = vmatmul.mubr.bf16.gmra.mrb[0].mxu0 %v2666
      %v2911 = vpop.f32.mrb[0].mxu0
      %v2912 = vadd.f32 0.0, %v2911
      %v2913 = vpop.f32.mrb[0].mxu0
      %v2914 = vpop.f32.mrb[0].mxu0
      %v2915 = vadd.f32 0.0, %v2914
      %v2916 = vpop.f32.mrb[0].mxu0
      %2917 = vmatprep.mubr.bf16.mxu0 %v2672
      %2918 = vmatmul.mubr.bf16.gmra.mrb[0].mxu0 %v2670
      %v2919 = vpop.f32.mrb[0].mxu0
      %v2920 = vadd.f32 0.0, %v2919
      %v2921 = vpop.f32.mrb[0].mxu0
      %v2922 = vpop.f32.mrb[0].mxu0
      %v2923 = vadd.f32 0.0, %v2922
      %v2924 = vpop.f32.mrb[0].mxu0
      %2925 = vmatprep.mubr.bf16.mxu0 %v2676
      %2926 = vmatmul.mubr.bf16.gmra.mrb[0].mxu0 %v2674
      %v2927 = vpop.f32.mrb[0].mxu0
      %v2928 = vadd.f32 0.0, %v2927
      %v2929 = vpop.f32.mrb[0].mxu0
      %v2930 = vpop.f32.mrb[0].mxu0
      %v2931 = vadd.f32 0.0, %v2930
      %v2932 = vpop.f32.mrb[0].mxu0
      %2933 = vmatprep.mubr.bf16.mxu0 %v2680
      %2934 = vmatmul.mubr.bf16.gmra.mrb[0].mxu0 %v2678
      %v2935 = vpop.f32.mrb[0].mxu0
      %v2936 = vadd.f32 0.0, %v2935
      %v2937 = vpop.f32.mrb[0].mxu0
      %v2938 = vpop.f32.mrb[0].mxu0
      %v2939 = vadd.f32 0.0, %v2938
      %v2940 = vpop.f32.mrb[0].mxu0
      %2941 = vmatprep.mubr.bf16.mxu0 %v2679
      %2942 = vmatmul.mubr.bf16.gmra.mrb[0].mxu0 %v2677
      %v2943 = vpop.f32.mrb[0].mxu0
      %v2944 = vadd.f32 0.0, %v2943
      %v2945 = vpop.f32.mrb[0].mxu0
      %v2946 = vpop.f32.mrb[0].mxu0
      %v2947 = vadd.f32 0.0, %v2946
      %v2948 = vpop.f32.mrb[0].mxu0
      %2949 = vdwg.mxu0
      %v2950 = vadd.f32 %v2509, %v2840
      %v2951 = vadd.f32 %v2510, %v2843
      %v2952 = vadd.f32 %v2511, %v2848
      %v2953 = vadd.f32 %v2512, %v2851
      %v2954 = vadd.f32 %v2513, %v2856
      %v2955 = vadd.f32 %v2514, %v2859
      %v2956 = vadd.f32 %v2515, %v2864
      %v2957 = vadd.f32 %v2516, %v2867
      %v2958 = vadd.f32 %v2517, %v2872
      %v2959 = vadd.f32 %v2518, %v2875
      %v2960 = vadd.f32 %v2519, %v2880
      %v2961 = vadd.f32 %v2520, %v2883
      %v2962 = vadd.f32 %v2521, %v2888
      %v2963 = vadd.f32 %v2522, %v2891
      %v2964 = vadd.f32 %v2523, %v2896
      %v2965 = vadd.f32 %v2524, %v2899
      %v2966 = vadd.f32 %v2525, %v2904
      %v2967 = vadd.f32 %v2526, %v2907
      %v2968 = vadd.f32 %v2527, %v2912
      %v2969 = vadd.f32 %v2528, %v2915
      %v2970 = vadd.f32 %v2529, %v2920
      %v2971 = vadd.f32 %v2530, %v2923
      %v2972 = vadd.f32 %v2531, %v2928
      %v2973 = vadd.f32 %v2532, %v2931
      %v2974 = vadd.f32 %v2533, %v2936
      %v2975 = vadd.f32 %v2534, %v2939
      %v2976 = vadd.f32 %v2535, %v2944
      %v2977 = vadd.f32 %v2536, %v2947
      %2978 = vst [vmem:[#allocation4] sm:$0xff] %v2950
      %2979 = vst [vmem:[#allocation4 + $0x8] sm:$0xff] %v2951
      %2980 = vst [vmem:[#allocation4 + $0x10] sm:$0xff] %v2952
      %2981 = vst [vmem:[#allocation4 + $0x18] sm:$0xff] %v2953
      %2982 = vst [vmem:[#allocation4 + $0x20] sm:$0xff] %v2954
      %2983 = vst [vmem:[#allocation4 + $0x28] sm:$0xff] %v2955
      %2984 = vst [vmem:[#allocation4 + $0x30] sm:$0xff] %v2956
      %2985 = vst [vmem:[#allocation4 + $0x38] sm:$0xff] %v2957
      %2986 = vst [vmem:[#allocation4 + $0x40] sm:$0xff] %v2958
      %2987 = vst [vmem:[#allocation4 + $0x48] sm:$0xff] %v2959
      %2988 = vst [vmem:[#allocation4 + $0x50] sm:$0xff] %v2960
      %2989 = vst [vmem:[#allocation4 + $0x58] sm:$0xff] %v2961
      %2990 = vst [vmem:[#allocation4 + $0x60] sm:$0xff] %v2962
      %2991 = vst [vmem:[#allocation4 + $0x68] sm:$0xff] %v2963
      %2992 = vst [vmem:[#allocation4 + $0x70] sm:$0xff] %v2964
      %2993 = vst [vmem:[#allocation4 + $0x78] sm:$0xff] %v2965
      %2994 = vst [vmem:[#allocation4 + $0x80] sm:$0xff] %v2966
      %2995 = vst [vmem:[#allocation4 + $0x88] sm:$0xff] %v2967
      %2996 = vst [vmem:[#allocation4 + $0x90] sm:$0xff] %v2968
      %2997 = vst [vmem:[#allocation4 + $0x98] sm:$0xff] %v2969
      %2998 = vst [vmem:[#allocation4 + $0xa0] sm:$0xff] %v2970
      %2999 = vst [vmem:[#allocation4 + $0xa8] sm:$0xff] %v2971
      %3000 = vst [vmem:[#allocation4 + $0xb0] sm:$0xff] %v2972
      %3001 = vst [vmem:[#allocation4 + $0xb8] sm:$0xff] %v2973
      %3002 = vst [vmem:[#allocation4 + $0xc0] sm:$0xff] %v2974
      %3003 = vst [vmem:[#allocation4 + $0xc8] sm:$0xff] %v2975
      %3004 = vst [vmem:[#allocation4 + $0xd0] sm:$0xff] %v2976
      %3005 = vst [vmem:[#allocation4 + $0xd8] sm:$0x3f] %v2977
      %v3006 = vld [vmem:[#allocation4] sm:$0xff]
      %v3007 = vld [vmem:[#allocation4 + $0x8] sm:$0xff]
      %v3008 = vld [vmem:[#allocation4 + $0x10] sm:$0xff]
      %v3009 = vld [vmem:[#allocation4 + $0x18] sm:$0xff]
      %v3010 = vld [vmem:[#allocation4 + $0x20] sm:$0xff]
      %v3011 = vld [vmem:[#allocation4 + $0x28] sm:$0xff]
      %v3012 = vld [vmem:[#allocation4 + $0x30] sm:$0xff]
      %v3013 = vld [vmem:[#allocation4 + $0x38] sm:$0xff]
      %v3014 = vld [vmem:[#allocation4 + $0x40] sm:$0xff]
      %v3015 = vld [vmem:[#allocation4 + $0x48] sm:$0xff]
      %v3016 = vld [vmem:[#allocation4 + $0x50] sm:$0xff]
      %v3017 = vld [vmem:[#allocation4 + $0x58] sm:$0xff]
      %v3018 = vld [vmem:[#allocation4 + $0x60] sm:$0xff]
      %v3019 = vld [vmem:[#allocation4 + $0x68] sm:$0xff]
      %v3020 = vld [vmem:[#allocation4 + $0x70] sm:$0xff]
      %v3021 = vld [vmem:[#allocation4 + $0x78] sm:$0xff]
      %v3022 = vld [vmem:[#allocation4 + $0x80] sm:$0xff]
      %v3023 = vld [vmem:[#allocation4 + $0x88] sm:$0xff]
      %v3024 = vld [vmem:[#allocation4 + $0x90] sm:$0xff]
      %v3025 = vld [vmem:[#allocation4 + $0x98] sm:$0xff]
      %v3026 = vld [vmem:[#allocation4 + $0xa0] sm:$0xff]
      %v3027 = vld [vmem:[#allocation4 + $0xa8] sm:$0xff]
      %v3028 = vld [vmem:[#allocation4 + $0xb0] sm:$0xff]
      %v3029 = vld [vmem:[#allocation4 + $0xb8] sm:$0xff]
      %v3030 = vld [vmem:[#allocation4 + $0xc0] sm:$0xff]
      %v3031 = vld [vmem:[#allocation4 + $0xc8] sm:$0xff]
      %v3032 = vld [vmem:[#allocation4 + $0xd0] sm:$0xff]
      %v3033 = vld [vmem:[#allocation4 + $0xd8] sm:$0x3f]
      %v3034 = vld [vmem:[#allocation2 + $0x10] sm:$0xff]
      %v3035 = vld [vmem:[#allocation2 + $0x18] sm:$0xff]
      %v3036 = vld [vmem:[#allocation2 + $0x20] sm:$0xff]
      %v3037 = vld [vmem:[#allocation2 + $0x28] sm:$0xff]
      %v3038 = vld [vmem:[#allocation2 + $0x30] sm:$0xff]
      %v3039 = vld [vmem:[#allocation2 + $0x38] sm:$0xff]
      %v3040 = vld [vmem:[#allocation2 + $0x40] sm:$0xff]
      %v3041 = vld [vmem:[#allocation2 + $0x48] sm:$0xff]
      %v3042 = vld [vmem:[#allocation2 + $0x50] sm:$0xff]
      %v3043 = vld [vmem:[#allocation2 + $0x58] sm:$0xff]
      %v3044 = vld [vmem:[#allocation2 + $0x60] sm:$0xff]
      %v3045 = vld [vmem:[#allocation2 + $0x68] sm:$0xff]
      %v3046 = vld [vmem:[#allocation2 + $0x70] sm:$0xff]
      %v3047 = vld [vmem:[#allocation2 + $0x78] sm:$0xff]
      %v3048 = vld [vmem:[#allocation2 + $0x80] sm:$0xff]
      %v3049 = vld [vmem:[#allocation2 + $0x88] sm:$0xff]
      %v3050 = vld [vmem:[#allocation2 + $0x90] sm:$0xff]
      %v3051 = vld [vmem:[#allocation2 + $0x98] sm:$0xff]
      %v3052 = vld [vmem:[#allocation2 + $0xa0] sm:$0xff]
      %v3053 = vld [vmem:[#allocation2 + $0xa8] sm:$0xff]
      %v3054 = vld [vmem:[#allocation2 + $0xb0] sm:$0xff]
      %v3055 = vld [vmem:[#allocation2 + $0xb8] sm:$0xff]
      %v3056 = vld [vmem:[#allocation2 + $0xc0] sm:$0xff]
      %v3057 = vld [vmem:[#allocation2 + $0xc8] sm:$0xff]
      %v3058 = vld [vmem:[#allocation2 + $0xd0] sm:$0xff]
      %v3059 = vld [vmem:[#allocation2 + $0xd8] sm:$0xff]
      %v3060 = vld [vmem:[#allocation2 + $0xe0] sm:$0x7f]
      %v3061 = vld [vmem:[#allocation2 + $0xe8] sm:$0x7f]
      %s3062 = scalar_lea.vmem %s4, 384
      %v3063 = vld [vmem:[%s3062] sm:$0xf]
      %v3064 = vld [vmem:[%s3062 + $0x4] sm:$0xf]
      %v3065 = vld [vmem:[%s3062 + $0x8] sm:$0xf]
      %v3066 = vld [vmem:[%s3062 + $0xc] sm:$0xf]
      %v3067 = vld [vmem:[%s3062 + $0x10] sm:$0xf]
      %v3068 = vld [vmem:[%s3062 + $0x14] sm:$0xf]
      %v3069 = vld [vmem:[%s3062 + $0x18] sm:$0xf]
      %v3070 = vld [vmem:[%s3062 + $0x1c] sm:$0xf]
      %v3071 = vld [vmem:[%s3062 + $0x20] sm:$0xf]
      %v3072 = vld [vmem:[%s3062 + $0x24] sm:$0xf]
      %v3073 = vld [vmem:[%s3062 + $0x28] sm:$0xf]
      %v3074 = vld [vmem:[%s3062 + $0x2c] sm:$0xf]
      %v3075 = vld [vmem:[%s3062 + $0x30] sm:$0xf]
      %v3076 = vld [vmem:[%s3062 + $0x34] sm:$0xf]
      %v3077 = vld [vmem:[%s3062 + $0x38] sm:$0xf]
      %v3078 = vld [vmem:[%s3062 + $0x3c] sm:$0xf]
      %v3079 = vld [vmem:[%s3062 + $0x40] sm:$0xf]
      %v3080 = vld [vmem:[%s3062 + $0x44] sm:$0xf]
      %v3081 = vld [vmem:[%s3062 + $0x48] sm:$0xf]
      %v3082 = vld [vmem:[%s3062 + $0x4c] sm:$0xf]
      %v3083 = vld [vmem:[%s3062 + $0x50] sm:$0xf]
      %v3084 = vld [vmem:[%s3062 + $0x54] sm:$0xf]
      %v3085 = vld [vmem:[%s3062 + $0x58] sm:$0xf]
      %v3086 = vld [vmem:[%s3062 + $0x5c] sm:$0xf]
      %v3087 = vld [vmem:[%s3062 + $0x60] sm:$0xf]
      %v3088 = vld [vmem:[%s3062 + $0x64] sm:$0xf]
      %v3089 = vld [vmem:[%s3062 + $0x68] sm:$0xf]
      %v3090 = vld [vmem:[%s3062 + $0x6c] sm:$0xf]
      %v3091 = vld [vmem:[%s3062 + $0x70] sm:$0xf]
      %v3092 = vld [vmem:[%s3062 + $0x74] sm:$0xf]
      %v3093 = vld [vmem:[%s3062 + $0x78] sm:$0xf]
      %v3094 = vld [vmem:[%s3062 + $0x7c] sm:$0xf]
      %v3127 = vunpack.c.l.b16 %v3063
      %v3128 = vunpack.c.l.b16 %v3064
      %v3129 = vunpack.c.l.b16 %v3065
      %v3130 = vunpack.c.l.b16 %v3066
      %v3131 = vunpack.c.l.b16 %v3067
      %v3132 = vunpack.c.l.b16 %v3068
      %v3133 = vunpack.c.l.b16 %v3069
      %v3134 = vunpack.c.l.b16 %v3070
      %v3135 = vunpack.c.l.b16 %v3071
      %v3136 = vunpack.c.l.b16 %v3072
      %v3137 = vunpack.c.l.b16 %v3073
      %v3138 = vunpack.c.l.b16 %v3074
      %v3139 = vunpack.c.l.b16 %v3075
      %v3140 = vunpack.c.l.b16 %v3076
      %v3141 = vunpack.c.l.b16 %v3077
      %v3142 = vunpack.c.l.b16 %v3078
      %v3143 = vunpack.c.l.b16 %v3079
      %v3144 = vunpack.c.l.b16 %v3080
      %v3145 = vunpack.c.l.b16 %v3081
      %v3146 = vunpack.c.l.b16 %v3082
      %v3147 = vunpack.c.l.b16 %v3083
      %v3148 = vunpack.c.l.b16 %v3084
      %v3149 = vunpack.c.l.b16 %v3085
      %v3150 = vunpack.c.l.b16 %v3086
      %v3151 = vunpack.c.l.b16 %v3087
      %v3152 = vunpack.c.l.b16 %v3088
      %v3153 = vunpack.c.l.b16 %v3089
      %v3154 = vunpack.c.l.b16 %v3090
      %v3155 = vunpack.c.l.b16 %v3091
      %v3156 = vunpack.c.l.b16 %v3092
      %v3157 = vunpack.c.l.b16 %v3093
      %v3158 = vunpack.c.l.b16 %v3094
      %v3159 = vpack.c.b16 %v3128, %v3127
      %v3160 = vpack.c.b16 %v3130, %v3129
      %v3161 = vpack.c.b16 %v3132, %v3131
      %v3162 = vpack.c.b16 %v3134, %v3133
      %v3163 = vpack.c.b16 %v3136, %v3135
      %v3164 = vpack.c.b16 %v3138, %v3137
      %v3165 = vpack.c.b16 %v3140, %v3139
      %v3166 = vpack.c.b16 %v3142, %v3141
      %v3167 = vpack.c.b16 %v3144, %v3143
      %v3168 = vpack.c.b16 %v3146, %v3145
      %v3169 = vpack.c.b16 %v3148, %v3147
      %v3170 = vpack.c.b16 %v3150, %v3149
      %v3171 = vpack.c.b16 %v3152, %v3151
      %v3172 = vpack.c.b16 %v3154, %v3153
      %v3173 = vpack.c.b16 %v3156, %v3155
      %v3174 = vpack.c.b16 %v3158, %v3157
      %3191 = vmatprep.subr.bf16.mxu0 0
      %3192 = vmatpush1.bf16.msra.mxu0 %v3159
      %3193 = vmatprep.subr.bf16.mxu0 0
      %3194 = vmatpush1.bf16.msra.mxu0 %v3160
      %3195 = vmatprep.subr.bf16.mxu0 0
      %3196 = vmatpush1.bf16.msra.mxu0 %v3161
      %3197 = vmatprep.subr.bf16.mxu0 0
      %3198 = vmatpush1.bf16.msra.mxu0 %v3162
      %3199 = vmatprep.subr.bf16.mxu0 0
      %3200 = vmatpush1.bf16.msra.mxu0 %v3163
      %3201 = vmatprep.subr.bf16.mxu0 0
      %3202 = vmatpush1.bf16.msra.mxu0 %v3164
      %3203 = vmatprep.subr.bf16.mxu0 0
      %3204 = vmatpush1.bf16.msra.mxu0 %v3165
      %3205 = vmatprep.subr.bf16.mxu0 0
      %3206 = vmatpush1.bf16.msra.mxu0 %v3166
      %3207 = vmatprep.subr.bf16.mxu0 0
      %3208 = vmatpush1.bf16.msra.mxu0 %v3167
      %3209 = vmatprep.subr.bf16.mxu0 0
      %3210 = vmatpush1.bf16.msra.mxu0 %v3168
      %3211 = vmatprep.subr.bf16.mxu0 0
      %3212 = vmatpush1.bf16.msra.mxu0 %v3169
      %3213 = vmatprep.subr.bf16.mxu0 0
      %3214 = vmatpush1.bf16.msra.mxu0 %v3170
      %3215 = vmatprep.subr.bf16.mxu0 0
      %3216 = vmatpush1.bf16.msra.mxu0 %v3171
      %3217 = vmatprep.subr.bf16.mxu0 0
      %3218 = vmatpush1.bf16.msra.mxu0 %v3172
      %3219 = vmatprep.subr.bf16.mxu0 0
      %3220 = vmatpush1.bf16.msra.mxu0 %v3173
      %3221 = vmatprep.subr.bf16.mxu0 0
      %3222 = vmatpush1.bf16.msra.mxu0 %v3174
      %3223 = vmatprep.mubr.bf16.mxu0 %v3035
      %3224 = vmatmul.mubr.bf16.gmra.mrb[0].mxu0 %v3034
      %v3225 = vpop.f32.mrb[0].mxu0
      %v3226 = vadd.f32 0.0, %v3225
      %v3227 = vpop.f32.mrb[0].mxu0
      %v3228 = vpop.f32.mrb[0].mxu0
      %v3229 = vadd.f32 0.0, %v3228
      %v3230 = vpop.f32.mrb[0].mxu0
      %3231 = vmatprep.mubr.bf16.mxu0 %v3037
      %3232 = vmatmul.mubr.bf16.gmra.mrb[0].mxu0 %v3036
      %v3233 = vpop.f32.mrb[0].mxu0
      %v3234 = vadd.f32 0.0, %v3233
      %v3235 = vpop.f32.mrb[0].mxu0
      %v3236 = vpop.f32.mrb[0].mxu0
      %v3237 = vadd.f32 0.0, %v3236
      %v3238 = vpop.f32.mrb[0].mxu0
      %3239 = vmatprep.mubr.bf16.mxu0 %v3039
      %3240 = vmatmul.mubr.bf16.gmra.mrb[0].mxu0 %v3038
      %v3241 = vpop.f32.mrb[0].mxu0
      %v3242 = vadd.f32 0.0, %v3241
      %v3243 = vpop.f32.mrb[0].mxu0
      %v3244 = vpop.f32.mrb[0].mxu0
      %v3245 = vadd.f32 0.0, %v3244
      %v3246 = vpop.f32.mrb[0].mxu0
      %3247 = vmatprep.mubr.bf16.mxu0 %v3041
      %3248 = vmatmul.mubr.bf16.gmra.mrb[0].mxu0 %v3040
      %v3249 = vpop.f32.mrb[0].mxu0
      %v3250 = vadd.f32 0.0, %v3249
      %v3251 = vpop.f32.mrb[0].mxu0
      %v3252 = vpop.f32.mrb[0].mxu0
      %v3253 = vadd.f32 0.0, %v3252
      %v3254 = vpop.f32.mrb[0].mxu0
      %3255 = vmatprep.mubr.bf16.mxu0 %v3043
      %3256 = vmatmul.mubr.bf16.gmra.mrb[0].mxu0 %v3042
      %v3257 = vpop.f32.mrb[0].mxu0
      %v3258 = vadd.f32 0.0, %v3257
      %v3259 = vpop.f32.mrb[0].mxu0
      %v3260 = vpop.f32.mrb[0].mxu0
      %v3261 = vadd.f32 0.0, %v3260
      %v3262 = vpop.f32.mrb[0].mxu0
      %3263 = vmatprep.mubr.bf16.mxu0 %v3045
      %3264 = vmatmul.mubr.bf16.gmra.mrb[0].mxu0 %v3044
      %v3265 = vpop.f32.mrb[0].mxu0
      %v3266 = vadd.f32 0.0, %v3265
      %v3267 = vpop.f32.mrb[0].mxu0
      %v3268 = vpop.f32.mrb[0].mxu0
      %v3269 = vadd.f32 0.0, %v3268
      %v3270 = vpop.f32.mrb[0].mxu0
      %3271 = vmatprep.mubr.bf16.mxu0 %v3047
      %3272 = vmatmul.mubr.bf16.gmra.mrb[0].mxu0 %v3046
      %v3273 = vpop.f32.mrb[0].mxu0
      %v3274 = vadd.f32 0.0, %v3273
      %v3275 = vpop.f32.mrb[0].mxu0
      %v3276 = vpop.f32.mrb[0].mxu0
      %v3277 = vadd.f32 0.0, %v3276
      %v3278 = vpop.f32.mrb[0].mxu0
      %3279 = vmatprep.mubr.bf16.mxu0 %v3049
      %3280 = vmatmul.mubr.bf16.gmra.mrb[0].mxu0 %v3048
      %v3281 = vpop.f32.mrb[0].mxu0
      %v3282 = vadd.f32 0.0, %v3281
      %v3283 = vpop.f32.mrb[0].mxu0
      %v3284 = vpop.f32.mrb[0].mxu0
      %v3285 = vadd.f32 0.0, %v3284
      %v3286 = vpop.f32.mrb[0].mxu0
      %3287 = vmatprep.mubr.bf16.mxu0 %v3051
      %3288 = vmatmul.mubr.bf16.gmra.mrb[0].mxu0 %v3050
      %v3289 = vpop.f32.mrb[0].mxu0
      %v3290 = vadd.f32 0.0, %v3289
      %v3291 = vpop.f32.mrb[0].mxu0
      %v3292 = vpop.f32.mrb[0].mxu0
      %v3293 = vadd.f32 0.0, %v3292
      %v3294 = vpop.f32.mrb[0].mxu0
      %3295 = vmatprep.mubr.bf16.mxu0 %v3053
      %3296 = vmatmul.mubr.bf16.gmra.mrb[0].mxu0 %v3052
      %v3297 = vpop.f32.mrb[0].mxu0
      %v3298 = vadd.f32 0.0, %v3297
      %v3299 = vpop.f32.mrb[0].mxu0
      %v3300 = vpop.f32.mrb[0].mxu0
      %v3301 = vadd.f32 0.0, %v3300
      %v3302 = vpop.f32.mrb[0].mxu0
      %3303 = vmatprep.mubr.bf16.mxu0 %v3055
      %3304 = vmatmul.mubr.bf16.gmra.mrb[0].mxu0 %v3054
      %v3305 = vpop.f32.mrb[0].mxu0
      %v3306 = vadd.f32 0.0, %v3305
      %v3307 = vpop.f32.mrb[0].mxu0
      %v3308 = vpop.f32.mrb[0].mxu0
      %v3309 = vadd.f32 0.0, %v3308
      %v3310 = vpop.f32.mrb[0].mxu0
      %3311 = vmatprep.mubr.bf16.mxu0 %v3057
      %3312 = vmatmul.mubr.bf16.gmra.mrb[0].mxu0 %v3056
      %v3313 = vpop.f32.mrb[0].mxu0
      %v3314 = vadd.f32 0.0, %v3313
      %v3315 = vpop.f32.mrb[0].mxu0
      %v3316 = vpop.f32.mrb[0].mxu0
      %v3317 = vadd.f32 0.0, %v3316
      %v3318 = vpop.f32.mrb[0].mxu0
      %3319 = vmatprep.mubr.bf16.mxu0 %v3059
      %3320 = vmatmul.mubr.bf16.gmra.mrb[0].mxu0 %v3058
      %v3321 = vpop.f32.mrb[0].mxu0
      %v3322 = vadd.f32 0.0, %v3321
      %v3323 = vpop.f32.mrb[0].mxu0
      %v3324 = vpop.f32.mrb[0].mxu0
      %v3325 = vadd.f32 0.0, %v3324
      %v3326 = vpop.f32.mrb[0].mxu0
      %3327 = vmatprep.mubr.bf16.mxu0 %v3061
      %3328 = vmatmul.mubr.bf16.gmra.mrb[0].mxu0 %v3060
      %v3329 = vpop.f32.mrb[0].mxu0
      %v3330 = vadd.f32 0.0, %v3329
      %v3331 = vpop.f32.mrb[0].mxu0
      %v3332 = vpop.f32.mrb[0].mxu0
      %v3333 = vadd.f32 0.0, %v3332
      %v3334 = vpop.f32.mrb[0].mxu0
      %3335 = vdwg.mxu0
      %v3336 = vadd.f32 %v3006, %v3226
      %v3337 = vadd.f32 %v3007, %v3229
      %v3338 = vadd.f32 %v3008, %v3234
      %v3339 = vadd.f32 %v3009, %v3237
      %v3340 = vadd.f32 %v3010, %v3242
      %v3341 = vadd.f32 %v3011, %v3245
      %v3342 = vadd.f32 %v3012, %v3250
      %v3343 = vadd.f32 %v3013, %v3253
      %v3344 = vadd.f32 %v3014, %v3258
      %v3345 = vadd.f32 %v3015, %v3261
      %v3346 = vadd.f32 %v3016, %v3266
      %v3347 = vadd.f32 %v3017, %v3269
      %v3348 = vadd.f32 %v3018, %v3274
      %v3349 = vadd.f32 %v3019, %v3277
      %v3350 = vadd.f32 %v3020, %v3282
      %v3351 = vadd.f32 %v3021, %v3285
      %v3352 = vadd.f32 %v3022, %v3290
      %v3353 = vadd.f32 %v3023, %v3293
      %v3354 = vadd.f32 %v3024, %v3298
      %v3355 = vadd.f32 %v3025, %v3301
      %v3356 = vadd.f32 %v3026, %v3306
      %v3357 = vadd.f32 %v3027, %v3309
      %v3358 = vadd.f32 %v3028, %v3314
      %v3359 = vadd.f32 %v3029, %v3317
      %v3360 = vadd.f32 %v3030, %v3322
      %v3361 = vadd.f32 %v3031, %v3325
      %v3362 = vadd.f32 %v3032, %v3330
      %v3363 = vadd.f32 %v3033, %v3333
      %3364 = vst [vmem:[#allocation4] sm:$0xff] %v3336
      %3365 = vst [vmem:[#allocation4 + $0x8] sm:$0xff] %v3337
      %3366 = vst [vmem:[#allocation4 + $0x10] sm:$0xff] %v3338
      %3367 = vst [vmem:[#allocation4 + $0x18] sm:$0xff] %v3339
      %3368 = vst [vmem:[#allocation4 + $0x20] sm:$0xff] %v3340
      %3369 = vst [vmem:[#allocation4 + $0x28] sm:$0xff] %v3341
      %3370 = vst [vmem:[#allocation4 + $0x30] sm:$0xff] %v3342
      %3371 = vst [vmem:[#allocation4 + $0x38] sm:$0xff] %v3343
      %3372 = vst [vmem:[#allocation4 + $0x40] sm:$0xff] %v3344
      %3373 = vst [vmem:[#allocation4 + $0x48] sm:$0xff] %v3345
      %3374 = vst [vmem:[#allocation4 + $0x50] sm:$0xff] %v3346
      %3375 = vst [vmem:[#allocation4 + $0x58] sm:$0xff] %v3347
      %3376 = vst [vmem:[#allocation4 + $0x60] sm:$0xff] %v3348
      %3377 = vst [vmem:[#allocation4 + $0x68] sm:$0xff] %v3349
      %3378 = vst [vmem:[#allocation4 + $0x70] sm:$0xff] %v3350
      %3379 = vst [vmem:[#allocation4 + $0x78] sm:$0xff] %v3351
      %3380 = vst [vmem:[#allocation4 + $0x80] sm:$0xff] %v3352
      %3381 = vst [vmem:[#allocation4 + $0x88] sm:$0xff] %v3353
      %3382 = vst [vmem:[#allocation4 + $0x90] sm:$0xff] %v3354
      %3383 = vst [vmem:[#allocation4 + $0x98] sm:$0xff] %v3355
      %3384 = vst [vmem:[#allocation4 + $0xa0] sm:$0xff] %v3356
      %3385 = vst [vmem:[#allocation4 + $0xa8] sm:$0xff] %v3357
      %3386 = vst [vmem:[#allocation4 + $0xb0] sm:$0xff] %v3358
      %3387 = vst [vmem:[#allocation4 + $0xb8] sm:$0xff] %v3359
      %3388 = vst [vmem:[#allocation4 + $0xc0] sm:$0xff] %v3360
      %3389 = vst [vmem:[#allocation4 + $0xc8] sm:$0xff] %v3361
      %3390 = vst [vmem:[#allocation4 + $0xd0] sm:$0xff] %v3362
      %3391 = vst [vmem:[#allocation4 + $0xd8] sm:$0x3f] %v3363
      %v3392 = vld [vmem:[#allocation4] sm:$0xff]
      %v3393 = vld [vmem:[#allocation4 + $0x8] sm:$0xff]
      %v3394 = vld [vmem:[#allocation4 + $0x10] sm:$0xff]
      %v3395 = vld [vmem:[#allocation4 + $0x18] sm:$0xff]
      %v3396 = vld [vmem:[#allocation4 + $0x20] sm:$0xff]
      %v3397 = vld [vmem:[#allocation4 + $0x28] sm:$0xff]
      %v3398 = vld [vmem:[#allocation4 + $0x30] sm:$0xff]
      %v3399 = vld [vmem:[#allocation4 + $0x38] sm:$0xff]
      %v3400 = vld [vmem:[#allocation4 + $0x40] sm:$0xff]
      %v3401 = vld [vmem:[#allocation4 + $0x48] sm:$0xff]
      %v3402 = vld [vmem:[#allocation4 + $0x50] sm:$0xff]
      %v3403 = vld [vmem:[#allocation4 + $0x58] sm:$0xff]
      %v3404 = vld [vmem:[#allocation4 + $0x60] sm:$0xff]
      %v3405 = vld [vmem:[#allocation4 + $0x68] sm:$0xff]
      %v3406 = vld [vmem:[#allocation4 + $0x70] sm:$0xff]
      %v3407 = vld [vmem:[#allocation4 + $0x78] sm:$0xff]
      %v3408 = vld [vmem:[#allocation4 + $0x80] sm:$0xff]
      %v3409 = vld [vmem:[#allocation4 + $0x88] sm:$0xff]
      %v3410 = vld [vmem:[#allocation4 + $0x90] sm:$0xff]
      %v3411 = vld [vmem:[#allocation4 + $0x98] sm:$0xff]
      %v3412 = vld [vmem:[#allocation4 + $0xa0] sm:$0xff]
      %v3413 = vld [vmem:[#allocation4 + $0xa8] sm:$0xff]
      %v3414 = vld [vmem:[#allocation4 + $0xb0] sm:$0xff]
      %v3415 = vld [vmem:[#allocation4 + $0xb8] sm:$0xff]
      %v3416 = vld [vmem:[#allocation4 + $0xc0] sm:$0xff]
      %v3417 = vld [vmem:[#allocation4 + $0xc8] sm:$0xff]
      %v3418 = vld [vmem:[#allocation4 + $0xd0] sm:$0xff]
      %v3419 = vld [vmem:[#allocation4 + $0xd8] sm:$0x3f]
      %v3420 = vld [vmem:[#allocation2 + $0x10] sm:$0xff]
      %v3421 = vld [vmem:[#allocation2 + $0x18] sm:$0xff]
      %v3422 = vld [vmem:[#allocation2 + $0x20] sm:$0xff]
      %v3423 = vld [vmem:[#allocation2 + $0x28] sm:$0xff]
      %v3424 = vld [vmem:[#allocation2 + $0x30] sm:$0xff]
      %v3425 = vld [vmem:[#allocation2 + $0x38] sm:$0xff]
      %v3426 = vld [vmem:[#allocation2 + $0x40] sm:$0xff]
      %v3427 = vld [vmem:[#allocation2 + $0x48] sm:$0xff]
      %v3428 = vld [vmem:[#allocation2 + $0x50] sm:$0xff]
      %v3429 = vld [vmem:[#allocation2 + $0x58] sm:$0xff]
      %v3430 = vld [vmem:[#allocation2 + $0x60] sm:$0xff]
      %v3431 = vld [vmem:[#allocation2 + $0x68] sm:$0xff]
      %v3432 = vld [vmem:[#allocation2 + $0x70] sm:$0xff]
      %v3433 = vld [vmem:[#allocation2 + $0x78] sm:$0xff]
      %v3434 = vld [vmem:[#allocation2 + $0x80] sm:$0xff]
      %v3435 = vld [vmem:[#allocation2 + $0x88] sm:$0xff]
      %v3436 = vld [vmem:[#allocation2 + $0x90] sm:$0xff]
      %v3437 = vld [vmem:[#allocation2 + $0x98] sm:$0xff]
      %v3438 = vld [vmem:[#allocation2 + $0xa0] sm:$0xff]
      %v3439 = vld [vmem:[#allocation2 + $0xa8] sm:$0xff]
      %v3440 = vld [vmem:[#allocation2 + $0xb0] sm:$0xff]
      %v3441 = vld [vmem:[#allocation2 + $0xb8] sm:$0xff]
      %v3442 = vld [vmem:[#allocation2 + $0xc0] sm:$0xff]
      %v3443 = vld [vmem:[#allocation2 + $0xc8] sm:$0xff]
      %v3444 = vld [vmem:[#allocation2 + $0xd0] sm:$0xff]
      %v3445 = vld [vmem:[#allocation2 + $0xd8] sm:$0xff]
      %v3446 = vld [vmem:[#allocation2 + $0xe0] sm:$0xff]
      %v3447 = vld [vmem:[#allocation2 + $0xe8] sm:$0xff]
      %s3448 = scalar_lea.vmem %s4, 512
      %v3449 = vld [vmem:[%s3448] sm:$0xf]
      %v3450 = vld [vmem:[%s3448 + $0x4] sm:$0xf]
      %v3451 = vld [vmem:[%s3448 + $0x8] sm:$0xf]
      %v3452 = vld [vmem:[%s3448 + $0xc] sm:$0xf]
      %v3453 = vld [vmem:[%s3448 + $0x10] sm:$0xf]
      %v3454 = vld [vmem:[%s3448 + $0x14] sm:$0xf]
      %v3455 = vld [vmem:[%s3448 + $0x18] sm:$0xf]
      %v3456 = vld [vmem:[%s3448 + $0x1c] sm:$0xf]
      %v3457 = vld [vmem:[%s3448 + $0x20] sm:$0xf]
      %v3458 = vld [vmem:[%s3448 + $0x24] sm:$0xf]
      %v3459 = vld [vmem:[%s3448 + $0x28] sm:$0xf]
      %v3460 = vld [vmem:[%s3448 + $0x2c] sm:$0xf]
      %v3461 = vld [vmem:[%s3448 + $0x30] sm:$0xf]
      %v3462 = vld [vmem:[%s3448 + $0x34] sm:$0xf]
      %v3463 = vld [vmem:[%s3448 + $0x38] sm:$0xf]
      %v3464 = vld [vmem:[%s3448 + $0x3c] sm:$0xf]
      %v3465 = vld [vmem:[%s3448 + $0x40] sm:$0xf]
      %v3466 = vld [vmem:[%s3448 + $0x44] sm:$0xf]
      %v3467 = vld [vmem:[%s3448 + $0x48] sm:$0xf]
      %v3468 = vld [vmem:[%s3448 + $0x4c] sm:$0xf]
      %v3469 = vld [vmem:[%s3448 + $0x50] sm:$0xf]
      %v3470 = vld [vmem:[%s3448 + $0x54] sm:$0xf]
      %v3471 = vld [vmem:[%s3448 + $0x58] sm:$0xf]
      %v3472 = vld [vmem:[%s3448 + $0x5c] sm:$0xf]
      %v3473 = vld [vmem:[%s3448 + $0x60] sm:$0xf]
      %v3474 = vld [vmem:[%s3448 + $0x64] sm:$0xf]
      %v3475 = vld [vmem:[%s3448 + $0x68] sm:$0xf]
      %v3476 = vld [vmem:[%s3448 + $0x6c] sm:$0xf]
      %v3477 = vld [vmem:[%s3448 + $0x70] sm:$0xf]
      %v3478 = vld [vmem:[%s3448 + $0x74] sm:$0xf]
      %v3479 = vld [vmem:[%s3448 + $0x78] sm:$0xf]
      %v3480 = vld [vmem:[%s3448 + $0x7c] sm:$0xf]
      %v3482 = vshrl.u32 %v3420, 16
      %v3484 = vshll.u32 %v3420, 16
      %v3486 = vrot.slane %v3484, 1
      %v3487 = vor.u32 %v3482, %v3486
      %v3489 = vshll.u32 %v3422, 16
      %v3491 = vrot.slane %v3489, 1
      %v3492 = vsel %vm1961, %v3487, %v3491
      %v3494 = vshrl.u32 %v3421, 16
      %v3496 = vshll.u32 %v3421, 16
      %v3498 = vrot.slane %v3496, 1
      %v3499 = vor.u32 %v3494, %v3498
      %v3501 = vshll.u32 %v3423, 16
      %v3503 = vrot.slane %v3501, 1
      %v3504 = vsel %vm1961, %v3499, %v3503
      %v3505 = vshrl.u32 %v3422, 16
      %v3507 = vor.u32 %v3505, %v3491
      %v3509 = vshll.u32 %v3424, 16
      %v3511 = vrot.slane %v3509, 1
      %v3512 = vsel %vm1961, %v3507, %v3511
      %v3513 = vshrl.u32 %v3423, 16
      %v3515 = vor.u32 %v3513, %v3503
      %v3517 = vshll.u32 %v3425, 16
      %v3519 = vrot.slane %v3517, 1
      %v3520 = vsel %vm1961, %v3515, %v3519
      %v3521 = vshrl.u32 %v3424, 16
      %v3523 = vor.u32 %v3521, %v3511
      %v3525 = vshll.u32 %v3426, 16
      %v3527 = vrot.slane %v3525, 1
      %v3528 = vsel %vm1961, %v3523, %v3527
      %v3529 = vshrl.u32 %v3425, 16
      %v3531 = vor.u32 %v3529, %v3519
      %v3533 = vshll.u32 %v3427, 16
      %v3535 = vrot.slane %v3533, 1
      %v3536 = vsel %vm1961, %v3531, %v3535
      %v3537 = vshrl.u32 %v3426, 16
      %v3539 = vor.u32 %v3537, %v3527
      %v3541 = vshll.u32 %v3428, 16
      %v3543 = vrot.slane %v3541, 1
      %v3544 = vsel %vm1961, %v3539, %v3543
      %v3545 = vshrl.u32 %v3427, 16
      %v3547 = vor.u32 %v3545, %v3535
      %v3549 = vshll.u32 %v3429, 16
      %v3551 = vrot.slane %v3549, 1
      %v3552 = vsel %vm1961, %v3547, %v3551
      %v3553 = vshrl.u32 %v3428, 16
      %v3555 = vor.u32 %v3553, %v3543
      %v3557 = vshll.u32 %v3430, 16
      %v3559 = vrot.slane %v3557, 1
      %v3560 = vsel %vm1961, %v3555, %v3559
      %v3561 = vshrl.u32 %v3429, 16
      %v3563 = vor.u32 %v3561, %v3551
      %v3565 = vshll.u32 %v3431, 16
      %v3567 = vrot.slane %v3565, 1
      %v3568 = vsel %vm1961, %v3563, %v3567
      %v3569 = vshrl.u32 %v3430, 16
      %v3571 = vor.u32 %v3569, %v3559
      %v3573 = vshll.u32 %v3432, 16
      %v3575 = vrot.slane %v3573, 1
      %v3576 = vsel %vm1961, %v3571, %v3575
      %v3577 = vshrl.u32 %v3431, 16
      %v3579 = vor.u32 %v3577, %v3567
      %v3581 = vshll.u32 %v3433, 16
      %v3583 = vrot.slane %v3581, 1
      %v3584 = vsel %vm1961, %v3579, %v3583
      %v3585 = vshrl.u32 %v3432, 16
      %v3587 = vor.u32 %v3585, %v3575
      %v3589 = vshll.u32 %v3434, 16
      %v3591 = vrot.slane %v3589, 1
      %v3592 = vsel %vm1961, %v3587, %v3591
      %v3593 = vshrl.u32 %v3433, 16
      %v3595 = vor.u32 %v3593, %v3583
      %v3597 = vshll.u32 %v3435, 16
      %v3599 = vrot.slane %v3597, 1
      %v3600 = vsel %vm1961, %v3595, %v3599
      %v3601 = vshrl.u32 %v3434, 16
      %v3603 = vor.u32 %v3601, %v3591
      %v3605 = vshll.u32 %v3436, 16
      %v3607 = vrot.slane %v3605, 1
      %v3608 = vsel %vm1961, %v3603, %v3607
      %v3609 = vshrl.u32 %v3435, 16
      %v3611 = vor.u32 %v3609, %v3599
      %v3613 = vshll.u32 %v3437, 16
      %v3615 = vrot.slane %v3613, 1
      %v3616 = vsel %vm1961, %v3611, %v3615
      %v3617 = vshrl.u32 %v3436, 16
      %v3619 = vor.u32 %v3617, %v3607
      %v3621 = vshll.u32 %v3438, 16
      %v3623 = vrot.slane %v3621, 1
      %v3624 = vsel %vm1961, %v3619, %v3623
      %v3625 = vshrl.u32 %v3437, 16
      %v3627 = vor.u32 %v3625, %v3615
      %v3629 = vshll.u32 %v3439, 16
      %v3631 = vrot.slane %v3629, 1
      %v3632 = vsel %vm1961, %v3627, %v3631
      %v3633 = vshrl.u32 %v3438, 16
      %v3635 = vor.u32 %v3633, %v3623
      %v3637 = vshll.u32 %v3440, 16
      %v3639 = vrot.slane %v3637, 1
      %v3640 = vsel %vm1961, %v3635, %v3639
      %v3641 = vshrl.u32 %v3439, 16
      %v3643 = vor.u32 %v3641, %v3631
      %v3645 = vshll.u32 %v3441, 16
      %v3647 = vrot.slane %v3645, 1
      %v3648 = vsel %vm1961, %v3643, %v3647
      %v3649 = vshrl.u32 %v3440, 16
      %v3651 = vor.u32 %v3649, %v3639
      %v3653 = vshll.u32 %v3442, 16
      %v3655 = vrot.slane %v3653, 1
      %v3656 = vsel %vm1961, %v3651, %v3655
      %v3657 = vshrl.u32 %v3441, 16
      %v3659 = vor.u32 %v3657, %v3647
      %v3661 = vshll.u32 %v3443, 16
      %v3663 = vrot.slane %v3661, 1
      %v3664 = vsel %vm1961, %v3659, %v3663
      %v3665 = vshrl.u32 %v3442, 16
      %v3667 = vor.u32 %v3665, %v3655
      %v3669 = vshll.u32 %v3444, 16
      %v3671 = vrot.slane %v3669, 1
      %v3672 = vsel %vm1961, %v3667, %v3671
      %v3673 = vshrl.u32 %v3443, 16
      %v3675 = vor.u32 %v3673, %v3663
      %v3677 = vshll.u32 %v3445, 16
      %v3679 = vrot.slane %v3677, 1
      %v3680 = vsel %vm1961, %v3675, %v3679
      %v3681 = vshrl.u32 %v3444, 16
      %v3683 = vor.u32 %v3681, %v3671
      %v3685 = vshll.u32 %v3446, 16
      %v3687 = vrot.slane %v3685, 1
      %v3688 = vsel %vm1961, %v3683, %v3687
      %v3689 = vshrl.u32 %v3445, 16
      %v3691 = vor.u32 %v3689, %v3679
      %v3693 = vshll.u32 %v3447, 16
      %v3695 = vrot.slane %v3693, 1
      %v3696 = vsel %vm1961, %v3691, %v3695
      %v3697 = vshrl.u32 %v3446, 16
      %v3699 = vor.u32 %v3697, %v3687
      %v3700 = vshrl.u32 %v3447, 16
      %v3702 = vor.u32 %v3700, %v3695
      %v3763 = vunpack.c.l.b16 %v3449
      %v3764 = vunpack.c.l.b16 %v3450
      %v3765 = vunpack.c.l.b16 %v3451
      %v3766 = vunpack.c.l.b16 %v3452
      %v3767 = vunpack.c.l.b16 %v3453
      %v3768 = vunpack.c.l.b16 %v3454
      %v3769 = vunpack.c.l.b16 %v3455
      %v3770 = vunpack.c.l.b16 %v3456
      %v3771 = vunpack.c.l.b16 %v3457
      %v3772 = vunpack.c.l.b16 %v3458
      %v3773 = vunpack.c.l.b16 %v3459
      %v3774 = vunpack.c.l.b16 %v3460
      %v3775 = vunpack.c.l.b16 %v3461
      %v3776 = vunpack.c.l.b16 %v3462
      %v3777 = vunpack.c.l.b16 %v3463
      %v3778 = vunpack.c.l.b16 %v3464
      %v3779 = vunpack.c.l.b16 %v3465
      %v3780 = vunpack.c.l.b16 %v3466
      %v3781 = vunpack.c.l.b16 %v3467
      %v3782 = vunpack.c.l.b16 %v3468
      %v3783 = vunpack.c.l.b16 %v3469
      %v3784 = vunpack.c.l.b16 %v3470
      %v3785 = vunpack.c.l.b16 %v3471
      %v3786 = vunpack.c.l.b16 %v3472
      %v3787 = vunpack.c.l.b16 %v3473
      %v3788 = vunpack.c.l.b16 %v3474
      %v3789 = vunpack.c.l.b16 %v3475
      %v3790 = vunpack.c.l.b16 %v3476
      %v3791 = vunpack.c.l.b16 %v3477
      %v3792 = vunpack.c.l.b16 %v3478
      %v3793 = vunpack.c.l.b16 %v3479
      %v3794 = vunpack.c.l.b16 %v3480
      %v3795 = vpack.c.b16 %v3764, %v3763
      %v3796 = vpack.c.b16 %v3766, %v3765
      %v3797 = vpack.c.b16 %v3768, %v3767
      %v3798 = vpack.c.b16 %v3770, %v3769
      %v3799 = vpack.c.b16 %v3772, %v3771
      %v3800 = vpack.c.b16 %v3774, %v3773
      %v3801 = vpack.c.b16 %v3776, %v3775
      %v3802 = vpack.c.b16 %v3778, %v3777
      %v3803 = vpack.c.b16 %v3780, %v3779
      %v3804 = vpack.c.b16 %v3782, %v3781
      %v3805 = vpack.c.b16 %v3784, %v3783
      %v3806 = vpack.c.b16 %v3786, %v3785
      %v3807 = vpack.c.b16 %v3788, %v3787
      %v3808 = vpack.c.b16 %v3790, %v3789
      %v3809 = vpack.c.b16 %v3792, %v3791
      %v3810 = vpack.c.b16 %v3794, %v3793
      %3827 = vmatprep.subr.bf16.mxu0 0
      %3828 = vmatpush1.bf16.msra.mxu0 %v3795
      %3829 = vmatprep.subr.bf16.mxu0 0
      %3830 = vmatpush1.bf16.msra.mxu0 %v3796
      %3831 = vmatprep.subr.bf16.mxu0 0
      %3832 = vmatpush1.bf16.msra.mxu0 %v3797
      %3833 = vmatprep.subr.bf16.mxu0 0
      %3834 = vmatpush1.bf16.msra.mxu0 %v3798
      %3835 = vmatprep.subr.bf16.mxu0 0
      %3836 = vmatpush1.bf16.msra.mxu0 %v3799
      %3837 = vmatprep.subr.bf16.mxu0 0
      %3838 = vmatpush1.bf16.msra.mxu0 %v3800
      %3839 = vmatprep.subr.bf16.mxu0 0
      %3840 = vmatpush1.bf16.msra.mxu0 %v3801
      %3841 = vmatprep.subr.bf16.mxu0 0
      %3842 = vmatpush1.bf16.msra.mxu0 %v3802
      %3843 = vmatprep.subr.bf16.mxu0 0
      %3844 = vmatpush1.bf16.msra.mxu0 %v3803
      %3845 = vmatprep.subr.bf16.mxu0 0
      %3846 = vmatpush1.bf16.msra.mxu0 %v3804
      %3847 = vmatprep.subr.bf16.mxu0 0
      %3848 = vmatpush1.bf16.msra.mxu0 %v3805
      %3849 = vmatprep.subr.bf16.mxu0 0
      %3850 = vmatpush1.bf16.msra.mxu0 %v3806
      %3851 = vmatprep.subr.bf16.mxu0 0
      %3852 = vmatpush1.bf16.msra.mxu0 %v3807
      %3853 = vmatprep.subr.bf16.mxu0 0
      %3854 = vmatpush1.bf16.msra.mxu0 %v3808
      %3855 = vmatprep.subr.bf16.mxu0 0
      %3856 = vmatpush1.bf16.msra.mxu0 %v3809
      %3857 = vmatprep.subr.bf16.mxu0 0
      %3858 = vmatpush1.bf16.msra.mxu0 %v3810
      %3859 = vmatprep.mubr.bf16.mxu0 %v3504
      %3860 = vmatmul.mubr.bf16.gmra.mrb[0].mxu0 %v3492
      %v3861 = vpop.f32.mrb[0].mxu0
      %v3862 = vadd.f32 0.0, %v3861
      %v3863 = vpop.f32.mrb[0].mxu0
      %v3864 = vpop.f32.mrb[0].mxu0
      %v3865 = vadd.f32 0.0, %v3864
      %v3866 = vpop.f32.mrb[0].mxu0
      %3867 = vmatprep.mubr.bf16.mxu0 %v3520
      %3868 = vmatmul.mubr.bf16.gmra.mrb[0].mxu0 %v3512
      %v3869 = vpop.f32.mrb[0].mxu0
      %v3870 = vadd.f32 0.0, %v3869
      %v3871 = vpop.f32.mrb[0].mxu0
      %v3872 = vpop.f32.mrb[0].mxu0
      %v3873 = vadd.f32 0.0, %v3872
      %v3874 = vpop.f32.mrb[0].mxu0
      %3875 = vmatprep.mubr.bf16.mxu0 %v3536
      %3876 = vmatmul.mubr.bf16.gmra.mrb[0].mxu0 %v3528
      %v3877 = vpop.f32.mrb[0].mxu0
      %v3878 = vadd.f32 0.0, %v3877
      %v3879 = vpop.f32.mrb[0].mxu0
      %v3880 = vpop.f32.mrb[0].mxu0
      %v3881 = vadd.f32 0.0, %v3880
      %v3882 = vpop.f32.mrb[0].mxu0
      %3883 = vmatprep.mubr.bf16.mxu0 %v3552
      %3884 = vmatmul.mubr.bf16.gmra.mrb[0].mxu0 %v3544
      %v3885 = vpop.f32.mrb[0].mxu0
      %v3886 = vadd.f32 0.0, %v3885
      %v3887 = vpop.f32.mrb[0].mxu0
      %v3888 = vpop.f32.mrb[0].mxu0
      %v3889 = vadd.f32 0.0, %v3888
      %v3890 = vpop.f32.mrb[0].mxu0
      %3891 = vmatprep.mubr.bf16.mxu0 %v3568
      %3892 = vmatmul.mubr.bf16.gmra.mrb[0].mxu0 %v3560
      %v3893 = vpop.f32.mrb[0].mxu0
      %v3894 = vadd.f32 0.0, %v3893
      %v3895 = vpop.f32.mrb[0].mxu0
      %v3896 = vpop.f32.mrb[0].mxu0
      %v3897 = vadd.f32 0.0, %v3896
      %v3898 = vpop.f32.mrb[0].mxu0
      %3899 = vmatprep.mubr.bf16.mxu0 %v3584
      %3900 = vmatmul.mubr.bf16.gmra.mrb[0].mxu0 %v3576
      %v3901 = vpop.f32.mrb[0].mxu0
      %v3902 = vadd.f32 0.0, %v3901
      %v3903 = vpop.f32.mrb[0].mxu0
      %v3904 = vpop.f32.mrb[0].mxu0
      %v3905 = vadd.f32 0.0, %v3904
      %v3906 = vpop.f32.mrb[0].mxu0
      %3907 = vmatprep.mubr.bf16.mxu0 %v3600
      %3908 = vmatmul.mubr.bf16.gmra.mrb[0].mxu0 %v3592
      %v3909 = vpop.f32.mrb[0].mxu0
      %v3910 = vadd.f32 0.0, %v3909
      %v3911 = vpop.f32.mrb[0].mxu0
      %v3912 = vpop.f32.mrb[0].mxu0
      %v3913 = vadd.f32 0.0, %v3912
      %v3914 = vpop.f32.mrb[0].mxu0
      %3915 = vmatprep.mubr.bf16.mxu0 %v3616
      %3916 = vmatmul.mubr.bf16.gmra.mrb[0].mxu0 %v3608
      %v3917 = vpop.f32.mrb[0].mxu0
      %v3918 = vadd.f32 0.0, %v3917
      %v3919 = vpop.f32.mrb[0].mxu0
      %v3920 = vpop.f32.mrb[0].mxu0
      %v3921 = vadd.f32 0.0, %v3920
      %v3922 = vpop.f32.mrb[0].mxu0
      %3923 = vmatprep.mubr.bf16.mxu0 %v3632
      %3924 = vmatmul.mubr.bf16.gmra.mrb[0].mxu0 %v3624
      %v3925 = vpop.f32.mrb[0].mxu0
      %v3926 = vadd.f32 0.0, %v3925
      %v3927 = vpop.f32.mrb[0].mxu0
      %v3928 = vpop.f32.mrb[0].mxu0
      %v3929 = vadd.f32 0.0, %v3928
      %v3930 = vpop.f32.mrb[0].mxu0
      %3931 = vmatprep.mubr.bf16.mxu0 %v3648
      %3932 = vmatmul.mubr.bf16.gmra.mrb[0].mxu0 %v3640
      %v3933 = vpop.f32.mrb[0].mxu0
      %v3934 = vadd.f32 0.0, %v3933
      %v3935 = vpop.f32.mrb[0].mxu0
      %v3936 = vpop.f32.mrb[0].mxu0
      %v3937 = vadd.f32 0.0, %v3936
      %v3938 = vpop.f32.mrb[0].mxu0
      %3939 = vmatprep.mubr.bf16.mxu0 %v3664
      %3940 = vmatmul.mubr.bf16.gmra.mrb[0].mxu0 %v3656
      %v3941 = vpop.f32.mrb[0].mxu0
      %v3942 = vadd.f32 0.0, %v3941
      %v3943 = vpop.f32.mrb[0].mxu0
      %v3944 = vpop.f32.mrb[0].mxu0
      %v3945 = vadd.f32 0.0, %v3944
      %v3946 = vpop.f32.mrb[0].mxu0
      %3947 = vmatprep.mubr.bf16.mxu0 %v3680
      %3948 = vmatmul.mubr.bf16.gmra.mrb[0].mxu0 %v3672
      %v3949 = vpop.f32.mrb[0].mxu0
      %v3950 = vadd.f32 0.0, %v3949
      %v3951 = vpop.f32.mrb[0].mxu0
      %v3952 = vpop.f32.mrb[0].mxu0
      %v3953 = vadd.f32 0.0, %v3952
      %v3954 = vpop.f32.mrb[0].mxu0
      %3955 = vmatprep.mubr.bf16.mxu0 %v3696
      %3956 = vmatmul.mubr.bf16.gmra.mrb[0].mxu0 %v3688
      %v3957 = vpop.f32.mrb[0].mxu0
      %v3958 = vadd.f32 0.0, %v3957
      %v3959 = vpop.f32.mrb[0].mxu0
      %v3960 = vpop.f32.mrb[0].mxu0
      %v3961 = vadd.f32 0.0, %v3960
      %v3962 = vpop.f32.mrb[0].mxu0
      %3963 = vmatprep.mubr.bf16.mxu0 %v3702
      %3964 = vmatmul.mubr.bf16.gmra.mrb[0].mxu0 %v3699
      %v3965 = vpop.f32.mrb[0].mxu0
      %v3966 = vadd.f32 0.0, %v3965
      %v3967 = vpop.f32.mrb[0].mxu0
      %v3968 = vpop.f32.mrb[0].mxu0
      %v3969 = vadd.f32 0.0, %v3968
      %v3970 = vpop.f32.mrb[0].mxu0
      %3971 = vdwg.mxu0
      %v3972 = vadd.f32 %v3392, %v3862
      %v3973 = vadd.f32 %v3393, %v3865
      %v3974 = vadd.f32 %v3394, %v3870
      %v3975 = vadd.f32 %v3395, %v3873
      %v3976 = vadd.f32 %v3396, %v3878
      %v3977 = vadd.f32 %v3397, %v3881
      %v3978 = vadd.f32 %v3398, %v3886
      %v3979 = vadd.f32 %v3399, %v3889
      %v3980 = vadd.f32 %v3400, %v3894
      %v3981 = vadd.f32 %v3401, %v3897
      %v3982 = vadd.f32 %v3402, %v3902
      %v3983 = vadd.f32 %v3403, %v3905
      %v3984 = vadd.f32 %v3404, %v3910
      %v3985 = vadd.f32 %v3405, %v3913
      %v3986 = vadd.f32 %v3406, %v3918
      %v3987 = vadd.f32 %v3407, %v3921
      %v3988 = vadd.f32 %v3408, %v3926
      %v3989 = vadd.f32 %v3409, %v3929
      %v3990 = vadd.f32 %v3410, %v3934
      %v3991 = vadd.f32 %v3411, %v3937
      %v3992 = vadd.f32 %v3412, %v3942
      %v3993 = vadd.f32 %v3413, %v3945
      %v3994 = vadd.f32 %v3414, %v3950
      %v3995 = vadd.f32 %v3415, %v3953
      %v3996 = vadd.f32 %v3416, %v3958
      %v3997 = vadd.f32 %v3417, %v3961
      %v3998 = vadd.f32 %v3418, %v3966
      %v3999 = vadd.f32 %v3419, %v3969
      %4000 = vst [vmem:[#allocation4] sm:$0xff] %v3972
      %4001 = vst [vmem:[#allocation4 + $0x8] sm:$0xff] %v3973
      %4002 = vst [vmem:[#allocation4 + $0x10] sm:$0xff] %v3974
      %4003 = vst [vmem:[#allocation4 + $0x18] sm:$0xff] %v3975
      %4004 = vst [vmem:[#allocation4 + $0x20] sm:$0xff] %v3976
      %4005 = vst [vmem:[#allocation4 + $0x28] sm:$0xff] %v3977
      %4006 = vst [vmem:[#allocation4 + $0x30] sm:$0xff] %v3978
      %4007 = vst [vmem:[#allocation4 + $0x38] sm:$0xff] %v3979
      %4008 = vst [vmem:[#allocation4 + $0x40] sm:$0xff] %v3980
      %4009 = vst [vmem:[#allocation4 + $0x48] sm:$0xff] %v3981
      %4010 = vst [vmem:[#allocation4 + $0x50] sm:$0xff] %v3982
      %4011 = vst [vmem:[#allocation4 + $0x58] sm:$0xff] %v3983
      %4012 = vst [vmem:[#allocation4 + $0x60] sm:$0xff] %v3984
      %4013 = vst [vmem:[#allocation4 + $0x68] sm:$0xff] %v3985
      %4014 = vst [vmem:[#allocation4 + $0x70] sm:$0xff] %v3986
      %4015 = vst [vmem:[#allocation4 + $0x78] sm:$0xff] %v3987
      %4016 = vst [vmem:[#allocation4 + $0x80] sm:$0xff] %v3988
      %4017 = vst [vmem:[#allocation4 + $0x88] sm:$0xff] %v3989
      %4018 = vst [vmem:[#allocation4 + $0x90] sm:$0xff] %v3990
      %4019 = vst [vmem:[#allocation4 + $0x98] sm:$0xff] %v3991
      %4020 = vst [vmem:[#allocation4 + $0xa0] sm:$0xff] %v3992
      %4021 = vst [vmem:[#allocation4 + $0xa8] sm:$0xff] %v3993
      %4022 = vst [vmem:[#allocation4 + $0xb0] sm:$0xff] %v3994
      %4023 = vst [vmem:[#allocation4 + $0xb8] sm:$0xff] %v3995
      %4024 = vst [vmem:[#allocation4 + $0xc0] sm:$0xff] %v3996
      %4025 = vst [vmem:[#allocation4 + $0xc8] sm:$0xff] %v3997
      %4026 = vst [vmem:[#allocation4 + $0xd0] sm:$0xff] %v3998
      %4027 = vst [vmem:[#allocation4 + $0xd8] sm:$0x3f] %v3999
      %v4028 = vld [vmem:[#allocation4] sm:$0xff]
      %v4029 = vld [vmem:[#allocation4 + $0x8] sm:$0xff]
      %v4030 = vld [vmem:[#allocation4 + $0x10] sm:$0xff]
      %v4031 = vld [vmem:[#allocation4 + $0x18] sm:$0xff]
      %v4032 = vld [vmem:[#allocation4 + $0x20] sm:$0xff]
      %v4033 = vld [vmem:[#allocation4 + $0x28] sm:$0xff]
      %v4034 = vld [vmem:[#allocation4 + $0x30] sm:$0xff]
      %v4035 = vld [vmem:[#allocation4 + $0x38] sm:$0xff]
      %v4036 = vld [vmem:[#allocation4 + $0x40] sm:$0xff]
      %v4037 = vld [vmem:[#allocation4 + $0x48] sm:$0xff]
      %v4038 = vld [vmem:[#allocation4 + $0x50] sm:$0xff]
      %v4039 = vld [vmem:[#allocation4 + $0x58] sm:$0xff]
      %v4040 = vld [vmem:[#allocation4 + $0x60] sm:$0xff]
      %v4041 = vld [vmem:[#allocation4 + $0x68] sm:$0xff]
      %v4042 = vld [vmem:[#allocation4 + $0x70] sm:$0xff]
      %v4043 = vld [vmem:[#allocation4 + $0x78] sm:$0xff]
      %v4044 = vld [vmem:[#allocation4 + $0x80] sm:$0xff]
      %v4045 = vld [vmem:[#allocation4 + $0x88] sm:$0xff]
      %v4046 = vld [vmem:[#allocation4 + $0x90] sm:$0xff]
      %v4047 = vld [vmem:[#allocation4 + $0x98] sm:$0xff]
      %v4048 = vld [vmem:[#allocation4 + $0xa0] sm:$0xff]
      %v4049 = vld [vmem:[#allocation4 + $0xa8] sm:$0xff]
      %v4050 = vld [vmem:[#allocation4 + $0xb0] sm:$0xff]
      %v4051 = vld [vmem:[#allocation4 + $0xb8] sm:$0xff]
      %v4052 = vld [vmem:[#allocation4 + $0xc0] sm:$0xff]
      %v4053 = vld [vmem:[#allocation4 + $0xc8] sm:$0xff]
      %v4054 = vld [vmem:[#allocation4 + $0xd0] sm:$0xff]
      %v4055 = vld [vmem:[#allocation4 + $0xd8] sm:$0x3f]
      %v4056 = vld [vmem:[#allocation2 + $0x10] sm:$0xfe]
      %v4057 = vld [vmem:[#allocation2 + $0x18] sm:$0xfe]
      %v4058 = vld [vmem:[#allocation2 + $0x20] sm:$0xff]
      %v4059 = vld [vmem:[#allocation2 + $0x28] sm:$0xff]
      %v4060 = vld [vmem:[#allocation2 + $0x30] sm:$0xff]
      %v4061 = vld [vmem:[#allocation2 + $0x38] sm:$0xff]
      %v4062 = vld [vmem:[#allocation2 + $0x40] sm:$0xff]
      %v4063 = vld [vmem:[#allocation2 + $0x48] sm:$0xff]
      %v4064 = vld [vmem:[#allocation2 + $0x50] sm:$0xff]
      %v4065 = vld [vmem:[#allocation2 + $0x58] sm:$0xff]
      %v4066 = vld [vmem:[#allocation2 + $0x60] sm:$0xff]
      %v4067 = vld [vmem:[#allocation2 + $0x68] sm:$0xff]
      %v4068 = vld [vmem:[#allocation2 + $0x70] sm:$0xff]
      %v4069 = vld [vmem:[#allocation2 + $0x78] sm:$0xff]
      %v4070 = vld [vmem:[#allocation2 + $0x80] sm:$0xff]
      %v4071 = vld [vmem:[#allocation2 + $0x88] sm:$0xff]
      %v4072 = vld [vmem:[#allocation2 + $0x90] sm:$0xff]
      %v4073 = vld [vmem:[#allocation2 + $0x98] sm:$0xff]
      %v4074 = vld [vmem:[#allocation2 + $0xa0] sm:$0xff]
      %v4075 = vld [vmem:[#allocation2 + $0xa8] sm:$0xff]
      %v4076 = vld [vmem:[#allocation2 + $0xb0] sm:$0xff]
      %v4077 = vld [vmem:[#allocation2 + $0xb8] sm:$0xff]
      %v4078 = vld [vmem:[#allocation2 + $0xc0] sm:$0xff]
      %v4079 = vld [vmem:[#allocation2 + $0xc8] sm:$0xff]
      %v4080 = vld [vmem:[#allocation2 + $0xd0] sm:$0xff]
      %v4081 = vld [vmem:[#allocation2 + $0xd8] sm:$0xff]
      %v4082 = vld [vmem:[#allocation2 + $0xe0] sm:$0xff]
      %v4083 = vld [vmem:[#allocation2 + $0xe8] sm:$0xff]
      %s4084 = scalar_lea.vmem %s4, 640
      %v4085 = vld [vmem:[%s4084] sm:$0xf]
      %v4086 = vld [vmem:[%s4084 + $0x4] sm:$0xf]
      %v4087 = vld [vmem:[%s4084 + $0x8] sm:$0xf]
      %v4088 = vld [vmem:[%s4084 + $0xc] sm:$0xf]
      %v4089 = vld [vmem:[%s4084 + $0x10] sm:$0xf]
      %v4090 = vld [vmem:[%s4084 + $0x14] sm:$0xf]
      %v4091 = vld [vmem:[%s4084 + $0x18] sm:$0xf]
      %v4092 = vld [vmem:[%s4084 + $0x1c] sm:$0xf]
      %v4093 = vld [vmem:[%s4084 + $0x20] sm:$0xf]
      %v4094 = vld [vmem:[%s4084 + $0x24] sm:$0xf]
      %v4095 = vld [vmem:[%s4084 + $0x28] sm:$0xf]
      %v4096 = vld [vmem:[%s4084 + $0x2c] sm:$0xf]
      %v4097 = vld [vmem:[%s4084 + $0x30] sm:$0xf]
      %v4098 = vld [vmem:[%s4084 + $0x34] sm:$0xf]
      %v4099 = vld [vmem:[%s4084 + $0x38] sm:$0xf]
      %v4100 = vld [vmem:[%s4084 + $0x3c] sm:$0xf]
      %v4101 = vld [vmem:[%s4084 + $0x40] sm:$0xf]
      %v4102 = vld [vmem:[%s4084 + $0x44] sm:$0xf]
      %v4103 = vld [vmem:[%s4084 + $0x48] sm:$0xf]
      %v4104 = vld [vmem:[%s4084 + $0x4c] sm:$0xf]
      %v4105 = vld [vmem:[%s4084 + $0x50] sm:$0xf]
      %v4106 = vld [vmem:[%s4084 + $0x54] sm:$0xf]
      %v4107 = vld [vmem:[%s4084 + $0x58] sm:$0xf]
      %v4108 = vld [vmem:[%s4084 + $0x5c] sm:$0xf]
      %v4109 = vld [vmem:[%s4084 + $0x60] sm:$0xf]
      %v4110 = vld [vmem:[%s4084 + $0x64] sm:$0xf]
      %v4111 = vld [vmem:[%s4084 + $0x68] sm:$0xf]
      %v4112 = vld [vmem:[%s4084 + $0x6c] sm:$0xf]
      %v4113 = vld [vmem:[%s4084 + $0x70] sm:$0xf]
      %v4114 = vld [vmem:[%s4084 + $0x74] sm:$0xf]
      %v4115 = vld [vmem:[%s4084 + $0x78] sm:$0xf]
      %v4116 = vld [vmem:[%s4084 + $0x7c] sm:$0xf]
      %v4145 = vrot.slane %v4056, 1
      %v4146 = vrot.slane %v4058, 1
      %v4147 = vsel %vm2626, %v4145, %v4146
      %v4148 = vrot.slane %v4057, 1
      %v4149 = vrot.slane %v4059, 1
      %v4150 = vsel %vm2626, %v4148, %v4149
      %v4151 = vrot.slane %v4060, 1
      %v4152 = vsel %vm2626, %v4146, %v4151
      %v4153 = vrot.slane %v4061, 1
      %v4154 = vsel %vm2626, %v4149, %v4153
      %v4155 = vrot.slane %v4062, 1
      %v4156 = vsel %vm2626, %v4151, %v4155
      %v4157 = vrot.slane %v4063, 1
      %v4158 = vsel %vm2626, %v4153, %v4157
      %v4159 = vrot.slane %v4064, 1
      %v4160 = vsel %vm2626, %v4155, %v4159
      %v4161 = vrot.slane %v4065, 1
      %v4162 = vsel %vm2626, %v4157, %v4161
      %v4163 = vrot.slane %v4066, 1
      %v4164 = vsel %vm2626, %v4159, %v4163
      %v4165 = vrot.slane %v4067, 1
      %v4166 = vsel %vm2626, %v4161, %v4165
      %v4167 = vrot.slane %v4068, 1
      %v4168 = vsel %vm2626, %v4163, %v4167
      %v4169 = vrot.slane %v4069, 1
      %v4170 = vsel %vm2626, %v4165, %v4169
      %v4171 = vrot.slane %v4070, 1
      %v4172 = vsel %vm2626, %v4167, %v4171
      %v4173 = vrot.slane %v4071, 1
      %v4174 = vsel %vm2626, %v4169, %v4173
      %v4175 = vrot.slane %v4072, 1
      %v4176 = vsel %vm2626, %v4171, %v4175
      %v4177 = vrot.slane %v4073, 1
      %v4178 = vsel %vm2626, %v4173, %v4177
      %v4179 = vrot.slane %v4074, 1
      %v4180 = vsel %vm2626, %v4175, %v4179
      %v4181 = vrot.slane %v4075, 1
      %v4182 = vsel %vm2626, %v4177, %v4181
      %v4183 = vrot.slane %v4076, 1
      %v4184 = vsel %vm2626, %v4179, %v4183
      %v4185 = vrot.slane %v4077, 1
      %v4186 = vsel %vm2626, %v4181, %v4185
      %v4187 = vrot.slane %v4078, 1
      %v4188 = vsel %vm2626, %v4183, %v4187
      %v4189 = vrot.slane %v4079, 1
      %v4190 = vsel %vm2626, %v4185, %v4189
      %v4191 = vrot.slane %v4080, 1
      %v4192 = vsel %vm2626, %v4187, %v4191
      %v4193 = vrot.slane %v4081, 1
      %v4194 = vsel %vm2626, %v4189, %v4193
      %v4195 = vrot.slane %v4082, 1
      %v4196 = vsel %vm2626, %v4191, %v4195
      %v4197 = vrot.slane %v4083, 1
      %v4198 = vsel %vm2626, %v4193, %v4197
      %v4259 = vunpack.c.l.b16 %v4085
      %v4260 = vunpack.c.l.b16 %v4086
      %v4261 = vunpack.c.l.b16 %v4087
      %v4262 = vunpack.c.l.b16 %v4088
      %v4263 = vunpack.c.l.b16 %v4089
      %v4264 = vunpack.c.l.b16 %v4090
      %v4265 = vunpack.c.l.b16 %v4091
      %v4266 = vunpack.c.l.b16 %v4092
      %v4267 = vunpack.c.l.b16 %v4093
      %v4268 = vunpack.c.l.b16 %v4094
      %v4269 = vunpack.c.l.b16 %v4095
      %v4270 = vunpack.c.l.b16 %v4096
      %v4271 = vunpack.c.l.b16 %v4097
      %v4272 = vunpack.c.l.b16 %v4098
      %v4273 = vunpack.c.l.b16 %v4099
      %v4274 = vunpack.c.l.b16 %v4100
      %v4275 = vunpack.c.l.b16 %v4101
      %v4276 = vunpack.c.l.b16 %v4102
      %v4277 = vunpack.c.l.b16 %v4103
      %v4278 = vunpack.c.l.b16 %v4104
      %v4279 = vunpack.c.l.b16 %v4105
      %v4280 = vunpack.c.l.b16 %v4106
      %v4281 = vunpack.c.l.b16 %v4107
      %v4282 = vunpack.c.l.b16 %v4108
      %v4283 = vunpack.c.l.b16 %v4109
      %v4284 = vunpack.c.l.b16 %v4110
      %v4285 = vunpack.c.l.b16 %v4111
      %v4286 = vunpack.c.l.b16 %v4112
      %v4287 = vunpack.c.l.b16 %v4113
      %v4288 = vunpack.c.l.b16 %v4114
      %v4289 = vunpack.c.l.b16 %v4115
      %v4290 = vunpack.c.l.b16 %v4116
      %v4291 = vpack.c.b16 %v4260, %v4259
      %v4292 = vpack.c.b16 %v4262, %v4261
      %v4293 = vpack.c.b16 %v4264, %v4263
      %v4294 = vpack.c.b16 %v4266, %v4265
      %v4295 = vpack.c.b16 %v4268, %v4267
      %v4296 = vpack.c.b16 %v4270, %v4269
      %v4297 = vpack.c.b16 %v4272, %v4271
      %v4298 = vpack.c.b16 %v4274, %v4273
      %v4299 = vpack.c.b16 %v4276, %v4275
      %v4300 = vpack.c.b16 %v4278, %v4277
      %v4301 = vpack.c.b16 %v4280, %v4279
      %v4302 = vpack.c.b16 %v4282, %v4281
      %v4303 = vpack.c.b16 %v4284, %v4283
      %v4304 = vpack.c.b16 %v4286, %v4285
      %v4305 = vpack.c.b16 %v4288, %v4287
      %v4306 = vpack.c.b16 %v4290, %v4289
      %4323 = vmatprep.subr.bf16.mxu0 0
      %4324 = vmatpush1.bf16.msra.mxu0 %v4291
      %4325 = vmatprep.subr.bf16.mxu0 0
      %4326 = vmatpush1.bf16.msra.mxu0 %v4292
      %4327 = vmatprep.subr.bf16.mxu0 0
      %4328 = vmatpush1.bf16.msra.mxu0 %v4293
      %4329 = vmatprep.subr.bf16.mxu0 0
      %4330 = vmatpush1.bf16.msra.mxu0 %v4294
      %4331 = vmatprep.subr.bf16.mxu0 0
      %4332 = vmatpush1.bf16.msra.mxu0 %v4295
      %4333 = vmatprep.subr.bf16.mxu0 0
      %4334 = vmatpush1.bf16.msra.mxu0 %v4296
      %4335 = vmatprep.subr.bf16.mxu0 0
      %4336 = vmatpush1.bf16.msra.mxu0 %v4297
      %4337 = vmatprep.subr.bf16.mxu0 0
      %4338 = vmatpush1.bf16.msra.mxu0 %v4298
      %4339 = vmatprep.subr.bf16.mxu0 0
      %4340 = vmatpush1.bf16.msra.mxu0 %v4299
      %4341 = vmatprep.subr.bf16.mxu0 0
      %4342 = vmatpush1.bf16.msra.mxu0 %v4300
      %4343 = vmatprep.subr.bf16.mxu0 0
      %4344 = vmatpush1.bf16.msra.mxu0 %v4301
      %4345 = vmatprep.subr.bf16.mxu0 0
      %4346 = vmatpush1.bf16.msra.mxu0 %v4302
      %4347 = vmatprep.subr.bf16.mxu0 0
      %4348 = vmatpush1.bf16.msra.mxu0 %v4303
      %4349 = vmatprep.subr.bf16.mxu0 0
      %4350 = vmatpush1.bf16.msra.mxu0 %v4304
      %4351 = vmatprep.subr.bf16.mxu0 0
      %4352 = vmatpush1.bf16.msra.mxu0 %v4305
      %4353 = vmatprep.subr.bf16.mxu0 0
      %4354 = vmatpush1.bf16.msra.mxu0 %v4306
      %4355 = vmatprep.mubr.bf16.mxu0 %v4150
      %4356 = vmatmul.mubr.bf16.gmra.mrb[0].mxu0 %v4147
      %v4357 = vpop.f32.mrb[0].mxu0
      %v4358 = vadd.f32 0.0, %v4357
      %v4359 = vpop.f32.mrb[0].mxu0
      %v4360 = vpop.f32.mrb[0].mxu0
      %v4361 = vadd.f32 0.0, %v4360
      %v4362 = vpop.f32.mrb[0].mxu0
      %4363 = vmatprep.mubr.bf16.mxu0 %v4154
      %4364 = vmatmul.mubr.bf16.gmra.mrb[0].mxu0 %v4152
      %v4365 = vpop.f32.mrb[0].mxu0
      %v4366 = vadd.f32 0.0, %v4365
      %v4367 = vpop.f32.mrb[0].mxu0
      %v4368 = vpop.f32.mrb[0].mxu0
      %v4369 = vadd.f32 0.0, %v4368
      %v4370 = vpop.f32.mrb[0].mxu0
      %4371 = vmatprep.mubr.bf16.mxu0 %v4158
      %4372 = vmatmul.mubr.bf16.gmra.mrb[0].mxu0 %v4156
      %v4373 = vpop.f32.mrb[0].mxu0
      %v4374 = vadd.f32 0.0, %v4373
      %v4375 = vpop.f32.mrb[0].mxu0
      %v4376 = vpop.f32.mrb[0].mxu0
      %v4377 = vadd.f32 0.0, %v4376
      %v4378 = vpop.f32.mrb[0].mxu0
      %4379 = vmatprep.mubr.bf16.mxu0 %v4162
      %4380 = vmatmul.mubr.bf16.gmra.mrb[0].mxu0 %v4160
      %v4381 = vpop.f32.mrb[0].mxu0
      %v4382 = vadd.f32 0.0, %v4381
      %v4383 = vpop.f32.mrb[0].mxu0
      %v4384 = vpop.f32.mrb[0].mxu0
      %v4385 = vadd.f32 0.0, %v4384
      %v4386 = vpop.f32.mrb[0].mxu0
      %4387 = vmatprep.mubr.bf16.mxu0 %v4166
      %4388 = vmatmul.mubr.bf16.gmra.mrb[0].mxu0 %v4164
      %v4389 = vpop.f32.mrb[0].mxu0
      %v4390 = vadd.f32 0.0, %v4389
      %v4391 = vpop.f32.mrb[0].mxu0
      %v4392 = vpop.f32.mrb[0].mxu0
      %v4393 = vadd.f32 0.0, %v4392
      %v4394 = vpop.f32.mrb[0].mxu0
      %4395 = vmatprep.mubr.bf16.mxu0 %v4170
      %4396 = vmatmul.mubr.bf16.gmra.mrb[0].mxu0 %v4168
      %v4397 = vpop.f32.mrb[0].mxu0
      %v4398 = vadd.f32 0.0, %v4397
      %v4399 = vpop.f32.mrb[0].mxu0
      %v4400 = vpop.f32.mrb[0].mxu0
      %v4401 = vadd.f32 0.0, %v4400
      %v4402 = vpop.f32.mrb[0].mxu0
      %4403 = vmatprep.mubr.bf16.mxu0 %v4174
      %4404 = vmatmul.mubr.bf16.gmra.mrb[0].mxu0 %v4172
      %v4405 = vpop.f32.mrb[0].mxu0
      %v4406 = vadd.f32 0.0, %v4405
      %v4407 = vpop.f32.mrb[0].mxu0
      %v4408 = vpop.f32.mrb[0].mxu0
      %v4409 = vadd.f32 0.0, %v4408
      %v4410 = vpop.f32.mrb[0].mxu0
      %4411 = vmatprep.mubr.bf16.mxu0 %v4178
      %4412 = vmatmul.mubr.bf16.gmra.mrb[0].mxu0 %v4176
      %v4413 = vpop.f32.mrb[0].mxu0
      %v4414 = vadd.f32 0.0, %v4413
      %v4415 = vpop.f32.mrb[0].mxu0
      %v4416 = vpop.f32.mrb[0].mxu0
      %v4417 = vadd.f32 0.0, %v4416
      %v4418 = vpop.f32.mrb[0].mxu0
      %4419 = vmatprep.mubr.bf16.mxu0 %v4182
      %4420 = vmatmul.mubr.bf16.gmra.mrb[0].mxu0 %v4180
      %v4421 = vpop.f32.mrb[0].mxu0
      %v4422 = vadd.f32 0.0, %v4421
      %v4423 = vpop.f32.mrb[0].mxu0
      %v4424 = vpop.f32.mrb[0].mxu0
      %v4425 = vadd.f32 0.0, %v4424
      %v4426 = vpop.f32.mrb[0].mxu0
      %4427 = vmatprep.mubr.bf16.mxu0 %v4186
      %4428 = vmatmul.mubr.bf16.gmra.mrb[0].mxu0 %v4184
      %v4429 = vpop.f32.mrb[0].mxu0
      %v4430 = vadd.f32 0.0, %v4429
      %v4431 = vpop.f32.mrb[0].mxu0
      %v4432 = vpop.f32.mrb[0].mxu0
      %v4433 = vadd.f32 0.0, %v4432
      %v4434 = vpop.f32.mrb[0].mxu0
      %4435 = vmatprep.mubr.bf16.mxu0 %v4190
      %4436 = vmatmul.mubr.bf16.gmra.mrb[0].mxu0 %v4188
      %v4437 = vpop.f32.mrb[0].mxu0
      %v4438 = vadd.f32 0.0, %v4437
      %v4439 = vpop.f32.mrb[0].mxu0
      %v4440 = vpop.f32.mrb[0].mxu0
      %v4441 = vadd.f32 0.0, %v4440
      %v4442 = vpop.f32.mrb[0].mxu0
      %4443 = vmatprep.mubr.bf16.mxu0 %v4194
      %4444 = vmatmul.mubr.bf16.gmra.mrb[0].mxu0 %v4192
      %v4445 = vpop.f32.mrb[0].mxu0
      %v4446 = vadd.f32 0.0, %v4445
      %v4447 = vpop.f32.mrb[0].mxu0
      %v4448 = vpop.f32.mrb[0].mxu0
      %v4449 = vadd.f32 0.0, %v4448
      %v4450 = vpop.f32.mrb[0].mxu0
      %4451 = vmatprep.mubr.bf16.mxu0 %v4198
      %4452 = vmatmul.mubr.bf16.gmra.mrb[0].mxu0 %v4196
      %v4453 = vpop.f32.mrb[0].mxu0
      %v4454 = vadd.f32 0.0, %v4453
      %v4455 = vpop.f32.mrb[0].mxu0
      %v4456 = vpop.f32.mrb[0].mxu0
      %v4457 = vadd.f32 0.0, %v4456
      %v4458 = vpop.f32.mrb[0].mxu0
      %4459 = vmatprep.mubr.bf16.mxu0 %v4197
      %4460 = vmatmul.mubr.bf16.gmra.mrb[0].mxu0 %v4195
      %v4461 = vpop.f32.mrb[0].mxu0
      %v4462 = vadd.f32 0.0, %v4461
      %v4463 = vpop.f32.mrb[0].mxu0
      %v4464 = vpop.f32.mrb[0].mxu0
      %v4465 = vadd.f32 0.0, %v4464
      %v4466 = vpop.f32.mrb[0].mxu0
      %4467 = vdwg.mxu0
      %v4468 = vadd.f32 %v4028, %v4358
      %v4469 = vadd.f32 %v4029, %v4361
      %v4470 = vadd.f32 %v4030, %v4366
      %v4471 = vadd.f32 %v4031, %v4369
      %v4472 = vadd.f32 %v4032, %v4374
      %v4473 = vadd.f32 %v4033, %v4377
      %v4474 = vadd.f32 %v4034, %v4382
      %v4475 = vadd.f32 %v4035, %v4385
      %v4476 = vadd.f32 %v4036, %v4390
      %v4477 = vadd.f32 %v4037, %v4393
      %v4478 = vadd.f32 %v4038, %v4398
      %v4479 = vadd.f32 %v4039, %v4401
      %v4480 = vadd.f32 %v4040, %v4406
      %v4481 = vadd.f32 %v4041, %v4409
      %v4482 = vadd.f32 %v4042, %v4414
      %v4483 = vadd.f32 %v4043, %v4417
      %v4484 = vadd.f32 %v4044, %v4422
      %v4485 = vadd.f32 %v4045, %v4425
      %v4486 = vadd.f32 %v4046, %v4430
      %v4487 = vadd.f32 %v4047, %v4433
      %v4488 = vadd.f32 %v4048, %v4438
      %v4489 = vadd.f32 %v4049, %v4441
      %v4490 = vadd.f32 %v4050, %v4446
      %v4491 = vadd.f32 %v4051, %v4449
      %v4492 = vadd.f32 %v4052, %v4454
      %v4493 = vadd.f32 %v4053, %v4457
      %v4494 = vadd.f32 %v4054, %v4462
      %v4495 = vadd.f32 %v4055, %v4465
      %4496 = vst [vmem:[#allocation4] sm:$0xff] %v4468
      %4497 = vst [vmem:[#allocation4 + $0x8] sm:$0xff] %v4469
      %4498 = vst [vmem:[#allocation4 + $0x10] sm:$0xff] %v4470
      %4499 = vst [vmem:[#allocation4 + $0x18] sm:$0xff] %v4471
      %4500 = vst [vmem:[#allocation4 + $0x20] sm:$0xff] %v4472
      %4501 = vst [vmem:[#allocation4 + $0x28] sm:$0xff] %v4473
      %4502 = vst [vmem:[#allocation4 + $0x30] sm:$0xff] %v4474
      %4503 = vst [vmem:[#allocation4 + $0x38] sm:$0xff] %v4475
      %4504 = vst [vmem:[#allocation4 + $0x40] sm:$0xff] %v4476
      %4505 = vst [vmem:[#allocation4 + $0x48] sm:$0xff] %v4477
      %4506 = vst [vmem:[#allocation4 + $0x50] sm:$0xff] %v4478
      %4507 = vst [vmem:[#allocation4 + $0x58] sm:$0xff] %v4479
      %4508 = vst [vmem:[#allocation4 + $0x60] sm:$0xff] %v4480
      %4509 = vst [vmem:[#allocation4 + $0x68] sm:$0xff] %v4481
      %4510 = vst [vmem:[#allocation4 + $0x70] sm:$0xff] %v4482
      %4511 = vst [vmem:[#allocation4 + $0x78] sm:$0xff] %v4483
      %4512 = vst [vmem:[#allocation4 + $0x80] sm:$0xff] %v4484
      %4513 = vst [vmem:[#allocation4 + $0x88] sm:$0xff] %v4485
      %4514 = vst [vmem:[#allocation4 + $0x90] sm:$0xff] %v4486
      %4515 = vst [vmem:[#allocation4 + $0x98] sm:$0xff] %v4487
      %4516 = vst [vmem:[#allocation4 + $0xa0] sm:$0xff] %v4488
      %4517 = vst [vmem:[#allocation4 + $0xa8] sm:$0xff] %v4489
      %4518 = vst [vmem:[#allocation4 + $0xb0] sm:$0xff] %v4490
      %4519 = vst [vmem:[#allocation4 + $0xb8] sm:$0xff] %v4491
      %4520 = vst [vmem:[#allocation4 + $0xc0] sm:$0xff] %v4492
      %4521 = vst [vmem:[#allocation4 + $0xc8] sm:$0xff] %v4493
      %4522 = vst [vmem:[#allocation4 + $0xd0] sm:$0xff] %v4494
      %4523 = vst [vmem:[#allocation4 + $0xd8] sm:$0x3f] %v4495
      %v4524 = vld [vmem:[#allocation4] sm:$0xff]
      %v4525 = vld [vmem:[#allocation4 + $0x8] sm:$0xff]
      %v4526 = vld [vmem:[#allocation4 + $0x10] sm:$0xff]
      %v4527 = vld [vmem:[#allocation4 + $0x18] sm:$0xff]
      %v4528 = vld [vmem:[#allocation4 + $0x20] sm:$0xff]
      %v4529 = vld [vmem:[#allocation4 + $0x28] sm:$0xff]
      %v4530 = vld [vmem:[#allocation4 + $0x30] sm:$0xff]
      %v4531 = vld [vmem:[#allocation4 + $0x38] sm:$0xff]
      %v4532 = vld [vmem:[#allocation4 + $0x40] sm:$0xff]
      %v4533 = vld [vmem:[#allocation4 + $0x48] sm:$0xff]
      %v4534 = vld [vmem:[#allocation4 + $0x50] sm:$0xff]
      %v4535 = vld [vmem:[#allocation4 + $0x58] sm:$0xff]
      %v4536 = vld [vmem:[#allocation4 + $0x60] sm:$0xff]
      %v4537 = vld [vmem:[#allocation4 + $0x68] sm:$0xff]
      %v4538 = vld [vmem:[#allocation4 + $0x70] sm:$0xff]
      %v4539 = vld [vmem:[#allocation4 + $0x78] sm:$0xff]
      %v4540 = vld [vmem:[#allocation4 + $0x80] sm:$0xff]
      %v4541 = vld [vmem:[#allocation4 + $0x88] sm:$0xff]
      %v4542 = vld [vmem:[#allocation4 + $0x90] sm:$0xff]
      %v4543 = vld [vmem:[#allocation4 + $0x98] sm:$0xff]
      %v4544 = vld [vmem:[#allocation4 + $0xa0] sm:$0xff]
      %v4545 = vld [vmem:[#allocation4 + $0xa8] sm:$0xff]
      %v4546 = vld [vmem:[#allocation4 + $0xb0] sm:$0xff]
      %v4547 = vld [vmem:[#allocation4 + $0xb8] sm:$0xff]
      %v4548 = vld [vmem:[#allocation4 + $0xc0] sm:$0xff]
      %v4549 = vld [vmem:[#allocation4 + $0xc8] sm:$0xff]
      %v4550 = vld [vmem:[#allocation4 + $0xd0] sm:$0xff]
      %v4551 = vld [vmem:[#allocation4 + $0xd8] sm:$0x3f]
      %v4552 = vld [vmem:[#allocation2 + $0x20] sm:$0xff]
      %v4553 = vld [vmem:[#allocation2 + $0x28] sm:$0xff]
      %v4554 = vld [vmem:[#allocation2 + $0x30] sm:$0xff]
      %v4555 = vld [vmem:[#allocation2 + $0x38] sm:$0xff]
      %v4556 = vld [vmem:[#allocation2 + $0x40] sm:$0xff]
      %v4557 = vld [vmem:[#allocation2 + $0x48] sm:$0xff]
      %v4558 = vld [vmem:[#allocation2 + $0x50] sm:$0xff]
      %v4559 = vld [vmem:[#allocation2 + $0x58] sm:$0xff]
      %v4560 = vld [vmem:[#allocation2 + $0x60] sm:$0xff]
      %v4561 = vld [vmem:[#allocation2 + $0x68] sm:$0xff]
      %v4562 = vld [vmem:[#allocation2 + $0x70] sm:$0xff]
      %v4563 = vld [vmem:[#allocation2 + $0x78] sm:$0xff]
      %v4564 = vld [vmem:[#allocation2 + $0x80] sm:$0xff]
      %v4565 = vld [vmem:[#allocation2 + $0x88] sm:$0xff]
      %v4566 = vld [vmem:[#allocation2 + $0x90] sm:$0xff]
      %v4567 = vld [vmem:[#allocation2 + $0x98] sm:$0xff]
      %v4568 = vld [vmem:[#allocation2 + $0xa0] sm:$0xff]
      %v4569 = vld [vmem:[#allocation2 + $0xa8] sm:$0xff]
      %v4570 = vld [vmem:[#allocation2 + $0xb0] sm:$0xff]
      %v4571 = vld [vmem:[#allocation2 + $0xb8] sm:$0xff]
      %v4572 = vld [vmem:[#allocation2 + $0xc0] sm:$0xff]
      %v4573 = vld [vmem:[#allocation2 + $0xc8] sm:$0xff]
      %v4574 = vld [vmem:[#allocation2 + $0xd0] sm:$0xff]
      %v4575 = vld [vmem:[#allocation2 + $0xd8] sm:$0xff]
      %v4576 = vld [vmem:[#allocation2 + $0xe0] sm:$0xff]
      %v4577 = vld [vmem:[#allocation2 + $0xe8] sm:$0xff]
      %v4578 = vld [vmem:[#allocation2 + $0xf0] sm:$0x7f]
      %v4579 = vld [vmem:[#allocation2 + $0xf8] sm:$0x7f]
      %s4580 = scalar_lea.vmem %s4, 768
      %v4581 = vld [vmem:[%s4580] sm:$0xf]
      %v4582 = vld [vmem:[%s4580 + $0x4] sm:$0xf]
      %v4583 = vld [vmem:[%s4580 + $0x8] sm:$0xf]
      %v4584 = vld [vmem:[%s4580 + $0xc] sm:$0xf]
      %v4585 = vld [vmem:[%s4580 + $0x10] sm:$0xf]
      %v4586 = vld [vmem:[%s4580 + $0x14] sm:$0xf]
      %v4587 = vld [vmem:[%s4580 + $0x18] sm:$0xf]
      %v4588 = vld [vmem:[%s4580 + $0x1c] sm:$0xf]
      %v4589 = vld [vmem:[%s4580 + $0x20] sm:$0xf]
      %v4590 = vld [vmem:[%s4580 + $0x24] sm:$0xf]
      %v4591 = vld [vmem:[%s4580 + $0x28] sm:$0xf]
      %v4592 = vld [vmem:[%s4580 + $0x2c] sm:$0xf]
      %v4593 = vld [vmem:[%s4580 + $0x30] sm:$0xf]
      %v4594 = vld [vmem:[%s4580 + $0x34] sm:$0xf]
      %v4595 = vld [vmem:[%s4580 + $0x38] sm:$0xf]
      %v4596 = vld [vmem:[%s4580 + $0x3c] sm:$0xf]
      %v4597 = vld [vmem:[%s4580 + $0x40] sm:$0xf]
      %v4598 = vld [vmem:[%s4580 + $0x44] sm:$0xf]
      %v4599 = vld [vmem:[%s4580 + $0x48] sm:$0xf]
      %v4600 = vld [vmem:[%s4580 + $0x4c] sm:$0xf]
      %v4601 = vld [vmem:[%s4580 + $0x50] sm:$0xf]
      %v4602 = vld [vmem:[%s4580 + $0x54] sm:$0xf]
      %v4603 = vld [vmem:[%s4580 + $0x58] sm:$0xf]
      %v4604 = vld [vmem:[%s4580 + $0x5c] sm:$0xf]
      %v4605 = vld [vmem:[%s4580 + $0x60] sm:$0xf]
      %v4606 = vld [vmem:[%s4580 + $0x64] sm:$0xf]
      %v4607 = vld [vmem:[%s4580 + $0x68] sm:$0xf]
      %v4608 = vld [vmem:[%s4580 + $0x6c] sm:$0xf]
      %v4609 = vld [vmem:[%s4580 + $0x70] sm:$0xf]
      %v4610 = vld [vmem:[%s4580 + $0x74] sm:$0xf]
      %v4611 = vld [vmem:[%s4580 + $0x78] sm:$0xf]
      %v4612 = vld [vmem:[%s4580 + $0x7c] sm:$0xf]
      %v4645 = vunpack.c.l.b16 %v4581
      %v4646 = vunpack.c.l.b16 %v4582
      %v4647 = vunpack.c.l.b16 %v4583
      %v4648 = vunpack.c.l.b16 %v4584
      %v4649 = vunpack.c.l.b16 %v4585
      %v4650 = vunpack.c.l.b16 %v4586
      %v4651 = vunpack.c.l.b16 %v4587
      %v4652 = vunpack.c.l.b16 %v4588
      %v4653 = vunpack.c.l.b16 %v4589
      %v4654 = vunpack.c.l.b16 %v4590
      %v4655 = vunpack.c.l.b16 %v4591
      %v4656 = vunpack.c.l.b16 %v4592
      %v4657 = vunpack.c.l.b16 %v4593
      %v4658 = vunpack.c.l.b16 %v4594
      %v4659 = vunpack.c.l.b16 %v4595
      %v4660 = vunpack.c.l.b16 %v4596
      %v4661 = vunpack.c.l.b16 %v4597
      %v4662 = vunpack.c.l.b16 %v4598
      %v4663 = vunpack.c.l.b16 %v4599
      %v4664 = vunpack.c.l.b16 %v4600
      %v4665 = vunpack.c.l.b16 %v4601
      %v4666 = vunpack.c.l.b16 %v4602
      %v4667 = vunpack.c.l.b16 %v4603
      %v4668 = vunpack.c.l.b16 %v4604
      %v4669 = vunpack.c.l.b16 %v4605
      %v4670 = vunpack.c.l.b16 %v4606
      %v4671 = vunpack.c.l.b16 %v4607
      %v4672 = vunpack.c.l.b16 %v4608
      %v4673 = vunpack.c.l.b16 %v4609
      %v4674 = vunpack.c.l.b16 %v4610
      %v4675 = vunpack.c.l.b16 %v4611
      %v4676 = vunpack.c.l.b16 %v4612
      %v4677 = vpack.c.b16 %v4646, %v4645
      %v4678 = vpack.c.b16 %v4648, %v4647
      %v4679 = vpack.c.b16 %v4650, %v4649
      %v4680 = vpack.c.b16 %v4652, %v4651
      %v4681 = vpack.c.b16 %v4654, %v4653
      %v4682 = vpack.c.b16 %v4656, %v4655
      %v4683 = vpack.c.b16 %v4658, %v4657
      %v4684 = vpack.c.b16 %v4660, %v4659
      %v4685 = vpack.c.b16 %v4662, %v4661
      %v4686 = vpack.c.b16 %v4664, %v4663
      %v4687 = vpack.c.b16 %v4666, %v4665
      %v4688 = vpack.c.b16 %v4668, %v4667
      %v4689 = vpack.c.b16 %v4670, %v4669
      %v4690 = vpack.c.b16 %v4672, %v4671
      %v4691 = vpack.c.b16 %v4674, %v4673
      %v4692 = vpack.c.b16 %v4676, %v4675
      %4709 = vmatprep.subr.bf16.mxu0 0
      %4710 = vmatpush1.bf16.msra.mxu0 %v4677
      %4711 = vmatprep.subr.bf16.mxu0 0
      %4712 = vmatpush1.bf16.msra.mxu0 %v4678
      %4713 = vmatprep.subr.bf16.mxu0 0
      %4714 = vmatpush1.bf16.msra.mxu0 %v4679
      %4715 = vmatprep.subr.bf16.mxu0 0
      %4716 = vmatpush1.bf16.msra.mxu0 %v4680
      %4717 = vmatprep.subr.bf16.mxu0 0
      %4718 = vmatpush1.bf16.msra.mxu0 %v4681
      %4719 = vmatprep.subr.bf16.mxu0 0
      %4720 = vmatpush1.bf16.msra.mxu0 %v4682
      %4721 = vmatprep.subr.bf16.mxu0 0
      %4722 = vmatpush1.bf16.msra.mxu0 %v4683
      %4723 = vmatprep.subr.bf16.mxu0 0
      %4724 = vmatpush1.bf16.msra.mxu0 %v4684
      %4725 = vmatprep.subr.bf16.mxu0 0
      %4726 = vmatpush1.bf16.msra.mxu0 %v4685
      %4727 = vmatprep.subr.bf16.mxu0 0
      %4728 = vmatpush1.bf16.msra.mxu0 %v4686
      %4729 = vmatprep.subr.bf16.mxu0 0
      %4730 = vmatpush1.bf16.msra.mxu0 %v4687
      %4731 = vmatprep.subr.bf16.mxu0 0
      %4732 = vmatpush1.bf16.msra.mxu0 %v4688
      %4733 = vmatprep.subr.bf16.mxu0 0
      %4734 = vmatpush1.bf16.msra.mxu0 %v4689
      %4735 = vmatprep.subr.bf16.mxu0 0
      %4736 = vmatpush1.bf16.msra.mxu0 %v4690
      %4737 = vmatprep.subr.bf16.mxu0 0
      %4738 = vmatpush1.bf16.msra.mxu0 %v4691
      %4739 = vmatprep.subr.bf16.mxu0 0
      %4740 = vmatpush1.bf16.msra.mxu0 %v4692
      %4741 = vmatprep.mubr.bf16.mxu0 %v4553
      %4742 = vmatmul.mubr.bf16.gmra.mrb[0].mxu0 %v4552
      %v4743 = vpop.f32.mrb[0].mxu0
      %v4744 = vadd.f32 0.0, %v4743
      %v4745 = vpop.f32.mrb[0].mxu0
      %v4746 = vpop.f32.mrb[0].mxu0
      %v4747 = vadd.f32 0.0, %v4746
      %v4748 = vpop.f32.mrb[0].mxu0
      %4749 = vmatprep.mubr.bf16.mxu0 %v4555
      %4750 = vmatmul.mubr.bf16.gmra.mrb[0].mxu0 %v4554
      %v4751 = vpop.f32.mrb[0].mxu0
      %v4752 = vadd.f32 0.0, %v4751
      %v4753 = vpop.f32.mrb[0].mxu0
      %v4754 = vpop.f32.mrb[0].mxu0
      %v4755 = vadd.f32 0.0, %v4754
      %v4756 = vpop.f32.mrb[0].mxu0
      %4757 = vmatprep.mubr.bf16.mxu0 %v4557
      %4758 = vmatmul.mubr.bf16.gmra.mrb[0].mxu0 %v4556
      %v4759 = vpop.f32.mrb[0].mxu0
      %v4760 = vadd.f32 0.0, %v4759
      %v4761 = vpop.f32.mrb[0].mxu0
      %v4762 = vpop.f32.mrb[0].mxu0
      %v4763 = vadd.f32 0.0, %v4762
      %v4764 = vpop.f32.mrb[0].mxu0
      %4765 = vmatprep.mubr.bf16.mxu0 %v4559
      %4766 = vmatmul.mubr.bf16.gmra.mrb[0].mxu0 %v4558
      %v4767 = vpop.f32.mrb[0].mxu0
      %v4768 = vadd.f32 0.0, %v4767
      %v4769 = vpop.f32.mrb[0].mxu0
      %v4770 = vpop.f32.mrb[0].mxu0
      %v4771 = vadd.f32 0.0, %v4770
      %v4772 = vpop.f32.mrb[0].mxu0
      %4773 = vmatprep.mubr.bf16.mxu0 %v4561
      %4774 = vmatmul.mubr.bf16.gmra.mrb[0].mxu0 %v4560
      %v4775 = vpop.f32.mrb[0].mxu0
      %v4776 = vadd.f32 0.0, %v4775
      %v4777 = vpop.f32.mrb[0].mxu0
      %v4778 = vpop.f32.mrb[0].mxu0
      %v4779 = vadd.f32 0.0, %v4778
      %v4780 = vpop.f32.mrb[0].mxu0
      %4781 = vmatprep.mubr.bf16.mxu0 %v4563
      %4782 = vmatmul.mubr.bf16.gmra.mrb[0].mxu0 %v4562
      %v4783 = vpop.f32.mrb[0].mxu0
      %v4784 = vadd.f32 0.0, %v4783
      %v4785 = vpop.f32.mrb[0].mxu0
      %v4786 = vpop.f32.mrb[0].mxu0
      %v4787 = vadd.f32 0.0, %v4786
      %v4788 = vpop.f32.mrb[0].mxu0
      %4789 = vmatprep.mubr.bf16.mxu0 %v4565
      %4790 = vmatmul.mubr.bf16.gmra.mrb[0].mxu0 %v4564
      %v4791 = vpop.f32.mrb[0].mxu0
      %v4792 = vadd.f32 0.0, %v4791
      %v4793 = vpop.f32.mrb[0].mxu0
      %v4794 = vpop.f32.mrb[0].mxu0
      %v4795 = vadd.f32 0.0, %v4794
      %v4796 = vpop.f32.mrb[0].mxu0
      %4797 = vmatprep.mubr.bf16.mxu0 %v4567
      %4798 = vmatmul.mubr.bf16.gmra.mrb[0].mxu0 %v4566
      %v4799 = vpop.f32.mrb[0].mxu0
      %v4800 = vadd.f32 0.0, %v4799
      %v4801 = vpop.f32.mrb[0].mxu0
      %v4802 = vpop.f32.mrb[0].mxu0
      %v4803 = vadd.f32 0.0, %v4802
      %v4804 = vpop.f32.mrb[0].mxu0
      %4805 = vmatprep.mubr.bf16.mxu0 %v4569
      %4806 = vmatmul.mubr.bf16.gmra.mrb[0].mxu0 %v4568
      %v4807 = vpop.f32.mrb[0].mxu0
      %v4808 = vadd.f32 0.0, %v4807
      %v4809 = vpop.f32.mrb[0].mxu0
      %v4810 = vpop.f32.mrb[0].mxu0
      %v4811 = vadd.f32 0.0, %v4810
      %v4812 = vpop.f32.mrb[0].mxu0
      %4813 = vmatprep.mubr.bf16.mxu0 %v4571
      %4814 = vmatmul.mubr.bf16.gmra.mrb[0].mxu0 %v4570
      %v4815 = vpop.f32.mrb[0].mxu0
      %v4816 = vadd.f32 0.0, %v4815
      %v4817 = vpop.f32.mrb[0].mxu0
      %v4818 = vpop.f32.mrb[0].mxu0
      %v4819 = vadd.f32 0.0, %v4818
      %v4820 = vpop.f32.mrb[0].mxu0
      %4821 = vmatprep.mubr.bf16.mxu0 %v4573
      %4822 = vmatmul.mubr.bf16.gmra.mrb[0].mxu0 %v4572
      %v4823 = vpop.f32.mrb[0].mxu0
      %v4824 = vadd.f32 0.0, %v4823
      %v4825 = vpop.f32.mrb[0].mxu0
      %v4826 = vpop.f32.mrb[0].mxu0
      %v4827 = vadd.f32 0.0, %v4826
      %v4828 = vpop.f32.mrb[0].mxu0
      %4829 = vmatprep.mubr.bf16.mxu0 %v4575
      %4830 = vmatmul.mubr.bf16.gmra.mrb[0].mxu0 %v4574
      %v4831 = vpop.f32.mrb[0].mxu0
      %v4832 = vadd.f32 0.0, %v4831
      %v4833 = vpop.f32.mrb[0].mxu0
      %v4834 = vpop.f32.mrb[0].mxu0
      %v4835 = vadd.f32 0.0, %v4834
      %v4836 = vpop.f32.mrb[0].mxu0
      %4837 = vmatprep.mubr.bf16.mxu0 %v4577
      %4838 = vmatmul.mubr.bf16.gmra.mrb[0].mxu0 %v4576
      %v4839 = vpop.f32.mrb[0].mxu0
      %v4840 = vadd.f32 0.0, %v4839
      %v4841 = vpop.f32.mrb[0].mxu0
      %v4842 = vpop.f32.mrb[0].mxu0
      %v4843 = vadd.f32 0.0, %v4842
      %v4844 = vpop.f32.mrb[0].mxu0
      %4845 = vmatprep.mubr.bf16.mxu0 %v4579
      %4846 = vmatmul.mubr.bf16.gmra.mrb[0].mxu0 %v4578
      %v4847 = vpop.f32.mrb[0].mxu0
      %v4848 = vadd.f32 0.0, %v4847
      %v4849 = vpop.f32.mrb[0].mxu0
      %v4850 = vpop.f32.mrb[0].mxu0
      %v4851 = vadd.f32 0.0, %v4850
      %v4852 = vpop.f32.mrb[0].mxu0
      %4853 = vdwg.mxu0
      %v4854 = vadd.f32 %v4524, %v4744
      %v4855 = vadd.f32 %v4525, %v4747
      %v4856 = vadd.f32 %v4526, %v4752
      %v4857 = vadd.f32 %v4527, %v4755
      %v4858 = vadd.f32 %v4528, %v4760
      %v4859 = vadd.f32 %v4529, %v4763
      %v4860 = vadd.f32 %v4530, %v4768
      %v4861 = vadd.f32 %v4531, %v4771
      %v4862 = vadd.f32 %v4532, %v4776
      %v4863 = vadd.f32 %v4533, %v4779
      %v4864 = vadd.f32 %v4534, %v4784
      %v4865 = vadd.f32 %v4535, %v4787
      %v4866 = vadd.f32 %v4536, %v4792
      %v4867 = vadd.f32 %v4537, %v4795
      %v4868 = vadd.f32 %v4538, %v4800
      %v4869 = vadd.f32 %v4539, %v4803
      %v4870 = vadd.f32 %v4540, %v4808
      %v4871 = vadd.f32 %v4541, %v4811
      %v4872 = vadd.f32 %v4542, %v4816
      %v4873 = vadd.f32 %v4543, %v4819
      %v4874 = vadd.f32 %v4544, %v4824
      %v4875 = vadd.f32 %v4545, %v4827
      %v4876 = vadd.f32 %v4546, %v4832
      %v4877 = vadd.f32 %v4547, %v4835
      %v4878 = vadd.f32 %v4548, %v4840
      %v4879 = vadd.f32 %v4549, %v4843
      %v4880 = vadd.f32 %v4550, %v4848
      %v4881 = vadd.f32 %v4551, %v4851
      %4882 = vst [vmem:[#allocation4] sm:$0xff] %v4854
      %4883 = vst [vmem:[#allocation4 + $0x8] sm:$0xff] %v4855
      %4884 = vst [vmem:[#allocation4 + $0x10] sm:$0xff] %v4856
      %4885 = vst [vmem:[#allocation4 + $0x18] sm:$0xff] %v4857
      %4886 = vst [vmem:[#allocation4 + $0x20] sm:$0xff] %v4858
      %4887 = vst [vmem:[#allocation4 + $0x28] sm:$0xff] %v4859
      %4888 = vst [vmem:[#allocation4 + $0x30] sm:$0xff] %v4860
      %4889 = vst [vmem:[#allocation4 + $0x38] sm:$0xff] %v4861
      %4890 = vst [vmem:[#allocation4 + $0x40] sm:$0xff] %v4862
      %4891 = vst [vmem:[#allocation4 + $0x48] sm:$0xff] %v4863
      %4892 = vst [vmem:[#allocation4 + $0x50] sm:$0xff] %v4864
      %4893 = vst [vmem:[#allocation4 + $0x58] sm:$0xff] %v4865
      %4894 = vst [vmem:[#allocation4 + $0x60] sm:$0xff] %v4866
      %4895 = vst [vmem:[#allocation4 + $0x68] sm:$0xff] %v4867
      %4896 = vst [vmem:[#allocation4 + $0x70] sm:$0xff] %v4868
      %4897 = vst [vmem:[#allocation4 + $0x78] sm:$0xff] %v4869
      %4898 = vst [vmem:[#allocation4 + $0x80] sm:$0xff] %v4870
      %4899 = vst [vmem:[#allocation4 + $0x88] sm:$0xff] %v4871
      %4900 = vst [vmem:[#allocation4 + $0x90] sm:$0xff] %v4872
      %4901 = vst [vmem:[#allocation4 + $0x98] sm:$0xff] %v4873
      %4902 = vst [vmem:[#allocation4 + $0xa0] sm:$0xff] %v4874
      %4903 = vst [vmem:[#allocation4 + $0xa8] sm:$0xff] %v4875
      %4904 = vst [vmem:[#allocation4 + $0xb0] sm:$0xff] %v4876
      %4905 = vst [vmem:[#allocation4 + $0xb8] sm:$0xff] %v4877
      %4906 = vst [vmem:[#allocation4 + $0xc0] sm:$0xff] %v4878
      %4907 = vst [vmem:[#allocation4 + $0xc8] sm:$0xff] %v4879
      %4908 = vst [vmem:[#allocation4 + $0xd0] sm:$0xff] %v4880
      %4909 = vst [vmem:[#allocation4 + $0xd8] sm:$0x3f] %v4881
      %v4910 = vld [vmem:[#allocation4] sm:$0xff]
      %v4911 = vld [vmem:[#allocation4 + $0x8] sm:$0xff]
      %v4912 = vld [vmem:[#allocation4 + $0x10] sm:$0xff]
      %v4913 = vld [vmem:[#allocation4 + $0x18] sm:$0xff]
      %v4914 = vld [vmem:[#allocation4 + $0x20] sm:$0xff]
      %v4915 = vld [vmem:[#allocation4 + $0x28] sm:$0xff]
      %v4916 = vld [vmem:[#allocation4 + $0x30] sm:$0xff]
      %v4917 = vld [vmem:[#allocation4 + $0x38] sm:$0xff]
      %v4918 = vld [vmem:[#allocation4 + $0x40] sm:$0xff]
      %v4919 = vld [vmem:[#allocation4 + $0x48] sm:$0xff]
      %v4920 = vld [vmem:[#allocation4 + $0x50] sm:$0xff]
      %v4921 = vld [vmem:[#allocation4 + $0x58] sm:$0xff]
      %v4922 = vld [vmem:[#allocation4 + $0x60] sm:$0xff]
      %v4923 = vld [vmem:[#allocation4 + $0x68] sm:$0xff]
      %v4924 = vld [vmem:[#allocation4 + $0x70] sm:$0xff]
      %v4925 = vld [vmem:[#allocation4 + $0x78] sm:$0xff]
      %v4926 = vld [vmem:[#allocation4 + $0x80] sm:$0xff]
      %v4927 = vld [vmem:[#allocation4 + $0x88] sm:$0xff]
      %v4928 = vld [vmem:[#allocation4 + $0x90] sm:$0xff]
      %v4929 = vld [vmem:[#allocation4 + $0x98] sm:$0xff]
      %v4930 = vld [vmem:[#allocation4 + $0xa0] sm:$0xff]
      %v4931 = vld [vmem:[#allocation4 + $0xa8] sm:$0xff]
      %v4932 = vld [vmem:[#allocation4 + $0xb0] sm:$0xff]
      %v4933 = vld [vmem:[#allocation4 + $0xb8] sm:$0xff]
      %v4934 = vld [vmem:[#allocation4 + $0xc0] sm:$0xff]
      %v4935 = vld [vmem:[#allocation4 + $0xc8] sm:$0xff]
      %v4936 = vld [vmem:[#allocation4 + $0xd0] sm:$0xff]
      %v4937 = vld [vmem:[#allocation4 + $0xd8] sm:$0x3f]
      %v4938 = vld [vmem:[#allocation2 + $0x20] sm:$0xff]
      %v4939 = vld [vmem:[#allocation2 + $0x28] sm:$0xff]
      %v4940 = vld [vmem:[#allocation2 + $0x30] sm:$0xff]
      %v4941 = vld [vmem:[#allocation2 + $0x38] sm:$0xff]
      %v4942 = vld [vmem:[#allocation2 + $0x40] sm:$0xff]
      %v4943 = vld [vmem:[#allocation2 + $0x48] sm:$0xff]
      %v4944 = vld [vmem:[#allocation2 + $0x50] sm:$0xff]
      %v4945 = vld [vmem:[#allocation2 + $0x58] sm:$0xff]
      %v4946 = vld [vmem:[#allocation2 + $0x60] sm:$0xff]
      %v4947 = vld [vmem:[#allocation2 + $0x68] sm:$0xff]
      %v4948 = vld [vmem:[#allocation2 + $0x70] sm:$0xff]
      %v4949 = vld [vmem:[#allocation2 + $0x78] sm:$0xff]
      %v4950 = vld [vmem:[#allocation2 + $0x80] sm:$0xff]
      %v4951 = vld [vmem:[#allocation2 + $0x88] sm:$0xff]
      %v4952 = vld [vmem:[#allocation2 + $0x90] sm:$0xff]
      %v4953 = vld [vmem:[#allocation2 + $0x98] sm:$0xff]
      %v4954 = vld [vmem:[#allocation2 + $0xa0] sm:$0xff]
      %v4955 = vld [vmem:[#allocation2 + $0xa8] sm:$0xff]
      %v4956 = vld [vmem:[#allocation2 + $0xb0] sm:$0xff]
      %v4957 = vld [vmem:[#allocation2 + $0xb8] sm:$0xff]
      %v4958 = vld [vmem:[#allocation2 + $0xc0] sm:$0xff]
      %v4959 = vld [vmem:[#allocation2 + $0xc8] sm:$0xff]
      %v4960 = vld [vmem:[#allocation2 + $0xd0] sm:$0xff]
      %v4961 = vld [vmem:[#allocation2 + $0xd8] sm:$0xff]
      %v4962 = vld [vmem:[#allocation2 + $0xe0] sm:$0xff]
      %v4963 = vld [vmem:[#allocation2 + $0xe8] sm:$0xff]
      %v4964 = vld [vmem:[#allocation2 + $0xf0] sm:$0xff]
      %v4965 = vld [vmem:[#allocation2 + $0xf8] sm:$0xff]
      %s4966 = scalar_lea.vmem %s4, 896
      %v4967 = vld [vmem:[%s4966] sm:$0xf]
      %v4968 = vld [vmem:[%s4966 + $0x4] sm:$0xf]
      %v4969 = vld [vmem:[%s4966 + $0x8] sm:$0xf]
      %v4970 = vld [vmem:[%s4966 + $0xc] sm:$0xf]
      %v4971 = vld [vmem:[%s4966 + $0x10] sm:$0xf]
      %v4972 = vld [vmem:[%s4966 + $0x14] sm:$0xf]
      %v4973 = vld [vmem:[%s4966 + $0x18] sm:$0xf]
      %v4974 = vld [vmem:[%s4966 + $0x1c] sm:$0xf]
      %v4975 = vld [vmem:[%s4966 + $0x20] sm:$0xf]
      %v4976 = vld [vmem:[%s4966 + $0x24] sm:$0xf]
      %v4977 = vld [vmem:[%s4966 + $0x28] sm:$0xf]
      %v4978 = vld [vmem:[%s4966 + $0x2c] sm:$0xf]
      %v4979 = vld [vmem:[%s4966 + $0x30] sm:$0xf]
      %v4980 = vld [vmem:[%s4966 + $0x34] sm:$0xf]
      %v4981 = vld [vmem:[%s4966 + $0x38] sm:$0xf]
      %v4982 = vld [vmem:[%s4966 + $0x3c] sm:$0xf]
      %v4983 = vld [vmem:[%s4966 + $0x40] sm:$0xf]
      %v4984 = vld [vmem:[%s4966 + $0x44] sm:$0xf]
      %v4985 = vld [vmem:[%s4966 + $0x48] sm:$0xf]
      %v4986 = vld [vmem:[%s4966 + $0x4c] sm:$0xf]
      %v4987 = vld [vmem:[%s4966 + $0x50] sm:$0xf]
      %v4988 = vld [vmem:[%s4966 + $0x54] sm:$0xf]
      %v4989 = vld [vmem:[%s4966 + $0x58] sm:$0xf]
      %v4990 = vld [vmem:[%s4966 + $0x5c] sm:$0xf]
      %v4991 = vld [vmem:[%s4966 + $0x60] sm:$0xf]
      %v4992 = vld [vmem:[%s4966 + $0x64] sm:$0xf]
      %v4993 = vld [vmem:[%s4966 + $0x68] sm:$0xf]
      %v4994 = vld [vmem:[%s4966 + $0x6c] sm:$0xf]
      %v4995 = vld [vmem:[%s4966 + $0x70] sm:$0xf]
      %v4996 = vld [vmem:[%s4966 + $0x74] sm:$0xf]
      %v4997 = vld [vmem:[%s4966 + $0x78] sm:$0xf]
      %v4998 = vld [vmem:[%s4966 + $0x7c] sm:$0xf]
      %v5000 = vshrl.u32 %v4938, 16
      %v5002 = vshll.u32 %v4938, 16
      %v5004 = vrot.slane %v5002, 1
      %v5005 = vor.u32 %v5000, %v5004
      %v5007 = vshll.u32 %v4940, 16
      %v5009 = vrot.slane %v5007, 1
      %v5010 = vsel %vm1961, %v5005, %v5009
      %v5012 = vshrl.u32 %v4939, 16
      %v5014 = vshll.u32 %v4939, 16
      %v5016 = vrot.slane %v5014, 1
      %v5017 = vor.u32 %v5012, %v5016
      %v5019 = vshll.u32 %v4941, 16
      %v5021 = vrot.slane %v5019, 1
      %v5022 = vsel %vm1961, %v5017, %v5021
      %v5023 = vshrl.u32 %v4940, 16
      %v5025 = vor.u32 %v5023, %v5009
      %v5027 = vshll.u32 %v4942, 16
      %v5029 = vrot.slane %v5027, 1
      %v5030 = vsel %vm1961, %v5025, %v5029
      %v5031 = vshrl.u32 %v4941, 16
      %v5033 = vor.u32 %v5031, %v5021
      %v5035 = vshll.u32 %v4943, 16
      %v5037 = vrot.slane %v5035, 1
      %v5038 = vsel %vm1961, %v5033, %v5037
      %v5039 = vshrl.u32 %v4942, 16
      %v5041 = vor.u32 %v5039, %v5029
      %v5043 = vshll.u32 %v4944, 16
      %v5045 = vrot.slane %v5043, 1
      %v5046 = vsel %vm1961, %v5041, %v5045
      %v5047 = vshrl.u32 %v4943, 16
      %v5049 = vor.u32 %v5047, %v5037
      %v5051 = vshll.u32 %v4945, 16
      %v5053 = vrot.slane %v5051, 1
      %v5054 = vsel %vm1961, %v5049, %v5053
      %v5055 = vshrl.u32 %v4944, 16
      %v5057 = vor.u32 %v5055, %v5045
      %v5059 = vshll.u32 %v4946, 16
      %v5061 = vrot.slane %v5059, 1
      %v5062 = vsel %vm1961, %v5057, %v5061
      %v5063 = vshrl.u32 %v4945, 16
      %v5065 = vor.u32 %v5063, %v5053
      %v5067 = vshll.u32 %v4947, 16
      %v5069 = vrot.slane %v5067, 1
      %v5070 = vsel %vm1961, %v5065, %v5069
      %v5071 = vshrl.u32 %v4946, 16
      %v5073 = vor.u32 %v5071, %v5061
      %v5075 = vshll.u32 %v4948, 16
      %v5077 = vrot.slane %v5075, 1
      %v5078 = vsel %vm1961, %v5073, %v5077
      %v5079 = vshrl.u32 %v4947, 16
      %v5081 = vor.u32 %v5079, %v5069
      %v5083 = vshll.u32 %v4949, 16
      %v5085 = vrot.slane %v5083, 1
      %v5086 = vsel %vm1961, %v5081, %v5085
      %v5087 = vshrl.u32 %v4948, 16
      %v5089 = vor.u32 %v5087, %v5077
      %v5091 = vshll.u32 %v4950, 16
      %v5093 = vrot.slane %v5091, 1
      %v5094 = vsel %vm1961, %v5089, %v5093
      %v5095 = vshrl.u32 %v4949, 16
      %v5097 = vor.u32 %v5095, %v5085
      %v5099 = vshll.u32 %v4951, 16
      %v5101 = vrot.slane %v5099, 1
      %v5102 = vsel %vm1961, %v5097, %v5101
      %v5103 = vshrl.u32 %v4950, 16
      %v5105 = vor.u32 %v5103, %v5093
      %v5107 = vshll.u32 %v4952, 16
      %v5109 = vrot.slane %v5107, 1
      %v5110 = vsel %vm1961, %v5105, %v5109
      %v5111 = vshrl.u32 %v4951, 16
      %v5113 = vor.u32 %v5111, %v5101
      %v5115 = vshll.u32 %v4953, 16
      %v5117 = vrot.slane %v5115, 1
      %v5118 = vsel %vm1961, %v5113, %v5117
      %v5119 = vshrl.u32 %v4952, 16
      %v5121 = vor.u32 %v5119, %v5109
      %v5123 = vshll.u32 %v4954, 16
      %v5125 = vrot.slane %v5123, 1
      %v5126 = vsel %vm1961, %v5121, %v5125
      %v5127 = vshrl.u32 %v4953, 16
      %v5129 = vor.u32 %v5127, %v5117
      %v5131 = vshll.u32 %v4955, 16
      %v5133 = vrot.slane %v5131, 1
      %v5134 = vsel %vm1961, %v5129, %v5133
      %v5135 = vshrl.u32 %v4954, 16
      %v5137 = vor.u32 %v5135, %v5125
      %v5139 = vshll.u32 %v4956, 16
      %v5141 = vrot.slane %v5139, 1
      %v5142 = vsel %vm1961, %v5137, %v5141
      %v5143 = vshrl.u32 %v4955, 16
      %v5145 = vor.u32 %v5143, %v5133
      %v5147 = vshll.u32 %v4957, 16
      %v5149 = vrot.slane %v5147, 1
      %v5150 = vsel %vm1961, %v5145, %v5149
      %v5151 = vshrl.u32 %v4956, 16
      %v5153 = vor.u32 %v5151, %v5141
      %v5155 = vshll.u32 %v4958, 16
      %v5157 = vrot.slane %v5155, 1
      %v5158 = vsel %vm1961, %v5153, %v5157
      %v5159 = vshrl.u32 %v4957, 16
      %v5161 = vor.u32 %v5159, %v5149
      %v5163 = vshll.u32 %v4959, 16
      %v5165 = vrot.slane %v5163, 1
      %v5166 = vsel %vm1961, %v5161, %v5165
      %v5167 = vshrl.u32 %v4958, 16
      %v5169 = vor.u32 %v5167, %v5157
      %v5171 = vshll.u32 %v4960, 16
      %v5173 = vrot.slane %v5171, 1
      %v5174 = vsel %vm1961, %v5169, %v5173
      %v5175 = vshrl.u32 %v4959, 16
      %v5177 = vor.u32 %v5175, %v5165
      %v5179 = vshll.u32 %v4961, 16
      %v5181 = vrot.slane %v5179, 1
      %v5182 = vsel %vm1961, %v5177, %v5181
      %v5183 = vshrl.u32 %v4960, 16
      %v5185 = vor.u32 %v5183, %v5173
      %v5187 = vshll.u32 %v4962, 16
      %v5189 = vrot.slane %v5187, 1
      %v5190 = vsel %vm1961, %v5185, %v5189
      %v5191 = vshrl.u32 %v4961, 16
      %v5193 = vor.u32 %v5191, %v5181
      %v5195 = vshll.u32 %v4963, 16
      %v5197 = vrot.slane %v5195, 1
      %v5198 = vsel %vm1961, %v5193, %v5197
      %v5199 = vshrl.u32 %v4962, 16
      %v5201 = vor.u32 %v5199, %v5189
      %v5203 = vshll.u32 %v4964, 16
      %v5205 = vrot.slane %v5203, 1
      %v5206 = vsel %vm1961, %v5201, %v5205
      %v5207 = vshrl.u32 %v4963, 16
      %v5209 = vor.u32 %v5207, %v5197
      %v5211 = vshll.u32 %v4965, 16
      %v5213 = vrot.slane %v5211, 1
      %v5214 = vsel %vm1961, %v5209, %v5213
      %v5215 = vshrl.u32 %v4964, 16
      %v5217 = vor.u32 %v5215, %v5205
      %v5218 = vshrl.u32 %v4965, 16
      %v5220 = vor.u32 %v5218, %v5213
      %v5281 = vunpack.c.l.b16 %v4967
      %v5282 = vunpack.c.l.b16 %v4968
      %v5283 = vunpack.c.l.b16 %v4969
      %v5284 = vunpack.c.l.b16 %v4970
      %v5285 = vunpack.c.l.b16 %v4971
      %v5286 = vunpack.c.l.b16 %v4972
      %v5287 = vunpack.c.l.b16 %v4973
      %v5288 = vunpack.c.l.b16 %v4974
      %v5289 = vunpack.c.l.b16 %v4975
      %v5290 = vunpack.c.l.b16 %v4976
      %v5291 = vunpack.c.l.b16 %v4977
      %v5292 = vunpack.c.l.b16 %v4978
      %v5293 = vunpack.c.l.b16 %v4979
      %v5294 = vunpack.c.l.b16 %v4980
      %v5295 = vunpack.c.l.b16 %v4981
      %v5296 = vunpack.c.l.b16 %v4982
      %v5297 = vunpack.c.l.b16 %v4983
      %v5298 = vunpack.c.l.b16 %v4984
      %v5299 = vunpack.c.l.b16 %v4985
      %v5300 = vunpack.c.l.b16 %v4986
      %v5301 = vunpack.c.l.b16 %v4987
      %v5302 = vunpack.c.l.b16 %v4988
      %v5303 = vunpack.c.l.b16 %v4989
      %v5304 = vunpack.c.l.b16 %v4990
      %v5305 = vunpack.c.l.b16 %v4991
      %v5306 = vunpack.c.l.b16 %v4992
      %v5307 = vunpack.c.l.b16 %v4993
      %v5308 = vunpack.c.l.b16 %v4994
      %v5309 = vunpack.c.l.b16 %v4995
      %v5310 = vunpack.c.l.b16 %v4996
      %v5311 = vunpack.c.l.b16 %v4997
      %v5312 = vunpack.c.l.b16 %v4998
      %v5313 = vpack.c.b16 %v5282, %v5281
      %v5314 = vpack.c.b16 %v5284, %v5283
      %v5315 = vpack.c.b16 %v5286, %v5285
      %v5316 = vpack.c.b16 %v5288, %v5287
      %v5317 = vpack.c.b16 %v5290, %v5289
      %v5318 = vpack.c.b16 %v5292, %v5291
      %v5319 = vpack.c.b16 %v5294, %v5293
      %v5320 = vpack.c.b16 %v5296, %v5295
      %v5321 = vpack.c.b16 %v5298, %v5297
      %v5322 = vpack.c.b16 %v5300, %v5299
      %v5323 = vpack.c.b16 %v5302, %v5301
      %v5324 = vpack.c.b16 %v5304, %v5303
      %v5325 = vpack.c.b16 %v5306, %v5305
      %v5326 = vpack.c.b16 %v5308, %v5307
      %v5327 = vpack.c.b16 %v5310, %v5309
      %v5328 = vpack.c.b16 %v5312, %v5311
      %5345 = vmatprep.subr.bf16.mxu0 0
      %5346 = vmatpush1.bf16.msra.mxu0 %v5313
      %5347 = vmatprep.subr.bf16.mxu0 0
      %5348 = vmatpush1.bf16.msra.mxu0 %v5314
      %5349 = vmatprep.subr.bf16.mxu0 0
      %5350 = vmatpush1.bf16.msra.mxu0 %v5315
      %5351 = vmatprep.subr.bf16.mxu0 0
      %5352 = vmatpush1.bf16.msra.mxu0 %v5316
      %5353 = vmatprep.subr.bf16.mxu0 0
      %5354 = vmatpush1.bf16.msra.mxu0 %v5317
      %5355 = vmatprep.subr.bf16.mxu0 0
      %5356 = vmatpush1.bf16.msra.mxu0 %v5318
      %5357 = vmatprep.subr.bf16.mxu0 0
      %5358 = vmatpush1.bf16.msra.mxu0 %v5319
      %5359 = vmatprep.subr.bf16.mxu0 0
      %5360 = vmatpush1.bf16.msra.mxu0 %v5320
      %5361 = vmatprep.subr.bf16.mxu0 0
      %5362 = vmatpush1.bf16.msra.mxu0 %v5321
      %5363 = vmatprep.subr.bf16.mxu0 0
      %5364 = vmatpush1.bf16.msra.mxu0 %v5322
      %5365 = vmatprep.subr.bf16.mxu0 0
      %5366 = vmatpush1.bf16.msra.mxu0 %v5323
      %5367 = vmatprep.subr.bf16.mxu0 0
      %5368 = vmatpush1.bf16.msra.mxu0 %v5324
      %5369 = vmatprep.subr.bf16.mxu0 0
      %5370 = vmatpush1.bf16.msra.mxu0 %v5325
      %5371 = vmatprep.subr.bf16.mxu0 0
      %5372 = vmatpush1.bf16.msra.mxu0 %v5326
      %5373 = vmatprep.subr.bf16.mxu0 0
      %5374 = vmatpush1.bf16.msra.mxu0 %v5327
      %5375 = vmatprep.subr.bf16.mxu0 0
      %5376 = vmatpush1.bf16.msra.mxu0 %v5328
      %5377 = vmatprep.mubr.bf16.mxu0 %v5022
      %5378 = vmatmul.mubr.bf16.gmra.mrb[0].mxu0 %v5010
      %v5379 = vpop.f32.mrb[0].mxu0
      %v5380 = vadd.f32 0.0, %v5379
      %v5381 = vpop.f32.mrb[0].mxu0
      %v5382 = vpop.f32.mrb[0].mxu0
      %v5383 = vadd.f32 0.0, %v5382
      %v5384 = vpop.f32.mrb[0].mxu0
      %5385 = vmatprep.mubr.bf16.mxu0 %v5038
      %5386 = vmatmul.mubr.bf16.gmra.mrb[0].mxu0 %v5030
      %v5387 = vpop.f32.mrb[0].mxu0
      %v5388 = vadd.f32 0.0, %v5387
      %v5389 = vpop.f32.mrb[0].mxu0
      %v5390 = vpop.f32.mrb[0].mxu0
      %v5391 = vadd.f32 0.0, %v5390
      %v5392 = vpop.f32.mrb[0].mxu0
      %5393 = vmatprep.mubr.bf16.mxu0 %v5054
      %5394 = vmatmul.mubr.bf16.gmra.mrb[0].mxu0 %v5046
      %v5395 = vpop.f32.mrb[0].mxu0
      %v5396 = vadd.f32 0.0, %v5395
      %v5397 = vpop.f32.mrb[0].mxu0
      %v5398 = vpop.f32.mrb[0].mxu0
      %v5399 = vadd.f32 0.0, %v5398
      %v5400 = vpop.f32.mrb[0].mxu0
      %5401 = vmatprep.mubr.bf16.mxu0 %v5070
      %5402 = vmatmul.mubr.bf16.gmra.mrb[0].mxu0 %v5062
      %v5403 = vpop.f32.mrb[0].mxu0
      %v5404 = vadd.f32 0.0, %v5403
      %v5405 = vpop.f32.mrb[0].mxu0
      %v5406 = vpop.f32.mrb[0].mxu0
      %v5407 = vadd.f32 0.0, %v5406
      %v5408 = vpop.f32.mrb[0].mxu0
      %5409 = vmatprep.mubr.bf16.mxu0 %v5086
      %5410 = vmatmul.mubr.bf16.gmra.mrb[0].mxu0 %v5078
      %v5411 = vpop.f32.mrb[0].mxu0
      %v5412 = vadd.f32 0.0, %v5411
      %v5413 = vpop.f32.mrb[0].mxu0
      %v5414 = vpop.f32.mrb[0].mxu0
      %v5415 = vadd.f32 0.0, %v5414
      %v5416 = vpop.f32.mrb[0].mxu0
      %5417 = vmatprep.mubr.bf16.mxu0 %v5102
      %5418 = vmatmul.mubr.bf16.gmra.mrb[0].mxu0 %v5094
      %v5419 = vpop.f32.mrb[0].mxu0
      %v5420 = vadd.f32 0.0, %v5419
      %v5421 = vpop.f32.mrb[0].mxu0
      %v5422 = vpop.f32.mrb[0].mxu0
      %v5423 = vadd.f32 0.0, %v5422
      %v5424 = vpop.f32.mrb[0].mxu0
      %5425 = vmatprep.mubr.bf16.mxu0 %v5118
      %5426 = vmatmul.mubr.bf16.gmra.mrb[0].mxu0 %v5110
      %v5427 = vpop.f32.mrb[0].mxu0
      %v5428 = vadd.f32 0.0, %v5427
      %v5429 = vpop.f32.mrb[0].mxu0
      %v5430 = vpop.f32.mrb[0].mxu0
      %v5431 = vadd.f32 0.0, %v5430
      %v5432 = vpop.f32.mrb[0].mxu0
      %5433 = vmatprep.mubr.bf16.mxu0 %v5134
      %5434 = vmatmul.mubr.bf16.gmra.mrb[0].mxu0 %v5126
      %v5435 = vpop.f32.mrb[0].mxu0
      %v5436 = vadd.f32 0.0, %v5435
      %v5437 = vpop.f32.mrb[0].mxu0
      %v5438 = vpop.f32.mrb[0].mxu0
      %v5439 = vadd.f32 0.0, %v5438
      %v5440 = vpop.f32.mrb[0].mxu0
      %5441 = vmatprep.mubr.bf16.mxu0 %v5150
      %5442 = vmatmul.mubr.bf16.gmra.mrb[0].mxu0 %v5142
      %v5443 = vpop.f32.mrb[0].mxu0
      %v5444 = vadd.f32 0.0, %v5443
      %v5445 = vpop.f32.mrb[0].mxu0
      %v5446 = vpop.f32.mrb[0].mxu0
      %v5447 = vadd.f32 0.0, %v5446
      %v5448 = vpop.f32.mrb[0].mxu0
      %5449 = vmatprep.mubr.bf16.mxu0 %v5166
      %5450 = vmatmul.mubr.bf16.gmra.mrb[0].mxu0 %v5158
      %v5451 = vpop.f32.mrb[0].mxu0
      %v5452 = vadd.f32 0.0, %v5451
      %v5453 = vpop.f32.mrb[0].mxu0
      %v5454 = vpop.f32.mrb[0].mxu0
      %v5455 = vadd.f32 0.0, %v5454
      %v5456 = vpop.f32.mrb[0].mxu0
      %5457 = vmatprep.mubr.bf16.mxu0 %v5182
      %5458 = vmatmul.mubr.bf16.gmra.mrb[0].mxu0 %v5174
      %v5459 = vpop.f32.mrb[0].mxu0
      %v5460 = vadd.f32 0.0, %v5459
      %v5461 = vpop.f32.mrb[0].mxu0
      %v5462 = vpop.f32.mrb[0].mxu0
      %v5463 = vadd.f32 0.0, %v5462
      %v5464 = vpop.f32.mrb[0].mxu0
      %5465 = vmatprep.mubr.bf16.mxu0 %v5198
      %5466 = vmatmul.mubr.bf16.gmra.mrb[0].mxu0 %v5190
      %v5467 = vpop.f32.mrb[0].mxu0
      %v5468 = vadd.f32 0.0, %v5467
      %v5469 = vpop.f32.mrb[0].mxu0
      %v5470 = vpop.f32.mrb[0].mxu0
      %v5471 = vadd.f32 0.0, %v5470
      %v5472 = vpop.f32.mrb[0].mxu0
      %5473 = vmatprep.mubr.bf16.mxu0 %v5214
      %5474 = vmatmul.mubr.bf16.gmra.mrb[0].mxu0 %v5206
      %v5475 = vpop.f32.mrb[0].mxu0
      %v5476 = vadd.f32 0.0, %v5475
      %v5477 = vpop.f32.mrb[0].mxu0
      %v5478 = vpop.f32.mrb[0].mxu0
      %v5479 = vadd.f32 0.0, %v5478
      %v5480 = vpop.f32.mrb[0].mxu0
      %5481 = vmatprep.mubr.bf16.mxu0 %v5220
      %5482 = vmatmul.mubr.bf16.gmra.mrb[0].mxu0 %v5217
      %v5483 = vpop.f32.mrb[0].mxu0
      %v5484 = vadd.f32 0.0, %v5483
      %v5485 = vpop.f32.mrb[0].mxu0
      %v5486 = vpop.f32.mrb[0].mxu0
      %v5487 = vadd.f32 0.0, %v5486
      %v5488 = vpop.f32.mrb[0].mxu0
      %5489 = vdwg.mxu0
      %v5490 = vadd.f32 %v4910, %v5380
      %v5491 = vadd.f32 %v4911, %v5383
      %v5492 = vadd.f32 %v4912, %v5388
      %v5493 = vadd.f32 %v4913, %v5391
      %v5494 = vadd.f32 %v4914, %v5396
      %v5495 = vadd.f32 %v4915, %v5399
      %v5496 = vadd.f32 %v4916, %v5404
      %v5497 = vadd.f32 %v4917, %v5407
      %v5498 = vadd.f32 %v4918, %v5412
      %v5499 = vadd.f32 %v4919, %v5415
      %v5500 = vadd.f32 %v4920, %v5420
      %v5501 = vadd.f32 %v4921, %v5423
      %v5502 = vadd.f32 %v4922, %v5428
      %v5503 = vadd.f32 %v4923, %v5431
      %v5504 = vadd.f32 %v4924, %v5436
      %v5505 = vadd.f32 %v4925, %v5439
      %v5506 = vadd.f32 %v4926, %v5444
      %v5507 = vadd.f32 %v4927, %v5447
      %v5508 = vadd.f32 %v4928, %v5452
      %v5509 = vadd.f32 %v4929, %v5455
      %v5510 = vadd.f32 %v4930, %v5460
      %v5511 = vadd.f32 %v4931, %v5463
      %v5512 = vadd.f32 %v4932, %v5468
      %v5513 = vadd.f32 %v4933, %v5471
      %v5514 = vadd.f32 %v4934, %v5476
      %v5515 = vadd.f32 %v4935, %v5479
      %v5516 = vadd.f32 %v4936, %v5484
      %v5517 = vadd.f32 %v4937, %v5487
      %5518 = vst [vmem:[#allocation4] sm:$0xff] %v5490
      %5519 = vst [vmem:[#allocation4 + $0x8] sm:$0xff] %v5491
      %5520 = vst [vmem:[#allocation4 + $0x10] sm:$0xff] %v5492
      %5521 = vst [vmem:[#allocation4 + $0x18] sm:$0xff] %v5493
      %5522 = vst [vmem:[#allocation4 + $0x20] sm:$0xff] %v5494
      %5523 = vst [vmem:[#allocation4 + $0x28] sm:$0xff] %v5495
      %5524 = vst [vmem:[#allocation4 + $0x30] sm:$0xff] %v5496
      %5525 = vst [vmem:[#allocation4 + $0x38] sm:$0xff] %v5497
      %5526 = vst [vmem:[#allocation4 + $0x40] sm:$0xff] %v5498
      %5527 = vst [vmem:[#allocation4 + $0x48] sm:$0xff] %v5499
      %5528 = vst [vmem:[#allocation4 + $0x50] sm:$0xff] %v5500
      %5529 = vst [vmem:[#allocation4 + $0x58] sm:$0xff] %v5501
      %5530 = vst [vmem:[#allocation4 + $0x60] sm:$0xff] %v5502
      %5531 = vst [vmem:[#allocation4 + $0x68] sm:$0xff] %v5503
      %5532 = vst [vmem:[#allocation4 + $0x70] sm:$0xff] %v5504
      %5533 = vst [vmem:[#allocation4 + $0x78] sm:$0xff] %v5505
      %5534 = vst [vmem:[#allocation4 + $0x80] sm:$0xff] %v5506
      %5535 = vst [vmem:[#allocation4 + $0x88] sm:$0xff] %v5507
      %5536 = vst [vmem:[#allocation4 + $0x90] sm:$0xff] %v5508
      %5537 = vst [vmem:[#allocation4 + $0x98] sm:$0xff] %v5509
      %5538 = vst [vmem:[#allocation4 + $0xa0] sm:$0xff] %v5510
      %5539 = vst [vmem:[#allocation4 + $0xa8] sm:$0xff] %v5511
      %5540 = vst [vmem:[#allocation4 + $0xb0] sm:$0xff] %v5512
      %5541 = vst [vmem:[#allocation4 + $0xb8] sm:$0xff] %v5513
      %5542 = vst [vmem:[#allocation4 + $0xc0] sm:$0xff] %v5514
      %5543 = vst [vmem:[#allocation4 + $0xc8] sm:$0xff] %v5515
      %5544 = vst [vmem:[#allocation4 + $0xd0] sm:$0xff] %v5516
      %5545 = vst [vmem:[#allocation4 + $0xd8] sm:$0x3f] %v5517
      %v5546 = vld [vmem:[#allocation4] sm:$0xff]
      %v5547 = vld [vmem:[#allocation4 + $0x8] sm:$0xff]
      %v5548 = vld [vmem:[#allocation4 + $0x10] sm:$0xff]
      %v5549 = vld [vmem:[#allocation4 + $0x18] sm:$0xff]
      %v5550 = vld [vmem:[#allocation4 + $0x20] sm:$0xff]
      %v5551 = vld [vmem:[#allocation4 + $0x28] sm:$0xff]
      %v5552 = vld [vmem:[#allocation4 + $0x30] sm:$0xff]
      %v5553 = vld [vmem:[#allocation4 + $0x38] sm:$0xff]
      %v5554 = vld [vmem:[#allocation4 + $0x40] sm:$0xff]
      %v5555 = vld [vmem:[#allocation4 + $0x48] sm:$0xff]
      %v5556 = vld [vmem:[#allocation4 + $0x50] sm:$0xff]
      %v5557 = vld [vmem:[#allocation4 + $0x58] sm:$0xff]
      %v5558 = vld [vmem:[#allocation4 + $0x60] sm:$0xff]
      %v5559 = vld [vmem:[#allocation4 + $0x68] sm:$0xff]
      %v5560 = vld [vmem:[#allocation4 + $0x70] sm:$0xff]
      %v5561 = vld [vmem:[#allocation4 + $0x78] sm:$0xff]
      %v5562 = vld [vmem:[#allocation4 + $0x80] sm:$0xff]
      %v5563 = vld [vmem:[#allocation4 + $0x88] sm:$0xff]
      %v5564 = vld [vmem:[#allocation4 + $0x90] sm:$0xff]
      %v5565 = vld [vmem:[#allocation4 + $0x98] sm:$0xff]
      %v5566 = vld [vmem:[#allocation4 + $0xa0] sm:$0xff]
      %v5567 = vld [vmem:[#allocation4 + $0xa8] sm:$0xff]
      %v5568 = vld [vmem:[#allocation4 + $0xb0] sm:$0xff]
      %v5569 = vld [vmem:[#allocation4 + $0xb8] sm:$0xff]
      %v5570 = vld [vmem:[#allocation4 + $0xc0] sm:$0xff]
      %v5571 = vld [vmem:[#allocation4 + $0xc8] sm:$0xff]
      %v5572 = vld [vmem:[#allocation4 + $0xd0] sm:$0xff]
      %v5573 = vld [vmem:[#allocation4 + $0xd8] sm:$0x3f]
      %v5574 = vld [vmem:[#allocation2 + $0x20] sm:$0xfe]
      %v5575 = vld [vmem:[#allocation2 + $0x28] sm:$0xfe]
      %v5576 = vld [vmem:[#allocation2 + $0x30] sm:$0xff]
      %v5577 = vld [vmem:[#allocation2 + $0x38] sm:$0xff]
      %v5578 = vld [vmem:[#allocation2 + $0x40] sm:$0xff]
      %v5579 = vld [vmem:[#allocation2 + $0x48] sm:$0xff]
      %v5580 = vld [vmem:[#allocation2 + $0x50] sm:$0xff]
      %v5581 = vld [vmem:[#allocation2 + $0x58] sm:$0xff]
      %v5582 = vld [vmem:[#allocation2 + $0x60] sm:$0xff]
      %v5583 = vld [vmem:[#allocation2 + $0x68] sm:$0xff]
      %v5584 = vld [vmem:[#allocation2 + $0x70] sm:$0xff]
      %v5585 = vld [vmem:[#allocation2 + $0x78] sm:$0xff]
      %v5586 = vld [vmem:[#allocation2 + $0x80] sm:$0xff]
      %v5587 = vld [vmem:[#allocation2 + $0x88] sm:$0xff]
      %v5588 = vld [vmem:[#allocation2 + $0x90] sm:$0xff]
      %v5589 = vld [vmem:[#allocation2 + $0x98] sm:$0xff]
      %v5590 = vld [vmem:[#allocation2 + $0xa0] sm:$0xff]
      %v5591 = vld [vmem:[#allocation2 + $0xa8] sm:$0xff]
      %v5592 = vld [vmem:[#allocation2 + $0xb0] sm:$0xff]
      %v5593 = vld [vmem:[#allocation2 + $0xb8] sm:$0xff]
      %v5594 = vld [vmem:[#allocation2 + $0xc0] sm:$0xff]
      %v5595 = vld [vmem:[#allocation2 + $0xc8] sm:$0xff]
      %v5596 = vld [vmem:[#allocation2 + $0xd0] sm:$0xff]
      %v5597 = vld [vmem:[#allocation2 + $0xd8] sm:$0xff]
      %v5598 = vld [vmem:[#allocation2 + $0xe0] sm:$0xff]
      %v5599 = vld [vmem:[#allocation2 + $0xe8] sm:$0xff]
      %v5600 = vld [vmem:[#allocation2 + $0xf0] sm:$0xff]
      %v5601 = vld [vmem:[#allocation2 + $0xf8] sm:$0xff]
      %s5602 = scalar_lea.vmem %s4, 1024
      %v5603 = vld [vmem:[%s5602] sm:$0xf]
      %v5604 = vld [vmem:[%s5602 + $0x4] sm:$0xf]
      %v5605 = vld [vmem:[%s5602 + $0x8] sm:$0xf]
      %v5606 = vld [vmem:[%s5602 + $0xc] sm:$0xf]
      %v5607 = vld [vmem:[%s5602 + $0x10] sm:$0xf]
      %v5608 = vld [vmem:[%s5602 + $0x14] sm:$0xf]
      %v5609 = vld [vmem:[%s5602 + $0x18] sm:$0xf]
      %v5610 = vld [vmem:[%s5602 + $0x1c] sm:$0xf]
      %v5611 = vld [vmem:[%s5602 + $0x20] sm:$0xf]
      %v5612 = vld [vmem:[%s5602 + $0x24] sm:$0xf]
      %v5613 = vld [vmem:[%s5602 + $0x28] sm:$0xf]
      %v5614 = vld [vmem:[%s5602 + $0x2c] sm:$0xf]
      %v5615 = vld [vmem:[%s5602 + $0x30] sm:$0xf]
      %v5616 = vld [vmem:[%s5602 + $0x34] sm:$0xf]
      %v5617 = vld [vmem:[%s5602 + $0x38] sm:$0xf]
      %v5618 = vld [vmem:[%s5602 + $0x3c] sm:$0xf]
      %v5619 = vld [vmem:[%s5602 + $0x40] sm:$0xf]
      %v5620 = vld [vmem:[%s5602 + $0x44] sm:$0xf]
      %v5621 = vld [vmem:[%s5602 + $0x48] sm:$0xf]
      %v5622 = vld [vmem:[%s5602 + $0x4c] sm:$0xf]
      %v5623 = vld [vmem:[%s5602 + $0x50] sm:$0xf]
      %v5624 = vld [vmem:[%s5602 + $0x54] sm:$0xf]
      %v5625 = vld [vmem:[%s5602 + $0x58] sm:$0xf]
      %v5626 = vld [vmem:[%s5602 + $0x5c] sm:$0xf]
      %v5627 = vld [vmem:[%s5602 + $0x60] sm:$0xf]
      %v5628 = vld [vmem:[%s5602 + $0x64] sm:$0xf]
      %v5629 = vld [vmem:[%s5602 + $0x68] sm:$0xf]
      %v5630 = vld [vmem:[%s5602 + $0x6c] sm:$0xf]
      %v5631 = vld [vmem:[%s5602 + $0x70] sm:$0xf]
      %v5632 = vld [vmem:[%s5602 + $0x74] sm:$0xf]
      %v5633 = vld [vmem:[%s5602 + $0x78] sm:$0xf]
      %v5634 = vld [vmem:[%s5602 + $0x7c] sm:$0xf]
      %v5663 = vrot.slane %v5574, 1
      %v5664 = vrot.slane %v5576, 1
      %v5665 = vsel %vm2626, %v5663, %v5664
      %v5666 = vrot.slane %v5575, 1
      %v5667 = vrot.slane %v5577, 1
      %v5668 = vsel %vm2626, %v5666, %v5667
      %v5669 = vrot.slane %v5578, 1
      %v5670 = vsel %vm2626, %v5664, %v5669
      %v5671 = vrot.slane %v5579, 1
      %v5672 = vsel %vm2626, %v5667, %v5671
      %v5673 = vrot.slane %v5580, 1
      %v5674 = vsel %vm2626, %v5669, %v5673
      %v5675 = vrot.slane %v5581, 1
      %v5676 = vsel %vm2626, %v5671, %v5675
      %v5677 = vrot.slane %v5582, 1
      %v5678 = vsel %vm2626, %v5673, %v5677
      %v5679 = vrot.slane %v5583, 1
      %v5680 = vsel %vm2626, %v5675, %v5679
      %v5681 = vrot.slane %v5584, 1
      %v5682 = vsel %vm2626, %v5677, %v5681
      %v5683 = vrot.slane %v5585, 1
      %v5684 = vsel %vm2626, %v5679, %v5683
      %v5685 = vrot.slane %v5586, 1
      %v5686 = vsel %vm2626, %v5681, %v5685
      %v5687 = vrot.slane %v5587, 1
      %v5688 = vsel %vm2626, %v5683, %v5687
      %v5689 = vrot.slane %v5588, 1
      %v5690 = vsel %vm2626, %v5685, %v5689
      %v5691 = vrot.slane %v5589, 1
      %v5692 = vsel %vm2626, %v5687, %v5691
      %v5693 = vrot.slane %v5590, 1
      %v5694 = vsel %vm2626, %v5689, %v5693
      %v5695 = vrot.slane %v5591, 1
      %v5696 = vsel %vm2626, %v5691, %v5695
      %v5697 = vrot.slane %v5592, 1
      %v5698 = vsel %vm2626, %v5693, %v5697
      %v5699 = vrot.slane %v5593, 1
      %v5700 = vsel %vm2626, %v5695, %v5699
      %v5701 = vrot.slane %v5594, 1
      %v5702 = vsel %vm2626, %v5697, %v5701
      %v5703 = vrot.slane %v5595, 1
      %v5704 = vsel %vm2626, %v5699, %v5703
      %v5705 = vrot.slane %v5596, 1
      %v5706 = vsel %vm2626, %v5701, %v5705
      %v5707 = vrot.slane %v5597, 1
      %v5708 = vsel %vm2626, %v5703, %v5707
      %v5709 = vrot.slane %v5598, 1
      %v5710 = vsel %vm2626, %v5705, %v5709
      %v5711 = vrot.slane %v5599, 1
      %v5712 = vsel %vm2626, %v5707, %v5711
      %v5713 = vrot.slane %v5600, 1
      %v5714 = vsel %vm2626, %v5709, %v5713
      %v5715 = vrot.slane %v5601, 1
      %v5716 = vsel %vm2626, %v5711, %v5715
      %v5777 = vunpack.c.l.b16 %v5603
      %v5778 = vunpack.c.l.b16 %v5604
      %v5779 = vunpack.c.l.b16 %v5605
      %v5780 = vunpack.c.l.b16 %v5606
      %v5781 = vunpack.c.l.b16 %v5607
      %v5782 = vunpack.c.l.b16 %v5608
      %v5783 = vunpack.c.l.b16 %v5609
      %v5784 = vunpack.c.l.b16 %v5610
      %v5785 = vunpack.c.l.b16 %v5611
      %v5786 = vunpack.c.l.b16 %v5612
      %v5787 = vunpack.c.l.b16 %v5613
      %v5788 = vunpack.c.l.b16 %v5614
      %v5789 = vunpack.c.l.b16 %v5615
      %v5790 = vunpack.c.l.b16 %v5616
      %v5791 = vunpack.c.l.b16 %v5617
      %v5792 = vunpack.c.l.b16 %v5618
      %v5793 = vunpack.c.l.b16 %v5619
      %v5794 = vunpack.c.l.b16 %v5620
      %v5795 = vunpack.c.l.b16 %v5621
      %v5796 = vunpack.c.l.b16 %v5622
      %v5797 = vunpack.c.l.b16 %v5623
      %v5798 = vunpack.c.l.b16 %v5624
      %v5799 = vunpack.c.l.b16 %v5625
      %v5800 = vunpack.c.l.b16 %v5626
      %v5801 = vunpack.c.l.b16 %v5627
      %v5802 = vunpack.c.l.b16 %v5628
      %v5803 = vunpack.c.l.b16 %v5629
      %v5804 = vunpack.c.l.b16 %v5630
      %v5805 = vunpack.c.l.b16 %v5631
      %v5806 = vunpack.c.l.b16 %v5632
      %v5807 = vunpack.c.l.b16 %v5633
      %v5808 = vunpack.c.l.b16 %v5634
      %v5809 = vpack.c.b16 %v5778, %v5777
      %v5810 = vpack.c.b16 %v5780, %v5779
      %v5811 = vpack.c.b16 %v5782, %v5781
      %v5812 = vpack.c.b16 %v5784, %v5783
      %v5813 = vpack.c.b16 %v5786, %v5785
      %v5814 = vpack.c.b16 %v5788, %v5787
      %v5815 = vpack.c.b16 %v5790, %v5789
      %v5816 = vpack.c.b16 %v5792, %v5791
      %v5817 = vpack.c.b16 %v5794, %v5793
      %v5818 = vpack.c.b16 %v5796, %v5795
      %v5819 = vpack.c.b16 %v5798, %v5797
      %v5820 = vpack.c.b16 %v5800, %v5799
      %v5821 = vpack.c.b16 %v5802, %v5801
      %v5822 = vpack.c.b16 %v5804, %v5803
      %v5823 = vpack.c.b16 %v5806, %v5805
      %v5824 = vpack.c.b16 %v5808, %v5807
      %5841 = vmatprep.subr.bf16.mxu0 0
      %5842 = vmatpush1.bf16.msra.mxu0 %v5809
      %5843 = vmatprep.subr.bf16.mxu0 0
      %5844 = vmatpush1.bf16.msra.mxu0 %v5810
      %5845 = vmatprep.subr.bf16.mxu0 0
      %5846 = vmatpush1.bf16.msra.mxu0 %v5811
      %5847 = vmatprep.subr.bf16.mxu0 0
      %5848 = vmatpush1.bf16.msra.mxu0 %v5812
      %5849 = vmatprep.subr.bf16.mxu0 0
      %5850 = vmatpush1.bf16.msra.mxu0 %v5813
      %5851 = vmatprep.subr.bf16.mxu0 0
      %5852 = vmatpush1.bf16.msra.mxu0 %v5814
      %5853 = vmatprep.subr.bf16.mxu0 0
      %5854 = vmatpush1.bf16.msra.mxu0 %v5815
      %5855 = vmatprep.subr.bf16.mxu0 0
      %5856 = vmatpush1.bf16.msra.mxu0 %v5816
      %5857 = vmatprep.subr.bf16.mxu0 0
      %5858 = vmatpush1.bf16.msra.mxu0 %v5817
      %5859 = vmatprep.subr.bf16.mxu0 0
      %5860 = vmatpush1.bf16.msra.mxu0 %v5818
      %5861 = vmatprep.subr.bf16.mxu0 0
      %5862 = vmatpush1.bf16.msra.mxu0 %v5819
      %5863 = vmatprep.subr.bf16.mxu0 0
      %5864 = vmatpush1.bf16.msra.mxu0 %v5820
      %5865 = vmatprep.subr.bf16.mxu0 0
      %5866 = vmatpush1.bf16.msra.mxu0 %v5821
      %5867 = vmatprep.subr.bf16.mxu0 0
      %5868 = vmatpush1.bf16.msra.mxu0 %v5822
      %5869 = vmatprep.subr.bf16.mxu0 0
      %5870 = vmatpush1.bf16.msra.mxu0 %v5823
      %5871 = vmatprep.subr.bf16.mxu0 0
      %5872 = vmatpush1.bf16.msra.mxu0 %v5824
      %5873 = vmatprep.mubr.bf16.mxu0 %v5668
      %5874 = vmatmul.mubr.bf16.gmra.mrb[0].mxu0 %v5665
      %v5875 = vpop.f32.mrb[0].mxu0
      %v5876 = vadd.f32 0.0, %v5875
      %v5877 = vpop.f32.mrb[0].mxu0
      %v5878 = vpop.f32.mrb[0].mxu0
      %v5879 = vadd.f32 0.0, %v5878
      %v5880 = vpop.f32.mrb[0].mxu0
      %5881 = vmatprep.mubr.bf16.mxu0 %v5672
      %5882 = vmatmul.mubr.bf16.gmra.mrb[0].mxu0 %v5670
      %v5883 = vpop.f32.mrb[0].mxu0
      %v5884 = vadd.f32 0.0, %v5883
      %v5885 = vpop.f32.mrb[0].mxu0
      %v5886 = vpop.f32.mrb[0].mxu0
      %v5887 = vadd.f32 0.0, %v5886
      %v5888 = vpop.f32.mrb[0].mxu0
      %5889 = vmatprep.mubr.bf16.mxu0 %v5676
      %5890 = vmatmul.mubr.bf16.gmra.mrb[0].mxu0 %v5674
      %v5891 = vpop.f32.mrb[0].mxu0
      %v5892 = vadd.f32 0.0, %v5891
      %v5893 = vpop.f32.mrb[0].mxu0
      %v5894 = vpop.f32.mrb[0].mxu0
      %v5895 = vadd.f32 0.0, %v5894
      %v5896 = vpop.f32.mrb[0].mxu0
      %5897 = vmatprep.mubr.bf16.mxu0 %v5680
      %5898 = vmatmul.mubr.bf16.gmra.mrb[0].mxu0 %v5678
      %v5899 = vpop.f32.mrb[0].mxu0
      %v5900 = vadd.f32 0.0, %v5899
      %v5901 = vpop.f32.mrb[0].mxu0
      %v5902 = vpop.f32.mrb[0].mxu0
      %v5903 = vadd.f32 0.0, %v5902
      %v5904 = vpop.f32.mrb[0].mxu0
      %5905 = vmatprep.mubr.bf16.mxu0 %v5684
      %5906 = vmatmul.mubr.bf16.gmra.mrb[0].mxu0 %v5682
      %v5907 = vpop.f32.mrb[0].mxu0
      %v5908 = vadd.f32 0.0, %v5907
      %v5909 = vpop.f32.mrb[0].mxu0
      %v5910 = vpop.f32.mrb[0].mxu0
      %v5911 = vadd.f32 0.0, %v5910
      %v5912 = vpop.f32.mrb[0].mxu0
      %5913 = vmatprep.mubr.bf16.mxu0 %v5688
      %5914 = vmatmul.mubr.bf16.gmra.mrb[0].mxu0 %v5686
      %v5915 = vpop.f32.mrb[0].mxu0
      %v5916 = vadd.f32 0.0, %v5915
      %v5917 = vpop.f32.mrb[0].mxu0
      %v5918 = vpop.f32.mrb[0].mxu0
      %v5919 = vadd.f32 0.0, %v5918
      %v5920 = vpop.f32.mrb[0].mxu0
      %5921 = vmatprep.mubr.bf16.mxu0 %v5692
      %5922 = vmatmul.mubr.bf16.gmra.mrb[0].mxu0 %v5690
      %v5923 = vpop.f32.mrb[0].mxu0
      %v5924 = vadd.f32 0.0, %v5923
      %v5925 = vpop.f32.mrb[0].mxu0
      %v5926 = vpop.f32.mrb[0].mxu0
      %v5927 = vadd.f32 0.0, %v5926
      %v5928 = vpop.f32.mrb[0].mxu0
      %5929 = vmatprep.mubr.bf16.mxu0 %v5696
      %5930 = vmatmul.mubr.bf16.gmra.mrb[0].mxu0 %v5694
      %v5931 = vpop.f32.mrb[0].mxu0
      %v5932 = vadd.f32 0.0, %v5931
      %v5933 = vpop.f32.mrb[0].mxu0
      %v5934 = vpop.f32.mrb[0].mxu0
      %v5935 = vadd.f32 0.0, %v5934
      %v5936 = vpop.f32.mrb[0].mxu0
      %5937 = vmatprep.mubr.bf16.mxu0 %v5700
      %5938 = vmatmul.mubr.bf16.gmra.mrb[0].mxu0 %v5698
      %v5939 = vpop.f32.mrb[0].mxu0
      %v5940 = vadd.f32 0.0, %v5939
      %v5941 = vpop.f32.mrb[0].mxu0
      %v5942 = vpop.f32.mrb[0].mxu0
      %v5943 = vadd.f32 0.0, %v5942
      %v5944 = vpop.f32.mrb[0].mxu0
      %5945 = vmatprep.mubr.bf16.mxu0 %v5704
      %5946 = vmatmul.mubr.bf16.gmra.mrb[0].mxu0 %v5702
      %v5947 = vpop.f32.mrb[0].mxu0
      %v5948 = vadd.f32 0.0, %v5947
      %v5949 = vpop.f32.mrb[0].mxu0
      %v5950 = vpop.f32.mrb[0].mxu0
      %v5951 = vadd.f32 0.0, %v5950
      %v5952 = vpop.f32.mrb[0].mxu0
      %5953 = vmatprep.mubr.bf16.mxu0 %v5708
      %5954 = vmatmul.mubr.bf16.gmra.mrb[0].mxu0 %v5706
      %v5955 = vpop.f32.mrb[0].mxu0
      %v5956 = vadd.f32 0.0, %v5955
      %v5957 = vpop.f32.mrb[0].mxu0
      %v5958 = vpop.f32.mrb[0].mxu0
      %v5959 = vadd.f32 0.0, %v5958
      %v5960 = vpop.f32.mrb[0].mxu0
      %5961 = vmatprep.mubr.bf16.mxu0 %v5712
      %5962 = vmatmul.mubr.bf16.gmra.mrb[0].mxu0 %v5710
      %v5963 = vpop.f32.mrb[0].mxu0
      %v5964 = vadd.f32 0.0, %v5963
      %v5965 = vpop.f32.mrb[0].mxu0
      %v5966 = vpop.f32.mrb[0].mxu0
      %v5967 = vadd.f32 0.0, %v5966
      %v5968 = vpop.f32.mrb[0].mxu0
      %5969 = vmatprep.mubr.bf16.mxu0 %v5716
      %5970 = vmatmul.mubr.bf16.gmra.mrb[0].mxu0 %v5714
      %v5971 = vpop.f32.mrb[0].mxu0
      %v5972 = vadd.f32 0.0, %v5971
      %v5973 = vpop.f32.mrb[0].mxu0
      %v5974 = vpop.f32.mrb[0].mxu0
      %v5975 = vadd.f32 0.0, %v5974
      %v5976 = vpop.f32.mrb[0].mxu0
      %5977 = vmatprep.mubr.bf16.mxu0 %v5715
      %5978 = vmatmul.mubr.bf16.gmra.mrb[0].mxu0 %v5713
      %v5979 = vpop.f32.mrb[0].mxu0
      %v5980 = vadd.f32 0.0, %v5979
      %v5981 = vpop.f32.mrb[0].mxu0
      %v5982 = vpop.f32.mrb[0].mxu0
      %v5983 = vadd.f32 0.0, %v5982
      %v5984 = vpop.f32.mrb[0].mxu0
      %5985 = vdwg.mxu0
      %v5986 = vadd.f32 %v5546, %v5876
      %v5987 = vadd.f32 %v5547, %v5879
      %v5988 = vadd.f32 %v5548, %v5884
      %v5989 = vadd.f32 %v5549, %v5887
      %v5990 = vadd.f32 %v5550, %v5892
      %v5991 = vadd.f32 %v5551, %v5895
      %v5992 = vadd.f32 %v5552, %v5900
      %v5993 = vadd.f32 %v5553, %v5903
      %v5994 = vadd.f32 %v5554, %v5908
      %v5995 = vadd.f32 %v5555, %v5911
      %v5996 = vadd.f32 %v5556, %v5916
      %v5997 = vadd.f32 %v5557, %v5919
      %v5998 = vadd.f32 %v5558, %v5924
      %v5999 = vadd.f32 %v5559, %v5927
      %v6000 = vadd.f32 %v5560, %v5932
      %v6001 = vadd.f32 %v5561, %v5935
      %v6002 = vadd.f32 %v5562, %v5940
      %v6003 = vadd.f32 %v5563, %v5943
      %v6004 = vadd.f32 %v5564, %v5948
      %v6005 = vadd.f32 %v5565, %v5951
      %v6006 = vadd.f32 %v5566, %v5956
      %v6007 = vadd.f32 %v5567, %v5959
      %v6008 = vadd.f32 %v5568, %v5964
      %v6009 = vadd.f32 %v5569, %v5967
      %v6010 = vadd.f32 %v5570, %v5972
      %v6011 = vadd.f32 %v5571, %v5975
      %v6012 = vadd.f32 %v5572, %v5980
      %v6013 = vadd.f32 %v5573, %v5983
      %6014 = vst [vmem:[#allocation4] sm:$0xff] %v5986
      %6015 = vst [vmem:[#allocation4 + $0x8] sm:$0xff] %v5987
      %6016 = vst [vmem:[#allocation4 + $0x10] sm:$0xff] %v5988
      %6017 = vst [vmem:[#allocation4 + $0x18] sm:$0xff] %v5989
      %6018 = vst [vmem:[#allocation4 + $0x20] sm:$0xff] %v5990
      %6019 = vst [vmem:[#allocation4 + $0x28] sm:$0xff] %v5991
      %6020 = vst [vmem:[#allocation4 + $0x30] sm:$0xff] %v5992
      %6021 = vst [vmem:[#allocation4 + $0x38] sm:$0xff] %v5993
      %6022 = vst [vmem:[#allocation4 + $0x40] sm:$0xff] %v5994
      %6023 = vst [vmem:[#allocation4 + $0x48] sm:$0xff] %v5995
      %6024 = vst [vmem:[#allocation4 + $0x50] sm:$0xff] %v5996
      %6025 = vst [vmem:[#allocation4 + $0x58] sm:$0xff] %v5997
      %6026 = vst [vmem:[#allocation4 + $0x60] sm:$0xff] %v5998
      %6027 = vst [vmem:[#allocation4 + $0x68] sm:$0xff] %v5999
      %6028 = vst [vmem:[#allocation4 + $0x70] sm:$0xff] %v6000
      %6029 = vst [vmem:[#allocation4 + $0x78] sm:$0xff] %v6001
      %6030 = vst [vmem:[#allocation4 + $0x80] sm:$0xff] %v6002
      %6031 = vst [vmem:[#allocation4 + $0x88] sm:$0xff] %v6003
      %6032 = vst [vmem:[#allocation4 + $0x90] sm:$0xff] %v6004
      %6033 = vst [vmem:[#allocation4 + $0x98] sm:$0xff] %v6005
      %6034 = vst [vmem:[#allocation4 + $0xa0] sm:$0xff] %v6006
      %6035 = vst [vmem:[#allocation4 + $0xa8] sm:$0xff] %v6007
      %6036 = vst [vmem:[#allocation4 + $0xb0] sm:$0xff] %v6008
      %6037 = vst [vmem:[#allocation4 + $0xb8] sm:$0xff] %v6009
      %6038 = vst [vmem:[#allocation4 + $0xc0] sm:$0xff] %v6010
      %6039 = vst [vmem:[#allocation4 + $0xc8] sm:$0xff] %v6011
      %6040 = vst [vmem:[#allocation4 + $0xd0] sm:$0xff] %v6012
      %6041 = vst [vmem:[#allocation4 + $0xd8] sm:$0x3f] %v6013
      %v6042 = vld [vmem:[#allocation4] sm:$0xff]
      %v6043 = vld [vmem:[#allocation4 + $0x8] sm:$0xff]
      %v6044 = vld [vmem:[#allocation4 + $0x10] sm:$0xff]
      %v6045 = vld [vmem:[#allocation4 + $0x18] sm:$0xff]
      %v6046 = vld [vmem:[#allocation4 + $0x20] sm:$0xff]
      %v6047 = vld [vmem:[#allocation4 + $0x28] sm:$0xff]
      %v6048 = vld [vmem:[#allocation4 + $0x30] sm:$0xff]
      %v6049 = vld [vmem:[#allocation4 + $0x38] sm:$0xff]
      %v6050 = vld [vmem:[#allocation4 + $0x40] sm:$0xff]
      %v6051 = vld [vmem:[#allocation4 + $0x48] sm:$0xff]
      %v6052 = vld [vmem:[#allocation4 + $0x50] sm:$0xff]
      %v6053 = vld [vmem:[#allocation4 + $0x58] sm:$0xff]
      %v6054 = vld [vmem:[#allocation4 + $0x60] sm:$0xff]
      %v6055 = vld [vmem:[#allocation4 + $0x68] sm:$0xff]
      %v6056 = vld [vmem:[#allocation4 + $0x70] sm:$0xff]
      %v6057 = vld [vmem:[#allocation4 + $0x78] sm:$0xff]
      %v6058 = vld [vmem:[#allocation4 + $0x80] sm:$0xff]
      %v6059 = vld [vmem:[#allocation4 + $0x88] sm:$0xff]
      %v6060 = vld [vmem:[#allocation4 + $0x90] sm:$0xff]
      %v6061 = vld [vmem:[#allocation4 + $0x98] sm:$0xff]
      %v6062 = vld [vmem:[#allocation4 + $0xa0] sm:$0xff]
      %v6063 = vld [vmem:[#allocation4 + $0xa8] sm:$0xff]
      %v6064 = vld [vmem:[#allocation4 + $0xb0] sm:$0xff]
      %v6065 = vld [vmem:[#allocation4 + $0xb8] sm:$0xff]
      %v6066 = vld [vmem:[#allocation4 + $0xc0] sm:$0xff]
      %v6067 = vld [vmem:[#allocation4 + $0xc8] sm:$0xff]
      %v6068 = vld [vmem:[#allocation4 + $0xd0] sm:$0xff]
      %v6069 = vld [vmem:[#allocation4 + $0xd8] sm:$0x3f]
      %v6071 = vlaneseq
      %v6072 = vshrl.u32 %v6071, 7
      %v6073 = vsub.s32 0, %v6072
      %v6074 = vrot.slane %v1542, %v6073
      %v6076 = vadd.f32 %v6042, %v6074
      %v6077 = vadd.f32 %v6043, %v6074
      %v6078 = vadd.f32 %v6044, %v6074
      %v6079 = vadd.f32 %v6045, %v6074
      %v6080 = vadd.f32 %v6046, %v6074
      %v6081 = vadd.f32 %v6047, %v6074
      %v6082 = vadd.f32 %v6048, %v6074
      %v6083 = vadd.f32 %v6049, %v6074
      %v6084 = vadd.f32 %v6050, %v6074
      %v6085 = vadd.f32 %v6051, %v6074
      %v6086 = vadd.f32 %v6052, %v6074
      %v6087 = vadd.f32 %v6053, %v6074
      %v6088 = vadd.f32 %v6054, %v6074
      %v6089 = vadd.f32 %v6055, %v6074
      %v6090 = vadd.f32 %v6056, %v6074
      %v6091 = vadd.f32 %v6057, %v6074
      %v6092 = vadd.f32 %v6058, %v6074
      %v6093 = vadd.f32 %v6059, %v6074
      %v6094 = vadd.f32 %v6060, %v6074
      %v6095 = vadd.f32 %v6061, %v6074
      %v6096 = vadd.f32 %v6062, %v6074
      %v6097 = vadd.f32 %v6063, %v6074
      %v6098 = vadd.f32 %v6064, %v6074
      %v6099 = vadd.f32 %v6065, %v6074
      %v6100 = vadd.f32 %v6066, %v6074
      %v6101 = vadd.f32 %v6067, %v6074
      %v6102 = vadd.f32 %v6068, %v6074
      %v6103 = vadd.f32 %v6069, %v6074
      %v6104 = vmax.f32 %v6076, 0.0
      %v6105 = vmax.f32 %v6077, 0.0
      %v6106 = vmax.f32 %v6078, 0.0
      %v6107 = vmax.f32 %v6079, 0.0
      %v6108 = vmax.f32 %v6080, 0.0
      %v6109 = vmax.f32 %v6081, 0.0
      %v6110 = vmax.f32 %v6082, 0.0
      %v6111 = vmax.f32 %v6083, 0.0
      %v6112 = vmax.f32 %v6084, 0.0
      %v6113 = vmax.f32 %v6085, 0.0
      %v6114 = vmax.f32 %v6086, 0.0
      %v6115 = vmax.f32 %v6087, 0.0
      %v6116 = vmax.f32 %v6088, 0.0
      %v6117 = vmax.f32 %v6089, 0.0
      %v6118 = vmax.f32 %v6090, 0.0
      %v6119 = vmax.f32 %v6091, 0.0
      %v6120 = vmax.f32 %v6092, 0.0
      %v6121 = vmax.f32 %v6093, 0.0
      %v6122 = vmax.f32 %v6094, 0.0
      %v6123 = vmax.f32 %v6095, 0.0
      %v6124 = vmax.f32 %v6096, 0.0
      %v6125 = vmax.f32 %v6097, 0.0
      %v6126 = vmax.f32 %v6098, 0.0
      %v6127 = vmax.f32 %v6099, 0.0
      %v6128 = vmax.f32 %v6100, 0.0
      %v6129 = vmax.f32 %v6101, 0.0
      %v6130 = vmax.f32 %v6102, 0.0
      %v6131 = vmax.f32 %v6103, 0.0
      %v6132 = vpack.c.bf16 %v6105, %v6104
      %v6133 = vpack.c.bf16 %v6107, %v6106
      %v6134 = vpack.c.bf16 %v6109, %v6108
      %v6135 = vpack.c.bf16 %v6111, %v6110
      %v6136 = vpack.c.bf16 %v6113, %v6112
      %v6137 = vpack.c.bf16 %v6115, %v6114
      %v6138 = vpack.c.bf16 %v6117, %v6116
      %v6139 = vpack.c.bf16 %v6119, %v6118
      %v6140 = vpack.c.bf16 %v6121, %v6120
      %v6141 = vpack.c.bf16 %v6123, %v6122
      %v6142 = vpack.c.bf16 %v6125, %v6124
      %v6143 = vpack.c.bf16 %v6127, %v6126
      %v6144 = vpack.c.bf16 %v6129, %v6128
      %v6145 = vpack.c.bf16 %v6131, %v6130
      %6146 = vst [vmem:[#allocation3] sm:$0xff] %v6132
      %6147 = vst [vmem:[#allocation3 + $0x8] sm:$0xff] %v6133
      %6148 = vst [vmem:[#allocation3 + $0x10] sm:$0xff] %v6134
      %6149 = vst [vmem:[#allocation3 + $0x18] sm:$0xff] %v6135
      %6150 = vst [vmem:[#allocation3 + $0x20] sm:$0xff] %v6136
      %6151 = vst [vmem:[#allocation3 + $0x28] sm:$0xff] %v6137
      %6152 = vst [vmem:[#allocation3 + $0x30] sm:$0xff] %v6138
      %6153 = vst [vmem:[#allocation3 + $0x38] sm:$0xff] %v6139
      %6154 = vst [vmem:[#allocation3 + $0x40] sm:$0xff] %v6140
      %6155 = vst [vmem:[#allocation3 + $0x48] sm:$0xff] %v6141
      %6156 = vst [vmem:[#allocation3 + $0x50] sm:$0xff] %v6142
      %6157 = vst [vmem:[#allocation3 + $0x58] sm:$0xff] %v6143
      %6158 = vst [vmem:[#allocation3 + $0x60] sm:$0xff] %v6144
      %6159 = vst [vmem:[#allocation3 + $0x68] sm:$0x7f] %v6145
      %v6160 = vld [vmem:[%s7] sm:$0x1]
      %v6161 = vld [vmem:[#allocation3] sm:$0xff]
      %v6162 = vld [vmem:[#allocation3 + $0x8] sm:$0xff]
      %v6163 = vld [vmem:[#allocation3 + $0x10] sm:$0xff]
      %v6164 = vld [vmem:[#allocation3 + $0x18] sm:$0xff]
      %v6165 = vld [vmem:[#allocation3 + $0x20] sm:$0xff]
      %v6166 = vld [vmem:[#allocation3 + $0x28] sm:$0xff]
      %v6167 = vld [vmem:[#allocation3 + $0x30] sm:$0xff]
      %v6168 = vld [vmem:[#allocation3 + $0x38] sm:$0xff]
      %v6169 = vld [vmem:[#allocation3 + $0x40] sm:$0xff]
      %v6170 = vld [vmem:[#allocation3 + $0x48] sm:$0xff]
      %v6171 = vld [vmem:[#allocation3 + $0x50] sm:$0xff]
      %v6172 = vld [vmem:[#allocation3 + $0x58] sm:$0x3f]
      %v6173 = vld [vmem:[%s6] sm:$0xf]
      %v6174 = vld [vmem:[%s6 + $0x4] sm:$0xf]
      %v6175 = vld [vmem:[%s6 + $0x8] sm:$0xf]
      %v6176 = vld [vmem:[%s6 + $0xc] sm:$0xf]
      %v6177 = vld [vmem:[%s6 + $0x10] sm:$0xf]
      %v6178 = vld [vmem:[%s6 + $0x14] sm:$0xf]
      %v6179 = vld [vmem:[%s6 + $0x18] sm:$0xf]
      %v6180 = vld [vmem:[%s6 + $0x1c] sm:$0xf]
      %v6181 = vld [vmem:[%s6 + $0x20] sm:$0xf]
      %v6182 = vld [vmem:[%s6 + $0x24] sm:$0xf]
      %v6183 = vld [vmem:[%s6 + $0x28] sm:$0xf]
      %v6184 = vld [vmem:[%s6 + $0x2c] sm:$0xf]
      %v6185 = vld [vmem:[%s6 + $0x30] sm:$0xf]
      %v6186 = vld [vmem:[%s6 + $0x34] sm:$0xf]
      %v6187 = vld [vmem:[%s6 + $0x38] sm:$0xf]
      %v6188 = vld [vmem:[%s6 + $0x3c] sm:$0xf]
      %v6205 = vunpack.c.l.b16 %v6173
      %v6206 = vunpack.c.l.b16 %v6174
      %v6207 = vunpack.c.l.b16 %v6175
      %v6208 = vunpack.c.l.b16 %v6176
      %v6209 = vunpack.c.l.b16 %v6177
      %v6210 = vunpack.c.l.b16 %v6178
      %v6211 = vunpack.c.l.b16 %v6179
      %v6212 = vunpack.c.l.b16 %v6180
      %v6213 = vunpack.c.l.b16 %v6181
      %v6214 = vunpack.c.l.b16 %v6182
      %v6215 = vunpack.c.l.b16 %v6183
      %v6216 = vunpack.c.l.b16 %v6184
      %v6217 = vunpack.c.l.b16 %v6185
      %v6218 = vunpack.c.l.b16 %v6186
      %v6219 = vunpack.c.l.b16 %v6187
      %v6220 = vunpack.c.l.b16 %v6188
      %v6221 = vpack.c.b16 %v6206, %v6205
      %v6222 = vpack.c.b16 %v6208, %v6207
      %v6223 = vpack.c.b16 %v6210, %v6209
      %v6224 = vpack.c.b16 %v6212, %v6211
      %v6225 = vpack.c.b16 %v6214, %v6213
      %v6226 = vpack.c.b16 %v6216, %v6215
      %v6227 = vpack.c.b16 %v6218, %v6217
      %v6228 = vpack.c.b16 %v6220, %v6219
      %6237 = vmatprep.subr.bf16.mxu0 0
      %6238 = vmatpush1.bf16.msra.mxu0 %v6221
      %6239 = vmatprep.subr.bf16.mxu0 0
      %6240 = vmatpush1.bf16.msra.mxu0 %v6222
      %6241 = vmatprep.subr.bf16.mxu0 0
      %6242 = vmatpush1.bf16.msra.mxu0 %v6223
      %6243 = vmatprep.subr.bf16.mxu0 0
      %6244 = vmatpush1.bf16.msra.mxu0 %v6224
      %6245 = vmatprep.subr.bf16.mxu0 0
      %6246 = vmatpush1.bf16.msra.mxu0 %v6225
      %6247 = vmatprep.subr.bf16.mxu0 0
      %6248 = vmatpush1.bf16.msra.mxu0 %v6226
      %6249 = vmatprep.subr.bf16.mxu0 0
      %6250 = vmatpush1.bf16.msra.mxu0 %v6227
      %6251 = vmatprep.subr.bf16.mxu0 0
      %6252 = vmatpush1.bf16.msra.mxu0 %v6228
      %6253 = vmatprep.subr.bf16.mxu0 0
      %6254 = vmatpush1.bf16.msra.mxu0 0
      %6255 = vmatprep.subr.bf16.mxu0 0
      %6256 = vmatpush1.bf16.msra.mxu0 0
      %6257 = vmatprep.subr.bf16.mxu0 0
      %6258 = vmatpush1.bf16.msra.mxu0 0
      %6259 = vmatprep.subr.bf16.mxu0 0
      %6260 = vmatpush1.bf16.msra.mxu0 0
      %6261 = vmatprep.subr.bf16.mxu0 0
      %6262 = vmatpush1.bf16.msra.mxu0 0
      %6263 = vmatprep.subr.bf16.mxu0 0
      %6264 = vmatpush1.bf16.msra.mxu0 0
      %6265 = vmatprep.subr.bf16.mxu0 0
      %6266 = vmatpush1.bf16.msra.mxu0 0
      %6267 = vmatprep.subr.bf16.mxu0 0
      %6268 = vmatpush1.bf16.msra.mxu0 0
      %6269 = vmatprep.mubr.bf16.mxu0 0
      %6270 = vmatmul.mubr.bf16.gmra.mrb[0].mxu0 %v6161
      %v6271 = vpop.f32.mrb[0].mxu0
      %v6272 = vadd.f32 0.0, %v6271
      %v6273 = vpop.f32.mrb[0].mxu0
      %v6274 = vpop.f32.mrb[0].mxu0
      %v6275 = vadd.f32 0.0, %v6274
      %v6276 = vpop.f32.mrb[0].mxu0
      %6277 = vmatprep.mubr.bf16.mxu0 0
      %6278 = vmatmul.mubr.bf16.gmra.mrb[0].mxu0 %v6162
      %v6279 = vpop.f32.mrb[0].mxu0
      %v6280 = vadd.f32 0.0, %v6279
      %v6281 = vpop.f32.mrb[0].mxu0
      %v6282 = vpop.f32.mrb[0].mxu0
      %v6283 = vadd.f32 0.0, %v6282
      %v6284 = vpop.f32.mrb[0].mxu0
      %6285 = vmatprep.mubr.bf16.mxu0 0
      %6286 = vmatmul.mubr.bf16.gmra.mrb[0].mxu0 %v6163
      %v6287 = vpop.f32.mrb[0].mxu0
      %v6288 = vadd.f32 0.0, %v6287
      %v6289 = vpop.f32.mrb[0].mxu0
      %v6290 = vpop.f32.mrb[0].mxu0
      %v6291 = vadd.f32 0.0, %v6290
      %v6292 = vpop.f32.mrb[0].mxu0
      %6293 = vmatprep.mubr.bf16.mxu0 0
      %6294 = vmatmul.mubr.bf16.gmra.mrb[0].mxu0 %v6164
      %v6295 = vpop.f32.mrb[0].mxu0
      %v6296 = vadd.f32 0.0, %v6295
      %v6297 = vpop.f32.mrb[0].mxu0
      %v6298 = vpop.f32.mrb[0].mxu0
      %v6299 = vadd.f32 0.0, %v6298
      %v6300 = vpop.f32.mrb[0].mxu0
      %6301 = vmatprep.mubr.bf16.mxu0 0
      %6302 = vmatmul.mubr.bf16.gmra.mrb[0].mxu0 %v6165
      %v6303 = vpop.f32.mrb[0].mxu0
      %v6304 = vadd.f32 0.0, %v6303
      %v6305 = vpop.f32.mrb[0].mxu0
      %v6306 = vpop.f32.mrb[0].mxu0
      %v6307 = vadd.f32 0.0, %v6306
      %v6308 = vpop.f32.mrb[0].mxu0
      %6309 = vmatprep.mubr.bf16.mxu0 0
      %6310 = vmatmul.mubr.bf16.gmra.mrb[0].mxu0 %v6166
      %v6311 = vpop.f32.mrb[0].mxu0
      %v6312 = vadd.f32 0.0, %v6311
      %v6313 = vpop.f32.mrb[0].mxu0
      %v6314 = vpop.f32.mrb[0].mxu0
      %v6315 = vadd.f32 0.0, %v6314
      %v6316 = vpop.f32.mrb[0].mxu0
      %6317 = vmatprep.mubr.bf16.mxu0 0
      %6318 = vmatmul.mubr.bf16.gmra.mrb[0].mxu0 %v6167
      %v6319 = vpop.f32.mrb[0].mxu0
      %v6320 = vadd.f32 0.0, %v6319
      %v6321 = vpop.f32.mrb[0].mxu0
      %v6322 = vpop.f32.mrb[0].mxu0
      %v6323 = vadd.f32 0.0, %v6322
      %v6324 = vpop.f32.mrb[0].mxu0
      %6325 = vmatprep.mubr.bf16.mxu0 0
      %6326 = vmatmul.mubr.bf16.gmra.mrb[0].mxu0 %v6168
      %v6327 = vpop.f32.mrb[0].mxu0
      %v6328 = vadd.f32 0.0, %v6327
      %v6329 = vpop.f32.mrb[0].mxu0
      %v6330 = vpop.f32.mrb[0].mxu0
      %v6331 = vadd.f32 0.0, %v6330
      %v6332 = vpop.f32.mrb[0].mxu0
      %6333 = vmatprep.mubr.bf16.mxu0 0
      %6334 = vmatmul.mubr.bf16.gmra.mrb[0].mxu0 %v6169
      %v6335 = vpop.f32.mrb[0].mxu0
      %v6336 = vadd.f32 0.0, %v6335
      %v6337 = vpop.f32.mrb[0].mxu0
      %v6338 = vpop.f32.mrb[0].mxu0
      %v6339 = vadd.f32 0.0, %v6338
      %v6340 = vpop.f32.mrb[0].mxu0
      %6341 = vmatprep.mubr.bf16.mxu0 0
      %6342 = vmatmul.mubr.bf16.gmra.mrb[0].mxu0 %v6170
      %v6343 = vpop.f32.mrb[0].mxu0
      %v6344 = vadd.f32 0.0, %v6343
      %v6345 = vpop.f32.mrb[0].mxu0
      %v6346 = vpop.f32.mrb[0].mxu0
      %v6347 = vadd.f32 0.0, %v6346
      %v6348 = vpop.f32.mrb[0].mxu0
      %6349 = vmatprep.mubr.bf16.mxu0 0
      %6350 = vmatmul.mubr.bf16.gmra.mrb[0].mxu0 %v6171
      %v6351 = vpop.f32.mrb[0].mxu0
      %v6352 = vadd.f32 0.0, %v6351
      %v6353 = vpop.f32.mrb[0].mxu0
      %v6354 = vpop.f32.mrb[0].mxu0
      %v6355 = vadd.f32 0.0, %v6354
      %v6356 = vpop.f32.mrb[0].mxu0
      %6357 = vmatprep.mubr.bf16.mxu0 0
      %6358 = vmatmul.mubr.bf16.gmra.mrb[0].mxu0 %v6172
      %v6359 = vpop.f32.mrb[0].mxu0
      %v6360 = vadd.f32 0.0, %v6359
      %v6361 = vpop.f32.mrb[0].mxu0
      %v6362 = vpop.f32.mrb[0].mxu0
      %v6363 = vadd.f32 0.0, %v6362
      %v6364 = vpop.f32.mrb[0].mxu0
      %6365 = vdwg.mxu0
      %6366 = vst [vmem:[#allocation4] sm:$0xff] %v6272
      %6367 = vst [vmem:[#allocation4 + $0x8] sm:$0xff] %v6275
      %6368 = vst [vmem:[#allocation4 + $0x10] sm:$0xff] %v6280
      %6369 = vst [vmem:[#allocation4 + $0x18] sm:$0xff] %v6283
      %6370 = vst [vmem:[#allocation4 + $0x20] sm:$0xff] %v6288
      %6371 = vst [vmem:[#allocation4 + $0x28] sm:$0xff] %v6291
      %6372 = vst [vmem:[#allocation4 + $0x30] sm:$0xff] %v6296
      %6373 = vst [vmem:[#allocation4 + $0x38] sm:$0xff] %v6299
      %6374 = vst [vmem:[#allocation4 + $0x40] sm:$0xff] %v6304
      %6375 = vst [vmem:[#allocation4 + $0x48] sm:$0xff] %v6307
      %6376 = vst [vmem:[#allocation4 + $0x50] sm:$0xff] %v6312
      %6377 = vst [vmem:[#allocation4 + $0x58] sm:$0xff] %v6315
      %6378 = vst [vmem:[#allocation4 + $0x60] sm:$0xff] %v6320
      %6379 = vst [vmem:[#allocation4 + $0x68] sm:$0xff] %v6323
      %6380 = vst [vmem:[#allocation4 + $0x70] sm:$0xff] %v6328
      %6381 = vst [vmem:[#allocation4 + $0x78] sm:$0xff] %v6331
      %6382 = vst [vmem:[#allocation4 + $0x80] sm:$0xff] %v6336
      %6383 = vst [vmem:[#allocation4 + $0x88] sm:$0xff] %v6339
      %6384 = vst [vmem:[#allocation4 + $0x90] sm:$0xff] %v6344
      %6385 = vst [vmem:[#allocation4 + $0x98] sm:$0xff] %v6347
      %6386 = vst [vmem:[#allocation4 + $0xa0] sm:$0xff] %v6352
      %6387 = vst [vmem:[#allocation4 + $0xa8] sm:$0xff] %v6355
      %6388 = vst [vmem:[#allocation4 + $0xb0] sm:$0xff] %v6360
      %6389 = vst [vmem:[#allocation4 + $0xb8] sm:$0xf] %v6363
      %v6390 = vld [vmem:[#allocation4] sm:$0xff]
      %v6391 = vld [vmem:[#allocation4 + $0x8] sm:$0xff]
      %v6392 = vld [vmem:[#allocation4 + $0x10] sm:$0xff]
      %v6393 = vld [vmem:[#allocation4 + $0x18] sm:$0xff]
      %v6394 = vld [vmem:[#allocation4 + $0x20] sm:$0xff]
      %v6395 = vld [vmem:[#allocation4 + $0x28] sm:$0xff]
      %v6396 = vld [vmem:[#allocation4 + $0x30] sm:$0xff]
      %v6397 = vld [vmem:[#allocation4 + $0x38] sm:$0xff]
      %v6398 = vld [vmem:[#allocation4 + $0x40] sm:$0xff]
      %v6399 = vld [vmem:[#allocation4 + $0x48] sm:$0xff]
      %v6400 = vld [vmem:[#allocation4 + $0x50] sm:$0xff]
      %v6401 = vld [vmem:[#allocation4 + $0x58] sm:$0xff]
      %v6402 = vld [vmem:[#allocation4 + $0x60] sm:$0xff]
      %v6403 = vld [vmem:[#allocation4 + $0x68] sm:$0xff]
      %v6404 = vld [vmem:[#allocation4 + $0x70] sm:$0xff]
      %v6405 = vld [vmem:[#allocation4 + $0x78] sm:$0xff]
      %v6406 = vld [vmem:[#allocation4 + $0x80] sm:$0xff]
      %v6407 = vld [vmem:[#allocation4 + $0x88] sm:$0xff]
      %v6408 = vld [vmem:[#allocation4 + $0x90] sm:$0xff]
      %v6409 = vld [vmem:[#allocation4 + $0x98] sm:$0xff]
      %v6410 = vld [vmem:[#allocation4 + $0xa0] sm:$0xff]
      %v6411 = vld [vmem:[#allocation4 + $0xa8] sm:$0xff]
      %v6412 = vld [vmem:[#allocation4 + $0xb0] sm:$0xff]
      %v6413 = vld [vmem:[#allocation4 + $0xb8] sm:$0xf]
      %v6414 = vld [vmem:[#allocation3] sm:$0xff]
      %v6415 = vld [vmem:[#allocation3 + $0x8] sm:$0xff]
      %v6416 = vld [vmem:[#allocation3 + $0x10] sm:$0xff]
      %v6417 = vld [vmem:[#allocation3 + $0x18] sm:$0xff]
      %v6418 = vld [vmem:[#allocation3 + $0x20] sm:$0xff]
      %v6419 = vld [vmem:[#allocation3 + $0x28] sm:$0xff]
      %v6420 = vld [vmem:[#allocation3 + $0x30] sm:$0xff]
      %v6421 = vld [vmem:[#allocation3 + $0x38] sm:$0xff]
      %v6422 = vld [vmem:[#allocation3 + $0x40] sm:$0xff]
      %v6423 = vld [vmem:[#allocation3 + $0x48] sm:$0xff]
      %v6424 = vld [vmem:[#allocation3 + $0x50] sm:$0xff]
      %v6425 = vld [vmem:[#allocation3 + $0x58] sm:$0x7f]
      %s6426 = scalar_lea.vmem %s6, 64
      %v6427 = vld [vmem:[%s6426] sm:$0xf]
      %v6428 = vld [vmem:[%s6426 + $0x4] sm:$0xf]
      %v6429 = vld [vmem:[%s6426 + $0x8] sm:$0xf]
      %v6430 = vld [vmem:[%s6426 + $0xc] sm:$0xf]
      %v6431 = vld [vmem:[%s6426 + $0x10] sm:$0xf]
      %v6432 = vld [vmem:[%s6426 + $0x14] sm:$0xf]
      %v6433 = vld [vmem:[%s6426 + $0x18] sm:$0xf]
      %v6434 = vld [vmem:[%s6426 + $0x1c] sm:$0xf]
      %v6435 = vld [vmem:[%s6426 + $0x20] sm:$0xf]
      %v6436 = vld [vmem:[%s6426 + $0x24] sm:$0xf]
      %v6437 = vld [vmem:[%s6426 + $0x28] sm:$0xf]
      %v6438 = vld [vmem:[%s6426 + $0x2c] sm:$0xf]
      %v6439 = vld [vmem:[%s6426 + $0x30] sm:$0xf]
      %v6440 = vld [vmem:[%s6426 + $0x34] sm:$0xf]
      %v6441 = vld [vmem:[%s6426 + $0x38] sm:$0xf]
      %v6442 = vld [vmem:[%s6426 + $0x3c] sm:$0xf]
      %v6444 = vshrl.u32 %v6414, 16
      %v6446 = vshll.u32 %v6414, 16
      %v6448 = vrot.slane %v6446, 1
      %v6449 = vor.u32 %v6444, %v6448
      %v6451 = vshll.u32 %v6415, 16
      %v6453 = vrot.slane %v6451, 1
      %v6454 = vsel %vm1961, %v6449, %v6453
      %v6455 = vshrl.u32 %v6415, 16
      %v6457 = vor.u32 %v6455, %v6453
      %v6459 = vshll.u32 %v6416, 16
      %v6461 = vrot.slane %v6459, 1
      %v6462 = vsel %vm1961, %v6457, %v6461
      %v6463 = vshrl.u32 %v6416, 16
      %v6465 = vor.u32 %v6463, %v6461
      %v6467 = vshll.u32 %v6417, 16
      %v6469 = vrot.slane %v6467, 1
      %v6470 = vsel %vm1961, %v6465, %v6469
      %v6471 = vshrl.u32 %v6417, 16
      %v6473 = vor.u32 %v6471, %v6469
      %v6475 = vshll.u32 %v6418, 16
      %v6477 = vrot.slane %v6475, 1
      %v6478 = vsel %vm1961, %v6473, %v6477
      %v6479 = vshrl.u32 %v6418, 16
      %v6481 = vor.u32 %v6479, %v6477
      %v6483 = vshll.u32 %v6419, 16
      %v6485 = vrot.slane %v6483, 1
      %v6486 = vsel %vm1961, %v6481, %v6485
      %v6487 = vshrl.u32 %v6419, 16
      %v6489 = vor.u32 %v6487, %v6485
      %v6491 = vshll.u32 %v6420, 16
      %v6493 = vrot.slane %v6491, 1
      %v6494 = vsel %vm1961, %v6489, %v6493
      %v6495 = vshrl.u32 %v6420, 16
      %v6497 = vor.u32 %v6495, %v6493
      %v6499 = vshll.u32 %v6421, 16
      %v6501 = vrot.slane %v6499, 1
      %v6502 = vsel %vm1961, %v6497, %v6501
      %v6503 = vshrl.u32 %v6421, 16
      %v6505 = vor.u32 %v6503, %v6501
      %v6507 = vshll.u32 %v6422, 16
      %v6509 = vrot.slane %v6507, 1
      %v6510 = vsel %vm1961, %v6505, %v6509
      %v6511 = vshrl.u32 %v6422, 16
      %v6513 = vor.u32 %v6511, %v6509
      %v6515 = vshll.u32 %v6423, 16
      %v6517 = vrot.slane %v6515, 1
      %v6518 = vsel %vm1961, %v6513, %v6517
      %v6519 = vshrl.u32 %v6423, 16
      %v6521 = vor.u32 %v6519, %v6517
      %v6523 = vshll.u32 %v6424, 16
      %v6525 = vrot.slane %v6523, 1
      %v6526 = vsel %vm1961, %v6521, %v6525
      %v6527 = vshrl.u32 %v6424, 16
      %v6529 = vor.u32 %v6527, %v6525
      %v6531 = vshll.u32 %v6425, 16
      %v6533 = vrot.slane %v6531, 1
      %v6534 = vsel %vm1961, %v6529, %v6533
      %v6535 = vshrl.u32 %v6425, 16
      %v6537 = vor.u32 %v6535, %v6533
      %v6566 = vunpack.c.l.b16 %v6427
      %v6567 = vunpack.c.l.b16 %v6428
      %v6568 = vunpack.c.l.b16 %v6429
      %v6569 = vunpack.c.l.b16 %v6430
      %v6570 = vunpack.c.l.b16 %v6431
      %v6571 = vunpack.c.l.b16 %v6432
      %v6572 = vunpack.c.l.b16 %v6433
      %v6573 = vunpack.c.l.b16 %v6434
      %v6574 = vunpack.c.l.b16 %v6435
      %v6575 = vunpack.c.l.b16 %v6436
      %v6576 = vunpack.c.l.b16 %v6437
      %v6577 = vunpack.c.l.b16 %v6438
      %v6578 = vunpack.c.l.b16 %v6439
      %v6579 = vunpack.c.l.b16 %v6440
      %v6580 = vunpack.c.l.b16 %v6441
      %v6581 = vunpack.c.l.b16 %v6442
      %v6582 = vpack.c.b16 %v6567, %v6566
      %v6583 = vpack.c.b16 %v6569, %v6568
      %v6584 = vpack.c.b16 %v6571, %v6570
      %v6585 = vpack.c.b16 %v6573, %v6572
      %v6586 = vpack.c.b16 %v6575, %v6574
      %v6587 = vpack.c.b16 %v6577, %v6576
      %v6588 = vpack.c.b16 %v6579, %v6578
      %v6589 = vpack.c.b16 %v6581, %v6580
      %6598 = vmatprep.subr.bf16.mxu0 0
      %6599 = vmatpush1.bf16.msra.mxu0 %v6582
      %6600 = vmatprep.subr.bf16.mxu0 0
      %6601 = vmatpush1.bf16.msra.mxu0 %v6583
      %6602 = vmatprep.subr.bf16.mxu0 0
      %6603 = vmatpush1.bf16.msra.mxu0 %v6584
      %6604 = vmatprep.subr.bf16.mxu0 0
      %6605 = vmatpush1.bf16.msra.mxu0 %v6585
      %6606 = vmatprep.subr.bf16.mxu0 0
      %6607 = vmatpush1.bf16.msra.mxu0 %v6586
      %6608 = vmatprep.subr.bf16.mxu0 0
      %6609 = vmatpush1.bf16.msra.mxu0 %v6587
      %6610 = vmatprep.subr.bf16.mxu0 0
      %6611 = vmatpush1.bf16.msra.mxu0 %v6588
      %6612 = vmatprep.subr.bf16.mxu0 0
      %6613 = vmatpush1.bf16.msra.mxu0 %v6589
      %6614 = vmatprep.subr.bf16.mxu0 0
      %6615 = vmatpush1.bf16.msra.mxu0 0
      %6616 = vmatprep.subr.bf16.mxu0 0
      %6617 = vmatpush1.bf16.msra.mxu0 0
      %6618 = vmatprep.subr.bf16.mxu0 0
      %6619 = vmatpush1.bf16.msra.mxu0 0
      %6620 = vmatprep.subr.bf16.mxu0 0
      %6621 = vmatpush1.bf16.msra.mxu0 0
      %6622 = vmatprep.subr.bf16.mxu0 0
      %6623 = vmatpush1.bf16.msra.mxu0 0
      %6624 = vmatprep.subr.bf16.mxu0 0
      %6625 = vmatpush1.bf16.msra.mxu0 0
      %6626 = vmatprep.subr.bf16.mxu0 0
      %6627 = vmatpush1.bf16.msra.mxu0 0
      %6628 = vmatprep.subr.bf16.mxu0 0
      %6629 = vmatpush1.bf16.msra.mxu0 0
      %6630 = vmatprep.mubr.bf16.mxu0 0
      %6631 = vmatmul.mubr.bf16.gmra.mrb[0].mxu0 %v6454
      %v6632 = vpop.f32.mrb[0].mxu0
      %v6633 = vadd.f32 0.0, %v6632
      %v6634 = vpop.f32.mrb[0].mxu0
      %v6635 = vpop.f32.mrb[0].mxu0
      %v6636 = vadd.f32 0.0, %v6635
      %v6637 = vpop.f32.mrb[0].mxu0
      %6638 = vmatprep.mubr.bf16.mxu0 0
      %6639 = vmatmul.mubr.bf16.gmra.mrb[0].mxu0 %v6462
      %v6640 = vpop.f32.mrb[0].mxu0
      %v6641 = vadd.f32 0.0, %v6640
      %v6642 = vpop.f32.mrb[0].mxu0
      %v6643 = vpop.f32.mrb[0].mxu0
      %v6644 = vadd.f32 0.0, %v6643
      %v6645 = vpop.f32.mrb[0].mxu0
      %6646 = vmatprep.mubr.bf16.mxu0 0
      %6647 = vmatmul.mubr.bf16.gmra.mrb[0].mxu0 %v6470
      %v6648 = vpop.f32.mrb[0].mxu0
      %v6649 = vadd.f32 0.0, %v6648
      %v6650 = vpop.f32.mrb[0].mxu0
      %v6651 = vpop.f32.mrb[0].mxu0
      %v6652 = vadd.f32 0.0, %v6651
      %v6653 = vpop.f32.mrb[0].mxu0
      %6654 = vmatprep.mubr.bf16.mxu0 0
      %6655 = vmatmul.mubr.bf16.gmra.mrb[0].mxu0 %v6478
      %v6656 = vpop.f32.mrb[0].mxu0
      %v6657 = vadd.f32 0.0, %v6656
      %v6658 = vpop.f32.mrb[0].mxu0
      %v6659 = vpop.f32.mrb[0].mxu0
      %v6660 = vadd.f32 0.0, %v6659
      %v6661 = vpop.f32.mrb[0].mxu0
      %6662 = vmatprep.mubr.bf16.mxu0 0
      %6663 = vmatmul.mubr.bf16.gmra.mrb[0].mxu0 %v6486
      %v6664 = vpop.f32.mrb[0].mxu0
      %v6665 = vadd.f32 0.0, %v6664
      %v6666 = vpop.f32.mrb[0].mxu0
      %v6667 = vpop.f32.mrb[0].mxu0
      %v6668 = vadd.f32 0.0, %v6667
      %v6669 = vpop.f32.mrb[0].mxu0
      %6670 = vmatprep.mubr.bf16.mxu0 0
      %6671 = vmatmul.mubr.bf16.gmra.mrb[0].mxu0 %v6494
      %v6672 = vpop.f32.mrb[0].mxu0
      %v6673 = vadd.f32 0.0, %v6672
      %v6674 = vpop.f32.mrb[0].mxu0
      %v6675 = vpop.f32.mrb[0].mxu0
      %v6676 = vadd.f32 0.0, %v6675
      %v6677 = vpop.f32.mrb[0].mxu0
      %6678 = vmatprep.mubr.bf16.mxu0 0
      %6679 = vmatmul.mubr.bf16.gmra.mrb[0].mxu0 %v6502
      %v6680 = vpop.f32.mrb[0].mxu0
      %v6681 = vadd.f32 0.0, %v6680
      %v6682 = vpop.f32.mrb[0].mxu0
      %v6683 = vpop.f32.mrb[0].mxu0
      %v6684 = vadd.f32 0.0, %v6683
      %v6685 = vpop.f32.mrb[0].mxu0
      %6686 = vmatprep.mubr.bf16.mxu0 0
      %6687 = vmatmul.mubr.bf16.gmra.mrb[0].mxu0 %v6510
      %v6688 = vpop.f32.mrb[0].mxu0
      %v6689 = vadd.f32 0.0, %v6688
      %v6690 = vpop.f32.mrb[0].mxu0
      %v6691 = vpop.f32.mrb[0].mxu0
      %v6692 = vadd.f32 0.0, %v6691
      %v6693 = vpop.f32.mrb[0].mxu0
      %6694 = vmatprep.mubr.bf16.mxu0 0
      %6695 = vmatmul.mubr.bf16.gmra.mrb[0].mxu0 %v6518
      %v6696 = vpop.f32.mrb[0].mxu0
      %v6697 = vadd.f32 0.0, %v6696
      %v6698 = vpop.f32.mrb[0].mxu0
      %v6699 = vpop.f32.mrb[0].mxu0
      %v6700 = vadd.f32 0.0, %v6699
      %v6701 = vpop.f32.mrb[0].mxu0
      %6702 = vmatprep.mubr.bf16.mxu0 0
      %6703 = vmatmul.mubr.bf16.gmra.mrb[0].mxu0 %v6526
      %v6704 = vpop.f32.mrb[0].mxu0
      %v6705 = vadd.f32 0.0, %v6704
      %v6706 = vpop.f32.mrb[0].mxu0
      %v6707 = vpop.f32.mrb[0].mxu0
      %v6708 = vadd.f32 0.0, %v6707
      %v6709 = vpop.f32.mrb[0].mxu0
      %6710 = vmatprep.mubr.bf16.mxu0 0
      %6711 = vmatmul.mubr.bf16.gmra.mrb[0].mxu0 %v6534
      %v6712 = vpop.f32.mrb[0].mxu0
      %v6713 = vadd.f32 0.0, %v6712
      %v6714 = vpop.f32.mrb[0].mxu0
      %v6715 = vpop.f32.mrb[0].mxu0
      %v6716 = vadd.f32 0.0, %v6715
      %v6717 = vpop.f32.mrb[0].mxu0
      %6718 = vmatprep.mubr.bf16.mxu0 0
      %6719 = vmatmul.mubr.bf16.gmra.mrb[0].mxu0 %v6537
      %v6720 = vpop.f32.mrb[0].mxu0
      %v6721 = vadd.f32 0.0, %v6720
      %v6722 = vpop.f32.mrb[0].mxu0
      %v6723 = vpop.f32.mrb[0].mxu0
      %v6724 = vadd.f32 0.0, %v6723
      %v6725 = vpop.f32.mrb[0].mxu0
      %6726 = vdwg.mxu0
      %v6727 = vadd.f32 %v6390, %v6633
      %v6728 = vadd.f32 %v6391, %v6636
      %v6729 = vadd.f32 %v6392, %v6641
      %v6730 = vadd.f32 %v6393, %v6644
      %v6731 = vadd.f32 %v6394, %v6649
      %v6732 = vadd.f32 %v6395, %v6652
      %v6733 = vadd.f32 %v6396, %v6657
      %v6734 = vadd.f32 %v6397, %v6660
      %v6735 = vadd.f32 %v6398, %v6665
      %v6736 = vadd.f32 %v6399, %v6668
      %v6737 = vadd.f32 %v6400, %v6673
      %v6738 = vadd.f32 %v6401, %v6676
      %v6739 = vadd.f32 %v6402, %v6681
      %v6740 = vadd.f32 %v6403, %v6684
      %v6741 = vadd.f32 %v6404, %v6689
      %v6742 = vadd.f32 %v6405, %v6692
      %v6743 = vadd.f32 %v6406, %v6697
      %v6744 = vadd.f32 %v6407, %v6700
      %v6745 = vadd.f32 %v6408, %v6705
      %v6746 = vadd.f32 %v6409, %v6708
      %v6747 = vadd.f32 %v6410, %v6713
      %v6748 = vadd.f32 %v6411, %v6716
      %v6749 = vadd.f32 %v6412, %v6721
      %v6750 = vadd.f32 %v6413, %v6724
      %6751 = vst [vmem:[#allocation4] sm:$0xff] %v6727
      %6752 = vst [vmem:[#allocation4 + $0x8] sm:$0xff] %v6728
      %6753 = vst [vmem:[#allocation4 + $0x10] sm:$0xff] %v6729
      %6754 = vst [vmem:[#allocation4 + $0x18] sm:$0xff] %v6730
      %6755 = vst [vmem:[#allocation4 + $0x20] sm:$0xff] %v6731
      %6756 = vst [vmem:[#allocation4 + $0x28] sm:$0xff] %v6732
      %6757 = vst [vmem:[#allocation4 + $0x30] sm:$0xff] %v6733
      %6758 = vst [vmem:[#allocation4 + $0x38] sm:$0xff] %v6734
      %6759 = vst [vmem:[#allocation4 + $0x40] sm:$0xff] %v6735
      %6760 = vst [vmem:[#allocation4 + $0x48] sm:$0xff] %v6736
      %6761 = vst [vmem:[#allocation4 + $0x50] sm:$0xff] %v6737
      %6762 = vst [vmem:[#allocation4 + $0x58] sm:$0xff] %v6738
      %6763 = vst [vmem:[#allocation4 + $0x60] sm:$0xff] %v6739
      %6764 = vst [vmem:[#allocation4 + $0x68] sm:$0xff] %v6740
      %6765 = vst [vmem:[#allocation4 + $0x70] sm:$0xff] %v6741
      %6766 = vst [vmem:[#allocation4 + $0x78] sm:$0xff] %v6742
      %6767 = vst [vmem:[#allocation4 + $0x80] sm:$0xff] %v6743
      %6768 = vst [vmem:[#allocation4 + $0x88] sm:$0xff] %v6744
      %6769 = vst [vmem:[#allocation4 + $0x90] sm:$0xff] %v6745
      %6770 = vst [vmem:[#allocation4 + $0x98] sm:$0xff] %v6746
      %6771 = vst [vmem:[#allocation4 + $0xa0] sm:$0xff] %v6747
      %6772 = vst [vmem:[#allocation4 + $0xa8] sm:$0xff] %v6748
      %6773 = vst [vmem:[#allocation4 + $0xb0] sm:$0xff] %v6749
      %6774 = vst [vmem:[#allocation4 + $0xb8] sm:$0xf] %v6750
      %v6775 = vld [vmem:[#allocation4] sm:$0xff]
      %v6776 = vld [vmem:[#allocation4 + $0x8] sm:$0xff]
      %v6777 = vld [vmem:[#allocation4 + $0x10] sm:$0xff]
      %v6778 = vld [vmem:[#allocation4 + $0x18] sm:$0xff]
      %v6779 = vld [vmem:[#allocation4 + $0x20] sm:$0xff]
      %v6780 = vld [vmem:[#allocation4 + $0x28] sm:$0xff]
      %v6781 = vld [vmem:[#allocation4 + $0x30] sm:$0xff]
      %v6782 = vld [vmem:[#allocation4 + $0x38] sm:$0xff]
      %v6783 = vld [vmem:[#allocation4 + $0x40] sm:$0xff]
      %v6784 = vld [vmem:[#allocation4 + $0x48] sm:$0xff]
      %v6785 = vld [vmem:[#allocation4 + $0x50] sm:$0xff]
      %v6786 = vld [vmem:[#allocation4 + $0x58] sm:$0xff]
      %v6787 = vld [vmem:[#allocation4 + $0x60] sm:$0xff]
      %v6788 = vld [vmem:[#allocation4 + $0x68] sm:$0xff]
      %v6789 = vld [vmem:[#allocation4 + $0x70] sm:$0xff]
      %v6790 = vld [vmem:[#allocation4 + $0x78] sm:$0xff]
      %v6791 = vld [vmem:[#allocation4 + $0x80] sm:$0xff]
      %v6792 = vld [vmem:[#allocation4 + $0x88] sm:$0xff]
      %v6793 = vld [vmem:[#allocation4 + $0x90] sm:$0xff]
      %v6794 = vld [vmem:[#allocation4 + $0x98] sm:$0xff]
      %v6795 = vld [vmem:[#allocation4 + $0xa0] sm:$0xff]
      %v6796 = vld [vmem:[#allocation4 + $0xa8] sm:$0xff]
      %v6797 = vld [vmem:[#allocation4 + $0xb0] sm:$0xff]
      %v6798 = vld [vmem:[#allocation4 + $0xb8] sm:$0xf]
      %v6799 = vld [vmem:[#allocation3] sm:$0xfe]
      %v6800 = vld [vmem:[#allocation3 + $0x8] sm:$0xff]
      %v6801 = vld [vmem:[#allocation3 + $0x10] sm:$0xff]
      %v6802 = vld [vmem:[#allocation3 + $0x18] sm:$0xff]
      %v6803 = vld [vmem:[#allocation3 + $0x20] sm:$0xff]
      %v6804 = vld [vmem:[#allocation3 + $0x28] sm:$0xff]
      %v6805 = vld [vmem:[#allocation3 + $0x30] sm:$0xff]
      %v6806 = vld [vmem:[#allocation3 + $0x38] sm:$0xff]
      %v6807 = vld [vmem:[#allocation3 + $0x40] sm:$0xff]
      %v6808 = vld [vmem:[#allocation3 + $0x48] sm:$0xff]
      %v6809 = vld [vmem:[#allocation3 + $0x50] sm:$0xff]
      %v6810 = vld [vmem:[#allocation3 + $0x58] sm:$0x7f]
      %s6811 = scalar_lea.vmem %s6, 128
      %v6812 = vld [vmem:[%s6811] sm:$0xf]
      %v6813 = vld [vmem:[%s6811 + $0x4] sm:$0xf]
      %v6814 = vld [vmem:[%s6811 + $0x8] sm:$0xf]
      %v6815 = vld [vmem:[%s6811 + $0xc] sm:$0xf]
      %v6816 = vld [vmem:[%s6811 + $0x10] sm:$0xf]
      %v6817 = vld [vmem:[%s6811 + $0x14] sm:$0xf]
      %v6818 = vld [vmem:[%s6811 + $0x18] sm:$0xf]
      %v6819 = vld [vmem:[%s6811 + $0x1c] sm:$0xf]
      %v6820 = vld [vmem:[%s6811 + $0x20] sm:$0xf]
      %v6821 = vld [vmem:[%s6811 + $0x24] sm:$0xf]
      %v6822 = vld [vmem:[%s6811 + $0x28] sm:$0xf]
      %v6823 = vld [vmem:[%s6811 + $0x2c] sm:$0xf]
      %v6824 = vld [vmem:[%s6811 + $0x30] sm:$0xf]
      %v6825 = vld [vmem:[%s6811 + $0x34] sm:$0xf]
      %v6826 = vld [vmem:[%s6811 + $0x38] sm:$0xf]
      %v6827 = vld [vmem:[%s6811 + $0x3c] sm:$0xf]
      %v6840 = vrot.slane %v6799, 1
      %v6841 = vrot.slane %v6800, 1
      %v6842 = vsel %vm2626, %v6840, %v6841
      %v6843 = vrot.slane %v6801, 1
      %v6844 = vsel %vm2626, %v6841, %v6843
      %v6845 = vrot.slane %v6802, 1
      %v6846 = vsel %vm2626, %v6843, %v6845
      %v6847 = vrot.slane %v6803, 1
      %v6848 = vsel %vm2626, %v6845, %v6847
      %v6849 = vrot.slane %v6804, 1
      %v6850 = vsel %vm2626, %v6847, %v6849
      %v6851 = vrot.slane %v6805, 1
      %v6852 = vsel %vm2626, %v6849, %v6851
      %v6853 = vrot.slane %v6806, 1
      %v6854 = vsel %vm2626, %v6851, %v6853
      %v6855 = vrot.slane %v6807, 1
      %v6856 = vsel %vm2626, %v6853, %v6855
      %v6857 = vrot.slane %v6808, 1
      %v6858 = vsel %vm2626, %v6855, %v6857
      %v6859 = vrot.slane %v6809, 1
      %v6860 = vsel %vm2626, %v6857, %v6859
      %v6861 = vrot.slane %v6810, 1
      %v6862 = vsel %vm2626, %v6859, %v6861
      %v6891 = vunpack.c.l.b16 %v6812
      %v6892 = vunpack.c.l.b16 %v6813
      %v6893 = vunpack.c.l.b16 %v6814
      %v6894 = vunpack.c.l.b16 %v6815
      %v6895 = vunpack.c.l.b16 %v6816
      %v6896 = vunpack.c.l.b16 %v6817
      %v6897 = vunpack.c.l.b16 %v6818
      %v6898 = vunpack.c.l.b16 %v6819
      %v6899 = vunpack.c.l.b16 %v6820
      %v6900 = vunpack.c.l.b16 %v6821
      %v6901 = vunpack.c.l.b16 %v6822
      %v6902 = vunpack.c.l.b16 %v6823
      %v6903 = vunpack.c.l.b16 %v6824
      %v6904 = vunpack.c.l.b16 %v6825
      %v6905 = vunpack.c.l.b16 %v6826
      %v6906 = vunpack.c.l.b16 %v6827
      %v6907 = vpack.c.b16 %v6892, %v6891
      %v6908 = vpack.c.b16 %v6894, %v6893
      %v6909 = vpack.c.b16 %v6896, %v6895
      %v6910 = vpack.c.b16 %v6898, %v6897
      %v6911 = vpack.c.b16 %v6900, %v6899
      %v6912 = vpack.c.b16 %v6902, %v6901
      %v6913 = vpack.c.b16 %v6904, %v6903
      %v6914 = vpack.c.b16 %v6906, %v6905
      %6923 = vmatprep.subr.bf16.mxu0 0
      %6924 = vmatpush1.bf16.msra.mxu0 %v6907
      %6925 = vmatprep.subr.bf16.mxu0 0
      %6926 = vmatpush1.bf16.msra.mxu0 %v6908
      %6927 = vmatprep.subr.bf16.mxu0 0
      %6928 = vmatpush1.bf16.msra.mxu0 %v6909
      %6929 = vmatprep.subr.bf16.mxu0 0
      %6930 = vmatpush1.bf16.msra.mxu0 %v6910
      %6931 = vmatprep.subr.bf16.mxu0 0
      %6932 = vmatpush1.bf16.msra.mxu0 %v6911
      %6933 = vmatprep.subr.bf16.mxu0 0
      %6934 = vmatpush1.bf16.msra.mxu0 %v6912
      %6935 = vmatprep.subr.bf16.mxu0 0
      %6936 = vmatpush1.bf16.msra.mxu0 %v6913
      %6937 = vmatprep.subr.bf16.mxu0 0
      %6938 = vmatpush1.bf16.msra.mxu0 %v6914
      %6939 = vmatprep.subr.bf16.mxu0 0
      %6940 = vmatpush1.bf16.msra.mxu0 0
      %6941 = vmatprep.subr.bf16.mxu0 0
      %6942 = vmatpush1.bf16.msra.mxu0 0
      %6943 = vmatprep.subr.bf16.mxu0 0
      %6944 = vmatpush1.bf16.msra.mxu0 0
      %6945 = vmatprep.subr.bf16.mxu0 0
      %6946 = vmatpush1.bf16.msra.mxu0 0
      %6947 = vmatprep.subr.bf16.mxu0 0
      %6948 = vmatpush1.bf16.msra.mxu0 0
      %6949 = vmatprep.subr.bf16.mxu0 0
      %6950 = vmatpush1.bf16.msra.mxu0 0
      %6951 = vmatprep.subr.bf16.mxu0 0
      %6952 = vmatpush1.bf16.msra.mxu0 0
      %6953 = vmatprep.subr.bf16.mxu0 0
      %6954 = vmatpush1.bf16.msra.mxu0 0
      %6955 = vmatprep.mubr.bf16.mxu0 0
      %6956 = vmatmul.mubr.bf16.gmra.mrb[0].mxu0 %v6842
      %v6957 = vpop.f32.mrb[0].mxu0
      %v6958 = vadd.f32 0.0, %v6957
      %v6959 = vpop.f32.mrb[0].mxu0
      %v6960 = vpop.f32.mrb[0].mxu0
      %v6961 = vadd.f32 0.0, %v6960
      %v6962 = vpop.f32.mrb[0].mxu0
      %6963 = vmatprep.mubr.bf16.mxu0 0
      %6964 = vmatmul.mubr.bf16.gmra.mrb[0].mxu0 %v6844
      %v6965 = vpop.f32.mrb[0].mxu0
      %v6966 = vadd.f32 0.0, %v6965
      %v6967 = vpop.f32.mrb[0].mxu0
      %v6968 = vpop.f32.mrb[0].mxu0
      %v6969 = vadd.f32 0.0, %v6968
      %v6970 = vpop.f32.mrb[0].mxu0
      %6971 = vmatprep.mubr.bf16.mxu0 0
      %6972 = vmatmul.mubr.bf16.gmra.mrb[0].mxu0 %v6846
      %v6973 = vpop.f32.mrb[0].mxu0
      %v6974 = vadd.f32 0.0, %v6973
      %v6975 = vpop.f32.mrb[0].mxu0
      %v6976 = vpop.f32.mrb[0].mxu0
      %v6977 = vadd.f32 0.0, %v6976
      %v6978 = vpop.f32.mrb[0].mxu0
      %6979 = vmatprep.mubr.bf16.mxu0 0
      %6980 = vmatmul.mubr.bf16.gmra.mrb[0].mxu0 %v6848
      %v6981 = vpop.f32.mrb[0].mxu0
      %v6982 = vadd.f32 0.0, %v6981
      %v6983 = vpop.f32.mrb[0].mxu0
      %v6984 = vpop.f32.mrb[0].mxu0
      %v6985 = vadd.f32 0.0, %v6984
      %v6986 = vpop.f32.mrb[0].mxu0
      %6987 = vmatprep.mubr.bf16.mxu0 0
      %6988 = vmatmul.mubr.bf16.gmra.mrb[0].mxu0 %v6850
      %v6989 = vpop.f32.mrb[0].mxu0
      %v6990 = vadd.f32 0.0, %v6989
      %v6991 = vpop.f32.mrb[0].mxu0
      %v6992 = vpop.f32.mrb[0].mxu0
      %v6993 = vadd.f32 0.0, %v6992
      %v6994 = vpop.f32.mrb[0].mxu0
      %6995 = vmatprep.mubr.bf16.mxu0 0
      %6996 = vmatmul.mubr.bf16.gmra.mrb[0].mxu0 %v6852
      %v6997 = vpop.f32.mrb[0].mxu0
      %v6998 = vadd.f32 0.0, %v6997
      %v6999 = vpop.f32.mrb[0].mxu0
      %v7000 = vpop.f32.mrb[0].mxu0
      %v7001 = vadd.f32 0.0, %v7000
      %v7002 = vpop.f32.mrb[0].mxu0
      %7003 = vmatprep.mubr.bf16.mxu0 0
      %7004 = vmatmul.mubr.bf16.gmra.mrb[0].mxu0 %v6854
      %v7005 = vpop.f32.mrb[0].mxu0
      %v7006 = vadd.f32 0.0, %v7005
      %v7007 = vpop.f32.mrb[0].mxu0
      %v7008 = vpop.f32.mrb[0].mxu0
      %v7009 = vadd.f32 0.0, %v7008
      %v7010 = vpop.f32.mrb[0].mxu0
      %7011 = vmatprep.mubr.bf16.mxu0 0
      %7012 = vmatmul.mubr.bf16.gmra.mrb[0].mxu0 %v6856
      %v7013 = vpop.f32.mrb[0].mxu0
      %v7014 = vadd.f32 0.0, %v7013
      %v7015 = vpop.f32.mrb[0].mxu0
      %v7016 = vpop.f32.mrb[0].mxu0
      %v7017 = vadd.f32 0.0, %v7016
      %v7018 = vpop.f32.mrb[0].mxu0
      %7019 = vmatprep.mubr.bf16.mxu0 0
      %7020 = vmatmul.mubr.bf16.gmra.mrb[0].mxu0 %v6858
      %v7021 = vpop.f32.mrb[0].mxu0
      %v7022 = vadd.f32 0.0, %v7021
      %v7023 = vpop.f32.mrb[0].mxu0
      %v7024 = vpop.f32.mrb[0].mxu0
      %v7025 = vadd.f32 0.0, %v7024
      %v7026 = vpop.f32.mrb[0].mxu0
      %7027 = vmatprep.mubr.bf16.mxu0 0
      %7028 = vmatmul.mubr.bf16.gmra.mrb[0].mxu0 %v6860
      %v7029 = vpop.f32.mrb[0].mxu0
      %v7030 = vadd.f32 0.0, %v7029
      %v7031 = vpop.f32.mrb[0].mxu0
      %v7032 = vpop.f32.mrb[0].mxu0
      %v7033 = vadd.f32 0.0, %v7032
      %v7034 = vpop.f32.mrb[0].mxu0
      %7035 = vmatprep.mubr.bf16.mxu0 0
      %7036 = vmatmul.mubr.bf16.gmra.mrb[0].mxu0 %v6862
      %v7037 = vpop.f32.mrb[0].mxu0
      %v7038 = vadd.f32 0.0, %v7037
      %v7039 = vpop.f32.mrb[0].mxu0
      %v7040 = vpop.f32.mrb[0].mxu0
      %v7041 = vadd.f32 0.0, %v7040
      %v7042 = vpop.f32.mrb[0].mxu0
      %7043 = vmatprep.mubr.bf16.mxu0 0
      %7044 = vmatmul.mubr.bf16.gmra.mrb[0].mxu0 %v6861
      %v7045 = vpop.f32.mrb[0].mxu0
      %v7046 = vadd.f32 0.0, %v7045
      %v7047 = vpop.f32.mrb[0].mxu0
      %v7048 = vpop.f32.mrb[0].mxu0
      %v7049 = vadd.f32 0.0, %v7048
      %v7050 = vpop.f32.mrb[0].mxu0
      %7051 = vdwg.mxu0
      %v7052 = vadd.f32 %v6775, %v6958
      %v7053 = vadd.f32 %v6776, %v6961
      %v7054 = vadd.f32 %v6777, %v6966
      %v7055 = vadd.f32 %v6778, %v6969
      %v7056 = vadd.f32 %v6779, %v6974
      %v7057 = vadd.f32 %v6780, %v6977
      %v7058 = vadd.f32 %v6781, %v6982
      %v7059 = vadd.f32 %v6782, %v6985
      %v7060 = vadd.f32 %v6783, %v6990
      %v7061 = vadd.f32 %v6784, %v6993
      %v7062 = vadd.f32 %v6785, %v6998
      %v7063 = vadd.f32 %v6786, %v7001
      %v7064 = vadd.f32 %v6787, %v7006
      %v7065 = vadd.f32 %v6788, %v7009
      %v7066 = vadd.f32 %v6789, %v7014
      %v7067 = vadd.f32 %v6790, %v7017
      %v7068 = vadd.f32 %v6791, %v7022
      %v7069 = vadd.f32 %v6792, %v7025
      %v7070 = vadd.f32 %v6793, %v7030
      %v7071 = vadd.f32 %v6794, %v7033
      %v7072 = vadd.f32 %v6795, %v7038
      %v7073 = vadd.f32 %v6796, %v7041
      %v7074 = vadd.f32 %v6797, %v7046
      %v7075 = vadd.f32 %v6798, %v7049
      %7076 = vst [vmem:[#allocation4] sm:$0xff] %v7052
      %7077 = vst [vmem:[#allocation4 + $0x8] sm:$0xff] %v7053
      %7078 = vst [vmem:[#allocation4 + $0x10] sm:$0xff] %v7054
      %7079 = vst [vmem:[#allocation4 + $0x18] sm:$0xff] %v7055
      %7080 = vst [vmem:[#allocation4 + $0x20] sm:$0xff] %v7056
      %7081 = vst [vmem:[#allocation4 + $0x28] sm:$0xff] %v7057
      %7082 = vst [vmem:[#allocation4 + $0x30] sm:$0xff] %v7058
      %7083 = vst [vmem:[#allocation4 + $0x38] sm:$0xff] %v7059
      %7084 = vst [vmem:[#allocation4 + $0x40] sm:$0xff] %v7060
      %7085 = vst [vmem:[#allocation4 + $0x48] sm:$0xff] %v7061
      %7086 = vst [vmem:[#allocation4 + $0x50] sm:$0xff] %v7062
      %7087 = vst [vmem:[#allocation4 + $0x58] sm:$0xff] %v7063
      %7088 = vst [vmem:[#allocation4 + $0x60] sm:$0xff] %v7064
      %7089 = vst [vmem:[#allocation4 + $0x68] sm:$0xff] %v7065
      %7090 = vst [vmem:[#allocation4 + $0x70] sm:$0xff] %v7066
      %7091 = vst [vmem:[#allocation4 + $0x78] sm:$0xff] %v7067
      %7092 = vst [vmem:[#allocation4 + $0x80] sm:$0xff] %v7068
      %7093 = vst [vmem:[#allocation4 + $0x88] sm:$0xff] %v7069
      %7094 = vst [vmem:[#allocation4 + $0x90] sm:$0xff] %v7070
      %7095 = vst [vmem:[#allocation4 + $0x98] sm:$0xff] %v7071
      %7096 = vst [vmem:[#allocation4 + $0xa0] sm:$0xff] %v7072
      %7097 = vst [vmem:[#allocation4 + $0xa8] sm:$0xff] %v7073
      %7098 = vst [vmem:[#allocation4 + $0xb0] sm:$0xff] %v7074
      %7099 = vst [vmem:[#allocation4 + $0xb8] sm:$0xf] %v7075
      %v7100 = vld [vmem:[#allocation4] sm:$0xff]
      %v7101 = vld [vmem:[#allocation4 + $0x8] sm:$0xff]
      %v7102 = vld [vmem:[#allocation4 + $0x10] sm:$0xff]
      %v7103 = vld [vmem:[#allocation4 + $0x18] sm:$0xff]
      %v7104 = vld [vmem:[#allocation4 + $0x20] sm:$0xff]
      %v7105 = vld [vmem:[#allocation4 + $0x28] sm:$0xff]
      %v7106 = vld [vmem:[#allocation4 + $0x30] sm:$0xff]
      %v7107 = vld [vmem:[#allocation4 + $0x38] sm:$0xff]
      %v7108 = vld [vmem:[#allocation4 + $0x40] sm:$0xff]
      %v7109 = vld [vmem:[#allocation4 + $0x48] sm:$0xff]
      %v7110 = vld [vmem:[#allocation4 + $0x50] sm:$0xff]
      %v7111 = vld [vmem:[#allocation4 + $0x58] sm:$0xff]
      %v7112 = vld [vmem:[#allocation4 + $0x60] sm:$0xff]
      %v7113 = vld [vmem:[#allocation4 + $0x68] sm:$0xff]
      %v7114 = vld [vmem:[#allocation4 + $0x70] sm:$0xff]
      %v7115 = vld [vmem:[#allocation4 + $0x78] sm:$0xff]
      %v7116 = vld [vmem:[#allocation4 + $0x80] sm:$0xff]
      %v7117 = vld [vmem:[#allocation4 + $0x88] sm:$0xff]
      %v7118 = vld [vmem:[#allocation4 + $0x90] sm:$0xff]
      %v7119 = vld [vmem:[#allocation4 + $0x98] sm:$0xff]
      %v7120 = vld [vmem:[#allocation4 + $0xa0] sm:$0xff]
      %v7121 = vld [vmem:[#allocation4 + $0xa8] sm:$0xff]
      %v7122 = vld [vmem:[#allocation4 + $0xb0] sm:$0xff]
      %v7123 = vld [vmem:[#allocation4 + $0xb8] sm:$0xf]
      %v7124 = vld [vmem:[#allocation3 + $0x8] sm:$0xff]
      %v7125 = vld [vmem:[#allocation3 + $0x10] sm:$0xff]
      %v7126 = vld [vmem:[#allocation3 + $0x18] sm:$0xff]
      %v7127 = vld [vmem:[#allocation3 + $0x20] sm:$0xff]
      %v7128 = vld [vmem:[#allocation3 + $0x28] sm:$0xff]
      %v7129 = vld [vmem:[#allocation3 + $0x30] sm:$0xff]
      %v7130 = vld [vmem:[#allocation3 + $0x38] sm:$0xff]
      %v7131 = vld [vmem:[#allocation3 + $0x40] sm:$0xff]
      %v7132 = vld [vmem:[#allocation3 + $0x48] sm:$0xff]
      %v7133 = vld [vmem:[#allocation3 + $0x50] sm:$0xff]
      %v7134 = vld [vmem:[#allocation3 + $0x58] sm:$0xff]
      %v7135 = vld [vmem:[#allocation3 + $0x60] sm:$0x3f]
      %s7136 = scalar_lea.vmem %s6, 192
      %v7137 = vld [vmem:[%s7136] sm:$0xf]
      %v7138 = vld [vmem:[%s7136 + $0x4] sm:$0xf]
      %v7139 = vld [vmem:[%s7136 + $0x8] sm:$0xf]
      %v7140 = vld [vmem:[%s7136 + $0xc] sm:$0xf]
      %v7141 = vld [vmem:[%s7136 + $0x10] sm:$0xf]
      %v7142 = vld [vmem:[%s7136 + $0x14] sm:$0xf]
      %v7143 = vld [vmem:[%s7136 + $0x18] sm:$0xf]
      %v7144 = vld [vmem:[%s7136 + $0x1c] sm:$0xf]
      %v7145 = vld [vmem:[%s7136 + $0x20] sm:$0xf]
      %v7146 = vld [vmem:[%s7136 + $0x24] sm:$0xf]
      %v7147 = vld [vmem:[%s7136 + $0x28] sm:$0xf]
      %v7148 = vld [vmem:[%s7136 + $0x2c] sm:$0xf]
      %v7149 = vld [vmem:[%s7136 + $0x30] sm:$0xf]
      %v7150 = vld [vmem:[%s7136 + $0x34] sm:$0xf]
      %v7151 = vld [vmem:[%s7136 + $0x38] sm:$0xf]
      %v7152 = vld [vmem:[%s7136 + $0x3c] sm:$0xf]
      %v7169 = vunpack.c.l.b16 %v7137
      %v7170 = vunpack.c.l.b16 %v7138
      %v7171 = vunpack.c.l.b16 %v7139
      %v7172 = vunpack.c.l.b16 %v7140
      %v7173 = vunpack.c.l.b16 %v7141
      %v7174 = vunpack.c.l.b16 %v7142
      %v7175 = vunpack.c.l.b16 %v7143
      %v7176 = vunpack.c.l.b16 %v7144
      %v7177 = vunpack.c.l.b16 %v7145
      %v7178 = vunpack.c.l.b16 %v7146
      %v7179 = vunpack.c.l.b16 %v7147
      %v7180 = vunpack.c.l.b16 %v7148
      %v7181 = vunpack.c.l.b16 %v7149
      %v7182 = vunpack.c.l.b16 %v7150
      %v7183 = vunpack.c.l.b16 %v7151
      %v7184 = vunpack.c.l.b16 %v7152
      %v7185 = vpack.c.b16 %v7170, %v7169
      %v7186 = vpack.c.b16 %v7172, %v7171
      %v7187 = vpack.c.b16 %v7174, %v7173
      %v7188 = vpack.c.b16 %v7176, %v7175
      %v7189 = vpack.c.b16 %v7178, %v7177
      %v7190 = vpack.c.b16 %v7180, %v7179
      %v7191 = vpack.c.b16 %v7182, %v7181
      %v7192 = vpack.c.b16 %v7184, %v7183
      %7201 = vmatprep.subr.bf16.mxu0 0
      %7202 = vmatpush1.bf16.msra.mxu0 %v7185
      %7203 = vmatprep.subr.bf16.mxu0 0
      %7204 = vmatpush1.bf16.msra.mxu0 %v7186
      %7205 = vmatprep.subr.bf16.mxu0 0
      %7206 = vmatpush1.bf16.msra.mxu0 %v7187
      %7207 = vmatprep.subr.bf16.mxu0 0
      %7208 = vmatpush1.bf16.msra.mxu0 %v7188
      %7209 = vmatprep.subr.bf16.mxu0 0
      %7210 = vmatpush1.bf16.msra.mxu0 %v7189
      %7211 = vmatprep.subr.bf16.mxu0 0
      %7212 = vmatpush1.bf16.msra.mxu0 %v7190
      %7213 = vmatprep.subr.bf16.mxu0 0
      %7214 = vmatpush1.bf16.msra.mxu0 %v7191
      %7215 = vmatprep.subr.bf16.mxu0 0
      %7216 = vmatpush1.bf16.msra.mxu0 %v7192
      %7217 = vmatprep.subr.bf16.mxu0 0
      %7218 = vmatpush1.bf16.msra.mxu0 0
      %7219 = vmatprep.subr.bf16.mxu0 0
      %7220 = vmatpush1.bf16.msra.mxu0 0
      %7221 = vmatprep.subr.bf16.mxu0 0
      %7222 = vmatpush1.bf16.msra.mxu0 0
      %7223 = vmatprep.subr.bf16.mxu0 0
      %7224 = vmatpush1.bf16.msra.mxu0 0
      %7225 = vmatprep.subr.bf16.mxu0 0
      %7226 = vmatpush1.bf16.msra.mxu0 0
      %7227 = vmatprep.subr.bf16.mxu0 0
      %7228 = vmatpush1.bf16.msra.mxu0 0
      %7229 = vmatprep.subr.bf16.mxu0 0
      %7230 = vmatpush1.bf16.msra.mxu0 0
      %7231 = vmatprep.subr.bf16.mxu0 0
      %7232 = vmatpush1.bf16.msra.mxu0 0
      %7233 = vmatprep.mubr.bf16.mxu0 0
      %7234 = vmatmul.mubr.bf16.gmra.mrb[0].mxu0 %v7124
      %v7235 = vpop.f32.mrb[0].mxu0
      %v7236 = vadd.f32 0.0, %v7235
      %v7237 = vpop.f32.mrb[0].mxu0
      %v7238 = vpop.f32.mrb[0].mxu0
      %v7239 = vadd.f32 0.0, %v7238
      %v7240 = vpop.f32.mrb[0].mxu0
      %7241 = vmatprep.mubr.bf16.mxu0 0
      %7242 = vmatmul.mubr.bf16.gmra.mrb[0].mxu0 %v7125
      %v7243 = vpop.f32.mrb[0].mxu0
      %v7244 = vadd.f32 0.0, %v7243
      %v7245 = vpop.f32.mrb[0].mxu0
      %v7246 = vpop.f32.mrb[0].mxu0
      %v7247 = vadd.f32 0.0, %v7246
      %v7248 = vpop.f32.mrb[0].mxu0
      %7249 = vmatprep.mubr.bf16.mxu0 0
      %7250 = vmatmul.mubr.bf16.gmra.mrb[0].mxu0 %v7126
      %v7251 = vpop.f32.mrb[0].mxu0
      %v7252 = vadd.f32 0.0, %v7251
      %v7253 = vpop.f32.mrb[0].mxu0
      %v7254 = vpop.f32.mrb[0].mxu0
      %v7255 = vadd.f32 0.0, %v7254
      %v7256 = vpop.f32.mrb[0].mxu0
      %7257 = vmatprep.mubr.bf16.mxu0 0
      %7258 = vmatmul.mubr.bf16.gmra.mrb[0].mxu0 %v7127
      %v7259 = vpop.f32.mrb[0].mxu0
      %v7260 = vadd.f32 0.0, %v7259
      %v7261 = vpop.f32.mrb[0].mxu0
      %v7262 = vpop.f32.mrb[0].mxu0
      %v7263 = vadd.f32 0.0, %v7262
      %v7264 = vpop.f32.mrb[0].mxu0
      %7265 = vmatprep.mubr.bf16.mxu0 0
      %7266 = vmatmul.mubr.bf16.gmra.mrb[0].mxu0 %v7128
      %v7267 = vpop.f32.mrb[0].mxu0
      %v7268 = vadd.f32 0.0, %v7267
      %v7269 = vpop.f32.mrb[0].mxu0
      %v7270 = vpop.f32.mrb[0].mxu0
      %v7271 = vadd.f32 0.0, %v7270
      %v7272 = vpop.f32.mrb[0].mxu0
      %7273 = vmatprep.mubr.bf16.mxu0 0
      %7274 = vmatmul.mubr.bf16.gmra.mrb[0].mxu0 %v7129
      %v7275 = vpop.f32.mrb[0].mxu0
      %v7276 = vadd.f32 0.0, %v7275
      %v7277 = vpop.f32.mrb[0].mxu0
      %v7278 = vpop.f32.mrb[0].mxu0
      %v7279 = vadd.f32 0.0, %v7278
      %v7280 = vpop.f32.mrb[0].mxu0
      %7281 = vmatprep.mubr.bf16.mxu0 0
      %7282 = vmatmul.mubr.bf16.gmra.mrb[0].mxu0 %v7130
      %v7283 = vpop.f32.mrb[0].mxu0
      %v7284 = vadd.f32 0.0, %v7283
      %v7285 = vpop.f32.mrb[0].mxu0
      %v7286 = vpop.f32.mrb[0].mxu0
      %v7287 = vadd.f32 0.0, %v7286
      %v7288 = vpop.f32.mrb[0].mxu0
      %7289 = vmatprep.mubr.bf16.mxu0 0
      %7290 = vmatmul.mubr.bf16.gmra.mrb[0].mxu0 %v7131
      %v7291 = vpop.f32.mrb[0].mxu0
      %v7292 = vadd.f32 0.0, %v7291
      %v7293 = vpop.f32.mrb[0].mxu0
      %v7294 = vpop.f32.mrb[0].mxu0
      %v7295 = vadd.f32 0.0, %v7294
      %v7296 = vpop.f32.mrb[0].mxu0
      %7297 = vmatprep.mubr.bf16.mxu0 0
      %7298 = vmatmul.mubr.bf16.gmra.mrb[0].mxu0 %v7132
      %v7299 = vpop.f32.mrb[0].mxu0
      %v7300 = vadd.f32 0.0, %v7299
      %v7301 = vpop.f32.mrb[0].mxu0
      %v7302 = vpop.f32.mrb[0].mxu0
      %v7303 = vadd.f32 0.0, %v7302
      %v7304 = vpop.f32.mrb[0].mxu0
      %7305 = vmatprep.mubr.bf16.mxu0 0
      %7306 = vmatmul.mubr.bf16.gmra.mrb[0].mxu0 %v7133
      %v7307 = vpop.f32.mrb[0].mxu0
      %v7308 = vadd.f32 0.0, %v7307
      %v7309 = vpop.f32.mrb[0].mxu0
      %v7310 = vpop.f32.mrb[0].mxu0
      %v7311 = vadd.f32 0.0, %v7310
      %v7312 = vpop.f32.mrb[0].mxu0
      %7313 = vmatprep.mubr.bf16.mxu0 0
      %7314 = vmatmul.mubr.bf16.gmra.mrb[0].mxu0 %v7134
      %v7315 = vpop.f32.mrb[0].mxu0
      %v7316 = vadd.f32 0.0, %v7315
      %v7317 = vpop.f32.mrb[0].mxu0
      %v7318 = vpop.f32.mrb[0].mxu0
      %v7319 = vadd.f32 0.0, %v7318
      %v7320 = vpop.f32.mrb[0].mxu0
      %7321 = vmatprep.mubr.bf16.mxu0 0
      %7322 = vmatmul.mubr.bf16.gmra.mrb[0].mxu0 %v7135
      %v7323 = vpop.f32.mrb[0].mxu0
      %v7324 = vadd.f32 0.0, %v7323
      %v7325 = vpop.f32.mrb[0].mxu0
      %v7326 = vpop.f32.mrb[0].mxu0
      %v7327 = vadd.f32 0.0, %v7326
      %v7328 = vpop.f32.mrb[0].mxu0
      %7329 = vdwg.mxu0
      %v7330 = vadd.f32 %v7100, %v7236
      %v7331 = vadd.f32 %v7101, %v7239
      %v7332 = vadd.f32 %v7102, %v7244
      %v7333 = vadd.f32 %v7103, %v7247
      %v7334 = vadd.f32 %v7104, %v7252
      %v7335 = vadd.f32 %v7105, %v7255
      %v7336 = vadd.f32 %v7106, %v7260
      %v7337 = vadd.f32 %v7107, %v7263
      %v7338 = vadd.f32 %v7108, %v7268
      %v7339 = vadd.f32 %v7109, %v7271
      %v7340 = vadd.f32 %v7110, %v7276
      %v7341 = vadd.f32 %v7111, %v7279
      %v7342 = vadd.f32 %v7112, %v7284
      %v7343 = vadd.f32 %v7113, %v7287
      %v7344 = vadd.f32 %v7114, %v7292
      %v7345 = vadd.f32 %v7115, %v7295
      %v7346 = vadd.f32 %v7116, %v7300
      %v7347 = vadd.f32 %v7117, %v7303
      %v7348 = vadd.f32 %v7118, %v7308
      %v7349 = vadd.f32 %v7119, %v7311
      %v7350 = vadd.f32 %v7120, %v7316
      %v7351 = vadd.f32 %v7121, %v7319
      %v7352 = vadd.f32 %v7122, %v7324
      %v7353 = vadd.f32 %v7123, %v7327
      %7354 = vst [vmem:[#allocation4] sm:$0xff] %v7330
      %7355 = vst [vmem:[#allocation4 + $0x8] sm:$0xff] %v7331
      %7356 = vst [vmem:[#allocation4 + $0x10] sm:$0xff] %v7332
      %7357 = vst [vmem:[#allocation4 + $0x18] sm:$0xff] %v7333
      %7358 = vst [vmem:[#allocation4 + $0x20] sm:$0xff] %v7334
      %7359 = vst [vmem:[#allocation4 + $0x28] sm:$0xff] %v7335
      %7360 = vst [vmem:[#allocation4 + $0x30] sm:$0xff] %v7336
      %7361 = vst [vmem:[#allocation4 + $0x38] sm:$0xff] %v7337
      %7362 = vst [vmem:[#allocation4 + $0x40] sm:$0xff] %v7338
      %7363 = vst [vmem:[#allocation4 + $0x48] sm:$0xff] %v7339
      %7364 = vst [vmem:[#allocation4 + $0x50] sm:$0xff] %v7340
      %7365 = vst [vmem:[#allocation4 + $0x58] sm:$0xff] %v7341
      %7366 = vst [vmem:[#allocation4 + $0x60] sm:$0xff] %v7342
      %7367 = vst [vmem:[#allocation4 + $0x68] sm:$0xff] %v7343
      %7368 = vst [vmem:[#allocation4 + $0x70] sm:$0xff] %v7344
      %7369 = vst [vmem:[#allocation4 + $0x78] sm:$0xff] %v7345
      %7370 = vst [vmem:[#allocation4 + $0x80] sm:$0xff] %v7346
      %7371 = vst [vmem:[#allocation4 + $0x88] sm:$0xff] %v7347
      %7372 = vst [vmem:[#allocation4 + $0x90] sm:$0xff] %v7348
      %7373 = vst [vmem:[#allocation4 + $0x98] sm:$0xff] %v7349
      %7374 = vst [vmem:[#allocation4 + $0xa0] sm:$0xff] %v7350
      %7375 = vst [vmem:[#allocation4 + $0xa8] sm:$0xff] %v7351
      %7376 = vst [vmem:[#allocation4 + $0xb0] sm:$0xff] %v7352
      %7377 = vst [vmem:[#allocation4 + $0xb8] sm:$0xf] %v7353
      %v7378 = vld [vmem:[#allocation4] sm:$0xff]
      %v7379 = vld [vmem:[#allocation4 + $0x8] sm:$0xff]
      %v7380 = vld [vmem:[#allocation4 + $0x10] sm:$0xff]
      %v7381 = vld [vmem:[#allocation4 + $0x18] sm:$0xff]
      %v7382 = vld [vmem:[#allocation4 + $0x20] sm:$0xff]
      %v7383 = vld [vmem:[#allocation4 + $0x28] sm:$0xff]
      %v7384 = vld [vmem:[#allocation4 + $0x30] sm:$0xff]
      %v7385 = vld [vmem:[#allocation4 + $0x38] sm:$0xff]
      %v7386 = vld [vmem:[#allocation4 + $0x40] sm:$0xff]
      %v7387 = vld [vmem:[#allocation4 + $0x48] sm:$0xff]
      %v7388 = vld [vmem:[#allocation4 + $0x50] sm:$0xff]
      %v7389 = vld [vmem:[#allocation4 + $0x58] sm:$0xff]
      %v7390 = vld [vmem:[#allocation4 + $0x60] sm:$0xff]
      %v7391 = vld [vmem:[#allocation4 + $0x68] sm:$0xff]
      %v7392 = vld [vmem:[#allocation4 + $0x70] sm:$0xff]
      %v7393 = vld [vmem:[#allocation4 + $0x78] sm:$0xff]
      %v7394 = vld [vmem:[#allocation4 + $0x80] sm:$0xff]
      %v7395 = vld [vmem:[#allocation4 + $0x88] sm:$0xff]
      %v7396 = vld [vmem:[#allocation4 + $0x90] sm:$0xff]
      %v7397 = vld [vmem:[#allocation4 + $0x98] sm:$0xff]
      %v7398 = vld [vmem:[#allocation4 + $0xa0] sm:$0xff]
      %v7399 = vld [vmem:[#allocation4 + $0xa8] sm:$0xff]
      %v7400 = vld [vmem:[#allocation4 + $0xb0] sm:$0xff]
      %v7401 = vld [vmem:[#allocation4 + $0xb8] sm:$0xf]
      %v7402 = vld [vmem:[#allocation3 + $0x8] sm:$0xff]
      %v7403 = vld [vmem:[#allocation3 + $0x10] sm:$0xff]
      %v7404 = vld [vmem:[#allocation3 + $0x18] sm:$0xff]
      %v7405 = vld [vmem:[#allocation3 + $0x20] sm:$0xff]
      %v7406 = vld [vmem:[#allocation3 + $0x28] sm:$0xff]
      %v7407 = vld [vmem:[#allocation3 + $0x30] sm:$0xff]
      %v7408 = vld [vmem:[#allocation3 + $0x38] sm:$0xff]
      %v7409 = vld [vmem:[#allocation3 + $0x40] sm:$0xff]
      %v7410 = vld [vmem:[#allocation3 + $0x48] sm:$0xff]
      %v7411 = vld [vmem:[#allocation3 + $0x50] sm:$0xff]
      %v7412 = vld [vmem:[#allocation3 + $0x58] sm:$0xff]
      %v7413 = vld [vmem:[#allocation3 + $0x60] sm:$0x7f]
      %s7414 = scalar_lea.vmem %s6, 256
      %v7415 = vld [vmem:[%s7414] sm:$0xf]
      %v7416 = vld [vmem:[%s7414 + $0x4] sm:$0xf]
      %v7417 = vld [vmem:[%s7414 + $0x8] sm:$0xf]
      %v7418 = vld [vmem:[%s7414 + $0xc] sm:$0xf]
      %v7419 = vld [vmem:[%s7414 + $0x10] sm:$0xf]
      %v7420 = vld [vmem:[%s7414 + $0x14] sm:$0xf]
      %v7421 = vld [vmem:[%s7414 + $0x18] sm:$0xf]
      %v7422 = vld [vmem:[%s7414 + $0x1c] sm:$0xf]
      %v7423 = vld [vmem:[%s7414 + $0x20] sm:$0xf]
      %v7424 = vld [vmem:[%s7414 + $0x24] sm:$0xf]
      %v7425 = vld [vmem:[%s7414 + $0x28] sm:$0xf]
      %v7426 = vld [vmem:[%s7414 + $0x2c] sm:$0xf]
      %v7427 = vld [vmem:[%s7414 + $0x30] sm:$0xf]
      %v7428 = vld [vmem:[%s7414 + $0x34] sm:$0xf]
      %v7429 = vld [vmem:[%s7414 + $0x38] sm:$0xf]
      %v7430 = vld [vmem:[%s7414 + $0x3c] sm:$0xf]
      %v7432 = vshrl.u32 %v7402, 16
      %v7434 = vshll.u32 %v7402, 16
      %v7436 = vrot.slane %v7434, 1
      %v7437 = vor.u32 %v7432, %v7436
      %v7439 = vshll.u32 %v7403, 16
      %v7441 = vrot.slane %v7439, 1
      %v7442 = vsel %vm1961, %v7437, %v7441
      %v7443 = vshrl.u32 %v7403, 16
      %v7445 = vor.u32 %v7443, %v7441
      %v7447 = vshll.u32 %v7404, 16
      %v7449 = vrot.slane %v7447, 1
      %v7450 = vsel %vm1961, %v7445, %v7449
      %v7451 = vshrl.u32 %v7404, 16
      %v7453 = vor.u32 %v7451, %v7449
      %v7455 = vshll.u32 %v7405, 16
      %v7457 = vrot.slane %v7455, 1
      %v7458 = vsel %vm1961, %v7453, %v7457
      %v7459 = vshrl.u32 %v7405, 16
      %v7461 = vor.u32 %v7459, %v7457
      %v7463 = vshll.u32 %v7406, 16
      %v7465 = vrot.slane %v7463, 1
      %v7466 = vsel %vm1961, %v7461, %v7465
      %v7467 = vshrl.u32 %v7406, 16
      %v7469 = vor.u32 %v7467, %v7465
      %v7471 = vshll.u32 %v7407, 16
      %v7473 = vrot.slane %v7471, 1
      %v7474 = vsel %vm1961, %v7469, %v7473
      %v7475 = vshrl.u32 %v7407, 16
      %v7477 = vor.u32 %v7475, %v7473
      %v7479 = vshll.u32 %v7408, 16
      %v7481 = vrot.slane %v7479, 1
      %v7482 = vsel %vm1961, %v7477, %v7481
      %v7483 = vshrl.u32 %v7408, 16
      %v7485 = vor.u32 %v7483, %v7481
      %v7487 = vshll.u32 %v7409, 16
      %v7489 = vrot.slane %v7487, 1
      %v7490 = vsel %vm1961, %v7485, %v7489
      %v7491 = vshrl.u32 %v7409, 16
      %v7493 = vor.u32 %v7491, %v7489
      %v7495 = vshll.u32 %v7410, 16
      %v7497 = vrot.slane %v7495, 1
      %v7498 = vsel %vm1961, %v7493, %v7497
      %v7499 = vshrl.u32 %v7410, 16
      %v7501 = vor.u32 %v7499, %v7497
      %v7503 = vshll.u32 %v7411, 16
      %v7505 = vrot.slane %v7503, 1
      %v7506 = vsel %vm1961, %v7501, %v7505
      %v7507 = vshrl.u32 %v7411, 16
      %v7509 = vor.u32 %v7507, %v7505
      %v7511 = vshll.u32 %v7412, 16
      %v7513 = vrot.slane %v7511, 1
      %v7514 = vsel %vm1961, %v7509, %v7513
      %v7515 = vshrl.u32 %v7412, 16
      %v7517 = vor.u32 %v7515, %v7513
      %v7519 = vshll.u32 %v7413, 16
      %v7521 = vrot.slane %v7519, 1
      %v7522 = vsel %vm1961, %v7517, %v7521
      %v7523 = vshrl.u32 %v7413, 16
      %v7525 = vor.u32 %v7523, %v7521
      %v7554 = vunpack.c.l.b16 %v7415
      %v7555 = vunpack.c.l.b16 %v7416
      %v7556 = vunpack.c.l.b16 %v7417
      %v7557 = vunpack.c.l.b16 %v7418
      %v7558 = vunpack.c.l.b16 %v7419
      %v7559 = vunpack.c.l.b16 %v7420
      %v7560 = vunpack.c.l.b16 %v7421
      %v7561 = vunpack.c.l.b16 %v7422
      %v7562 = vunpack.c.l.b16 %v7423
      %v7563 = vunpack.c.l.b16 %v7424
      %v7564 = vunpack.c.l.b16 %v7425
      %v7565 = vunpack.c.l.b16 %v7426
      %v7566 = vunpack.c.l.b16 %v7427
      %v7567 = vunpack.c.l.b16 %v7428
      %v7568 = vunpack.c.l.b16 %v7429
      %v7569 = vunpack.c.l.b16 %v7430
      %v7570 = vpack.c.b16 %v7555, %v7554
      %v7571 = vpack.c.b16 %v7557, %v7556
      %v7572 = vpack.c.b16 %v7559, %v7558
      %v7573 = vpack.c.b16 %v7561, %v7560
      %v7574 = vpack.c.b16 %v7563, %v7562
      %v7575 = vpack.c.b16 %v7565, %v7564
      %v7576 = vpack.c.b16 %v7567, %v7566
      %v7577 = vpack.c.b16 %v7569, %v7568
      %7586 = vmatprep.subr.bf16.mxu0 0
      %7587 = vmatpush1.bf16.msra.mxu0 %v7570
      %7588 = vmatprep.subr.bf16.mxu0 0
      %7589 = vmatpush1.bf16.msra.mxu0 %v7571
      %7590 = vmatprep.subr.bf16.mxu0 0
      %7591 = vmatpush1.bf16.msra.mxu0 %v7572
      %7592 = vmatprep.subr.bf16.mxu0 0
      %7593 = vmatpush1.bf16.msra.mxu0 %v7573
      %7594 = vmatprep.subr.bf16.mxu0 0
      %7595 = vmatpush1.bf16.msra.mxu0 %v7574
      %7596 = vmatprep.subr.bf16.mxu0 0
      %7597 = vmatpush1.bf16.msra.mxu0 %v7575
      %7598 = vmatprep.subr.bf16.mxu0 0
      %7599 = vmatpush1.bf16.msra.mxu0 %v7576
      %7600 = vmatprep.subr.bf16.mxu0 0
      %7601 = vmatpush1.bf16.msra.mxu0 %v7577
      %7602 = vmatprep.subr.bf16.mxu0 0
      %7603 = vmatpush1.bf16.msra.mxu0 0
      %7604 = vmatprep.subr.bf16.mxu0 0
      %7605 = vmatpush1.bf16.msra.mxu0 0
      %7606 = vmatprep.subr.bf16.mxu0 0
      %7607 = vmatpush1.bf16.msra.mxu0 0
      %7608 = vmatprep.subr.bf16.mxu0 0
      %7609 = vmatpush1.bf16.msra.mxu0 0
      %7610 = vmatprep.subr.bf16.mxu0 0
      %7611 = vmatpush1.bf16.msra.mxu0 0
      %7612 = vmatprep.subr.bf16.mxu0 0
      %7613 = vmatpush1.bf16.msra.mxu0 0
      %7614 = vmatprep.subr.bf16.mxu0 0
      %7615 = vmatpush1.bf16.msra.mxu0 0
      %7616 = vmatprep.subr.bf16.mxu0 0
      %7617 = vmatpush1.bf16.msra.mxu0 0
      %7618 = vmatprep.mubr.bf16.mxu0 0
      %7619 = vmatmul.mubr.bf16.gmra.mrb[0].mxu0 %v7442
      %v7620 = vpop.f32.mrb[0].mxu0
      %v7621 = vadd.f32 0.0, %v7620
      %v7622 = vpop.f32.mrb[0].mxu0
      %v7623 = vpop.f32.mrb[0].mxu0
      %v7624 = vadd.f32 0.0, %v7623
      %v7625 = vpop.f32.mrb[0].mxu0
      %7626 = vmatprep.mubr.bf16.mxu0 0
      %7627 = vmatmul.mubr.bf16.gmra.mrb[0].mxu0 %v7450
      %v7628 = vpop.f32.mrb[0].mxu0
      %v7629 = vadd.f32 0.0, %v7628
      %v7630 = vpop.f32.mrb[0].mxu0
      %v7631 = vpop.f32.mrb[0].mxu0
      %v7632 = vadd.f32 0.0, %v7631
      %v7633 = vpop.f32.mrb[0].mxu0
      %7634 = vmatprep.mubr.bf16.mxu0 0
      %7635 = vmatmul.mubr.bf16.gmra.mrb[0].mxu0 %v7458
      %v7636 = vpop.f32.mrb[0].mxu0
      %v7637 = vadd.f32 0.0, %v7636
      %v7638 = vpop.f32.mrb[0].mxu0
      %v7639 = vpop.f32.mrb[0].mxu0
      %v7640 = vadd.f32 0.0, %v7639
      %v7641 = vpop.f32.mrb[0].mxu0
      %7642 = vmatprep.mubr.bf16.mxu0 0
      %7643 = vmatmul.mubr.bf16.gmra.mrb[0].mxu0 %v7466
      %v7644 = vpop.f32.mrb[0].mxu0
      %v7645 = vadd.f32 0.0, %v7644
      %v7646 = vpop.f32.mrb[0].mxu0
      %v7647 = vpop.f32.mrb[0].mxu0
      %v7648 = vadd.f32 0.0, %v7647
      %v7649 = vpop.f32.mrb[0].mxu0
      %7650 = vmatprep.mubr.bf16.mxu0 0
      %7651 = vmatmul.mubr.bf16.gmra.mrb[0].mxu0 %v7474
      %v7652 = vpop.f32.mrb[0].mxu0
      %v7653 = vadd.f32 0.0, %v7652
      %v7654 = vpop.f32.mrb[0].mxu0
      %v7655 = vpop.f32.mrb[0].mxu0
      %v7656 = vadd.f32 0.0, %v7655
      %v7657 = vpop.f32.mrb[0].mxu0
      %7658 = vmatprep.mubr.bf16.mxu0 0
      %7659 = vmatmul.mubr.bf16.gmra.mrb[0].mxu0 %v7482
      %v7660 = vpop.f32.mrb[0].mxu0
      %v7661 = vadd.f32 0.0, %v7660
      %v7662 = vpop.f32.mrb[0].mxu0
      %v7663 = vpop.f32.mrb[0].mxu0
      %v7664 = vadd.f32 0.0, %v7663
      %v7665 = vpop.f32.mrb[0].mxu0
      %7666 = vmatprep.mubr.bf16.mxu0 0
      %7667 = vmatmul.mubr.bf16.gmra.mrb[0].mxu0 %v7490
      %v7668 = vpop.f32.mrb[0].mxu0
      %v7669 = vadd.f32 0.0, %v7668
      %v7670 = vpop.f32.mrb[0].mxu0
      %v7671 = vpop.f32.mrb[0].mxu0
      %v7672 = vadd.f32 0.0, %v7671
      %v7673 = vpop.f32.mrb[0].mxu0
      %7674 = vmatprep.mubr.bf16.mxu0 0
      %7675 = vmatmul.mubr.bf16.gmra.mrb[0].mxu0 %v7498
      %v7676 = vpop.f32.mrb[0].mxu0
      %v7677 = vadd.f32 0.0, %v7676
      %v7678 = vpop.f32.mrb[0].mxu0
      %v7679 = vpop.f32.mrb[0].mxu0
      %v7680 = vadd.f32 0.0, %v7679
      %v7681 = vpop.f32.mrb[0].mxu0
      %7682 = vmatprep.mubr.bf16.mxu0 0
      %7683 = vmatmul.mubr.bf16.gmra.mrb[0].mxu0 %v7506
      %v7684 = vpop.f32.mrb[0].mxu0
      %v7685 = vadd.f32 0.0, %v7684
      %v7686 = vpop.f32.mrb[0].mxu0
      %v7687 = vpop.f32.mrb[0].mxu0
      %v7688 = vadd.f32 0.0, %v7687
      %v7689 = vpop.f32.mrb[0].mxu0
      %7690 = vmatprep.mubr.bf16.mxu0 0
      %7691 = vmatmul.mubr.bf16.gmra.mrb[0].mxu0 %v7514
      %v7692 = vpop.f32.mrb[0].mxu0
      %v7693 = vadd.f32 0.0, %v7692
      %v7694 = vpop.f32.mrb[0].mxu0
      %v7695 = vpop.f32.mrb[0].mxu0
      %v7696 = vadd.f32 0.0, %v7695
      %v7697 = vpop.f32.mrb[0].mxu0
      %7698 = vmatprep.mubr.bf16.mxu0 0
      %7699 = vmatmul.mubr.bf16.gmra.mrb[0].mxu0 %v7522
      %v7700 = vpop.f32.mrb[0].mxu0
      %v7701 = vadd.f32 0.0, %v7700
      %v7702 = vpop.f32.mrb[0].mxu0
      %v7703 = vpop.f32.mrb[0].mxu0
      %v7704 = vadd.f32 0.0, %v7703
      %v7705 = vpop.f32.mrb[0].mxu0
      %7706 = vmatprep.mubr.bf16.mxu0 0
      %7707 = vmatmul.mubr.bf16.gmra.mrb[0].mxu0 %v7525
      %v7708 = vpop.f32.mrb[0].mxu0
      %v7709 = vadd.f32 0.0, %v7708
      %v7710 = vpop.f32.mrb[0].mxu0
      %v7711 = vpop.f32.mrb[0].mxu0
      %v7712 = vadd.f32 0.0, %v7711
      %v7713 = vpop.f32.mrb[0].mxu0
      %7714 = vdwg.mxu0
      %v7715 = vadd.f32 %v7378, %v7621
      %v7716 = vadd.f32 %v7379, %v7624
      %v7717 = vadd.f32 %v7380, %v7629
      %v7718 = vadd.f32 %v7381, %v7632
      %v7719 = vadd.f32 %v7382, %v7637
      %v7720 = vadd.f32 %v7383, %v7640
      %v7721 = vadd.f32 %v7384, %v7645
      %v7722 = vadd.f32 %v7385, %v7648
      %v7723 = vadd.f32 %v7386, %v7653
      %v7724 = vadd.f32 %v7387, %v7656
      %v7725 = vadd.f32 %v7388, %v7661
      %v7726 = vadd.f32 %v7389, %v7664
      %v7727 = vadd.f32 %v7390, %v7669
      %v7728 = vadd.f32 %v7391, %v7672
      %v7729 = vadd.f32 %v7392, %v7677
      %v7730 = vadd.f32 %v7393, %v7680
      %v7731 = vadd.f32 %v7394, %v7685
      %v7732 = vadd.f32 %v7395, %v7688
      %v7733 = vadd.f32 %v7396, %v7693
      %v7734 = vadd.f32 %v7397, %v7696
      %v7735 = vadd.f32 %v7398, %v7701
      %v7736 = vadd.f32 %v7399, %v7704
      %v7737 = vadd.f32 %v7400, %v7709
      %v7738 = vadd.f32 %v7401, %v7712
      %7739 = vst [vmem:[#allocation4] sm:$0xff] %v7715
      %7740 = vst [vmem:[#allocation4 + $0x8] sm:$0xff] %v7716
      %7741 = vst [vmem:[#allocation4 + $0x10] sm:$0xff] %v7717
      %7742 = vst [vmem:[#allocation4 + $0x18] sm:$0xff] %v7718
      %7743 = vst [vmem:[#allocation4 + $0x20] sm:$0xff] %v7719
      %7744 = vst [vmem:[#allocation4 + $0x28] sm:$0xff] %v7720
      %7745 = vst [vmem:[#allocation4 + $0x30] sm:$0xff] %v7721
      %7746 = vst [vmem:[#allocation4 + $0x38] sm:$0xff] %v7722
      %7747 = vst [vmem:[#allocation4 + $0x40] sm:$0xff] %v7723
      %7748 = vst [vmem:[#allocation4 + $0x48] sm:$0xff] %v7724
      %7749 = vst [vmem:[#allocation4 + $0x50] sm:$0xff] %v7725
      %7750 = vst [vmem:[#allocation4 + $0x58] sm:$0xff] %v7726
      %7751 = vst [vmem:[#allocation4 + $0x60] sm:$0xff] %v7727
      %7752 = vst [vmem:[#allocation4 + $0x68] sm:$0xff] %v7728
      %7753 = vst [vmem:[#allocation4 + $0x70] sm:$0xff] %v7729
      %7754 = vst [vmem:[#allocation4 + $0x78] sm:$0xff] %v7730
      %7755 = vst [vmem:[#allocation4 + $0x80] sm:$0xff] %v7731
      %7756 = vst [vmem:[#allocation4 + $0x88] sm:$0xff] %v7732
      %7757 = vst [vmem:[#allocation4 + $0x90] sm:$0xff] %v7733
      %7758 = vst [vmem:[#allocation4 + $0x98] sm:$0xff] %v7734
      %7759 = vst [vmem:[#allocation4 + $0xa0] sm:$0xff] %v7735
      %7760 = vst [vmem:[#allocation4 + $0xa8] sm:$0xff] %v7736
      %7761 = vst [vmem:[#allocation4 + $0xb0] sm:$0xff] %v7737
      %7762 = vst [vmem:[#allocation4 + $0xb8] sm:$0xf] %v7738
      %v7763 = vld [vmem:[#allocation4] sm:$0xff]
      %v7764 = vld [vmem:[#allocation4 + $0x8] sm:$0xff]
      %v7765 = vld [vmem:[#allocation4 + $0x10] sm:$0xff]
      %v7766 = vld [vmem:[#allocation4 + $0x18] sm:$0xff]
      %v7767 = vld [vmem:[#allocation4 + $0x20] sm:$0xff]
      %v7768 = vld [vmem:[#allocation4 + $0x28] sm:$0xff]
      %v7769 = vld [vmem:[#allocation4 + $0x30] sm:$0xff]
      %v7770 = vld [vmem:[#allocation4 + $0x38] sm:$0xff]
      %v7771 = vld [vmem:[#allocation4 + $0x40] sm:$0xff]
      %v7772 = vld [vmem:[#allocation4 + $0x48] sm:$0xff]
      %v7773 = vld [vmem:[#allocation4 + $0x50] sm:$0xff]
      %v7774 = vld [vmem:[#allocation4 + $0x58] sm:$0xff]
      %v7775 = vld [vmem:[#allocation4 + $0x60] sm:$0xff]
      %v7776 = vld [vmem:[#allocation4 + $0x68] sm:$0xff]
      %v7777 = vld [vmem:[#allocation4 + $0x70] sm:$0xff]
      %v7778 = vld [vmem:[#allocation4 + $0x78] sm:$0xff]
      %v7779 = vld [vmem:[#allocation4 + $0x80] sm:$0xff]
      %v7780 = vld [vmem:[#allocation4 + $0x88] sm:$0xff]
      %v7781 = vld [vmem:[#allocation4 + $0x90] sm:$0xff]
      %v7782 = vld [vmem:[#allocation4 + $0x98] sm:$0xff]
      %v7783 = vld [vmem:[#allocation4 + $0xa0] sm:$0xff]
      %v7784 = vld [vmem:[#allocation4 + $0xa8] sm:$0xff]
      %v7785 = vld [vmem:[#allocation4 + $0xb0] sm:$0xff]
      %v7786 = vld [vmem:[#allocation4 + $0xb8] sm:$0xf]
      %v7787 = vld [vmem:[#allocation3 + $0x8] sm:$0xfe]
      %v7788 = vld [vmem:[#allocation3 + $0x10] sm:$0xff]
      %v7789 = vld [vmem:[#allocation3 + $0x18] sm:$0xff]
      %v7790 = vld [vmem:[#allocation3 + $0x20] sm:$0xff]
      %v7791 = vld [vmem:[#allocation3 + $0x28] sm:$0xff]
      %v7792 = vld [vmem:[#allocation3 + $0x30] sm:$0xff]
      %v7793 = vld [vmem:[#allocation3 + $0x38] sm:$0xff]
      %v7794 = vld [vmem:[#allocation3 + $0x40] sm:$0xff]
      %v7795 = vld [vmem:[#allocation3 + $0x48] sm:$0xff]
      %v7796 = vld [vmem:[#allocation3 + $0x50] sm:$0xff]
      %v7797 = vld [vmem:[#allocation3 + $0x58] sm:$0xff]
      %v7798 = vld [vmem:[#allocation3 + $0x60] sm:$0x7f]
      %s7799 = scalar_lea.vmem %s6, 320
      %v7800 = vld [vmem:[%s7799] sm:$0xf]
      %v7801 = vld [vmem:[%s7799 + $0x4] sm:$0xf]
      %v7802 = vld [vmem:[%s7799 + $0x8] sm:$0xf]
      %v7803 = vld [vmem:[%s7799 + $0xc] sm:$0xf]
      %v7804 = vld [vmem:[%s7799 + $0x10] sm:$0xf]
      %v7805 = vld [vmem:[%s7799 + $0x14] sm:$0xf]
      %v7806 = vld [vmem:[%s7799 + $0x18] sm:$0xf]
      %v7807 = vld [vmem:[%s7799 + $0x1c] sm:$0xf]
      %v7808 = vld [vmem:[%s7799 + $0x20] sm:$0xf]
      %v7809 = vld [vmem:[%s7799 + $0x24] sm:$0xf]
      %v7810 = vld [vmem:[%s7799 + $0x28] sm:$0xf]
      %v7811 = vld [vmem:[%s7799 + $0x2c] sm:$0xf]
      %v7812 = vld [vmem:[%s7799 + $0x30] sm:$0xf]
      %v7813 = vld [vmem:[%s7799 + $0x34] sm:$0xf]
      %v7814 = vld [vmem:[%s7799 + $0x38] sm:$0xf]
      %v7815 = vld [vmem:[%s7799 + $0x3c] sm:$0xf]
      %v7828 = vrot.slane %v7787, 1
      %v7829 = vrot.slane %v7788, 1
      %v7830 = vsel %vm2626, %v7828, %v7829
      %v7831 = vrot.slane %v7789, 1
      %v7832 = vsel %vm2626, %v7829, %v7831
      %v7833 = vrot.slane %v7790, 1
      %v7834 = vsel %vm2626, %v7831, %v7833
      %v7835 = vrot.slane %v7791, 1
      %v7836 = vsel %vm2626, %v7833, %v7835
      %v7837 = vrot.slane %v7792, 1
      %v7838 = vsel %vm2626, %v7835, %v7837
      %v7839 = vrot.slane %v7793, 1
      %v7840 = vsel %vm2626, %v7837, %v7839
      %v7841 = vrot.slane %v7794, 1
      %v7842 = vsel %vm2626, %v7839, %v7841
      %v7843 = vrot.slane %v7795, 1
      %v7844 = vsel %vm2626, %v7841, %v7843
      %v7845 = vrot.slane %v7796, 1
      %v7846 = vsel %vm2626, %v7843, %v7845
      %v7847 = vrot.slane %v7797, 1
      %v7848 = vsel %vm2626, %v7845, %v7847
      %v7849 = vrot.slane %v7798, 1
      %v7850 = vsel %vm2626, %v7847, %v7849
      %v7879 = vunpack.c.l.b16 %v7800
      %v7880 = vunpack.c.l.b16 %v7801
      %v7881 = vunpack.c.l.b16 %v7802
      %v7882 = vunpack.c.l.b16 %v7803
      %v7883 = vunpack.c.l.b16 %v7804
      %v7884 = vunpack.c.l.b16 %v7805
      %v7885 = vunpack.c.l.b16 %v7806
      %v7886 = vunpack.c.l.b16 %v7807
      %v7887 = vunpack.c.l.b16 %v7808
      %v7888 = vunpack.c.l.b16 %v7809
      %v7889 = vunpack.c.l.b16 %v7810
      %v7890 = vunpack.c.l.b16 %v7811
      %v7891 = vunpack.c.l.b16 %v7812
      %v7892 = vunpack.c.l.b16 %v7813
      %v7893 = vunpack.c.l.b16 %v7814
      %v7894 = vunpack.c.l.b16 %v7815
      %v7895 = vpack.c.b16 %v7880, %v7879
      %v7896 = vpack.c.b16 %v7882, %v7881
      %v7897 = vpack.c.b16 %v7884, %v7883
      %v7898 = vpack.c.b16 %v7886, %v7885
      %v7899 = vpack.c.b16 %v7888, %v7887
      %v7900 = vpack.c.b16 %v7890, %v7889
      %v7901 = vpack.c.b16 %v7892, %v7891
      %v7902 = vpack.c.b16 %v7894, %v7893
      %7911 = vmatprep.subr.bf16.mxu0 0
      %7912 = vmatpush1.bf16.msra.mxu0 %v7895
      %7913 = vmatprep.subr.bf16.mxu0 0
      %7914 = vmatpush1.bf16.msra.mxu0 %v7896
      %7915 = vmatprep.subr.bf16.mxu0 0
      %7916 = vmatpush1.bf16.msra.mxu0 %v7897
      %7917 = vmatprep.subr.bf16.mxu0 0
      %7918 = vmatpush1.bf16.msra.mxu0 %v7898
      %7919 = vmatprep.subr.bf16.mxu0 0
      %7920 = vmatpush1.bf16.msra.mxu0 %v7899
      %7921 = vmatprep.subr.bf16.mxu0 0
      %7922 = vmatpush1.bf16.msra.mxu0 %v7900
      %7923 = vmatprep.subr.bf16.mxu0 0
      %7924 = vmatpush1.bf16.msra.mxu0 %v7901
      %7925 = vmatprep.subr.bf16.mxu0 0
      %7926 = vmatpush1.bf16.msra.mxu0 %v7902
      %7927 = vmatprep.subr.bf16.mxu0 0
      %7928 = vmatpush1.bf16.msra.mxu0 0
      %7929 = vmatprep.subr.bf16.mxu0 0
      %7930 = vmatpush1.bf16.msra.mxu0 0
      %7931 = vmatprep.subr.bf16.mxu0 0
      %7932 = vmatpush1.bf16.msra.mxu0 0
      %7933 = vmatprep.subr.bf16.mxu0 0
      %7934 = vmatpush1.bf16.msra.mxu0 0
      %7935 = vmatprep.subr.bf16.mxu0 0
      %7936 = vmatpush1.bf16.msra.mxu0 0
      %7937 = vmatprep.subr.bf16.mxu0 0
      %7938 = vmatpush1.bf16.msra.mxu0 0
      %7939 = vmatprep.subr.bf16.mxu0 0
      %7940 = vmatpush1.bf16.msra.mxu0 0
      %7941 = vmatprep.subr.bf16.mxu0 0
      %7942 = vmatpush1.bf16.msra.mxu0 0
      %7943 = vmatprep.mubr.bf16.mxu0 0
      %7944 = vmatmul.mubr.bf16.gmra.mrb[0].mxu0 %v7830
      %v7945 = vpop.f32.mrb[0].mxu0
      %v7946 = vadd.f32 0.0, %v7945
      %v7947 = vpop.f32.mrb[0].mxu0
      %v7948 = vpop.f32.mrb[0].mxu0
      %v7949 = vadd.f32 0.0, %v7948
      %v7950 = vpop.f32.mrb[0].mxu0
      %7951 = vmatprep.mubr.bf16.mxu0 0
      %7952 = vmatmul.mubr.bf16.gmra.mrb[0].mxu0 %v7832
      %v7953 = vpop.f32.mrb[0].mxu0
      %v7954 = vadd.f32 0.0, %v7953
      %v7955 = vpop.f32.mrb[0].mxu0
      %v7956 = vpop.f32.mrb[0].mxu0
      %v7957 = vadd.f32 0.0, %v7956
      %v7958 = vpop.f32.mrb[0].mxu0
      %7959 = vmatprep.mubr.bf16.mxu0 0
      %7960 = vmatmul.mubr.bf16.gmra.mrb[0].mxu0 %v7834
      %v7961 = vpop.f32.mrb[0].mxu0
      %v7962 = vadd.f32 0.0, %v7961
      %v7963 = vpop.f32.mrb[0].mxu0
      %v7964 = vpop.f32.mrb[0].mxu0
      %v7965 = vadd.f32 0.0, %v7964
      %v7966 = vpop.f32.mrb[0].mxu0
      %7967 = vmatprep.mubr.bf16.mxu0 0
      %7968 = vmatmul.mubr.bf16.gmra.mrb[0].mxu0 %v7836
      %v7969 = vpop.f32.mrb[0].mxu0
      %v7970 = vadd.f32 0.0, %v7969
      %v7971 = vpop.f32.mrb[0].mxu0
      %v7972 = vpop.f32.mrb[0].mxu0
      %v7973 = vadd.f32 0.0, %v7972
      %v7974 = vpop.f32.mrb[0].mxu0
      %7975 = vmatprep.mubr.bf16.mxu0 0
      %7976 = vmatmul.mubr.bf16.gmra.mrb[0].mxu0 %v7838
      %v7977 = vpop.f32.mrb[0].mxu0
      %v7978 = vadd.f32 0.0, %v7977
      %v7979 = vpop.f32.mrb[0].mxu0
      %v7980 = vpop.f32.mrb[0].mxu0
      %v7981 = vadd.f32 0.0, %v7980
      %v7982 = vpop.f32.mrb[0].mxu0
      %7983 = vmatprep.mubr.bf16.mxu0 0
      %7984 = vmatmul.mubr.bf16.gmra.mrb[0].mxu0 %v7840
      %v7985 = vpop.f32.mrb[0].mxu0
      %v7986 = vadd.f32 0.0, %v7985
      %v7987 = vpop.f32.mrb[0].mxu0
      %v7988 = vpop.f32.mrb[0].mxu0
      %v7989 = vadd.f32 0.0, %v7988
      %v7990 = vpop.f32.mrb[0].mxu0
      %7991 = vmatprep.mubr.bf16.mxu0 0
      %7992 = vmatmul.mubr.bf16.gmra.mrb[0].mxu0 %v7842
      %v7993 = vpop.f32.mrb[0].mxu0
      %v7994 = vadd.f32 0.0, %v7993
      %v7995 = vpop.f32.mrb[0].mxu0
      %v7996 = vpop.f32.mrb[0].mxu0
      %v7997 = vadd.f32 0.0, %v7996
      %v7998 = vpop.f32.mrb[0].mxu0
      %7999 = vmatprep.mubr.bf16.mxu0 0
      %8000 = vmatmul.mubr.bf16.gmra.mrb[0].mxu0 %v7844
      %v8001 = vpop.f32.mrb[0].mxu0
      %v8002 = vadd.f32 0.0, %v8001
      %v8003 = vpop.f32.mrb[0].mxu0
      %v8004 = vpop.f32.mrb[0].mxu0
      %v8005 = vadd.f32 0.0, %v8004
      %v8006 = vpop.f32.mrb[0].mxu0
      %8007 = vmatprep.mubr.bf16.mxu0 0
      %8008 = vmatmul.mubr.bf16.gmra.mrb[0].mxu0 %v7846
      %v8009 = vpop.f32.mrb[0].mxu0
      %v8010 = vadd.f32 0.0, %v8009
      %v8011 = vpop.f32.mrb[0].mxu0
      %v8012 = vpop.f32.mrb[0].mxu0
      %v8013 = vadd.f32 0.0, %v8012
      %v8014 = vpop.f32.mrb[0].mxu0
      %8015 = vmatprep.mubr.bf16.mxu0 0
      %8016 = vmatmul.mubr.bf16.gmra.mrb[0].mxu0 %v7848
      %v8017 = vpop.f32.mrb[0].mxu0
      %v8018 = vadd.f32 0.0, %v8017
      %v8019 = vpop.f32.mrb[0].mxu0
      %v8020 = vpop.f32.mrb[0].mxu0
      %v8021 = vadd.f32 0.0, %v8020
      %v8022 = vpop.f32.mrb[0].mxu0
      %8023 = vmatprep.mubr.bf16.mxu0 0
      %8024 = vmatmul.mubr.bf16.gmra.mrb[0].mxu0 %v7850
      %v8025 = vpop.f32.mrb[0].mxu0
      %v8026 = vadd.f32 0.0, %v8025
      %v8027 = vpop.f32.mrb[0].mxu0
      %v8028 = vpop.f32.mrb[0].mxu0
      %v8029 = vadd.f32 0.0, %v8028
      %v8030 = vpop.f32.mrb[0].mxu0
      %8031 = vmatprep.mubr.bf16.mxu0 0
      %8032 = vmatmul.mubr.bf16.gmra.mrb[0].mxu0 %v7849
      %v8033 = vpop.f32.mrb[0].mxu0
      %v8034 = vadd.f32 0.0, %v8033
      %v8035 = vpop.f32.mrb[0].mxu0
      %v8036 = vpop.f32.mrb[0].mxu0
      %v8037 = vadd.f32 0.0, %v8036
      %v8038 = vpop.f32.mrb[0].mxu0
      %8039 = vdwg.mxu0
      %v8040 = vadd.f32 %v7763, %v7946
      %v8041 = vadd.f32 %v7764, %v7949
      %v8042 = vadd.f32 %v7765, %v7954
      %v8043 = vadd.f32 %v7766, %v7957
      %v8044 = vadd.f32 %v7767, %v7962
      %v8045 = vadd.f32 %v7768, %v7965
      %v8046 = vadd.f32 %v7769, %v7970
      %v8047 = vadd.f32 %v7770, %v7973
      %v8048 = vadd.f32 %v7771, %v7978
      %v8049 = vadd.f32 %v7772, %v7981
      %v8050 = vadd.f32 %v7773, %v7986
      %v8051 = vadd.f32 %v7774, %v7989
      %v8052 = vadd.f32 %v7775, %v7994
      %v8053 = vadd.f32 %v7776, %v7997
      %v8054 = vadd.f32 %v7777, %v8002
      %v8055 = vadd.f32 %v7778, %v8005
      %v8056 = vadd.f32 %v7779, %v8010
      %v8057 = vadd.f32 %v7780, %v8013
      %v8058 = vadd.f32 %v7781, %v8018
      %v8059 = vadd.f32 %v7782, %v8021
      %v8060 = vadd.f32 %v7783, %v8026
      %v8061 = vadd.f32 %v7784, %v8029
      %v8062 = vadd.f32 %v7785, %v8034
      %v8063 = vadd.f32 %v7786, %v8037
      %8064 = vst [vmem:[#allocation4] sm:$0xff] %v8040
      %8065 = vst [vmem:[#allocation4 + $0x8] sm:$0xff] %v8041
      %8066 = vst [vmem:[#allocation4 + $0x10] sm:$0xff] %v8042
      %8067 = vst [vmem:[#allocation4 + $0x18] sm:$0xff] %v8043
      %8068 = vst [vmem:[#allocation4 + $0x20] sm:$0xff] %v8044
      %8069 = vst [vmem:[#allocation4 + $0x28] sm:$0xff] %v8045
      %8070 = vst [vmem:[#allocation4 + $0x30] sm:$0xff] %v8046
      %8071 = vst [vmem:[#allocation4 + $0x38] sm:$0xff] %v8047
      %8072 = vst [vmem:[#allocation4 + $0x40] sm:$0xff] %v8048
      %8073 = vst [vmem:[#allocation4 + $0x48] sm:$0xff] %v8049
      %8074 = vst [vmem:[#allocation4 + $0x50] sm:$0xff] %v8050
      %8075 = vst [vmem:[#allocation4 + $0x58] sm:$0xff] %v8051
      %8076 = vst [vmem:[#allocation4 + $0x60] sm:$0xff] %v8052
      %8077 = vst [vmem:[#allocation4 + $0x68] sm:$0xff] %v8053
      %8078 = vst [vmem:[#allocation4 + $0x70] sm:$0xff] %v8054
      %8079 = vst [vmem:[#allocation4 + $0x78] sm:$0xff] %v8055
      %8080 = vst [vmem:[#allocation4 + $0x80] sm:$0xff] %v8056
      %8081 = vst [vmem:[#allocation4 + $0x88] sm:$0xff] %v8057
      %8082 = vst [vmem:[#allocation4 + $0x90] sm:$0xff] %v8058
      %8083 = vst [vmem:[#allocation4 + $0x98] sm:$0xff] %v8059
      %8084 = vst [vmem:[#allocation4 + $0xa0] sm:$0xff] %v8060
      %8085 = vst [vmem:[#allocation4 + $0xa8] sm:$0xff] %v8061
      %8086 = vst [vmem:[#allocation4 + $0xb0] sm:$0xff] %v8062
      %8087 = vst [vmem:[#allocation4 + $0xb8] sm:$0xf] %v8063
      %v8088 = vld [vmem:[#allocation4] sm:$0xff]
      %v8089 = vld [vmem:[#allocation4 + $0x8] sm:$0xff]
      %v8090 = vld [vmem:[#allocation4 + $0x10] sm:$0xff]
      %v8091 = vld [vmem:[#allocation4 + $0x18] sm:$0xff]
      %v8092 = vld [vmem:[#allocation4 + $0x20] sm:$0xff]
      %v8093 = vld [vmem:[#allocation4 + $0x28] sm:$0xff]
      %v8094 = vld [vmem:[#allocation4 + $0x30] sm:$0xff]
      %v8095 = vld [vmem:[#allocation4 + $0x38] sm:$0xff]
      %v8096 = vld [vmem:[#allocation4 + $0x40] sm:$0xff]
      %v8097 = vld [vmem:[#allocation4 + $0x48] sm:$0xff]
      %v8098 = vld [vmem:[#allocation4 + $0x50] sm:$0xff]
      %v8099 = vld [vmem:[#allocation4 + $0x58] sm:$0xff]
      %v8100 = vld [vmem:[#allocation4 + $0x60] sm:$0xff]
      %v8101 = vld [vmem:[#allocation4 + $0x68] sm:$0xff]
      %v8102 = vld [vmem:[#allocation4 + $0x70] sm:$0xff]
      %v8103 = vld [vmem:[#allocation4 + $0x78] sm:$0xff]
      %v8104 = vld [vmem:[#allocation4 + $0x80] sm:$0xff]
      %v8105 = vld [vmem:[#allocation4 + $0x88] sm:$0xff]
      %v8106 = vld [vmem:[#allocation4 + $0x90] sm:$0xff]
      %v8107 = vld [vmem:[#allocation4 + $0x98] sm:$0xff]
      %v8108 = vld [vmem:[#allocation4 + $0xa0] sm:$0xff]
      %v8109 = vld [vmem:[#allocation4 + $0xa8] sm:$0xff]
      %v8110 = vld [vmem:[#allocation4 + $0xb0] sm:$0xff]
      %v8111 = vld [vmem:[#allocation4 + $0xb8] sm:$0xf]
      %v8112 = vld [vmem:[#allocation3 + $0x10] sm:$0xff]
      %v8113 = vld [vmem:[#allocation3 + $0x18] sm:$0xff]
      %v8114 = vld [vmem:[#allocation3 + $0x20] sm:$0xff]
      %v8115 = vld [vmem:[#allocation3 + $0x28] sm:$0xff]
      %v8116 = vld [vmem:[#allocation3 + $0x30] sm:$0xff]
      %v8117 = vld [vmem:[#allocation3 + $0x38] sm:$0xff]
      %v8118 = vld [vmem:[#allocation3 + $0x40] sm:$0xff]
      %v8119 = vld [vmem:[#allocation3 + $0x48] sm:$0xff]
      %v8120 = vld [vmem:[#allocation3 + $0x50] sm:$0xff]
      %v8121 = vld [vmem:[#allocation3 + $0x58] sm:$0xff]
      %v8122 = vld [vmem:[#allocation3 + $0x60] sm:$0xff]
      %v8123 = vld [vmem:[#allocation3 + $0x68] sm:$0x3f]
      %s8124 = scalar_lea.vmem %s6, 384
      %v8125 = vld [vmem:[%s8124] sm:$0xf]
      %v8126 = vld [vmem:[%s8124 + $0x4] sm:$0xf]
      %v8127 = vld [vmem:[%s8124 + $0x8] sm:$0xf]
      %v8128 = vld [vmem:[%s8124 + $0xc] sm:$0xf]
      %v8129 = vld [vmem:[%s8124 + $0x10] sm:$0xf]
      %v8130 = vld [vmem:[%s8124 + $0x14] sm:$0xf]
      %v8131 = vld [vmem:[%s8124 + $0x18] sm:$0xf]
      %v8132 = vld [vmem:[%s8124 + $0x1c] sm:$0xf]
      %v8133 = vld [vmem:[%s8124 + $0x20] sm:$0xf]
      %v8134 = vld [vmem:[%s8124 + $0x24] sm:$0xf]
      %v8135 = vld [vmem:[%s8124 + $0x28] sm:$0xf]
      %v8136 = vld [vmem:[%s8124 + $0x2c] sm:$0xf]
      %v8137 = vld [vmem:[%s8124 + $0x30] sm:$0xf]
      %v8138 = vld [vmem:[%s8124 + $0x34] sm:$0xf]
      %v8139 = vld [vmem:[%s8124 + $0x38] sm:$0xf]
      %v8140 = vld [vmem:[%s8124 + $0x3c] sm:$0xf]
      %v8157 = vunpack.c.l.b16 %v8125
      %v8158 = vunpack.c.l.b16 %v8126
      %v8159 = vunpack.c.l.b16 %v8127
      %v8160 = vunpack.c.l.b16 %v8128
      %v8161 = vunpack.c.l.b16 %v8129
      %v8162 = vunpack.c.l.b16 %v8130
      %v8163 = vunpack.c.l.b16 %v8131
      %v8164 = vunpack.c.l.b16 %v8132
      %v8165 = vunpack.c.l.b16 %v8133
      %v8166 = vunpack.c.l.b16 %v8134
      %v8167 = vunpack.c.l.b16 %v8135
      %v8168 = vunpack.c.l.b16 %v8136
      %v8169 = vunpack.c.l.b16 %v8137
      %v8170 = vunpack.c.l.b16 %v8138
      %v8171 = vunpack.c.l.b16 %v8139
      %v8172 = vunpack.c.l.b16 %v8140
      %v8173 = vpack.c.b16 %v8158, %v8157
      %v8174 = vpack.c.b16 %v8160, %v8159
      %v8175 = vpack.c.b16 %v8162, %v8161
      %v8176 = vpack.c.b16 %v8164, %v8163
      %v8177 = vpack.c.b16 %v8166, %v8165
      %v8178 = vpack.c.b16 %v8168, %v8167
      %v8179 = vpack.c.b16 %v8170, %v8169
      %v8180 = vpack.c.b16 %v8172, %v8171
      %8189 = vmatprep.subr.bf16.mxu0 0
      %8190 = vmatpush1.bf16.msra.mxu0 %v8173
      %8191 = vmatprep.subr.bf16.mxu0 0
      %8192 = vmatpush1.bf16.msra.mxu0 %v8174
      %8193 = vmatprep.subr.bf16.mxu0 0
      %8194 = vmatpush1.bf16.msra.mxu0 %v8175
      %8195 = vmatprep.subr.bf16.mxu0 0
      %8196 = vmatpush1.bf16.msra.mxu0 %v8176
      %8197 = vmatprep.subr.bf16.mxu0 0
      %8198 = vmatpush1.bf16.msra.mxu0 %v8177
      %8199 = vmatprep.subr.bf16.mxu0 0
      %8200 = vmatpush1.bf16.msra.mxu0 %v8178
      %8201 = vmatprep.subr.bf16.mxu0 0
      %8202 = vmatpush1.bf16.msra.mxu0 %v8179
      %8203 = vmatprep.subr.bf16.mxu0 0
      %8204 = vmatpush1.bf16.msra.mxu0 %v8180
      %8205 = vmatprep.subr.bf16.mxu0 0
      %8206 = vmatpush1.bf16.msra.mxu0 0
      %8207 = vmatprep.subr.bf16.mxu0 0
      %8208 = vmatpush1.bf16.msra.mxu0 0
      %8209 = vmatprep.subr.bf16.mxu0 0
      %8210 = vmatpush1.bf16.msra.mxu0 0
      %8211 = vmatprep.subr.bf16.mxu0 0
      %8212 = vmatpush1.bf16.msra.mxu0 0
      %8213 = vmatprep.subr.bf16.mxu0 0
      %8214 = vmatpush1.bf16.msra.mxu0 0
      %8215 = vmatprep.subr.bf16.mxu0 0
      %8216 = vmatpush1.bf16.msra.mxu0 0
      %8217 = vmatprep.subr.bf16.mxu0 0
      %8218 = vmatpush1.bf16.msra.mxu0 0
      %8219 = vmatprep.subr.bf16.mxu0 0
      %8220 = vmatpush1.bf16.msra.mxu0 0
      %8221 = vmatprep.mubr.bf16.mxu0 0
      %8222 = vmatmul.mubr.bf16.gmra.mrb[0].mxu0 %v8112
      %v8223 = vpop.f32.mrb[0].mxu0
      %v8224 = vadd.f32 0.0, %v8223
      %v8225 = vpop.f32.mrb[0].mxu0
      %v8226 = vpop.f32.mrb[0].mxu0
      %v8227 = vadd.f32 0.0, %v8226
      %v8228 = vpop.f32.mrb[0].mxu0
      %8229 = vmatprep.mubr.bf16.mxu0 0
      %8230 = vmatmul.mubr.bf16.gmra.mrb[0].mxu0 %v8113
      %v8231 = vpop.f32.mrb[0].mxu0
      %v8232 = vadd.f32 0.0, %v8231
      %v8233 = vpop.f32.mrb[0].mxu0
      %v8234 = vpop.f32.mrb[0].mxu0
      %v8235 = vadd.f32 0.0, %v8234
      %v8236 = vpop.f32.mrb[0].mxu0
      %8237 = vmatprep.mubr.bf16.mxu0 0
      %8238 = vmatmul.mubr.bf16.gmra.mrb[0].mxu0 %v8114
      %v8239 = vpop.f32.mrb[0].mxu0
      %v8240 = vadd.f32 0.0, %v8239
      %v8241 = vpop.f32.mrb[0].mxu0
      %v8242 = vpop.f32.mrb[0].mxu0
      %v8243 = vadd.f32 0.0, %v8242
      %v8244 = vpop.f32.mrb[0].mxu0
      %8245 = vmatprep.mubr.bf16.mxu0 0
      %8246 = vmatmul.mubr.bf16.gmra.mrb[0].mxu0 %v8115
      %v8247 = vpop.f32.mrb[0].mxu0
      %v8248 = vadd.f32 0.0, %v8247
      %v8249 = vpop.f32.mrb[0].mxu0
      %v8250 = vpop.f32.mrb[0].mxu0
      %v8251 = vadd.f32 0.0, %v8250
      %v8252 = vpop.f32.mrb[0].mxu0
      %8253 = vmatprep.mubr.bf16.mxu0 0
      %8254 = vmatmul.mubr.bf16.gmra.mrb[0].mxu0 %v8116
      %v8255 = vpop.f32.mrb[0].mxu0
      %v8256 = vadd.f32 0.0, %v8255
      %v8257 = vpop.f32.mrb[0].mxu0
      %v8258 = vpop.f32.mrb[0].mxu0
      %v8259 = vadd.f32 0.0, %v8258
      %v8260 = vpop.f32.mrb[0].mxu0
      %8261 = vmatprep.mubr.bf16.mxu0 0
      %8262 = vmatmul.mubr.bf16.gmra.mrb[0].mxu0 %v8117
      %v8263 = vpop.f32.mrb[0].mxu0
      %v8264 = vadd.f32 0.0, %v8263
      %v8265 = vpop.f32.mrb[0].mxu0
      %v8266 = vpop.f32.mrb[0].mxu0
      %v8267 = vadd.f32 0.0, %v8266
      %v8268 = vpop.f32.mrb[0].mxu0
      %8269 = vmatprep.mubr.bf16.mxu0 0
      %8270 = vmatmul.mubr.bf16.gmra.mrb[0].mxu0 %v8118
      %v8271 = vpop.f32.mrb[0].mxu0
      %v8272 = vadd.f32 0.0, %v8271
      %v8273 = vpop.f32.mrb[0].mxu0
      %v8274 = vpop.f32.mrb[0].mxu0
      %v8275 = vadd.f32 0.0, %v8274
      %v8276 = vpop.f32.mrb[0].mxu0
      %8277 = vmatprep.mubr.bf16.mxu0 0
      %8278 = vmatmul.mubr.bf16.gmra.mrb[0].mxu0 %v8119
      %v8279 = vpop.f32.mrb[0].mxu0
      %v8280 = vadd.f32 0.0, %v8279
      %v8281 = vpop.f32.mrb[0].mxu0
      %v8282 = vpop.f32.mrb[0].mxu0
      %v8283 = vadd.f32 0.0, %v8282
      %v8284 = vpop.f32.mrb[0].mxu0
      %8285 = vmatprep.mubr.bf16.mxu0 0
      %8286 = vmatmul.mubr.bf16.gmra.mrb[0].mxu0 %v8120
      %v8287 = vpop.f32.mrb[0].mxu0
      %v8288 = vadd.f32 0.0, %v8287
      %v8289 = vpop.f32.mrb[0].mxu0
      %v8290 = vpop.f32.mrb[0].mxu0
      %v8291 = vadd.f32 0.0, %v8290
      %v8292 = vpop.f32.mrb[0].mxu0
      %8293 = vmatprep.mubr.bf16.mxu0 0
      %8294 = vmatmul.mubr.bf16.gmra.mrb[0].mxu0 %v8121
      %v8295 = vpop.f32.mrb[0].mxu0
      %v8296 = vadd.f32 0.0, %v8295
      %v8297 = vpop.f32.mrb[0].mxu0
      %v8298 = vpop.f32.mrb[0].mxu0
      %v8299 = vadd.f32 0.0, %v8298
      %v8300 = vpop.f32.mrb[0].mxu0
      %8301 = vmatprep.mubr.bf16.mxu0 0
      %8302 = vmatmul.mubr.bf16.gmra.mrb[0].mxu0 %v8122
      %v8303 = vpop.f32.mrb[0].mxu0
      %v8304 = vadd.f32 0.0, %v8303
      %v8305 = vpop.f32.mrb[0].mxu0
      %v8306 = vpop.f32.mrb[0].mxu0
      %v8307 = vadd.f32 0.0, %v8306
      %v8308 = vpop.f32.mrb[0].mxu0
      %8309 = vmatprep.mubr.bf16.mxu0 0
      %8310 = vmatmul.mubr.bf16.gmra.mrb[0].mxu0 %v8123
      %v8311 = vpop.f32.mrb[0].mxu0
      %v8312 = vadd.f32 0.0, %v8311
      %v8313 = vpop.f32.mrb[0].mxu0
      %v8314 = vpop.f32.mrb[0].mxu0
      %v8315 = vadd.f32 0.0, %v8314
      %v8316 = vpop.f32.mrb[0].mxu0
      %8317 = vdwg.mxu0
      %v8318 = vadd.f32 %v8088, %v8224
      %v8319 = vadd.f32 %v8089, %v8227
      %v8320 = vadd.f32 %v8090, %v8232
      %v8321 = vadd.f32 %v8091, %v8235
      %v8322 = vadd.f32 %v8092, %v8240
      %v8323 = vadd.f32 %v8093, %v8243
      %v8324 = vadd.f32 %v8094, %v8248
      %v8325 = vadd.f32 %v8095, %v8251
      %v8326 = vadd.f32 %v8096, %v8256
      %v8327 = vadd.f32 %v8097, %v8259
      %v8328 = vadd.f32 %v8098, %v8264
      %v8329 = vadd.f32 %v8099, %v8267
      %v8330 = vadd.f32 %v8100, %v8272
      %v8331 = vadd.f32 %v8101, %v8275
      %v8332 = vadd.f32 %v8102, %v8280
      %v8333 = vadd.f32 %v8103, %v8283
      %v8334 = vadd.f32 %v8104, %v8288
      %v8335 = vadd.f32 %v8105, %v8291
      %v8336 = vadd.f32 %v8106, %v8296
      %v8337 = vadd.f32 %v8107, %v8299
      %v8338 = vadd.f32 %v8108, %v8304
      %v8339 = vadd.f32 %v8109, %v8307
      %v8340 = vadd.f32 %v8110, %v8312
      %v8341 = vadd.f32 %v8111, %v8315
      %8342 = vst [vmem:[#allocation4] sm:$0xff] %v8318
      %8343 = vst [vmem:[#allocation4 + $0x8] sm:$0xff] %v8319
      %8344 = vst [vmem:[#allocation4 + $0x10] sm:$0xff] %v8320
      %8345 = vst [vmem:[#allocation4 + $0x18] sm:$0xff] %v8321
      %8346 = vst [vmem:[#allocation4 + $0x20] sm:$0xff] %v8322
      %8347 = vst [vmem:[#allocation4 + $0x28] sm:$0xff] %v8323
      %8348 = vst [vmem:[#allocation4 + $0x30] sm:$0xff] %v8324
      %8349 = vst [vmem:[#allocation4 + $0x38] sm:$0xff] %v8325
      %8350 = vst [vmem:[#allocation4 + $0x40] sm:$0xff] %v8326
      %8351 = vst [vmem:[#allocation4 + $0x48] sm:$0xff] %v8327
      %8352 = vst [vmem:[#allocation4 + $0x50] sm:$0xff] %v8328
      %8353 = vst [vmem:[#allocation4 + $0x58] sm:$0xff] %v8329
      %8354 = vst [vmem:[#allocation4 + $0x60] sm:$0xff] %v8330
      %8355 = vst [vmem:[#allocation4 + $0x68] sm:$0xff] %v8331
      %8356 = vst [vmem:[#allocation4 + $0x70] sm:$0xff] %v8332
      %8357 = vst [vmem:[#allocation4 + $0x78] sm:$0xff] %v8333
      %8358 = vst [vmem:[#allocation4 + $0x80] sm:$0xff] %v8334
      %8359 = vst [vmem:[#allocation4 + $0x88] sm:$0xff] %v8335
      %8360 = vst [vmem:[#allocation4 + $0x90] sm:$0xff] %v8336
      %8361 = vst [vmem:[#allocation4 + $0x98] sm:$0xff] %v8337
      %8362 = vst [vmem:[#allocation4 + $0xa0] sm:$0xff] %v8338
      %8363 = vst [vmem:[#allocation4 + $0xa8] sm:$0xff] %v8339
      %8364 = vst [vmem:[#allocation4 + $0xb0] sm:$0xff] %v8340
      %8365 = vst [vmem:[#allocation4 + $0xb8] sm:$0xf] %v8341
      %v8366 = vld [vmem:[#allocation4] sm:$0xff]
      %v8367 = vld [vmem:[#allocation4 + $0x8] sm:$0xff]
      %v8368 = vld [vmem:[#allocation4 + $0x10] sm:$0xff]
      %v8369 = vld [vmem:[#allocation4 + $0x18] sm:$0xff]
      %v8370 = vld [vmem:[#allocation4 + $0x20] sm:$0xff]
      %v8371 = vld [vmem:[#allocation4 + $0x28] sm:$0xff]
      %v8372 = vld [vmem:[#allocation4 + $0x30] sm:$0xff]
      %v8373 = vld [vmem:[#allocation4 + $0x38] sm:$0xff]
      %v8374 = vld [vmem:[#allocation4 + $0x40] sm:$0xff]
      %v8375 = vld [vmem:[#allocation4 + $0x48] sm:$0xff]
      %v8376 = vld [vmem:[#allocation4 + $0x50] sm:$0xff]
      %v8377 = vld [vmem:[#allocation4 + $0x58] sm:$0xff]
      %v8378 = vld [vmem:[#allocation4 + $0x60] sm:$0xff]
      %v8379 = vld [vmem:[#allocation4 + $0x68] sm:$0xff]
      %v8380 = vld [vmem:[#allocation4 + $0x70] sm:$0xff]
      %v8381 = vld [vmem:[#allocation4 + $0x78] sm:$0xff]
      %v8382 = vld [vmem:[#allocation4 + $0x80] sm:$0xff]
      %v8383 = vld [vmem:[#allocation4 + $0x88] sm:$0xff]
      %v8384 = vld [vmem:[#allocation4 + $0x90] sm:$0xff]
      %v8385 = vld [vmem:[#allocation4 + $0x98] sm:$0xff]
      %v8386 = vld [vmem:[#allocation4 + $0xa0] sm:$0xff]
      %v8387 = vld [vmem:[#allocation4 + $0xa8] sm:$0xff]
      %v8388 = vld [vmem:[#allocation4 + $0xb0] sm:$0xff]
      %v8389 = vld [vmem:[#allocation4 + $0xb8] sm:$0xf]
      %v8390 = vld [vmem:[#allocation3 + $0x10] sm:$0xff]
      %v8391 = vld [vmem:[#allocation3 + $0x18] sm:$0xff]
      %v8392 = vld [vmem:[#allocation3 + $0x20] sm:$0xff]
      %v8393 = vld [vmem:[#allocation3 + $0x28] sm:$0xff]
      %v8394 = vld [vmem:[#allocation3 + $0x30] sm:$0xff]
      %v8395 = vld [vmem:[#allocation3 + $0x38] sm:$0xff]
      %v8396 = vld [vmem:[#allocation3 + $0x40] sm:$0xff]
      %v8397 = vld [vmem:[#allocation3 + $0x48] sm:$0xff]
      %v8398 = vld [vmem:[#allocation3 + $0x50] sm:$0xff]
      %v8399 = vld [vmem:[#allocation3 + $0x58] sm:$0xff]
      %v8400 = vld [vmem:[#allocation3 + $0x60] sm:$0xff]
      %v8401 = vld [vmem:[#allocation3 + $0x68] sm:$0x7f]
      %s8402 = scalar_lea.vmem %s6, 448
      %v8403 = vld [vmem:[%s8402] sm:$0xf]
      %v8404 = vld [vmem:[%s8402 + $0x4] sm:$0xf]
      %v8405 = vld [vmem:[%s8402 + $0x8] sm:$0xf]
      %v8406 = vld [vmem:[%s8402 + $0xc] sm:$0xf]
      %v8407 = vld [vmem:[%s8402 + $0x10] sm:$0xf]
      %v8408 = vld [vmem:[%s8402 + $0x14] sm:$0xf]
      %v8409 = vld [vmem:[%s8402 + $0x18] sm:$0xf]
      %v8410 = vld [vmem:[%s8402 + $0x1c] sm:$0xf]
      %v8411 = vld [vmem:[%s8402 + $0x20] sm:$0xf]
      %v8412 = vld [vmem:[%s8402 + $0x24] sm:$0xf]
      %v8413 = vld [vmem:[%s8402 + $0x28] sm:$0xf]
      %v8414 = vld [vmem:[%s8402 + $0x2c] sm:$0xf]
      %v8415 = vld [vmem:[%s8402 + $0x30] sm:$0xf]
      %v8416 = vld [vmem:[%s8402 + $0x34] sm:$0xf]
      %v8417 = vld [vmem:[%s8402 + $0x38] sm:$0xf]
      %v8418 = vld [vmem:[%s8402 + $0x3c] sm:$0xf]
      %v8420 = vshrl.u32 %v8390, 16
      %v8422 = vshll.u32 %v8390, 16
      %v8424 = vrot.slane %v8422, 1
      %v8425 = vor.u32 %v8420, %v8424
      %v8427 = vshll.u32 %v8391, 16
      %v8429 = vrot.slane %v8427, 1
      %v8430 = vsel %vm1961, %v8425, %v8429
      %v8431 = vshrl.u32 %v8391, 16
      %v8433 = vor.u32 %v8431, %v8429
      %v8435 = vshll.u32 %v8392, 16
      %v8437 = vrot.slane %v8435, 1
      %v8438 = vsel %vm1961, %v8433, %v8437
      %v8439 = vshrl.u32 %v8392, 16
      %v8441 = vor.u32 %v8439, %v8437
      %v8443 = vshll.u32 %v8393, 16
      %v8445 = vrot.slane %v8443, 1
      %v8446 = vsel %vm1961, %v8441, %v8445
      %v8447 = vshrl.u32 %v8393, 16
      %v8449 = vor.u32 %v8447, %v8445
      %v8451 = vshll.u32 %v8394, 16
      %v8453 = vrot.slane %v8451, 1
      %v8454 = vsel %vm1961, %v8449, %v8453
      %v8455 = vshrl.u32 %v8394, 16
      %v8457 = vor.u32 %v8455, %v8453
      %v8459 = vshll.u32 %v8395, 16
      %v8461 = vrot.slane %v8459, 1
      %v8462 = vsel %vm1961, %v8457, %v8461
      %v8463 = vshrl.u32 %v8395, 16
      %v8465 = vor.u32 %v8463, %v8461
      %v8467 = vshll.u32 %v8396, 16
      %v8469 = vrot.slane %v8467, 1
      %v8470 = vsel %vm1961, %v8465, %v8469
      %v8471 = vshrl.u32 %v8396, 16
      %v8473 = vor.u32 %v8471, %v8469
      %v8475 = vshll.u32 %v8397, 16
      %v8477 = vrot.slane %v8475, 1
      %v8478 = vsel %vm1961, %v8473, %v8477
      %v8479 = vshrl.u32 %v8397, 16
      %v8481 = vor.u32 %v8479, %v8477
      %v8483 = vshll.u32 %v8398, 16
      %v8485 = vrot.slane %v8483, 1
      %v8486 = vsel %vm1961, %v8481, %v8485
      %v8487 = vshrl.u32 %v8398, 16
      %v8489 = vor.u32 %v8487, %v8485
      %v8491 = vshll.u32 %v8399, 16
      %v8493 = vrot.slane %v8491, 1
      %v8494 = vsel %vm1961, %v8489, %v8493
      %v8495 = vshrl.u32 %v8399, 16
      %v8497 = vor.u32 %v8495, %v8493
      %v8499 = vshll.u32 %v8400, 16
      %v8501 = vrot.slane %v8499, 1
      %v8502 = vsel %vm1961, %v8497, %v8501
      %v8503 = vshrl.u32 %v8400, 16
      %v8505 = vor.u32 %v8503, %v8501
      %v8507 = vshll.u32 %v8401, 16
      %v8509 = vrot.slane %v8507, 1
      %v8510 = vsel %vm1961, %v8505, %v8509
      %v8511 = vshrl.u32 %v8401, 16
      %v8513 = vor.u32 %v8511, %v8509
      %v8542 = vunpack.c.l.b16 %v8403
      %v8543 = vunpack.c.l.b16 %v8404
      %v8544 = vunpack.c.l.b16 %v8405
      %v8545 = vunpack.c.l.b16 %v8406
      %v8546 = vunpack.c.l.b16 %v8407
      %v8547 = vunpack.c.l.b16 %v8408
      %v8548 = vunpack.c.l.b16 %v8409
      %v8549 = vunpack.c.l.b16 %v8410
      %v8550 = vunpack.c.l.b16 %v8411
      %v8551 = vunpack.c.l.b16 %v8412
      %v8552 = vunpack.c.l.b16 %v8413
      %v8553 = vunpack.c.l.b16 %v8414
      %v8554 = vunpack.c.l.b16 %v8415
      %v8555 = vunpack.c.l.b16 %v8416
      %v8556 = vunpack.c.l.b16 %v8417
      %v8557 = vunpack.c.l.b16 %v8418
      %v8558 = vpack.c.b16 %v8543, %v8542
      %v8559 = vpack.c.b16 %v8545, %v8544
      %v8560 = vpack.c.b16 %v8547, %v8546
      %v8561 = vpack.c.b16 %v8549, %v8548
      %v8562 = vpack.c.b16 %v8551, %v8550
      %v8563 = vpack.c.b16 %v8553, %v8552
      %v8564 = vpack.c.b16 %v8555, %v8554
      %v8565 = vpack.c.b16 %v8557, %v8556
      %8574 = vmatprep.subr.bf16.mxu0 0
      %8575 = vmatpush1.bf16.msra.mxu0 %v8558
      %8576 = vmatprep.subr.bf16.mxu0 0
      %8577 = vmatpush1.bf16.msra.mxu0 %v8559
      %8578 = vmatprep.subr.bf16.mxu0 0
      %8579 = vmatpush1.bf16.msra.mxu0 %v8560
      %8580 = vmatprep.subr.bf16.mxu0 0
      %8581 = vmatpush1.bf16.msra.mxu0 %v8561
      %8582 = vmatprep.subr.bf16.mxu0 0
      %8583 = vmatpush1.bf16.msra.mxu0 %v8562
      %8584 = vmatprep.subr.bf16.mxu0 0
      %8585 = vmatpush1.bf16.msra.mxu0 %v8563
      %8586 = vmatprep.subr.bf16.mxu0 0
      %8587 = vmatpush1.bf16.msra.mxu0 %v8564
      %8588 = vmatprep.subr.bf16.mxu0 0
      %8589 = vmatpush1.bf16.msra.mxu0 %v8565
      %8590 = vmatprep.subr.bf16.mxu0 0
      %8591 = vmatpush1.bf16.msra.mxu0 0
      %8592 = vmatprep.subr.bf16.mxu0 0
      %8593 = vmatpush1.bf16.msra.mxu0 0
      %8594 = vmatprep.subr.bf16.mxu0 0
      %8595 = vmatpush1.bf16.msra.mxu0 0
      %8596 = vmatprep.subr.bf16.mxu0 0
      %8597 = vmatpush1.bf16.msra.mxu0 0
      %8598 = vmatprep.subr.bf16.mxu0 0
      %8599 = vmatpush1.bf16.msra.mxu0 0
      %8600 = vmatprep.subr.bf16.mxu0 0
      %8601 = vmatpush1.bf16.msra.mxu0 0
      %8602 = vmatprep.subr.bf16.mxu0 0
      %8603 = vmatpush1.bf16.msra.mxu0 0
      %8604 = vmatprep.subr.bf16.mxu0 0
      %8605 = vmatpush1.bf16.msra.mxu0 0
      %8606 = vmatprep.mubr.bf16.mxu0 0
      %8607 = vmatmul.mubr.bf16.gmra.mrb[0].mxu0 %v8430
      %v8608 = vpop.f32.mrb[0].mxu0
      %v8609 = vadd.f32 0.0, %v8608
      %v8610 = vpop.f32.mrb[0].mxu0
      %v8611 = vpop.f32.mrb[0].mxu0
      %v8612 = vadd.f32 0.0, %v8611
      %v8613 = vpop.f32.mrb[0].mxu0
      %8614 = vmatprep.mubr.bf16.mxu0 0
      %8615 = vmatmul.mubr.bf16.gmra.mrb[0].mxu0 %v8438
      %v8616 = vpop.f32.mrb[0].mxu0
      %v8617 = vadd.f32 0.0, %v8616
      %v8618 = vpop.f32.mrb[0].mxu0
      %v8619 = vpop.f32.mrb[0].mxu0
      %v8620 = vadd.f32 0.0, %v8619
      %v8621 = vpop.f32.mrb[0].mxu0
      %8622 = vmatprep.mubr.bf16.mxu0 0
      %8623 = vmatmul.mubr.bf16.gmra.mrb[0].mxu0 %v8446
      %v8624 = vpop.f32.mrb[0].mxu0
      %v8625 = vadd.f32 0.0, %v8624
      %v8626 = vpop.f32.mrb[0].mxu0
      %v8627 = vpop.f32.mrb[0].mxu0
      %v8628 = vadd.f32 0.0, %v8627
      %v8629 = vpop.f32.mrb[0].mxu0
      %8630 = vmatprep.mubr.bf16.mxu0 0
      %8631 = vmatmul.mubr.bf16.gmra.mrb[0].mxu0 %v8454
      %v8632 = vpop.f32.mrb[0].mxu0
      %v8633 = vadd.f32 0.0, %v8632
      %v8634 = vpop.f32.mrb[0].mxu0
      %v8635 = vpop.f32.mrb[0].mxu0
      %v8636 = vadd.f32 0.0, %v8635
      %v8637 = vpop.f32.mrb[0].mxu0
      %8638 = vmatprep.mubr.bf16.mxu0 0
      %8639 = vmatmul.mubr.bf16.gmra.mrb[0].mxu0 %v8462
      %v8640 = vpop.f32.mrb[0].mxu0
      %v8641 = vadd.f32 0.0, %v8640
      %v8642 = vpop.f32.mrb[0].mxu0
      %v8643 = vpop.f32.mrb[0].mxu0
      %v8644 = vadd.f32 0.0, %v8643
      %v8645 = vpop.f32.mrb[0].mxu0
      %8646 = vmatprep.mubr.bf16.mxu0 0
      %8647 = vmatmul.mubr.bf16.gmra.mrb[0].mxu0 %v8470
      %v8648 = vpop.f32.mrb[0].mxu0
      %v8649 = vadd.f32 0.0, %v8648
      %v8650 = vpop.f32.mrb[0].mxu0
      %v8651 = vpop.f32.mrb[0].mxu0
      %v8652 = vadd.f32 0.0, %v8651
      %v8653 = vpop.f32.mrb[0].mxu0
      %8654 = vmatprep.mubr.bf16.mxu0 0
      %8655 = vmatmul.mubr.bf16.gmra.mrb[0].mxu0 %v8478
      %v8656 = vpop.f32.mrb[0].mxu0
      %v8657 = vadd.f32 0.0, %v8656
      %v8658 = vpop.f32.mrb[0].mxu0
      %v8659 = vpop.f32.mrb[0].mxu0
      %v8660 = vadd.f32 0.0, %v8659
      %v8661 = vpop.f32.mrb[0].mxu0
      %8662 = vmatprep.mubr.bf16.mxu0 0
      %8663 = vmatmul.mubr.bf16.gmra.mrb[0].mxu0 %v8486
      %v8664 = vpop.f32.mrb[0].mxu0
      %v8665 = vadd.f32 0.0, %v8664
      %v8666 = vpop.f32.mrb[0].mxu0
      %v8667 = vpop.f32.mrb[0].mxu0
      %v8668 = vadd.f32 0.0, %v8667
      %v8669 = vpop.f32.mrb[0].mxu0
      %8670 = vmatprep.mubr.bf16.mxu0 0
      %8671 = vmatmul.mubr.bf16.gmra.mrb[0].mxu0 %v8494
      %v8672 = vpop.f32.mrb[0].mxu0
      %v8673 = vadd.f32 0.0, %v8672
      %v8674 = vpop.f32.mrb[0].mxu0
      %v8675 = vpop.f32.mrb[0].mxu0
      %v8676 = vadd.f32 0.0, %v8675
      %v8677 = vpop.f32.mrb[0].mxu0
      %8678 = vmatprep.mubr.bf16.mxu0 0
      %8679 = vmatmul.mubr.bf16.gmra.mrb[0].mxu0 %v8502
      %v8680 = vpop.f32.mrb[0].mxu0
      %v8681 = vadd.f32 0.0, %v8680
      %v8682 = vpop.f32.mrb[0].mxu0
      %v8683 = vpop.f32.mrb[0].mxu0
      %v8684 = vadd.f32 0.0, %v8683
      %v8685 = vpop.f32.mrb[0].mxu0
      %8686 = vmatprep.mubr.bf16.mxu0 0
      %8687 = vmatmul.mubr.bf16.gmra.mrb[0].mxu0 %v8510
      %v8688 = vpop.f32.mrb[0].mxu0
      %v8689 = vadd.f32 0.0, %v8688
      %v8690 = vpop.f32.mrb[0].mxu0
      %v8691 = vpop.f32.mrb[0].mxu0
      %v8692 = vadd.f32 0.0, %v8691
      %v8693 = vpop.f32.mrb[0].mxu0
      %8694 = vmatprep.mubr.bf16.mxu0 0
      %8695 = vmatmul.mubr.bf16.gmra.mrb[0].mxu0 %v8513
      %v8696 = vpop.f32.mrb[0].mxu0
      %v8697 = vadd.f32 0.0, %v8696
      %v8698 = vpop.f32.mrb[0].mxu0
      %v8699 = vpop.f32.mrb[0].mxu0
      %v8700 = vadd.f32 0.0, %v8699
      %v8701 = vpop.f32.mrb[0].mxu0
      %8702 = vdwg.mxu0
      %v8703 = vadd.f32 %v8366, %v8609
      %v8704 = vadd.f32 %v8367, %v8612
      %v8705 = vadd.f32 %v8368, %v8617
      %v8706 = vadd.f32 %v8369, %v8620
      %v8707 = vadd.f32 %v8370, %v8625
      %v8708 = vadd.f32 %v8371, %v8628
      %v8709 = vadd.f32 %v8372, %v8633
      %v8710 = vadd.f32 %v8373, %v8636
      %v8711 = vadd.f32 %v8374, %v8641
      %v8712 = vadd.f32 %v8375, %v8644
      %v8713 = vadd.f32 %v8376, %v8649
      %v8714 = vadd.f32 %v8377, %v8652
      %v8715 = vadd.f32 %v8378, %v8657
      %v8716 = vadd.f32 %v8379, %v8660
      %v8717 = vadd.f32 %v8380, %v8665
      %v8718 = vadd.f32 %v8381, %v8668
      %v8719 = vadd.f32 %v8382, %v8673
      %v8720 = vadd.f32 %v8383, %v8676
      %v8721 = vadd.f32 %v8384, %v8681
      %v8722 = vadd.f32 %v8385, %v8684
      %v8723 = vadd.f32 %v8386, %v8689
      %v8724 = vadd.f32 %v8387, %v8692
      %v8725 = vadd.f32 %v8388, %v8697
      %v8726 = vadd.f32 %v8389, %v8700
      %8727 = vst [vmem:[#allocation4] sm:$0xff] %v8703
      %8728 = vst [vmem:[#allocation4 + $0x8] sm:$0xff] %v8704
      %8729 = vst [vmem:[#allocation4 + $0x10] sm:$0xff] %v8705
      %8730 = vst [vmem:[#allocation4 + $0x18] sm:$0xff] %v8706
      %8731 = vst [vmem:[#allocation4 + $0x20] sm:$0xff] %v8707
      %8732 = vst [vmem:[#allocation4 + $0x28] sm:$0xff] %v8708
      %8733 = vst [vmem:[#allocation4 + $0x30] sm:$0xff] %v8709
      %8734 = vst [vmem:[#allocation4 + $0x38] sm:$0xff] %v8710
      %8735 = vst [vmem:[#allocation4 + $0x40] sm:$0xff] %v8711
      %8736 = vst [vmem:[#allocation4 + $0x48] sm:$0xff] %v8712
      %8737 = vst [vmem:[#allocation4 + $0x50] sm:$0xff] %v8713
      %8738 = vst [vmem:[#allocation4 + $0x58] sm:$0xff] %v8714
      %8739 = vst [vmem:[#allocation4 + $0x60] sm:$0xff] %v8715
      %8740 = vst [vmem:[#allocation4 + $0x68] sm:$0xff] %v8716
      %8741 = vst [vmem:[#allocation4 + $0x70] sm:$0xff] %v8717
      %8742 = vst [vmem:[#allocation4 + $0x78] sm:$0xff] %v8718
      %8743 = vst [vmem:[#allocation4 + $0x80] sm:$0xff] %v8719
      %8744 = vst [vmem:[#allocation4 + $0x88] sm:$0xff] %v8720
      %8745 = vst [vmem:[#allocation4 + $0x90] sm:$0xff] %v8721
      %8746 = vst [vmem:[#allocation4 + $0x98] sm:$0xff] %v8722
      %8747 = vst [vmem:[#allocation4 + $0xa0] sm:$0xff] %v8723
      %8748 = vst [vmem:[#allocation4 + $0xa8] sm:$0xff] %v8724
      %8749 = vst [vmem:[#allocation4 + $0xb0] sm:$0xff] %v8725
      %8750 = vst [vmem:[#allocation4 + $0xb8] sm:$0xf] %v8726
      %v8751 = vld [vmem:[#allocation4] sm:$0xff]
      %v8752 = vld [vmem:[#allocation4 + $0x8] sm:$0xff]
      %v8753 = vld [vmem:[#allocation4 + $0x10] sm:$0xff]
      %v8754 = vld [vmem:[#allocation4 + $0x18] sm:$0xff]
      %v8755 = vld [vmem:[#allocation4 + $0x20] sm:$0xff]
      %v8756 = vld [vmem:[#allocation4 + $0x28] sm:$0xff]
      %v8757 = vld [vmem:[#allocation4 + $0x30] sm:$0xff]
      %v8758 = vld [vmem:[#allocation4 + $0x38] sm:$0xff]
      %v8759 = vld [vmem:[#allocation4 + $0x40] sm:$0xff]
      %v8760 = vld [vmem:[#allocation4 + $0x48] sm:$0xff]
      %v8761 = vld [vmem:[#allocation4 + $0x50] sm:$0xff]
      %v8762 = vld [vmem:[#allocation4 + $0x58] sm:$0xff]
      %v8763 = vld [vmem:[#allocation4 + $0x60] sm:$0xff]
      %v8764 = vld [vmem:[#allocation4 + $0x68] sm:$0xff]
      %v8765 = vld [vmem:[#allocation4 + $0x70] sm:$0xff]
      %v8766 = vld [vmem:[#allocation4 + $0x78] sm:$0xff]
      %v8767 = vld [vmem:[#allocation4 + $0x80] sm:$0xff]
      %v8768 = vld [vmem:[#allocation4 + $0x88] sm:$0xff]
      %v8769 = vld [vmem:[#allocation4 + $0x90] sm:$0xff]
      %v8770 = vld [vmem:[#allocation4 + $0x98] sm:$0xff]
      %v8771 = vld [vmem:[#allocation4 + $0xa0] sm:$0xff]
      %v8772 = vld [vmem:[#allocation4 + $0xa8] sm:$0xff]
      %v8773 = vld [vmem:[#allocation4 + $0xb0] sm:$0xff]
      %v8774 = vld [vmem:[#allocation4 + $0xb8] sm:$0xf]
      %v8775 = vld [vmem:[#allocation3 + $0x10] sm:$0xfe]
      %v8776 = vld [vmem:[#allocation3 + $0x18] sm:$0xff]
      %v8777 = vld [vmem:[#allocation3 + $0x20] sm:$0xff]
      %v8778 = vld [vmem:[#allocation3 + $0x28] sm:$0xff]
      %v8779 = vld [vmem:[#allocation3 + $0x30] sm:$0xff]
      %v8780 = vld [vmem:[#allocation3 + $0x38] sm:$0xff]
      %v8781 = vld [vmem:[#allocation3 + $0x40] sm:$0xff]
      %v8782 = vld [vmem:[#allocation3 + $0x48] sm:$0xff]
      %v8783 = vld [vmem:[#allocation3 + $0x50] sm:$0xff]
      %v8784 = vld [vmem:[#allocation3 + $0x58] sm:$0xff]
      %v8785 = vld [vmem:[#allocation3 + $0x60] sm:$0xff]
      %v8786 = vld [vmem:[#allocation3 + $0x68] sm:$0x7f]
      %s8787 = scalar_lea.vmem %s6, 512
      %v8788 = vld [vmem:[%s8787] sm:$0xf]
      %v8789 = vld [vmem:[%s8787 + $0x4] sm:$0xf]
      %v8790 = vld [vmem:[%s8787 + $0x8] sm:$0xf]
      %v8791 = vld [vmem:[%s8787 + $0xc] sm:$0xf]
      %v8792 = vld [vmem:[%s8787 + $0x10] sm:$0xf]
      %v8793 = vld [vmem:[%s8787 + $0x14] sm:$0xf]
      %v8794 = vld [vmem:[%s8787 + $0x18] sm:$0xf]
      %v8795 = vld [vmem:[%s8787 + $0x1c] sm:$0xf]
      %v8796 = vld [vmem:[%s8787 + $0x20] sm:$0xf]
      %v8797 = vld [vmem:[%s8787 + $0x24] sm:$0xf]
      %v8798 = vld [vmem:[%s8787 + $0x28] sm:$0xf]
      %v8799 = vld [vmem:[%s8787 + $0x2c] sm:$0xf]
      %v8800 = vld [vmem:[%s8787 + $0x30] sm:$0xf]
      %v8801 = vld [vmem:[%s8787 + $0x34] sm:$0xf]
      %v8802 = vld [vmem:[%s8787 + $0x38] sm:$0xf]
      %v8803 = vld [vmem:[%s8787 + $0x3c] sm:$0xf]
      %v8816 = vrot.slane %v8775, 1
      %v8817 = vrot.slane %v8776, 1
      %v8818 = vsel %vm2626, %v8816, %v8817
      %v8819 = vrot.slane %v8777, 1
      %v8820 = vsel %vm2626, %v8817, %v8819
      %v8821 = vrot.slane %v8778, 1
      %v8822 = vsel %vm2626, %v8819, %v8821
      %v8823 = vrot.slane %v8779, 1
      %v8824 = vsel %vm2626, %v8821, %v8823
      %v8825 = vrot.slane %v8780, 1
      %v8826 = vsel %vm2626, %v8823, %v8825
      %v8827 = vrot.slane %v8781, 1
      %v8828 = vsel %vm2626, %v8825, %v8827
      %v8829 = vrot.slane %v8782, 1
      %v8830 = vsel %vm2626, %v8827, %v8829
      %v8831 = vrot.slane %v8783, 1
      %v8832 = vsel %vm2626, %v8829, %v8831
      %v8833 = vrot.slane %v8784, 1
      %v8834 = vsel %vm2626, %v8831, %v8833
      %v8835 = vrot.slane %v8785, 1
      %v8836 = vsel %vm2626, %v8833, %v8835
      %v8837 = vrot.slane %v8786, 1
      %v8838 = vsel %vm2626, %v8835, %v8837
      %v8867 = vunpack.c.l.b16 %v8788
      %v8868 = vunpack.c.l.b16 %v8789
      %v8869 = vunpack.c.l.b16 %v8790
      %v8870 = vunpack.c.l.b16 %v8791
      %v8871 = vunpack.c.l.b16 %v8792
      %v8872 = vunpack.c.l.b16 %v8793
      %v8873 = vunpack.c.l.b16 %v8794
      %v8874 = vunpack.c.l.b16 %v8795
      %v8875 = vunpack.c.l.b16 %v8796
      %v8876 = vunpack.c.l.b16 %v8797
      %v8877 = vunpack.c.l.b16 %v8798
      %v8878 = vunpack.c.l.b16 %v8799
      %v8879 = vunpack.c.l.b16 %v8800
      %v8880 = vunpack.c.l.b16 %v8801
      %v8881 = vunpack.c.l.b16 %v8802
      %v8882 = vunpack.c.l.b16 %v8803
      %v8883 = vpack.c.b16 %v8868, %v8867
      %v8884 = vpack.c.b16 %v8870, %v8869
      %v8885 = vpack.c.b16 %v8872, %v8871
      %v8886 = vpack.c.b16 %v8874, %v8873
      %v8887 = vpack.c.b16 %v8876, %v8875
      %v8888 = vpack.c.b16 %v8878, %v8877
      %v8889 = vpack.c.b16 %v8880, %v8879
      %v8890 = vpack.c.b16 %v8882, %v8881
      %8899 = vmatprep.subr.bf16.mxu0 0
      %8900 = vmatpush1.bf16.msra.mxu0 %v8883
      %8901 = vmatprep.subr.bf16.mxu0 0
      %8902 = vmatpush1.bf16.msra.mxu0 %v8884
      %8903 = vmatprep.subr.bf16.mxu0 0
      %8904 = vmatpush1.bf16.msra.mxu0 %v8885
      %8905 = vmatprep.subr.bf16.mxu0 0
      %8906 = vmatpush1.bf16.msra.mxu0 %v8886
      %8907 = vmatprep.subr.bf16.mxu0 0
      %8908 = vmatpush1.bf16.msra.mxu0 %v8887
      %8909 = vmatprep.subr.bf16.mxu0 0
      %8910 = vmatpush1.bf16.msra.mxu0 %v8888
      %8911 = vmatprep.subr.bf16.mxu0 0
      %8912 = vmatpush1.bf16.msra.mxu0 %v8889
      %8913 = vmatprep.subr.bf16.mxu0 0
      %8914 = vmatpush1.bf16.msra.mxu0 %v8890
      %8915 = vmatprep.subr.bf16.mxu0 0
      %8916 = vmatpush1.bf16.msra.mxu0 0
      %8917 = vmatprep.subr.bf16.mxu0 0
      %8918 = vmatpush1.bf16.msra.mxu0 0
      %8919 = vmatprep.subr.bf16.mxu0 0
      %8920 = vmatpush1.bf16.msra.mxu0 0
      %8921 = vmatprep.subr.bf16.mxu0 0
      %8922 = vmatpush1.bf16.msra.mxu0 0
      %8923 = vmatprep.subr.bf16.mxu0 0
      %8924 = vmatpush1.bf16.msra.mxu0 0
      %8925 = vmatprep.subr.bf16.mxu0 0
      %8926 = vmatpush1.bf16.msra.mxu0 0
      %8927 = vmatprep.subr.bf16.mxu0 0
      %8928 = vmatpush1.bf16.msra.mxu0 0
      %8929 = vmatprep.subr.bf16.mxu0 0
      %8930 = vmatpush1.bf16.msra.mxu0 0
      %8931 = vmatprep.mubr.bf16.mxu0 0
      %8932 = vmatmul.mubr.bf16.gmra.mrb[0].mxu0 %v8818
      %v8933 = vpop.f32.mrb[0].mxu0
      %v8934 = vadd.f32 0.0, %v8933
      %v8935 = vpop.f32.mrb[0].mxu0
      %v8936 = vpop.f32.mrb[0].mxu0
      %v8937 = vadd.f32 0.0, %v8936
      %v8938 = vpop.f32.mrb[0].mxu0
      %8939 = vmatprep.mubr.bf16.mxu0 0
      %8940 = vmatmul.mubr.bf16.gmra.mrb[0].mxu0 %v8820
      %v8941 = vpop.f32.mrb[0].mxu0
      %v8942 = vadd.f32 0.0, %v8941
      %v8943 = vpop.f32.mrb[0].mxu0
      %v8944 = vpop.f32.mrb[0].mxu0
      %v8945 = vadd.f32 0.0, %v8944
      %v8946 = vpop.f32.mrb[0].mxu0
      %8947 = vmatprep.mubr.bf16.mxu0 0
      %8948 = vmatmul.mubr.bf16.gmra.mrb[0].mxu0 %v8822
      %v8949 = vpop.f32.mrb[0].mxu0
      %v8950 = vadd.f32 0.0, %v8949
      %v8951 = vpop.f32.mrb[0].mxu0
      %v8952 = vpop.f32.mrb[0].mxu0
      %v8953 = vadd.f32 0.0, %v8952
      %v8954 = vpop.f32.mrb[0].mxu0
      %8955 = vmatprep.mubr.bf16.mxu0 0
      %8956 = vmatmul.mubr.bf16.gmra.mrb[0].mxu0 %v8824
      %v8957 = vpop.f32.mrb[0].mxu0
      %v8958 = vadd.f32 0.0, %v8957
      %v8959 = vpop.f32.mrb[0].mxu0
      %v8960 = vpop.f32.mrb[0].mxu0
      %v8961 = vadd.f32 0.0, %v8960
      %v8962 = vpop.f32.mrb[0].mxu0
      %8963 = vmatprep.mubr.bf16.mxu0 0
      %8964 = vmatmul.mubr.bf16.gmra.mrb[0].mxu0 %v8826
      %v8965 = vpop.f32.mrb[0].mxu0
      %v8966 = vadd.f32 0.0, %v8965
      %v8967 = vpop.f32.mrb[0].mxu0
      %v8968 = vpop.f32.mrb[0].mxu0
      %v8969 = vadd.f32 0.0, %v8968
      %v8970 = vpop.f32.mrb[0].mxu0
      %8971 = vmatprep.mubr.bf16.mxu0 0
      %8972 = vmatmul.mubr.bf16.gmra.mrb[0].mxu0 %v8828
      %v8973 = vpop.f32.mrb[0].mxu0
      %v8974 = vadd.f32 0.0, %v8973
      %v8975 = vpop.f32.mrb[0].mxu0
      %v8976 = vpop.f32.mrb[0].mxu0
      %v8977 = vadd.f32 0.0, %v8976
      %v8978 = vpop.f32.mrb[0].mxu0
      %8979 = vmatprep.mubr.bf16.mxu0 0
      %8980 = vmatmul.mubr.bf16.gmra.mrb[0].mxu0 %v8830
      %v8981 = vpop.f32.mrb[0].mxu0
      %v8982 = vadd.f32 0.0, %v8981
      %v8983 = vpop.f32.mrb[0].mxu0
      %v8984 = vpop.f32.mrb[0].mxu0
      %v8985 = vadd.f32 0.0, %v8984
      %v8986 = vpop.f32.mrb[0].mxu0
      %8987 = vmatprep.mubr.bf16.mxu0 0
      %8988 = vmatmul.mubr.bf16.gmra.mrb[0].mxu0 %v8832
      %v8989 = vpop.f32.mrb[0].mxu0
      %v8990 = vadd.f32 0.0, %v8989
      %v8991 = vpop.f32.mrb[0].mxu0
      %v8992 = vpop.f32.mrb[0].mxu0
      %v8993 = vadd.f32 0.0, %v8992
      %v8994 = vpop.f32.mrb[0].mxu0
      %8995 = vmatprep.mubr.bf16.mxu0 0
      %8996 = vmatmul.mubr.bf16.gmra.mrb[0].mxu0 %v8834
      %v8997 = vpop.f32.mrb[0].mxu0
      %v8998 = vadd.f32 0.0, %v8997
      %v8999 = vpop.f32.mrb[0].mxu0
      %v9000 = vpop.f32.mrb[0].mxu0
      %v9001 = vadd.f32 0.0, %v9000
      %v9002 = vpop.f32.mrb[0].mxu0
      %9003 = vmatprep.mubr.bf16.mxu0 0
      %9004 = vmatmul.mubr.bf16.gmra.mrb[0].mxu0 %v8836
      %v9005 = vpop.f32.mrb[0].mxu0
      %v9006 = vadd.f32 0.0, %v9005
      %v9007 = vpop.f32.mrb[0].mxu0
      %v9008 = vpop.f32.mrb[0].mxu0
      %v9009 = vadd.f32 0.0, %v9008
      %v9010 = vpop.f32.mrb[0].mxu0
      %9011 = vmatprep.mubr.bf16.mxu0 0
      %9012 = vmatmul.mubr.bf16.gmra.mrb[0].mxu0 %v8838
      %v9013 = vpop.f32.mrb[0].mxu0
      %v9014 = vadd.f32 0.0, %v9013
      %v9015 = vpop.f32.mrb[0].mxu0
      %v9016 = vpop.f32.mrb[0].mxu0
      %v9017 = vadd.f32 0.0, %v9016
      %v9018 = vpop.f32.mrb[0].mxu0
      %9019 = vmatprep.mubr.bf16.mxu0 0
      %9020 = vmatmul.mubr.bf16.gmra.mrb[0].mxu0 %v8837
      %v9021 = vpop.f32.mrb[0].mxu0
      %v9022 = vadd.f32 0.0, %v9021
      %v9023 = vpop.f32.mrb[0].mxu0
      %v9024 = vpop.f32.mrb[0].mxu0
      %v9025 = vadd.f32 0.0, %v9024
      %v9026 = vpop.f32.mrb[0].mxu0
      %9027 = vdwg.mxu0
      %v9028 = vadd.f32 %v8751, %v8934
      %v9029 = vadd.f32 %v8752, %v8937
      %v9030 = vadd.f32 %v8753, %v8942
      %v9031 = vadd.f32 %v8754, %v8945
      %v9032 = vadd.f32 %v8755, %v8950
      %v9033 = vadd.f32 %v8756, %v8953
      %v9034 = vadd.f32 %v8757, %v8958
      %v9035 = vadd.f32 %v8758, %v8961
      %v9036 = vadd.f32 %v8759, %v8966
      %v9037 = vadd.f32 %v8760, %v8969
      %v9038 = vadd.f32 %v8761, %v8974
      %v9039 = vadd.f32 %v8762, %v8977
      %v9040 = vadd.f32 %v8763, %v8982
      %v9041 = vadd.f32 %v8764, %v8985
      %v9042 = vadd.f32 %v8765, %v8990
      %v9043 = vadd.f32 %v8766, %v8993
      %v9044 = vadd.f32 %v8767, %v8998
      %v9045 = vadd.f32 %v8768, %v9001
      %v9046 = vadd.f32 %v8769, %v9006
      %v9047 = vadd.f32 %v8770, %v9009
      %v9048 = vadd.f32 %v8771, %v9014
      %v9049 = vadd.f32 %v8772, %v9017
      %v9050 = vadd.f32 %v8773, %v9022
      %v9051 = vadd.f32 %v8774, %v9025
      %9052 = vst [vmem:[#allocation4] sm:$0xff] %v9028
      %9053 = vst [vmem:[#allocation4 + $0x8] sm:$0xff] %v9029
      %9054 = vst [vmem:[#allocation4 + $0x10] sm:$0xff] %v9030
      %9055 = vst [vmem:[#allocation4 + $0x18] sm:$0xff] %v9031
      %9056 = vst [vmem:[#allocation4 + $0x20] sm:$0xff] %v9032
      %9057 = vst [vmem:[#allocation4 + $0x28] sm:$0xff] %v9033
      %9058 = vst [vmem:[#allocation4 + $0x30] sm:$0xff] %v9034
      %9059 = vst [vmem:[#allocation4 + $0x38] sm:$0xff] %v9035
      %9060 = vst [vmem:[#allocation4 + $0x40] sm:$0xff] %v9036
      %9061 = vst [vmem:[#allocation4 + $0x48] sm:$0xff] %v9037
      %9062 = vst [vmem:[#allocation4 + $0x50] sm:$0xff] %v9038
      %9063 = vst [vmem:[#allocation4 + $0x58] sm:$0xff] %v9039
      %9064 = vst [vmem:[#allocation4 + $0x60] sm:$0xff] %v9040
      %9065 = vst [vmem:[#allocation4 + $0x68] sm:$0xff] %v9041
      %9066 = vst [vmem:[#allocation4 + $0x70] sm:$0xff] %v9042
      %9067 = vst [vmem:[#allocation4 + $0x78] sm:$0xff] %v9043
      %9068 = vst [vmem:[#allocation4 + $0x80] sm:$0xff] %v9044
      %9069 = vst [vmem:[#allocation4 + $0x88] sm:$0xff] %v9045
      %9070 = vst [vmem:[#allocation4 + $0x90] sm:$0xff] %v9046
      %9071 = vst [vmem:[#allocation4 + $0x98] sm:$0xff] %v9047
      %9072 = vst [vmem:[#allocation4 + $0xa0] sm:$0xff] %v9048
      %9073 = vst [vmem:[#allocation4 + $0xa8] sm:$0xff] %v9049
      %9074 = vst [vmem:[#allocation4 + $0xb0] sm:$0xff] %v9050
      %9075 = vst [vmem:[#allocation4 + $0xb8] sm:$0xf] %v9051
      %v9076 = vld [vmem:[#allocation4] sm:$0xff]
      %v9077 = vld [vmem:[#allocation4 + $0x8] sm:$0xff]
      %v9078 = vld [vmem:[#allocation4 + $0x10] sm:$0xff]
      %v9079 = vld [vmem:[#allocation4 + $0x18] sm:$0xff]
      %v9080 = vld [vmem:[#allocation4 + $0x20] sm:$0xff]
      %v9081 = vld [vmem:[#allocation4 + $0x28] sm:$0xff]
      %v9082 = vld [vmem:[#allocation4 + $0x30] sm:$0xff]
      %v9083 = vld [vmem:[#allocation4 + $0x38] sm:$0xff]
      %v9084 = vld [vmem:[#allocation4 + $0x40] sm:$0xff]
      %v9085 = vld [vmem:[#allocation4 + $0x48] sm:$0xff]
      %v9086 = vld [vmem:[#allocation4 + $0x50] sm:$0xff]
      %v9087 = vld [vmem:[#allocation4 + $0x58] sm:$0xff]
      %v9088 = vld [vmem:[#allocation4 + $0x60] sm:$0xff]
      %v9089 = vld [vmem:[#allocation4 + $0x68] sm:$0xff]
      %v9090 = vld [vmem:[#allocation4 + $0x70] sm:$0xff]
      %v9091 = vld [vmem:[#allocation4 + $0x78] sm:$0xff]
      %v9092 = vld [vmem:[#allocation4 + $0x80] sm:$0xff]
      %v9093 = vld [vmem:[#allocation4 + $0x88] sm:$0xff]
      %v9094 = vld [vmem:[#allocation4 + $0x90] sm:$0xff]
      %v9095 = vld [vmem:[#allocation4 + $0x98] sm:$0xff]
      %v9096 = vld [vmem:[#allocation4 + $0xa0] sm:$0xff]
      %v9097 = vld [vmem:[#allocation4 + $0xa8] sm:$0xff]
      %v9098 = vld [vmem:[#allocation4 + $0xb0] sm:$0xff]
      %v9099 = vld [vmem:[#allocation4 + $0xb8] sm:$0xf]
      %v9101 = vlaneseq
      %v9102 = vshrl.u32 %v9101, 7
      %v9103 = vsub.s32 0, %v9102
      %v9104 = vrot.slane %v6160, %v9103
      %v9106 = vadd.f32 %v9076, %v9104
      %v9107 = vadd.f32 %v9077, %v9104
      %v9108 = vadd.f32 %v9078, %v9104
      %v9109 = vadd.f32 %v9079, %v9104
      %v9110 = vadd.f32 %v9080, %v9104
      %v9111 = vadd.f32 %v9081, %v9104
      %v9112 = vadd.f32 %v9082, %v9104
      %v9113 = vadd.f32 %v9083, %v9104
      %v9114 = vadd.f32 %v9084, %v9104
      %v9115 = vadd.f32 %v9085, %v9104
      %v9116 = vadd.f32 %v9086, %v9104
      %v9117 = vadd.f32 %v9087, %v9104
      %v9118 = vadd.f32 %v9088, %v9104
      %v9119 = vadd.f32 %v9089, %v9104
      %v9120 = vadd.f32 %v9090, %v9104
      %v9121 = vadd.f32 %v9091, %v9104
      %v9122 = vadd.f32 %v9092, %v9104
      %v9123 = vadd.f32 %v9093, %v9104
      %v9124 = vadd.f32 %v9094, %v9104
      %v9125 = vadd.f32 %v9095, %v9104
      %v9126 = vadd.f32 %v9096, %v9104
      %v9127 = vadd.f32 %v9097, %v9104
      %v9128 = vadd.f32 %v9098, %v9104
      %v9129 = vadd.f32 %v9099, %v9104
      %v9130 = vmax.f32 %v9106, 0.0
      %v9131 = vmax.f32 %v9107, 0.0
      %v9132 = vmax.f32 %v9108, 0.0
      %v9133 = vmax.f32 %v9109, 0.0
      %v9134 = vmax.f32 %v9110, 0.0
      %v9135 = vmax.f32 %v9111, 0.0
      %v9136 = vmax.f32 %v9112, 0.0
      %v9137 = vmax.f32 %v9113, 0.0
      %v9138 = vmax.f32 %v9114, 0.0
      %v9139 = vmax.f32 %v9115, 0.0
      %v9140 = vmax.f32 %v9116, 0.0
      %v9141 = vmax.f32 %v9117, 0.0
      %v9142 = vmax.f32 %v9118, 0.0
      %v9143 = vmax.f32 %v9119, 0.0
      %v9144 = vmax.f32 %v9120, 0.0
      %v9145 = vmax.f32 %v9121, 0.0
      %v9146 = vmax.f32 %v9122, 0.0
      %v9147 = vmax.f32 %v9123, 0.0
      %v9148 = vmax.f32 %v9124, 0.0
      %v9149 = vmax.f32 %v9125, 0.0
      %v9150 = vmax.f32 %v9126, 0.0
      %v9151 = vmax.f32 %v9127, 0.0
      %v9152 = vmax.f32 %v9128, 0.0
      %v9153 = vmax.f32 %v9129, 0.0
      %9154 = vst [vmem:[%s325] sm:$0xff] %v9130
      %9155 = vst [vmem:[%s325 + $0x8] sm:$0xff] %v9131
      %9156 = vst [vmem:[%s325 + $0x10] sm:$0xff] %v9132
      %9157 = vst [vmem:[%s325 + $0x18] sm:$0xff] %v9133
      %9158 = vst [vmem:[%s325 + $0x20] sm:$0xff] %v9134
      %9159 = vst [vmem:[%s325 + $0x28] sm:$0xff] %v9135
      %9160 = vst [vmem:[%s325 + $0x30] sm:$0xff] %v9136
      %9161 = vst [vmem:[%s325 + $0x38] sm:$0xff] %v9137
      %9162 = vst [vmem:[%s325 + $0x40] sm:$0xff] %v9138
      %9163 = vst [vmem:[%s325 + $0x48] sm:$0xff] %v9139
      %9164 = vst [vmem:[%s325 + $0x50] sm:$0xff] %v9140
      %9165 = vst [vmem:[%s325 + $0x58] sm:$0xff] %v9141
      %9166 = vst [vmem:[%s325 + $0x60] sm:$0xff] %v9142
      %9167 = vst [vmem:[%s325 + $0x68] sm:$0xff] %v9143
      %9168 = vst [vmem:[%s325 + $0x70] sm:$0xff] %v9144
      %9169 = vst [vmem:[%s325 + $0x78] sm:$0xff] %v9145
      %9170 = vst [vmem:[%s325 + $0x80] sm:$0xff] %v9146
      %9171 = vst [vmem:[%s325 + $0x88] sm:$0xff] %v9147
      %9172 = vst [vmem:[%s325 + $0x90] sm:$0xff] %v9148
      %9173 = vst [vmem:[%s325 + $0x98] sm:$0xff] %v9149
      %9174 = vst [vmem:[%s325 + $0xa0] sm:$0xff] %v9150
      %9175 = vst [vmem:[%s325 + $0xa8] sm:$0xff] %v9151
      %9176 = vst [vmem:[%s325 + $0xb0] sm:$0xff] %v9152
      %9177 = vst [vmem:[%s325 + $0xb8] sm:$0xf] %v9153
      %9178 = vst [vmem:[%s325 + $0xbc] sm:$0xf] 0.0
      %p9179 = scmp.lt.s32.totalorder %s19, 1
      %s9180 = scalar_select %p9179, %s19, 1
      %s9181 = smul.addr %s9180, 24
      %s9182 = smul.addr %s9181, 8
      %s9183 = scalar_lea.vmem %s8, %s9182
      // Predicated region
      $region53: #{expansion_forward.1} parent=51 // pred_check
        %p9184 = pneg %p215
      $region54: #{expansion_forward.1} parent=51 // pred_check_branch
        %9186 = sbr.rel (%p9184) target = $region56
      $region55: #{expansion_forward.1} parent=51 // pred_region
        _
      $region56: #{expansion_forward.1} parent=51 // pred_fallthru
        _
    $region52: #{expansion_forward.1} parent=5 // pred_fallthru
      _
    %p9187 = scmp.le.s32.totalorder 2, %s14
    // Predicated region
    $region57: #{expansion_forward.1} parent=5 // pred_check
      %p9188 = pneg %p9187
    $region58: #{expansion_forward.1} parent=5 // pred_check_branch
      %9190 = sbr.rel (%p9188) target = $region60
    $region59: #{expansion_forward.1} parent=5 // pred_region
      %s9191 = ssub.s32 %s14, 2
      // Predicated region
      $region61: #{expansion_forward.1} parent=59 // pred_check
        %p9192 = pneg %p221
      $region62: #{expansion_forward.1} parent=59 // pred_check_branch
        %9194 = sbr.rel (%p9192) target = $region64
      $region63: #{expansion_forward.1} parent=59 // pred_region
        %p9195 = scmp.lt.s32.totalorder %s20, 1
        %s9196 = scalar_select %p9195, %s20, 1
        %s9197 = smul.addr %s9196, 24
        %s9198 = smul.addr %s9197, 8
        %s9199 = scalar_lea.vmem %s8, %s9198
      $region64: #{expansion_forward.1} parent=59 // pred_fallthru
        _
    $region60: #{expansion_forward.1} parent=5 // pred_fallthru
      _
  $region6: #{expansion_forward.1} parent=0 // loop_footer
    %s18 = sadd.s32 1, %s14
  $region7: #{expansion_forward.1} parent=0 // loop_footer_branch
    %13 = sbr.rel target = $region3
  $region8: #{expansion_forward.1} parent=0 // loop_exit
    _

</llo_original>
